<compile_context>
chip_gen: v6e
topology: v6e:2x2x1
jax: 0.10.0
libtpu: 0.0.40
codegen_flags: <defaults>
</compile_context>

<pallas_src>
import functools

import jax
import jax.numpy as jnp
from jax.experimental import pallas as pl
from jax.experimental.pallas import tpu as pltpu

_EPS = 1e-5
_VMEM_LIMIT = 48 * 1024 * 1024           # explicit scoped-VMEM limit (headroom on all gens)
_FUSED_VMEM_BUDGET = 24 * 1024 * 1024    # working-set cap for the fully fused path

_TILED_PARAMS = pltpu.CompilerParams(
    dimension_semantics=("parallel",), vmem_limit_bytes=_VMEM_LIMIT)
_FUSED_PARAMS = pltpu.CompilerParams(vmem_limit_bytes=_VMEM_LIMIT)


# ----------------------------------------------------------------------------
# In-kernel helpers (shared by the fused and the tiled kernels)
# ----------------------------------------------------------------------------
def _im2col_taps(x, xpad_ref, *, stride):
    """Write x into the bf16 halo-padded VMEM scratch and return the 9 conv taps.

    Only the border strips are zeroed (the interior is fully overwritten every
    call); zeroing is NOT gated on program_id, so per-core scratches under
    "parallel" megacore sharding stay correct.

    stride == 1: x is (B, H, W, C),                    scratch (B, H+2, W+2, C)
    stride == 2: x is polyphase-folded (B, Ho, 2, Wo, 2C), scratch (B, Ho+1, 2, Wo+1, 2C);
                 tap (kh, kw) of the stride-2 / pad-1 conv is then a contiguous
                 static window of the folded scratch (no strided loads).
    Returns (taps, Ho, Wo); each tap is (B, Ho, Wo, C) in the scratch dtype.
    """
    dt = xpad_ref.dtype
    x = x.astype(dt)                                   # bf16 im2col operands
    if stride == 1:
        B, H, W, C = x.shape
        Ho, Wo = H, W
        xpad_ref[:, 1:H + 1, 1:W + 1, :] = x           # interior
        xpad_ref[:, 0:1, :, :] = jnp.zeros((B, 1, W + 2, C), dt)          # top
        xpad_ref[:, H + 1:H + 2, :, :] = jnp.zeros((B, 1, W + 2, C), dt)  # bottom
        xpad_ref[:, 1:H + 1, 0:1, :] = jnp.zeros((B, H, 1, C), dt)        # left
        xpad_ref[:, 1:H + 1, W + 1:W + 2, :] = jnp.zeros((B, H, 1, C), dt)  # right
        taps = [xpad_ref[:, kh:kh + Ho, kw:kw + Wo, :]
                for kh in range(3) for kw in range(3)]
    else:
        B, Ho, _, Wo, C2 = x.shape
        cin = C2 // 2
        xpad_ref[:, 1:Ho + 1, :, 1:Wo + 1, :] = x      # interior
        xpad_ref[:, 0:1, :, :, :] = jnp.zeros((B, 1, 2, Wo + 1, C2), dt)   # top halo
        xpad_ref[:, 1:Ho + 1, :, 0:1, :] = jnp.zeros((B, Ho, 2, 1, C2), dt)  # left halo
        # x_fold[b, a, p, u, q*cin + c] == img[b, 2a + p, 2u + q, c]; tap (kh, kw)
        # of the stride-2 / pad-1 conv is a static window of the folded scratch:
        sel = [(0, 1), (1, 0), (1, 1)]                 # k -> (window start, phase)
        taps = []
        for kh in range(3):
            vs, m = sel[kh]
            for kw in range(3):
                us, q = sel[kw]
                taps.append(xpad_ref[:, vs:vs + Ho, m, us:us + Wo,
                                     q * cin:(q + 1) * cin])
    return taps, Ho, Wo


def _conv_matmul(taps, w_bf16, b_f32):
    """im2col once -> ONE fat-K MXU matmul (K = 9*Cin), bf16 in / f32 acc."""
    B, Ho, Wo, cin = taps[0].shape
    patches = jnp.concatenate(taps, axis=-1)           # (B, Ho, Wo, 9*Cin) bf16
    # TODO(synk): for narrow channel counts (9*Cin not a multiple of 128) this
    # reshape relayouts; write taps into a pre-shaped scratch for those stages.
    patches = patches.reshape(B * Ho * Wo, 9 * cin)
    acc = jnp.dot(patches, w_bf16, preferred_element_type=jnp.float32)
    return acc + b_f32                                  # (B*Ho*Wo, Cout) f32


def _bn_scale_shift(stats, gamma, beta, count):
    """Fold global batch statistics + affine params into per-channel scale/shift.

    stats: (N, 2, C) per-sample [sum, sum_sq] over (H, W); gamma, beta: (1, C).
    Returns (scale, shift), each (1, C), so that bn(y) == y * scale + shift.
    (One-pass variance; used only by the tiled fallback path.)
    """
    tot = jnp.sum(stats, axis=0)                        # (2, C) global over (N, H, W)
    inv_n = 1.0 / float(count)
    mean = tot[0:1, :] * inv_n
    ex2 = tot[1:2, :] * inv_n
    var = jnp.maximum(ex2 - mean * mean, 0.0)
    inv_std = jax.lax.rsqrt(var + _EPS)                 # EUP
    scale = gamma * inv_std
    shift = beta - mean * scale
    return scale, shift


# ----------------------------------------------------------------------------
# Fully fused residual unit (whole batch resident in VMEM)
# ----------------------------------------------------------------------------
def _fused_residual_kernel(*refs, stride, cin, cout, has_shortcut):
    it = iter(refs)
    x_ref = next(it)
    w1_ref, b1_ref, g1_ref, be1_ref = next(it), next(it), next(it), next(it)
    w2_ref, b2_ref, g2_ref, be2_ref = next(it), next(it), next(it), next(it)
    if has_shortcut:
        w3_ref, b3_ref = next(it), next(it)
    out_ref = next(it)
    xpad1_ref, xpad2_ref = next(it), next(it)

    # ---- conv1 (direct stride-1 or polyphase stride-2), fat-K MXU matmul ----
    taps1, Ho, Wo = _im2col_taps(x_ref[...], xpad1_ref, stride=stride)
    B = taps1[0].shape[0]
    y1 = _conv_matmul(taps1, w1_ref[...], b1_ref[...])  # (B*Ho*Wo, Cout) f32

    # ---- BN1 (training mode: exact global batch stats, two-pass) + ReLU ----
    mean1 = jnp.mean(y1, axis=0, keepdims=True)
    var1 = jnp.mean(jnp.square(y1 - mean1), axis=0, keepdims=True)
    scale1 = g1_ref[...] * jax.lax.rsqrt(var1 + _EPS)
    shift1 = be1_ref[...] - mean1 * scale1
    h = jnp.maximum(y1 * scale1 + shift1, 0.0)          # f32 epilogue math

    # ---- conv2 (stride 1) ----
    h = h.reshape(B, Ho, Wo, cout)
    taps2, _, _ = _im2col_taps(h, xpad2_ref, stride=1)
    y2 = _conv_matmul(taps2, w2_ref[...], b2_ref[...])  # (B*Ho*Wo, Cout) f32

    # ---- BN2 ----
    mean2 = jnp.mean(y2, axis=0, keepdims=True)
    var2 = jnp.mean(jnp.square(y2 - mean2), axis=0, keepdims=True)
    scale2 = g2_ref[...] * jax.lax.rsqrt(var2 + _EPS)
    shift2 = be2_ref[...] - mean2 * scale2
    y2 = y2 * scale2 + shift2

    # ---- shortcut + residual add + ReLU ----
    if has_shortcut:
        # 1x1 / stride-2 projection: its input is exactly the centre tap of
        # conv1 (img[::2, ::2, :]), already resident in the bf16 scratch.
        centre = taps1[4].reshape(B * Ho * Wo, cin)
        sc = jnp.dot(centre, w3_ref[...],
                     preferred_element_type=jnp.float32) + b3_ref[...]
    else:
        sc = x_ref[...].reshape(B * Ho * Wo, cin)       # identity (cin == cout)

    out_ref[...] = jnp.maximum(y2 + sc, 0.0).reshape(B, Ho, Wo, cout)


def residual_unit_fused(x, p, stride, use_1x1conv):
    """Entire residual unit in ONE pallas_call (whole batch in VMEM)."""
    N, H, W, Cin = x.shape
    Cout = p["w1"].shape[-1]
    assert stride in (1, 2)
    if not use_1x1conv:
        assert stride == 1 and Cin == Cout

    if stride == 1:
        Ho, Wo = H, W
        x_in = x
        pad1 = pltpu.VMEM((N, H + 2, W + 2, Cin), jnp.bfloat16)
    else:
        assert H % 2 == 0 and W % 2 == 0
        Ho, Wo = H // 2, W // 2
        # Free (metadata-only) polyphase fold of the 2x2 spatial phases.
        x_in = x.reshape(N, Ho, 2, Wo, 2 * Cin)
        pad1 = pltpu.VMEM((N, Ho + 1, 2, Wo + 1, 2 * Cin), jnp.bfloat16)
    pad2 = pltpu.VMEM((N, Ho + 2, Wo + 2, Cout), jnp.bfloat16)

    inputs = [x_in,
              p["w1"].reshape(9 * Cin, Cout).astype(jnp.bfloat16),
              p["b1"].reshape(1, Cout).astype(jnp.float32),
              p["g1"].reshape(1, Cout).astype(jnp.float32),
              p["be1"].reshape(1, Cout).astype(jnp.float32),
              p["w2"].reshape(9 * Cout, Cout).astype(jnp.bfloat16),
              p["b2"].reshape(1, Cout).astype(jnp.float32),
              p["g2"].reshape(1, Cout).astype(jnp.float32),
              p["be2"].reshape(1, Cout).astype(jnp.float32)]
    if use_1x1conv:
        inputs += [p["w3"].reshape(Cin, Cout).astype(jnp.bfloat16),
                   p["b3"].reshape(1, Cout).astype(jnp.float32)]

    kernel = functools.partial(_fused_residual_kernel, stride=stride, cin=Cin,
                               cout=Cout, has_shortcut=use_1x1conv)
    return pl.pallas_call(
        kernel,
        out_shape=jax.ShapeDtypeStruct((N, Ho, Wo, Cout), jnp.float32),
        scratch_shapes=[pad1, pad2],
        compiler_params=_FUSED_PARAMS,
    )(*inputs)


def _fused_vmem_bytes(n, h, w, cin, cout, stride):
    """Rough working-set estimate for the fully fused path."""
    ho, wo = h // stride, w // stride
    b = n * h * w * cin * 4                                  # f32 input
    b += n * (ho + 2) * (wo + 2) * cin * stride * stride * 2  # pad1 (bf16)
    b += n * (ho + 2) * (wo + 2) * cout * 2                  # pad2 (bf16)
    b += n * ho * wo * (9 * cin + 9 * cout) * 2              # im2col patches (bf16)
    b += 4 * n * ho * wo * cout * 4                          # y1 / h / y2 / out (f32)
    return b


# ----------------------------------------------------------------------------
# Tiled fallback path (one grid step per sample)
# ----------------------------------------------------------------------------
def _conv3x3_kernel(*refs, stride, prebn_count, has_prebn, has_shortcut):
    """3x3 conv (pad=1, stride in {1,2}) + bias, with fused extras.

    Optional fusions: BN+ReLU prologue on the input (stats of the previous
    conv), the stride-2 1x1 projection shortcut, and a per-sample BatchNorm
    statistics (sum, sum^2) epilogue.  Grid: one step per sample ("parallel").
    """
    it = iter(refs)
    x_ref, w_ref, b_ref = next(it), next(it), next(it)
    if has_prebn:
        pstats_ref, pgamma_ref, pbeta_ref = next(it), next(it), next(it)
    if has_shortcut:
        w3_ref, b3_ref = next(it), next(it)
    y_ref, stats_ref = next(it), next(it)
    if has_shortcut:
        sc_ref = next(it)
    xpad_ref = next(it)

    x = x_ref[...]
    if has_prebn:
        # BN(previous conv) + ReLU fused as a prologue (no extra HBM pass).
        scale, shift = _bn_scale_shift(pstats_ref[...], pgamma_ref[...],
                                       pbeta_ref[...], prebn_count)
        x = jnp.maximum(x.astype(jnp.float32) * scale + shift, 0.0)

    taps, Ho, Wo = _im2col_taps(x, xpad_ref, stride=stride)
    acc = _conv_matmul(taps, w_ref[...], b_ref[...])     # (Ho*Wo, Cout) f32
    cin = taps[0].shape[-1]
    cout = acc.shape[-1]
    y_ref[...] = acc.reshape(1, Ho, Wo, cout).astype(y_ref.dtype)   # bf16 HBM

    # BatchNorm partial-statistics epilogue (per-sample sum / sum^2).
    s1 = jnp.sum(acc, axis=0, keepdims=True)
    s2 = jnp.sum(acc * acc, axis=0, keepdims=True)
    stats_ref[0] = jnp.concatenate([s1, s2], axis=0)     # (2, Cout) f32

    if has_shortcut:
        centre = taps[4].reshape(Ho * Wo, cin)           # img[::2, ::2, :] in VMEM
        sc = jnp.dot(centre, w3_ref[...],
                     preferred_element_type=jnp.float32) + b3_ref[...]
        sc_ref[...] = sc.reshape(1, Ho, Wo, cout).astype(sc_ref.dtype)


def _bn_add_relu_kernel(y_ref, stats_ref, gamma_ref, beta_ref, res_ref, out_ref,
                        *, count):
    """relu(BN(y) + residual) -- BN uses global batch stats (training mode)."""
    scale, shift = _bn_scale_shift(stats_ref[...], gamma_ref[...], beta_ref[...],
                                   count)
    out = y_ref[...].astype(jnp.float32) * scale + shift \
        + res_ref[...].astype(jnp.float32)
    out_ref[...] = jnp.maximum(out, 0.0)


def conv3x3(x, w, b, *, stride=1, prebn=None, shortcut_wb=None):
    """3x3 conv, pad=1.  Returns (y_bf16, bn_partial_stats_f32[, shortcut_bf16])."""
    N, H, W, Cin = x.shape
    Cout = w.shape[-1]
    has_prebn = prebn is not None
    has_shortcut = shortcut_wb is not None
    assert stride in (1, 2)
    assert not (has_prebn and stride != 1)
    assert not (has_shortcut and stride != 2)

    if stride == 1:
        Ho, Wo = H, W
        x_in = x
        x_spec = pl.BlockSpec((1, H, W, Cin), lambda n: (n, 0, 0, 0))
        pad_scratch = pltpu.VMEM((1, H + 2, W + 2, Cin), jnp.bfloat16)
    else:
        assert H % 2 == 0 and W % 2 == 0
        Ho, Wo = H // 2, W // 2
        x_in = x.reshape(N, Ho, 2, Wo, 2 * Cin)          # free polyphase fold
        x_spec = pl.BlockSpec((1, Ho, 2, Wo, 2 * Cin), lambda n: (n, 0, 0, 0, 0))
        pad_scratch = pltpu.VMEM((1, Ho + 1, 2, Wo + 1, 2 * Cin), jnp.bfloat16)

    inputs = [x_in,
              w.reshape(9 * Cin, Cout).astype(jnp.bfloat16),
              b.reshape(1, Cout).astype(jnp.float32)]
    in_specs = [x_spec,
                pl.BlockSpec((9 * Cin, Cout), lambda n: (0, 0)),
                pl.BlockSpec((1, Cout), lambda n: (0, 0))]

    prebn_count = N * H * W
    if has_prebn:
        pstats, pgamma, pbeta = prebn
        inputs += [pstats,
                   pgamma.reshape(1, Cin).astype(jnp.float32),
                   pbeta.reshape(1, Cin).astype(jnp.float32)]
        in_specs += [pl.BlockSpec((N, 2, Cin), lambda n: (0, 0, 0)),
                     pl.BlockSpec((1, Cin), lambda n: (0, 0)),
                     pl.BlockSpec((1, Cin), lambda n: (0, 0))]
    if has_shortcut:
        w3, b3 = shortcut_wb
        inputs += [w3.reshape(Cin, Cout).astype(jnp.bfloat16),
                   b3.reshape(1, Cout).astype(jnp.float32)]
        in_specs += [pl.BlockSpec((Cin, Cout), lambda n: (0, 0)),
                     pl.BlockSpec((1, Cout), lambda n: (0, 0))]

    # Intermediate activations stored as bf16 in HBM; BN partial stats stay f32.
    out_shape = [jax.ShapeDtypeStruct((N, Ho, Wo, Cout), jnp.bfloat16),
                 jax.ShapeDtypeStruct((N, 2, Cout), jnp.float32)]
    out_specs = [pl.BlockSpec((1, Ho, Wo, Cout), lambda n: (n, 0, 0, 0)),
                 pl.BlockSpec((1, 2, Cout), lambda n: (n, 0, 0))]
    if has_shortcut:
        out_shape.append(jax.ShapeDtypeStruct((N, Ho, Wo, Cout), jnp.bfloat16))
        out_specs.append(pl.BlockSpec((1, Ho, Wo, Cout), lambda n: (n, 0, 0, 0)))

    kernel = functools.partial(
        _conv3x3_kernel, stride=stride, prebn_count=prebn_count,
        has_prebn=has_prebn, has_shortcut=has_shortcut)

    return pl.pallas_call(
        kernel,
        grid=(N,),
        in_specs=in_specs,
        out_specs=tuple(out_specs),
        out_shape=tuple(out_shape),
        scratch_shapes=[pad_scratch],
        compiler_params=_TILED_PARAMS,
    )(*inputs)


def bn_add_relu(y, stats, gamma, beta, residual):
    """relu(BN(y) + residual); BN stats are global over (N, H, W)."""
    N, H, W, C = y.shape
    kernel = functools.partial(_bn_add_relu_kernel, count=N * H * W)
    return pl.pallas_call(
        kernel,
        grid=(N,),
        in_specs=[pl.BlockSpec((1, H, W, C), lambda n: (n, 0, 0, 0)),
                  pl.BlockSpec((N, 2, C), lambda n: (0, 0, 0)),
                  pl.BlockSpec((1, C), lambda n: (0, 0)),
                  pl.BlockSpec((1, C), lambda n: (0, 0)),
                  pl.BlockSpec((1, H, W, C), lambda n: (n, 0, 0, 0))],
        out_specs=pl.BlockSpec((1, H, W, C), lambda n: (n, 0, 0, 0)),
        out_shape=jax.ShapeDtypeStruct((N, H, W, C), jnp.float32),
        compiler_params=_TILED_PARAMS,
    )(y, stats, gamma.reshape(1, C).astype(jnp.float32),
      beta.reshape(1, C).astype(jnp.float32), residual)


# ----------------------------------------------------------------------------
# Residual block (matches the PyTorch module, training-mode BatchNorm)
# ----------------------------------------------------------------------------
def init_residual_params(key, cin, cout, use_1x1conv):
    ks = jax.random.split(key, 6)
    s1 = 1.0 / (cin * 9) ** 0.5
    s2 = 1.0 / (cout * 9) ** 0.5
    p = dict(
        w1=jax.random.uniform(ks[0], (3, 3, cin, cout), jnp.float32, -s1, s1),
        b1=jax.random.uniform(ks[1], (cout,), jnp.float32, -s1, s1),
        w2=jax.random.uniform(ks[2], (3, 3, cout, cout), jnp.float32, -s2, s2),
        b2=jax.random.uniform(ks[3], (cout,), jnp.float32, -s2, s2),
        g1=jnp.ones((cout,), jnp.float32), be1=jnp.zeros((cout,), jnp.float32),
        g2=jnp.ones((cout,), jnp.float32), be2=jnp.zeros((cout,), jnp.float32),
    )
    if use_1x1conv:
        s3 = 1.0 / cin ** 0.5
        p["w3"] = jax.random.uniform(ks[4], (1, 1, cin, cout), jnp.float32, -s3, s3)
        p["b3"] = jax.random.uniform(ks[5], (cout,), jnp.float32, -s3, s3)
    return p


def residual_forward(x, p, stride, use_1x1conv, *, force_tiled=False):
    """One Residual unit: relu(bn2(conv2(relu(bn1(conv1(x))))) + shortcut)."""
    N, H, W, Cin = x.shape
    Cout = p["w1"].shape[-1]

    if (not force_tiled and
            _fused_vmem_bytes(N, H, W, Cin, Cout, stride) <= _FUSED_VMEM_BUDGET):
        # Whole unit fused in one pallas_call: no HBM intermediates at all.
        return residual_unit_fused(x, p, stride, use_1x1conv)

    # Tiled fallback (one grid step per sample) for larger working sets.
    # TODO(synk): H-tile with a 2-row halo (and a spatial parallel axis) so the
    # per-step footprint stays small on v7x / v5e at real ResNet spatial sizes.
    if use_1x1conv:
        y1, stats1, shortcut = conv3x3(x, p["w1"], p["b1"], stride=stride,
                                       shortcut_wb=(p["w3"], p["b3"]))
    else:
        y1, stats1 = conv3x3(x, p["w1"], p["b1"], stride=stride)
        shortcut = x
    y2, stats2 = conv3x3(y1, p["w2"], p["b2"], stride=1,
                         prebn=(stats1, p["g1"], p["be1"]))
    return bn_add_relu(y2, stats2, p["g2"], p["be2"], shortcut)


class ResidualBlockPallas:
    def __init__(self, in_channels, out_channels, num_residuals, first_block, key):
        self.cfg = []
        self.params = []
        keys = jax.random.split(key, num_residuals)
        for i in range(num_residuals):
            if i == 0 and (not first_block):
                cfg = dict(cin=in_channels, cout=out_channels, stride=2,
                           use_1x1conv=True)
            else:
                cfg = dict(cin=out_channels, cout=out_channels, stride=1,
                           use_1x1conv=False)
            self.cfg.append(cfg)
            self.params.append(
                init_residual_params(keys[i], cfg["cin"], cfg["cout"],
                                     cfg["use_1x1conv"]))
        self._fwd = jax.jit(self._forward, static_argnames=("force_tiled",))

    def _forward(self, x_nchw, params, force_tiled=False):
        x = jnp.transpose(x_nchw, (0, 2, 3, 1))                 # NCHW -> NHWC
        for cfg, p in zip(self.cfg, params):
            x = residual_forward(x, p, cfg["stride"], cfg["use_1x1conv"],
                                 force_tiled=force_tiled)
        return jnp.transpose(x, (0, 3, 1, 2))                   # NHWC -> NCHW

    def __call__(self, x_nchw, force_tiled=False):
        return self._fwd(x_nchw, self.params, force_tiled=force_tiled)

    # pure-JAX (XLA) reference, f32 everywhere, for numerical verification
    def reference(self, x_nchw):
        def rconv(x, w, b, stride, pad):
            y = jax.lax.conv_general_dilated(
                x, w, (stride, stride), ((pad, pad), (pad, pad)),
                dimension_numbers=("NHWC", "HWIO", "NHWC"))
            return y + b

        def rbn_relu(y, g, be, res):
            m = jnp.mean(y, axis=(0, 1, 2), keepdims=True)
            v = jnp.mean((y - m) ** 2, axis=(0, 1, 2), keepdims=True)
            return jnp.maximum((y - m) * jax.lax.rsqrt(v + _EPS) * g + be + res, 0.0)

        x = jnp.transpose(x_nchw, (0, 2, 3, 1))
        for cfg, p in zip(self.cfg, self.params):
            y = rconv(x, p["w1"], p["b1"], cfg["stride"], 1)
            y = rbn_relu(y, p["g1"], p["be1"], 0.0)
            y = rconv(y, p["w2"], p["b2"], 1, 1)
            sc = (rconv(x, p["w3"], p["b3"], cfg["stride"], 0)
                  if cfg["use_1x1conv"] else x)
            x = rbn_relu(y, p["g2"], p["be2"], sc)
        return jnp.transpose(x, (0, 3, 1, 2))


if __name__ == "__main__":
    key = jax.random.PRNGKey(0)
    kx, kp = jax.random.split(key)
    x = jax.random.normal(kx, (2, 4, 16, 16), jnp.float32)      # NCHW input

    # ResidualBlock(in_channels=4, out_channels=8, num_residuals=2, first_block=False)
    block = ResidualBlockPallas(4, 8, num_residuals=2, first_block=False, key=kp)

    out = jax.block_until_ready(block(x))                        # fused path
    out_tiled = jax.block_until_ready(block(x, force_tiled=True))  # tiled path
    assert out.shape == (2, 8, 8, 8), out.shape
    assert out_tiled.shape == (2, 8, 8, 8), out_tiled.shape

    ref = block.reference(x)
    err_f = float(jnp.max(jnp.abs(out - ref)))
    err_t = float(jnp.max(jnp.abs(out_tiled - ref)))
    # bf16 MXU operands / bf16 intermediates (f32 accumulation + f32 BN math)
    assert jnp.allclose(out, ref, atol=5e-2, rtol=5e-2), f"fused max abs err {err_f}"
    assert jnp.allclose(out_tiled, ref, atol=5e-2, rtol=5e-2), f"tiled max abs err {err_t}"

    print("KERNEL_OK")
</pallas_src>

<mosaic_0001>
module attributes {stable_mosaic.version = 11 : i64} {
  func.func @_fused_residual_kernel(%arg0: memref<2x8x2x8x8xf32, #tpu.memory_space<vmem>>, %arg1: memref<36x8xbf16, #tpu.memory_space<vmem>>, %arg2: memref<1x8xf32, #tpu.memory_space<vmem>>, %arg3: memref<1x8xf32, #tpu.memory_space<vmem>>, %arg4: memref<1x8xf32, #tpu.memory_space<vmem>>, %arg5: memref<72x8xbf16, #tpu.memory_space<vmem>>, %arg6: memref<1x8xf32, #tpu.memory_space<vmem>>, %arg7: memref<1x8xf32, #tpu.memory_space<vmem>>, %arg8: memref<1x8xf32, #tpu.memory_space<vmem>>, %arg9: memref<4x8xbf16, #tpu.memory_space<vmem>>, %arg10: memref<1x8xf32, #tpu.memory_space<vmem>>, %arg11: memref<2x8x8x8xf32, #tpu.memory_space<vmem>>, %arg12: memref<2x9x2x9x8xbf16, #tpu.memory_space<vmem>>, %arg13: memref<2x10x10x8xbf16, #tpu.memory_space<vmem>>) attributes {dimension_semantics = [], scalar_prefetch = 0 : i64, scratch_operands = 2 : i64, tpu.core_type = #tpu.core_type<tc>} {
    %c0 = arith.constant 0 : index
    %c0_0 = arith.constant 0 : index
    %c0_1 = arith.constant 0 : index
    %c0_2 = arith.constant 0 : index
    %c0_3 = arith.constant 0 : index
    %0 = vector.load %arg0[%c0, %c0_0, %c0_1, %c0_2, %c0_3] : memref<2x8x2x8x8xf32, #tpu.memory_space<vmem>>, vector<2x8x2x8x8xf32>
    %1 = arith.truncf %0 : vector<2x8x2x8x8xf32> to vector<2x8x2x8x8xbf16>
    %c0_4 = arith.constant 0 : index
    %c1 = arith.constant 1 : index
    %c0_5 = arith.constant 0 : index
    %c1_6 = arith.constant 1 : index
    %c0_7 = arith.constant 0 : index
    %2 = vector.load %arg12[%c0_4, %c1, %c0_5, %c1_6, %c0_7] : memref<2x9x2x9x8xbf16, #tpu.memory_space<vmem>>, vector<2x8x2x8x8xbf16>
    tpu.vector_store %arg12[%c0_4, %c1, %c0_5, %c1_6, %c0_7], %1 {strides = array<i32>} : memref<2x9x2x9x8xbf16, #tpu.memory_space<vmem>>, vector<2x8x2x8x8xbf16>,
    %cst = arith.constant 0.000000e+00 : bf16
    %3 = vector.broadcast %cst : bf16 to vector<2x1x2x9x8xbf16>
    %c0_8 = arith.constant 0 : index
    %c0_9 = arith.constant 0 : index
    %c0_10 = arith.constant 0 : index
    %c0_11 = arith.constant 0 : index
    %c0_12 = arith.constant 0 : index
    %4 = vector.load %arg12[%c0_8, %c0_9, %c0_10, %c0_11, %c0_12] : memref<2x9x2x9x8xbf16, #tpu.memory_space<vmem>>, vector<2x1x2x9x8xbf16>
    tpu.vector_store %arg12[%c0_8, %c0_9, %c0_10, %c0_11, %c0_12], %3 {strides = array<i32>} : memref<2x9x2x9x8xbf16, #tpu.memory_space<vmem>>, vector<2x1x2x9x8xbf16>,
    %cst_13 = arith.constant 0.000000e+00 : bf16
    %5 = vector.broadcast %cst_13 : bf16 to vector<2x8x2x1x8xbf16>
    %c0_14 = arith.constant 0 : index
    %c1_15 = arith.constant 1 : index
    %c0_16 = arith.constant 0 : index
    %c0_17 = arith.constant 0 : index
    %c0_18 = arith.constant 0 : index
    %6 = vector.load %arg12[%c0_14, %c1_15, %c0_16, %c0_17, %c0_18] : memref<2x9x2x9x8xbf16, #tpu.memory_space<vmem>>, vector<2x8x2x1x8xbf16>
    tpu.vector_store %arg12[%c0_14, %c1_15, %c0_16, %c0_17, %c0_18], %5 {strides = array<i32>} : memref<2x9x2x9x8xbf16, #tpu.memory_space<vmem>>, vector<2x8x2x1x8xbf16>,
    %c0_19 = arith.constant 0 : index
    %c0_20 = arith.constant 0 : index
    %c1_21 = arith.constant 1 : index
    %c0_22 = arith.constant 0 : index
    %c4 = arith.constant 4 : index
    %7 = vector.load %arg12[%c0_19, %c0_20, %c1_21, %c0_22, %c4] : memref<2x9x2x9x8xbf16, #tpu.memory_space<vmem>>, vector<2x8x1x8x4xbf16>
    %8 = vector.shape_cast %7 : vector<2x8x1x8x4xbf16> to vector<2x8x8x4xbf16>
    %c0_23 = arith.constant 0 : index
    %c0_24 = arith.constant 0 : index
    %c1_25 = arith.constant 1 : index
    %c1_26 = arith.constant 1 : index
    %c0_27 = arith.constant 0 : index
    %9 = vector.load %arg12[%c0_23, %c0_24, %c1_25, %c1_26, %c0_27] : memref<2x9x2x9x8xbf16, #tpu.memory_space<vmem>>, vector<2x8x1x8x4xbf16>
    %10 = vector.shape_cast %9 : vector<2x8x1x8x4xbf16> to vector<2x8x8x4xbf16>
    %c0_28 = arith.constant 0 : index
    %c0_29 = arith.constant 0 : index
    %c1_30 = arith.constant 1 : index
    %c1_31 = arith.constant 1 : index
    %c4_32 = arith.constant 4 : index
    %11 = vector.load %arg12[%c0_28, %c0_29, %c1_30, %c1_31, %c4_32] : memref<2x9x2x9x8xbf16, #tpu.memory_space<vmem>>, vector<2x8x1x8x4xbf16>
    %12 = vector.shape_cast %11 : vector<2x8x1x8x4xbf16> to vector<2x8x8x4xbf16>
    %c0_33 = arith.constant 0 : index
    %c1_34 = arith.constant 1 : index
    %c0_35 = arith.constant 0 : index
    %c0_36 = arith.constant 0 : index
    %c4_37 = arith.constant 4 : index
    %13 = vector.load %arg12[%c0_33, %c1_34, %c0_35, %c0_36, %c4_37] : memref<2x9x2x9x8xbf16, #tpu.memory_space<vmem>>, vector<2x8x1x8x4xbf16>
    %14 = vector.shape_cast %13 : vector<2x8x1x8x4xbf16> to vector<2x8x8x4xbf16>
    %c0_38 = arith.constant 0 : index
    %c1_39 = arith.constant 1 : index
    %c0_40 = arith.constant 0 : index
    %c1_41 = arith.constant 1 : index
    %c0_42 = arith.constant 0 : index
    %15 = vector.load %arg12[%c0_38, %c1_39, %c0_40, %c1_41, %c0_42] : memref<2x9x2x9x8xbf16, #tpu.memory_space<vmem>>, vector<2x8x1x8x4xbf16>
    %16 = vector.shape_cast %15 : vector<2x8x1x8x4xbf16> to vector<2x8x8x4xbf16>
    %c0_43 = arith.constant 0 : index
    %c1_44 = arith.constant 1 : index
    %c0_45 = arith.constant 0 : index
    %c1_46 = arith.constant 1 : index
    %c4_47 = arith.constant 4 : index
    %17 = vector.load %arg12[%c0_43, %c1_44, %c0_45, %c1_46, %c4_47] : memref<2x9x2x9x8xbf16, #tpu.memory_space<vmem>>, vector<2x8x1x8x4xbf16>
    %18 = vector.shape_cast %17 : vector<2x8x1x8x4xbf16> to vector<2x8x8x4xbf16>
    %c0_48 = arith.constant 0 : index
    %c1_49 = arith.constant 1 : index
    %c1_50 = arith.constant 1 : index
    %c0_51 = arith.constant 0 : index
    %c4_52 = arith.constant 4 : index
    %19 = vector.load %arg12[%c0_48, %c1_49, %c1_50, %c0_51, %c4_52] : memref<2x9x2x9x8xbf16, #tpu.memory_space<vmem>>, vector<2x8x1x8x4xbf16>
    %20 = vector.shape_cast %19 : vector<2x8x1x8x4xbf16> to vector<2x8x8x4xbf16>
    %c0_53 = arith.constant 0 : index
    %c1_54 = arith.constant 1 : index
    %c1_55 = arith.constant 1 : index
    %c1_56 = arith.constant 1 : index
    %c0_57 = arith.constant 0 : index
    %21 = vector.load %arg12[%c0_53, %c1_54, %c1_55, %c1_56, %c0_57] : memref<2x9x2x9x8xbf16, #tpu.memory_space<vmem>>, vector<2x8x1x8x4xbf16>
    %22 = vector.shape_cast %21 : vector<2x8x1x8x4xbf16> to vector<2x8x8x4xbf16>
    %c0_58 = arith.constant 0 : index
    %c1_59 = arith.constant 1 : index
    %c1_60 = arith.constant 1 : index
    %c1_61 = arith.constant 1 : index
    %c4_62 = arith.constant 4 : index
    %23 = vector.load %arg12[%c0_58, %c1_59, %c1_60, %c1_61, %c4_62] : memref<2x9x2x9x8xbf16, #tpu.memory_space<vmem>>, vector<2x8x1x8x4xbf16>
    %24 = vector.shape_cast %23 : vector<2x8x1x8x4xbf16> to vector<2x8x8x4xbf16>
    %c0_63 = arith.constant 0 : index
    %c0_64 = arith.constant 0 : index
    %25 = vector.load %arg1[%c0_63, %c0_64] : memref<36x8xbf16, #tpu.memory_space<vmem>>, vector<36x8xbf16>
    %c0_65 = arith.constant 0 : index
    %c0_66 = arith.constant 0 : index
    %26 = vector.load %arg2[%c0_65, %c0_66] : memref<1x8xf32, #tpu.memory_space<vmem>>, vector<1x8xf32>
    %27 = tpu.concatenate %8, %10, %12, %14, %16, %18, %20, %22, %24 in 3 : vector<2x8x8x4xbf16>, vector<2x8x8x4xbf16>, vector<2x8x8x4xbf16>, vector<2x8x8x4xbf16>, vector<2x8x8x4xbf16>, vector<2x8x8x4xbf16>, vector<2x8x8x4xbf16>, vector<2x8x8x4xbf16>, vector<2x8x8x4xbf16> -> vector<2x8x8x36xbf16>
    %28 = vector.shape_cast %27 : vector<2x8x8x36xbf16> to vector<128x36xbf16>
    %cst_67 = arith.constant dense<0.000000e+00> : vector<128x8xf32>
    %29 = tpu.matmul %28, %25, %cst_67 {dimension_numbers = #tpu.dot_dimension_numbers<[1], [0], [0], [1], [0, 0, 1, 1], [], []>} : vector<128x36xbf16>, vector<36x8xbf16>, vector<128x8xf32> -> vector<128x8xf32>
    %30 = vector.broadcast %26 : vector<1x8xf32> to vector<128x8xf32>
    %31 = arith.addf %29, %30 : vector<128x8xf32>
    %cst_68 = arith.constant dense<0.000000e+00> : vector<8xf32>
    %32 = vector.multi_reduction <add>, %31, %cst_68 [0] : vector<128x8xf32> to vector<8xf32>
    %33 = vector.shape_cast %32 : vector<8xf32> to vector<1x8xf32>
    %cst_69 = arith.constant 1.280000e+02 : f32
    %34 = vector.broadcast %cst_69 : f32 to vector<1x8xf32>
    %35 = arith.divf %33, %34 : vector<1x8xf32>
    %36 = vector.broadcast %35 : vector<1x8xf32> to vector<128x8xf32>
    %37 = arith.subf %31, %36 : vector<128x8xf32>
    %38 = arith.mulf %37, %37 : vector<128x8xf32>
    %cst_70 = arith.constant dense<0.000000e+00> : vector<8xf32>
    %39 = vector.multi_reduction <add>, %38, %cst_70 [0] : vector<128x8xf32> to vector<8xf32>
    %40 = vector.shape_cast %39 : vector<8xf32> to vector<1x8xf32>
    %cst_71 = arith.constant 1.280000e+02 : f32
    %41 = vector.broadcast %cst_71 : f32 to vector<1x8xf32>
    %42 = arith.divf %40, %41 : vector<1x8xf32>
    %c0_72 = arith.constant 0 : index
    %c0_73 = arith.constant 0 : index
    %43 = vector.load %arg3[%c0_72, %c0_73] : memref<1x8xf32, #tpu.memory_space<vmem>>, vector<1x8xf32>
    %cst_74 = arith.constant 9.99999974E-6 : f32
    %44 = vector.broadcast %cst_74 : f32 to vector<1x8xf32>
    %45 = arith.addf %42, %44 : vector<1x8xf32>
    %46 = math.rsqrt %45 : vector<1x8xf32>
    %47 = arith.mulf %43, %46 : vector<1x8xf32>
    %c0_75 = arith.constant 0 : index
    %c0_76 = arith.constant 0 : index
    %48 = vector.load %arg4[%c0_75, %c0_76] : memref<1x8xf32, #tpu.memory_space<vmem>>, vector<1x8xf32>
    %49 = arith.mulf %35, %47 : vector<1x8xf32>
    %50 = arith.subf %48, %49 : vector<1x8xf32>
    %51 = vector.broadcast %47 : vector<1x8xf32> to vector<128x8xf32>
    %52 = arith.mulf %31, %51 : vector<128x8xf32>
    %53 = vector.broadcast %50 : vector<1x8xf32> to vector<128x8xf32>
    %54 = arith.addf %52, %53 : vector<128x8xf32>
    %cst_77 = arith.constant 0.000000e+00 : f32
    %55 = vector.broadcast %cst_77 : f32 to vector<128x8xf32>
    %56 = arith.maximumf %54, %55 : vector<128x8xf32>
    %57 = vector.shape_cast %56 : vector<128x8xf32> to vector<2x8x8x8xf32>
    %58 = arith.truncf %57 : vector<2x8x8x8xf32> to vector<2x8x8x8xbf16>
    %c0_78 = arith.constant 0 : index
    %c1_79 = arith.constant 1 : index
    %c1_80 = arith.constant 1 : index
    %c0_81 = arith.constant 0 : index
    %59 = vector.load %arg13[%c0_78, %c1_79, %c1_80, %c0_81] : memref<2x10x10x8xbf16, #tpu.memory_space<vmem>>, vector<2x8x8x8xbf16>
    tpu.vector_store %arg13[%c0_78, %c1_79, %c1_80, %c0_81], %58 {strides = array<i32>} : memref<2x10x10x8xbf16, #tpu.memory_space<vmem>>, vector<2x8x8x8xbf16>,
    %cst_82 = arith.constant 0.000000e+00 : bf16
    %60 = vector.broadcast %cst_82 : bf16 to vector<2x1x10x8xbf16>
    %c0_83 = arith.constant 0 : index
    %c0_84 = arith.constant 0 : index
    %c0_85 = arith.constant 0 : index
    %c0_86 = arith.constant 0 : index
    %61 = vector.load %arg13[%c0_83, %c0_84, %c0_85, %c0_86] : memref<2x10x10x8xbf16, #tpu.memory_space<vmem>>, vector<2x1x10x8xbf16>
    tpu.vector_store %arg13[%c0_83, %c0_84, %c0_85, %c0_86], %60 {strides = array<i32>} : memref<2x10x10x8xbf16, #tpu.memory_space<vmem>>, vector<2x1x10x8xbf16>,
    %cst_87 = arith.constant 0.000000e+00 : bf16
    %62 = vector.broadcast %cst_87 : bf16 to vector<2x1x10x8xbf16>
    %c0_88 = arith.constant 0 : index
    %c9 = arith.constant 9 : index
    %c0_89 = arith.constant 0 : index
    %c0_90 = arith.constant 0 : index
    %63 = vector.load %arg13[%c0_88, %c9, %c0_89, %c0_90] : memref<2x10x10x8xbf16, #tpu.memory_space<vmem>>, vector<2x1x10x8xbf16>
    tpu.vector_store %arg13[%c0_88, %c9, %c0_89, %c0_90], %62 {strides = array<i32>} : memref<2x10x10x8xbf16, #tpu.memory_space<vmem>>, vector<2x1x10x8xbf16>,
    %cst_91 = arith.constant 0.000000e+00 : bf16
    %64 = vector.broadcast %cst_91 : bf16 to vector<2x8x1x8xbf16>
    %c0_92 = arith.constant 0 : index
    %c1_93 = arith.constant 1 : index
    %c0_94 = arith.constant 0 : index
    %c0_95 = arith.constant 0 : index
    %65 = vector.load %arg13[%c0_92, %c1_93, %c0_94, %c0_95] : memref<2x10x10x8xbf16, #tpu.memory_space<vmem>>, vector<2x8x1x8xbf16>
    tpu.vector_store %arg13[%c0_92, %c1_93, %c0_94, %c0_95], %64 {strides = array<i32>} : memref<2x10x10x8xbf16, #tpu.memory_space<vmem>>, vector<2x8x1x8xbf16>,
    %cst_96 = arith.constant 0.000000e+00 : bf16
    %66 = vector.broadcast %cst_96 : bf16 to vector<2x8x1x8xbf16>
    %c0_97 = arith.constant 0 : index
    %c1_98 = arith.constant 1 : index
    %c9_99 = arith.constant 9 : index
    %c0_100 = arith.constant 0 : index
    %67 = vector.load %arg13[%c0_97, %c1_98, %c9_99, %c0_100] : memref<2x10x10x8xbf16, #tpu.memory_space<vmem>>, vector<2x8x1x8xbf16>
    tpu.vector_store %arg13[%c0_97, %c1_98, %c9_99, %c0_100], %66 {strides = array<i32>} : memref<2x10x10x8xbf16, #tpu.memory_space<vmem>>, vector<2x8x1x8xbf16>,
    %c0_101 = arith.constant 0 : index
    %c0_102 = arith.constant 0 : index
    %c0_103 = arith.constant 0 : index
    %c0_104 = arith.constant 0 : index
    %68 = vector.load %arg13[%c0_101, %c0_102, %c0_103, %c0_104] : memref<2x10x10x8xbf16, #tpu.memory_space<vmem>>, vector<2x8x8x8xbf16>
    %c0_105 = arith.constant 0 : index
    %c0_106 = arith.constant 0 : index
    %c1_107 = arith.constant 1 : index
    %c0_108 = arith.constant 0 : index
    %69 = vector.load %arg13[%c0_105, %c0_106, %c1_107, %c0_108] : memref<2x10x10x8xbf16, #tpu.memory_space<vmem>>, vector<2x8x8x8xbf16>
    %c0_109 = arith.constant 0 : index
    %c0_110 = arith.constant 0 : index
    %c2 = arith.constant 2 : index
    %c0_111 = arith.constant 0 : index
    %70 = vector.load %arg13[%c0_109, %c0_110, %c2, %c0_111] : memref<2x10x10x8xbf16, #tpu.memory_space<vmem>>, vector<2x8x8x8xbf16>
    %c0_112 = arith.constant 0 : index
    %c1_113 = arith.constant 1 : index
    %c0_114 = arith.constant 0 : index
    %c0_115 = arith.constant 0 : index
    %71 = vector.load %arg13[%c0_112, %c1_113, %c0_114, %c0_115] : memref<2x10x10x8xbf16, #tpu.memory_space<vmem>>, vector<2x8x8x8xbf16>
    %c0_116 = arith.constant 0 : index
    %c1_117 = arith.constant 1 : index
    %c1_118 = arith.constant 1 : index
    %c0_119 = arith.constant 0 : index
    %72 = vector.load %arg13[%c0_116, %c1_117, %c1_118, %c0_119] : memref<2x10x10x8xbf16, #tpu.memory_space<vmem>>, vector<2x8x8x8xbf16>
    %c0_120 = arith.constant 0 : index
    %c1_121 = arith.constant 1 : index
    %c2_122 = arith.constant 2 : index
    %c0_123 = arith.constant 0 : index
    %73 = vector.load %arg13[%c0_120, %c1_121, %c2_122, %c0_123] : memref<2x10x10x8xbf16, #tpu.memory_space<vmem>>, vector<2x8x8x8xbf16>
    %c0_124 = arith.constant 0 : index
    %c2_125 = arith.constant 2 : index
    %c0_126 = arith.constant 0 : index
    %c0_127 = arith.constant 0 : index
    %74 = vector.load %arg13[%c0_124, %c2_125, %c0_126, %c0_127] : memref<2x10x10x8xbf16, #tpu.memory_space<vmem>>, vector<2x8x8x8xbf16>
    %c0_128 = arith.constant 0 : index
    %c2_129 = arith.constant 2 : index
    %c1_130 = arith.constant 1 : index
    %c0_131 = arith.constant 0 : index
    %75 = vector.load %arg13[%c0_128, %c2_129, %c1_130, %c0_131] : memref<2x10x10x8xbf16, #tpu.memory_space<vmem>>, vector<2x8x8x8xbf16>
    %c0_132 = arith.constant 0 : index
    %c2_133 = arith.constant 2 : index
    %c2_134 = arith.constant 2 : index
    %c0_135 = arith.constant 0 : index
    %76 = vector.load %arg13[%c0_132, %c2_133, %c2_134, %c0_135] : memref<2x10x10x8xbf16, #tpu.memory_space<vmem>>, vector<2x8x8x8xbf16>
    %c0_136 = arith.constant 0 : index
    %c0_137 = arith.constant 0 : index
    %77 = vector.load %arg5[%c0_136, %c0_137] : memref<72x8xbf16, #tpu.memory_space<vmem>>, vector<72x8xbf16>
    %c0_138 = arith.constant 0 : index
    %c0_139 = arith.constant 0 : index
    %78 = vector.load %arg6[%c0_138, %c0_139] : memref<1x8xf32, #tpu.memory_space<vmem>>, vector<1x8xf32>
    %79 = tpu.concatenate %68, %69, %70, %71, %72, %73, %74, %75, %76 in 3 : vector<2x8x8x8xbf16>, vector<2x8x8x8xbf16>, vector<2x8x8x8xbf16>, vector<2x8x8x8xbf16>, vector<2x8x8x8xbf16>, vector<2x8x8x8xbf16>, vector<2x8x8x8xbf16>, vector<2x8x8x8xbf16>, vector<2x8x8x8xbf16> -> vector<2x8x8x72xbf16>
    %80 = vector.shape_cast %79 : vector<2x8x8x72xbf16> to vector<128x72xbf16>
    %cst_140 = arith.constant dense<0.000000e+00> : vector<128x8xf32>
    %81 = tpu.matmul %80, %77, %cst_140 {dimension_numbers = #tpu.dot_dimension_numbers<[1], [0], [0], [1], [0, 0, 1, 1], [], []>} : vector<128x72xbf16>, vector<72x8xbf16>, vector<128x8xf32> -> vector<128x8xf32>
    %82 = vector.broadcast %78 : vector<1x8xf32> to vector<128x8xf32>
    %83 = arith.addf %81, %82 : vector<128x8xf32>
    %cst_141 = arith.constant dense<0.000000e+00> : vector<8xf32>
    %84 = vector.multi_reduction <add>, %83, %cst_141 [0] : vector<128x8xf32> to vector<8xf32>
    %85 = vector.shape_cast %84 : vector<8xf32> to vector<1x8xf32>
    %cst_142 = arith.constant 1.280000e+02 : f32
    %86 = vector.broadcast %cst_142 : f32 to vector<1x8xf32>
    %87 = arith.divf %85, %86 : vector<1x8xf32>
    %88 = vector.broadcast %87 : vector<1x8xf32> to vector<128x8xf32>
    %89 = arith.subf %83, %88 : vector<128x8xf32>
    %90 = arith.mulf %89, %89 : vector<128x8xf32>
    %cst_143 = arith.constant dense<0.000000e+00> : vector<8xf32>
    %91 = vector.multi_reduction <add>, %90, %cst_143 [0] : vector<128x8xf32> to vector<8xf32>
    %92 = vector.shape_cast %91 : vector<8xf32> to vector<1x8xf32>
    %cst_144 = arith.constant 1.280000e+02 : f32
    %93 = vector.broadcast %cst_144 : f32 to vector<1x8xf32>
    %94 = arith.divf %92, %93 : vector<1x8xf32>
    %c0_145 = arith.constant 0 : index
    %c0_146 = arith.constant 0 : index
    %95 = vector.load %arg7[%c0_145, %c0_146] : memref<1x8xf32, #tpu.memory_space<vmem>>, vector<1x8xf32>
    %cst_147 = arith.constant 9.99999974E-6 : f32
    %96 = vector.broadcast %cst_147 : f32 to vector<1x8xf32>
    %97 = arith.addf %94, %96 : vector<1x8xf32>
    %98 = math.rsqrt %97 : vector<1x8xf32>
    %99 = arith.mulf %95, %98 : vector<1x8xf32>
    %c0_148 = arith.constant 0 : index
    %c0_149 = arith.constant 0 : index
    %100 = vector.load %arg8[%c0_148, %c0_149] : memref<1x8xf32, #tpu.memory_space<vmem>>, vector<1x8xf32>
    %101 = arith.mulf %87, %99 : vector<1x8xf32>
    %102 = arith.subf %100, %101 : vector<1x8xf32>
    %103 = vector.broadcast %99 : vector<1x8xf32> to vector<128x8xf32>
    %104 = arith.mulf %83, %103 : vector<128x8xf32>
    %105 = vector.broadcast %102 : vector<1x8xf32> to vector<128x8xf32>
    %106 = arith.addf %104, %105 : vector<128x8xf32>
    %107 = vector.shape_cast %16 : vector<2x8x8x4xbf16> to vector<128x4xbf16>
    %c0_150 = arith.constant 0 : index
    %c0_151 = arith.constant 0 : index
    %108 = vector.load %arg9[%c0_150, %c0_151] : memref<4x8xbf16, #tpu.memory_space<vmem>>, vector<4x8xbf16>
    %cst_152 = arith.constant dense<0.000000e+00> : vector<128x8xf32>
    %109 = tpu.matmul %107, %108, %cst_152 {dimension_numbers = #tpu.dot_dimension_numbers<[1], [0], [0], [1], [0, 0, 1, 1], [], []>} : vector<128x4xbf16>, vector<4x8xbf16>, vector<128x8xf32> -> vector<128x8xf32>
    %c0_153 = arith.constant 0 : index
    %c0_154 = arith.constant 0 : index
    %110 = vector.load %arg10[%c0_153, %c0_154] : memref<1x8xf32, #tpu.memory_space<vmem>>, vector<1x8xf32>
    %111 = vector.broadcast %110 : vector<1x8xf32> to vector<128x8xf32>
    %112 = arith.addf %109, %111 : vector<128x8xf32>
    %113 = arith.addf %106, %112 : vector<128x8xf32>
    %cst_155 = arith.constant 0.000000e+00 : f32
    %114 = vector.broadcast %cst_155 : f32 to vector<128x8xf32>
    %115 = arith.maximumf %113, %114 : vector<128x8xf32>
    %116 = vector.shape_cast %115 : vector<128x8xf32> to vector<2x8x8x8xf32>
    %c0_156 = arith.constant 0 : index
    %c0_157 = arith.constant 0 : index
    %c0_158 = arith.constant 0 : index
    %c0_159 = arith.constant 0 : index
    %117 = vector.load %arg11[%c0_156, %c0_157, %c0_158, %c0_159] : memref<2x8x8x8xf32, #tpu.memory_space<vmem>>, vector<2x8x8x8xf32>
    tpu.vector_store %arg11[%c0_156, %c0_157, %c0_158, %c0_159], %116 {strides = array<i32>} : memref<2x8x8x8xf32, #tpu.memory_space<vmem>>, vector<2x8x8x8xf32>,
    return
  }
}

module attributes {stable_mosaic.version = 11 : i64} {
  func.func @_fused_residual_kernel(%arg0: memref<2x8x8x8xf32, #tpu.memory_space<vmem>>, %arg1: memref<72x8xbf16, #tpu.memory_space<vmem>>, %arg2: memref<1x8xf32, #tpu.memory_space<vmem>>, %arg3: memref<1x8xf32, #tpu.memory_space<vmem>>, %arg4: memref<1x8xf32, #tpu.memory_space<vmem>>, %arg5: memref<72x8xbf16, #tpu.memory_space<vmem>>, %arg6: memref<1x8xf32, #tpu.memory_space<vmem>>, %arg7: memref<1x8xf32, #tpu.memory_space<vmem>>, %arg8: memref<1x8xf32, #tpu.memory_space<vmem>>, %arg9: memref<2x8x8x8xf32, #tpu.memory_space<vmem>>, %arg10: memref<2x10x10x8xbf16, #tpu.memory_space<vmem>>, %arg11: memref<2x10x10x8xbf16, #tpu.memory_space<vmem>>) attributes {dimension_semantics = [], scalar_prefetch = 0 : i64, scratch_operands = 2 : i64, tpu.core_type = #tpu.core_type<tc>} {
    %c0 = arith.constant 0 : index
    %c0_0 = arith.constant 0 : index
    %c0_1 = arith.constant 0 : index
    %c0_2 = arith.constant 0 : index
    %0 = vector.load %arg0[%c0, %c0_0, %c0_1, %c0_2] : memref<2x8x8x8xf32, #tpu.memory_space<vmem>>, vector<2x8x8x8xf32>
    %1 = arith.truncf %0 : vector<2x8x8x8xf32> to vector<2x8x8x8xbf16>
    %c0_3 = arith.constant 0 : index
    %c1 = arith.constant 1 : index
    %c1_4 = arith.constant 1 : index
    %c0_5 = arith.constant 0 : index
    %2 = vector.load %arg10[%c0_3, %c1, %c1_4, %c0_5] : memref<2x10x10x8xbf16, #tpu.memory_space<vmem>>, vector<2x8x8x8xbf16>
    tpu.vector_store %arg10[%c0_3, %c1, %c1_4, %c0_5], %1 {strides = array<i32>} : memref<2x10x10x8xbf16, #tpu.memory_space<vmem>>, vector<2x8x8x8xbf16>,
    %cst = arith.constant 0.000000e+00 : bf16
    %3 = vector.broadcast %cst : bf16 to vector<2x1x10x8xbf16>
    %c0_6 = arith.constant 0 : index
    %c0_7 = arith.constant 0 : index
    %c0_8 = arith.constant 0 : index
    %c0_9 = arith.constant 0 : index
    %4 = vector.load %arg10[%c0_6, %c0_7, %c0_8, %c0_9] : memref<2x10x10x8xbf16, #tpu.memory_space<vmem>>, vector<2x1x10x8xbf16>
    tpu.vector_store %arg10[%c0_6, %c0_7, %c0_8, %c0_9], %3 {strides = array<i32>} : memref<2x10x10x8xbf16, #tpu.memory_space<vmem>>, vector<2x1x10x8xbf16>,
    %cst_10 = arith.constant 0.000000e+00 : bf16
    %5 = vector.broadcast %cst_10 : bf16 to vector<2x1x10x8xbf16>
    %c0_11 = arith.constant 0 : index
    %c9 = arith.constant 9 : index
    %c0_12 = arith.constant 0 : index
    %c0_13 = arith.constant 0 : index
    %6 = vector.load %arg10[%c0_11, %c9, %c0_12, %c0_13] : memref<2x10x10x8xbf16, #tpu.memory_space<vmem>>, vector<2x1x10x8xbf16>
    tpu.vector_store %arg10[%c0_11, %c9, %c0_12, %c0_13], %5 {strides = array<i32>} : memref<2x10x10x8xbf16, #tpu.memory_space<vmem>>, vector<2x1x10x8xbf16>,
    %cst_14 = arith.constant 0.000000e+00 : bf16
    %7 = vector.broadcast %cst_14 : bf16 to vector<2x8x1x8xbf16>
    %c0_15 = arith.constant 0 : index
    %c1_16 = arith.constant 1 : index
    %c0_17 = arith.constant 0 : index
    %c0_18 = arith.constant 0 : index
    %8 = vector.load %arg10[%c0_15, %c1_16, %c0_17, %c0_18] : memref<2x10x10x8xbf16, #tpu.memory_space<vmem>>, vector<2x8x1x8xbf16>
    tpu.vector_store %arg10[%c0_15, %c1_16, %c0_17, %c0_18], %7 {strides = array<i32>} : memref<2x10x10x8xbf16, #tpu.memory_space<vmem>>, vector<2x8x1x8xbf16>,
    %cst_19 = arith.constant 0.000000e+00 : bf16
    %9 = vector.broadcast %cst_19 : bf16 to vector<2x8x1x8xbf16>
    %c0_20 = arith.constant 0 : index
    %c1_21 = arith.constant 1 : index
    %c9_22 = arith.constant 9 : index
    %c0_23 = arith.constant 0 : index
    %10 = vector.load %arg10[%c0_20, %c1_21, %c9_22, %c0_23] : memref<2x10x10x8xbf16, #tpu.memory_space<vmem>>, vector<2x8x1x8xbf16>
    tpu.vector_store %arg10[%c0_20, %c1_21, %c9_22, %c0_23], %9 {strides = array<i32>} : memref<2x10x10x8xbf16, #tpu.memory_space<vmem>>, vector<2x8x1x8xbf16>,
    %c0_24 = arith.constant 0 : index
    %c0_25 = arith.constant 0 : index
    %c0_26 = arith.constant 0 : index
    %c0_27 = arith.constant 0 : index
    %11 = vector.load %arg10[%c0_24, %c0_25, %c0_26, %c0_27] : memref<2x10x10x8xbf16, #tpu.memory_space<vmem>>, vector<2x8x8x8xbf16>
    %c0_28 = arith.constant 0 : index
    %c0_29 = arith.constant 0 : index
    %c1_30 = arith.constant 1 : index
    %c0_31 = arith.constant 0 : index
    %12 = vector.load %arg10[%c0_28, %c0_29, %c1_30, %c0_31] : memref<2x10x10x8xbf16, #tpu.memory_space<vmem>>, vector<2x8x8x8xbf16>
    %c0_32 = arith.constant 0 : index
    %c0_33 = arith.constant 0 : index
    %c2 = arith.constant 2 : index
    %c0_34 = arith.constant 0 : index
    %13 = vector.load %arg10[%c0_32, %c0_33, %c2, %c0_34] : memref<2x10x10x8xbf16, #tpu.memory_space<vmem>>, vector<2x8x8x8xbf16>
    %c0_35 = arith.constant 0 : index
    %c1_36 = arith.constant 1 : index
    %c0_37 = arith.constant 0 : index
    %c0_38 = arith.constant 0 : index
    %14 = vector.load %arg10[%c0_35, %c1_36, %c0_37, %c0_38] : memref<2x10x10x8xbf16, #tpu.memory_space<vmem>>, vector<2x8x8x8xbf16>
    %c0_39 = arith.constant 0 : index
    %c1_40 = arith.constant 1 : index
    %c1_41 = arith.constant 1 : index
    %c0_42 = arith.constant 0 : index
    %15 = vector.load %arg10[%c0_39, %c1_40, %c1_41, %c0_42] : memref<2x10x10x8xbf16, #tpu.memory_space<vmem>>, vector<2x8x8x8xbf16>
    %c0_43 = arith.constant 0 : index
    %c1_44 = arith.constant 1 : index
    %c2_45 = arith.constant 2 : index
    %c0_46 = arith.constant 0 : index
    %16 = vector.load %arg10[%c0_43, %c1_44, %c2_45, %c0_46] : memref<2x10x10x8xbf16, #tpu.memory_space<vmem>>, vector<2x8x8x8xbf16>
    %c0_47 = arith.constant 0 : index
    %c2_48 = arith.constant 2 : index
    %c0_49 = arith.constant 0 : index
    %c0_50 = arith.constant 0 : index
    %17 = vector.load %arg10[%c0_47, %c2_48, %c0_49, %c0_50] : memref<2x10x10x8xbf16, #tpu.memory_space<vmem>>, vector<2x8x8x8xbf16>
    %c0_51 = arith.constant 0 : index
    %c2_52 = arith.constant 2 : index
    %c1_53 = arith.constant 1 : index
    %c0_54 = arith.constant 0 : index
    %18 = vector.load %arg10[%c0_51, %c2_52, %c1_53, %c0_54] : memref<2x10x10x8xbf16, #tpu.memory_space<vmem>>, vector<2x8x8x8xbf16>
    %c0_55 = arith.constant 0 : index
    %c2_56 = arith.constant 2 : index
    %c2_57 = arith.constant 2 : index
    %c0_58 = arith.constant 0 : index
    %19 = vector.load %arg10[%c0_55, %c2_56, %c2_57, %c0_58] : memref<2x10x10x8xbf16, #tpu.memory_space<vmem>>, vector<2x8x8x8xbf16>
    %c0_59 = arith.constant 0 : index
    %c0_60 = arith.constant 0 : index
    %20 = vector.load %arg1[%c0_59, %c0_60] : memref<72x8xbf16, #tpu.memory_space<vmem>>, vector<72x8xbf16>
    %c0_61 = arith.constant 0 : index
    %c0_62 = arith.constant 0 : index
    %21 = vector.load %arg2[%c0_61, %c0_62] : memref<1x8xf32, #tpu.memory_space<vmem>>, vector<1x8xf32>
    %22 = tpu.concatenate %11, %12, %13, %14, %15, %16, %17, %18, %19 in 3 : vector<2x8x8x8xbf16>, vector<2x8x8x8xbf16>, vector<2x8x8x8xbf16>, vector<2x8x8x8xbf16>, vector<2x8x8x8xbf16>, vector<2x8x8x8xbf16>, vector<2x8x8x8xbf16>, vector<2x8x8x8xbf16>, vector<2x8x8x8xbf16> -> vector<2x8x8x72xbf16>
    %23 = vector.shape_cast %22 : vector<2x8x8x72xbf16> to vector<128x72xbf16>
    %cst_63 = arith.constant dense<0.000000e+00> : vector<128x8xf32>
    %24 = tpu.matmul %23, %20, %cst_63 {dimension_numbers = #tpu.dot_dimension_numbers<[1], [0], [0], [1], [0, 0, 1, 1], [], []>} : vector<128x72xbf16>, vector<72x8xbf16>, vector<128x8xf32> -> vector<128x8xf32>
    %25 = vector.broadcast %21 : vector<1x8xf32> to vector<128x8xf32>
    %26 = arith.addf %24, %25 : vector<128x8xf32>
    %cst_64 = arith.constant dense<0.000000e+00> : vector<8xf32>
    %27 = vector.multi_reduction <add>, %26, %cst_64 [0] : vector<128x8xf32> to vector<8xf32>
    %28 = vector.shape_cast %27 : vector<8xf32> to vector<1x8xf32>
    %cst_65 = arith.constant 1.280000e+02 : f32
    %29 = vector.broadcast %cst_65 : f32 to vector<1x8xf32>
    %30 = arith.divf %28, %29 : vector<1x8xf32>
    %31 = vector.broadcast %30 : vector<1x8xf32> to vector<128x8xf32>
    %32 = arith.subf %26, %31 : vector<128x8xf32>
    %33 = arith.mulf %32, %32 : vector<128x8xf32>
    %cst_66 = arith.constant dense<0.000000e+00> : vector<8xf32>
    %34 = vector.multi_reduction <add>, %33, %cst_66 [0] : vector<128x8xf32> to vector<8xf32>
    %35 = vector.shape_cast %34 : vector<8xf32> to vector<1x8xf32>
    %cst_67 = arith.constant 1.280000e+02 : f32
    %36 = vector.broadcast %cst_67 : f32 to vector<1x8xf32>
    %37 = arith.divf %35, %36 : vector<1x8xf32>
    %c0_68 = arith.constant 0 : index
    %c0_69 = arith.constant 0 : index
    %38 = vector.load %arg3[%c0_68, %c0_69] : memref<1x8xf32, #tpu.memory_space<vmem>>, vector<1x8xf32>
    %cst_70 = arith.constant 9.99999974E-6 : f32
    %39 = vector.broadcast %cst_70 : f32 to vector<1x8xf32>
    %40 = arith.addf %37, %39 : vector<1x8xf32>
    %41 = math.rsqrt %40 : vector<1x8xf32>
    %42 = arith.mulf %38, %41 : vector<1x8xf32>
    %c0_71 = arith.constant 0 : index
    %c0_72 = arith.constant 0 : index
    %43 = vector.load %arg4[%c0_71, %c0_72] : memref<1x8xf32, #tpu.memory_space<vmem>>, vector<1x8xf32>
    %44 = arith.mulf %30, %42 : vector<1x8xf32>
    %45 = arith.subf %43, %44 : vector<1x8xf32>
    %46 = vector.broadcast %42 : vector<1x8xf32> to vector<128x8xf32>
    %47 = arith.mulf %26, %46 : vector<128x8xf32>
    %48 = vector.broadcast %45 : vector<1x8xf32> to vector<128x8xf32>
    %49 = arith.addf %47, %48 : vector<128x8xf32>
    %cst_73 = arith.constant 0.000000e+00 : f32
    %50 = vector.broadcast %cst_73 : f32 to vector<128x8xf32>
    %51 = arith.maximumf %49, %50 : vector<128x8xf32>
    %52 = vector.shape_cast %51 : vector<128x8xf32> to vector<2x8x8x8xf32>
    %53 = arith.truncf %52 : vector<2x8x8x8xf32> to vector<2x8x8x8xbf16>
    %c0_74 = arith.constant 0 : index
    %c1_75 = arith.constant 1 : index
    %c1_76 = arith.constant 1 : index
    %c0_77 = arith.constant 0 : index
    %54 = vector.load %arg11[%c0_74, %c1_75, %c1_76, %c0_77] : memref<2x10x10x8xbf16, #tpu.memory_space<vmem>>, vector<2x8x8x8xbf16>
    tpu.vector_store %arg11[%c0_74, %c1_75, %c1_76, %c0_77], %53 {strides = array<i32>} : memref<2x10x10x8xbf16, #tpu.memory_space<vmem>>, vector<2x8x8x8xbf16>,
    %cst_78 = arith.constant 0.000000e+00 : bf16
    %55 = vector.broadcast %cst_78 : bf16 to vector<2x1x10x8xbf16>
    %c0_79 = arith.constant 0 : index
    %c0_80 = arith.constant 0 : index
    %c0_81 = arith.constant 0 : index
    %c0_82 = arith.constant 0 : index
    %56 = vector.load %arg11[%c0_79, %c0_80, %c0_81, %c0_82] : memref<2x10x10x8xbf16, #tpu.memory_space<vmem>>, vector<2x1x10x8xbf16>
    tpu.vector_store %arg11[%c0_79, %c0_80, %c0_81, %c0_82], %55 {strides = array<i32>} : memref<2x10x10x8xbf16, #tpu.memory_space<vmem>>, vector<2x1x10x8xbf16>,
    %cst_83 = arith.constant 0.000000e+00 : bf16
    %57 = vector.broadcast %cst_83 : bf16 to vector<2x1x10x8xbf16>
    %c0_84 = arith.constant 0 : index
    %c9_85 = arith.constant 9 : index
    %c0_86 = arith.constant 0 : index
    %c0_87 = arith.constant 0 : index
    %58 = vector.load %arg11[%c0_84, %c9_85, %c0_86, %c0_87] : memref<2x10x10x8xbf16, #tpu.memory_space<vmem>>, vector<2x1x10x8xbf16>
    tpu.vector_store %arg11[%c0_84, %c9_85, %c0_86, %c0_87], %57 {strides = array<i32>} : memref<2x10x10x8xbf16, #tpu.memory_space<vmem>>, vector<2x1x10x8xbf16>,
    %cst_88 = arith.constant 0.000000e+00 : bf16
    %59 = vector.broadcast %cst_88 : bf16 to vector<2x8x1x8xbf16>
    %c0_89 = arith.constant 0 : index
    %c1_90 = arith.constant 1 : index
    %c0_91 = arith.constant 0 : index
    %c0_92 = arith.constant 0 : index
    %60 = vector.load %arg11[%c0_89, %c1_90, %c0_91, %c0_92] : memref<2x10x10x8xbf16, #tpu.memory_space<vmem>>, vector<2x8x1x8xbf16>
    tpu.vector_store %arg11[%c0_89, %c1_90, %c0_91, %c0_92], %59 {strides = array<i32>} : memref<2x10x10x8xbf16, #tpu.memory_space<vmem>>, vector<2x8x1x8xbf16>,
    %cst_93 = arith.constant 0.000000e+00 : bf16
    %61 = vector.broadcast %cst_93 : bf16 to vector<2x8x1x8xbf16>
    %c0_94 = arith.constant 0 : index
    %c1_95 = arith.constant 1 : index
    %c9_96 = arith.constant 9 : index
    %c0_97 = arith.constant 0 : index
    %62 = vector.load %arg11[%c0_94, %c1_95, %c9_96, %c0_97] : memref<2x10x10x8xbf16, #tpu.memory_space<vmem>>, vector<2x8x1x8xbf16>
    tpu.vector_store %arg11[%c0_94, %c1_95, %c9_96, %c0_97], %61 {strides = array<i32>} : memref<2x10x10x8xbf16, #tpu.memory_space<vmem>>, vector<2x8x1x8xbf16>,
    %c0_98 = arith.constant 0 : index
    %c0_99 = arith.constant 0 : index
    %c0_100 = arith.constant 0 : index
    %c0_101 = arith.constant 0 : index
    %63 = vector.load %arg11[%c0_98, %c0_99, %c0_100, %c0_101] : memref<2x10x10x8xbf16, #tpu.memory_space<vmem>>, vector<2x8x8x8xbf16>
    %c0_102 = arith.constant 0 : index
    %c0_103 = arith.constant 0 : index
    %c1_104 = arith.constant 1 : index
    %c0_105 = arith.constant 0 : index
    %64 = vector.load %arg11[%c0_102, %c0_103, %c1_104, %c0_105] : memref<2x10x10x8xbf16, #tpu.memory_space<vmem>>, vector<2x8x8x8xbf16>
    %c0_106 = arith.constant 0 : index
    %c0_107 = arith.constant 0 : index
    %c2_108 = arith.constant 2 : index
    %c0_109 = arith.constant 0 : index
    %65 = vector.load %arg11[%c0_106, %c0_107, %c2_108, %c0_109] : memref<2x10x10x8xbf16, #tpu.memory_space<vmem>>, vector<2x8x8x8xbf16>
    %c0_110 = arith.constant 0 : index
    %c1_111 = arith.constant 1 : index
    %c0_112 = arith.constant 0 : index
    %c0_113 = arith.constant 0 : index
    %66 = vector.load %arg11[%c0_110, %c1_111, %c0_112, %c0_113] : memref<2x10x10x8xbf16, #tpu.memory_space<vmem>>, vector<2x8x8x8xbf16>
    %c0_114 = arith.constant 0 : index
    %c1_115 = arith.constant 1 : index
    %c1_116 = arith.constant 1 : index
    %c0_117 = arith.constant 0 : index
    %67 = vector.load %arg11[%c0_114, %c1_115, %c1_116, %c0_117] : memref<2x10x10x8xbf16, #tpu.memory_space<vmem>>, vector<2x8x8x8xbf16>
    %c0_118 = arith.constant 0 : index
    %c1_119 = arith.constant 1 : index
    %c2_120 = arith.constant 2 : index
    %c0_121 = arith.constant 0 : index
    %68 = vector.load %arg11[%c0_118, %c1_119, %c2_120, %c0_121] : memref<2x10x10x8xbf16, #tpu.memory_space<vmem>>, vector<2x8x8x8xbf16>
    %c0_122 = arith.constant 0 : index
    %c2_123 = arith.constant 2 : index
    %c0_124 = arith.constant 0 : index
    %c0_125 = arith.constant 0 : index
    %69 = vector.load %arg11[%c0_122, %c2_123, %c0_124, %c0_125] : memref<2x10x10x8xbf16, #tpu.memory_space<vmem>>, vector<2x8x8x8xbf16>
    %c0_126 = arith.constant 0 : index
    %c2_127 = arith.constant 2 : index
    %c1_128 = arith.constant 1 : index
    %c0_129 = arith.constant 0 : index
    %70 = vector.load %arg11[%c0_126, %c2_127, %c1_128, %c0_129] : memref<2x10x10x8xbf16, #tpu.memory_space<vmem>>, vector<2x8x8x8xbf16>
    %c0_130 = arith.constant 0 : index
    %c2_131 = arith.constant 2 : index
    %c2_132 = arith.constant 2 : index
    %c0_133 = arith.constant 0 : index
    %71 = vector.load %arg11[%c0_130, %c2_131, %c2_132, %c0_133] : memref<2x10x10x8xbf16, #tpu.memory_space<vmem>>, vector<2x8x8x8xbf16>
    %c0_134 = arith.constant 0 : index
    %c0_135 = arith.constant 0 : index
    %72 = vector.load %arg5[%c0_134, %c0_135] : memref<72x8xbf16, #tpu.memory_space<vmem>>, vector<72x8xbf16>
    %c0_136 = arith.constant 0 : index
    %c0_137 = arith.constant 0 : index
    %73 = vector.load %arg6[%c0_136, %c0_137] : memref<1x8xf32, #tpu.memory_space<vmem>>, vector<1x8xf32>
    %74 = tpu.concatenate %63, %64, %65, %66, %67, %68, %69, %70, %71 in 3 : vector<2x8x8x8xbf16>, vector<2x8x8x8xbf16>, vector<2x8x8x8xbf16>, vector<2x8x8x8xbf16>, vector<2x8x8x8xbf16>, vector<2x8x8x8xbf16>, vector<2x8x8x8xbf16>, vector<2x8x8x8xbf16>, vector<2x8x8x8xbf16> -> vector<2x8x8x72xbf16>
    %75 = vector.shape_cast %74 : vector<2x8x8x72xbf16> to vector<128x72xbf16>
    %cst_138 = arith.constant dense<0.000000e+00> : vector<128x8xf32>
    %76 = tpu.matmul %75, %72, %cst_138 {dimension_numbers = #tpu.dot_dimension_numbers<[1], [0], [0], [1], [0, 0, 1, 1], [], []>} : vector<128x72xbf16>, vector<72x8xbf16>, vector<128x8xf32> -> vector<128x8xf32>
    %77 = vector.broadcast %73 : vector<1x8xf32> to vector<128x8xf32>
    %78 = arith.addf %76, %77 : vector<128x8xf32>
    %cst_139 = arith.constant dense<0.000000e+00> : vector<8xf32>
    %79 = vector.multi_reduction <add>, %78, %cst_139 [0] : vector<128x8xf32> to vector<8xf32>
    %80 = vector.shape_cast %79 : vector<8xf32> to vector<1x8xf32>
    %cst_140 = arith.constant 1.280000e+02 : f32
    %81 = vector.broadcast %cst_140 : f32 to vector<1x8xf32>
    %82 = arith.divf %80, %81 : vector<1x8xf32>
    %83 = vector.broadcast %82 : vector<1x8xf32> to vector<128x8xf32>
    %84 = arith.subf %78, %83 : vector<128x8xf32>
    %85 = arith.mulf %84, %84 : vector<128x8xf32>
    %cst_141 = arith.constant dense<0.000000e+00> : vector<8xf32>
    %86 = vector.multi_reduction <add>, %85, %cst_141 [0] : vector<128x8xf32> to vector<8xf32>
    %87 = vector.shape_cast %86 : vector<8xf32> to vector<1x8xf32>
    %cst_142 = arith.constant 1.280000e+02 : f32
    %88 = vector.broadcast %cst_142 : f32 to vector<1x8xf32>
    %89 = arith.divf %87, %88 : vector<1x8xf32>
    %c0_143 = arith.constant 0 : index
    %c0_144 = arith.constant 0 : index
    %90 = vector.load %arg7[%c0_143, %c0_144] : memref<1x8xf32, #tpu.memory_space<vmem>>, vector<1x8xf32>
    %cst_145 = arith.constant 9.99999974E-6 : f32
    %91 = vector.broadcast %cst_145 : f32 to vector<1x8xf32>
    %92 = arith.addf %89, %91 : vector<1x8xf32>
    %93 = math.rsqrt %92 : vector<1x8xf32>
    %94 = arith.mulf %90, %93 : vector<1x8xf32>
    %c0_146 = arith.constant 0 : index
    %c0_147 = arith.constant 0 : index
    %95 = vector.load %arg8[%c0_146, %c0_147] : memref<1x8xf32, #tpu.memory_space<vmem>>, vector<1x8xf32>
    %96 = arith.mulf %82, %94 : vector<1x8xf32>
    %97 = arith.subf %95, %96 : vector<1x8xf32>
    %98 = vector.broadcast %94 : vector<1x8xf32> to vector<128x8xf32>
    %99 = arith.mulf %78, %98 : vector<128x8xf32>
    %100 = vector.broadcast %97 : vector<1x8xf32> to vector<128x8xf32>
    %101 = arith.addf %99, %100 : vector<128x8xf32>
    %c0_148 = arith.constant 0 : index
    %c0_149 = arith.constant 0 : index
    %c0_150 = arith.constant 0 : index
    %c0_151 = arith.constant 0 : index
    %102 = vector.load %arg0[%c0_148, %c0_149, %c0_150, %c0_151] : memref<2x8x8x8xf32, #tpu.memory_space<vmem>>, vector<2x8x8x8xf32>
    %103 = vector.shape_cast %102 : vector<2x8x8x8xf32> to vector<128x8xf32>
    %104 = arith.addf %101, %103 : vector<128x8xf32>
    %cst_152 = arith.constant 0.000000e+00 : f32
    %105 = vector.broadcast %cst_152 : f32 to vector<128x8xf32>
    %106 = arith.maximumf %104, %105 : vector<128x8xf32>
    %107 = vector.shape_cast %106 : vector<128x8xf32> to vector<2x8x8x8xf32>
    %c0_153 = arith.constant 0 : index
    %c0_154 = arith.constant 0 : index
    %c0_155 = arith.constant 0 : index
    %c0_156 = arith.constant 0 : index
    %108 = vector.load %arg9[%c0_153, %c0_154, %c0_155, %c0_156] : memref<2x8x8x8xf32, #tpu.memory_space<vmem>>, vector<2x8x8x8xf32>
    tpu.vector_store %arg9[%c0_153, %c0_154, %c0_155, %c0_156], %107 {strides = array<i32>} : memref<2x8x8x8xf32, #tpu.memory_space<vmem>>, vector<2x8x8x8xf32>,
    return
  }
}

</mosaic_0001>

<llo_original>
// kernel: _forward.3
$region0: #{_forward.3}
  #allocation0 [shape = 'u32[]', space=smem, size = 0x4, offset = 0x4, fixed_abs, tag = 'smem constant byte address 0x4 - core index']
  #allocation1 [shape = 'u32[144,128]{1,0:T(1,128)}', space=vmem, size = 0x12000, scoped, tag = 'internal scratch']
  #allocation2 [shape = 'bf16[2,10,10,8]{3,2,1,0:T(8,128)(2,1)}', space=vmem, size = 0x14000, scoped, tag = 'scratch operand']
  #allocation3 [shape = 'bf16[2,10,10,8]{3,2,1,0:T(8,128)(2,1)}', space=vmem, size = 0x14000, scoped, tag = 'scratch operand']
  %s0 = inlined_call_operand.vmem [shape: f32[2,8,8,8], index: 0, kind: input, shape index: {}]
  %s1 = inlined_call_operand.vmem [shape: bf16[72,8], index: 1, kind: input, shape index: {}]
  %s2 = inlined_call_operand.vmem [shape: f32[1,8], index: 2, kind: input, shape index: {}]
  %s3 = inlined_call_operand.vmem [shape: f32[1,8], index: 3, kind: input, shape index: {}]
  %s4 = inlined_call_operand.vmem [shape: f32[1,8], index: 4, kind: input, shape index: {}]
  %s5 = inlined_call_operand.vmem [shape: bf16[72,8], index: 5, kind: input, shape index: {}]
  %s6 = inlined_call_operand.vmem [shape: f32[1,8], index: 6, kind: input, shape index: {}]
  %s7 = inlined_call_operand.vmem [shape: f32[1,8], index: 7, kind: input, shape index: {}]
  %s8 = inlined_call_operand.vmem [shape: f32[1,8], index: 8, kind: input, shape index: {}]
  %s9 = inlined_call_operand.vmem [shape: f32[2,8,8,8], index: 9, kind: output, shape index: {}]
  %s10 = sld [smem:[#allocation0]]
  $region46: #{_forward.3} parent=0
    _
  %s12 = ssub.s32 1, %s10
  %s13 = scalar_select 0, %s12, %s10
  // Predicated region
  $region2: #{_forward.3} parent=0 // pred_check
    _
  $region3: #{_forward.3} parent=0 // pred_check_branch
    %15 = sbr.rel (0) target = $region5
  $region4: #{_forward.3} parent=0 // pred_region
    _
  $region5: #{_forward.3} parent=0 // pred_fallthru
    _
  // Predicated region
  $region6: #{_forward.3} parent=0 // pred_check
    _
  $region7: #{_forward.3} parent=0 // pred_check_branch
    %17 = sbr.rel (0) target = $region9
  $region8: #{_forward.3} parent=0 // pred_region
    _
  $region9: #{_forward.3} parent=0 // pred_fallthru
    _
  // Predicated region
  $region10: #{_forward.3} parent=0 // pred_check
    _
  $region11: #{_forward.3} parent=0 // pred_check_branch
    %19 = sbr.rel (0) target = $region13
  $region12: #{_forward.3} parent=0 // pred_region
    _
  $region13: #{_forward.3} parent=0 // pred_fallthru
    _
  // Predicated region
  $region14: #{_forward.3} parent=0 // pred_check
    _
  $region15: #{_forward.3} parent=0 // pred_check_branch
    %21 = sbr.rel (0) target = $region17
  $region16: #{_forward.3} parent=0 // pred_region
    _
  $region17: #{_forward.3} parent=0 // pred_fallthru
    _
  // Predicated region
  $region18: #{_forward.3} parent=0 // pred_check
    _
  $region19: #{_forward.3} parent=0 // pred_check_branch
    %23 = sbr.rel (0) target = $region21
  $region20: #{_forward.3} parent=0 // pred_region
    _
  $region21: #{_forward.3} parent=0 // pred_fallthru
    _
  // Predicated region
  $region22: #{_forward.3} parent=0 // pred_check
    _
  $region23: #{_forward.3} parent=0 // pred_check_branch
    %25 = sbr.rel (0) target = $region25
  $region24: #{_forward.3} parent=0 // pred_region
    _
  $region25: #{_forward.3} parent=0 // pred_fallthru
    _
  // Predicated region
  $region26: #{_forward.3} parent=0 // pred_check
    _
  $region27: #{_forward.3} parent=0 // pred_check_branch
    %27 = sbr.rel (0) target = $region29
  $region28: #{_forward.3} parent=0 // pred_region
    _
  $region29: #{_forward.3} parent=0 // pred_fallthru
    _
  // Predicated region
  $region30: #{_forward.3} parent=0 // pred_check
    _
  $region31: #{_forward.3} parent=0 // pred_check_branch
    %29 = sbr.rel (0) target = $region33
  $region32: #{_forward.3} parent=0 // pred_region
    _
  $region33: #{_forward.3} parent=0 // pred_fallthru
    _
  // Predicated region
  $region34: #{_forward.3} parent=0 // pred_check
    _
  $region35: #{_forward.3} parent=0 // pred_check_branch
    %31 = sbr.rel (0) target = $region37
  $region36: #{_forward.3} parent=0 // pred_region
    _
  $region37: #{_forward.3} parent=0 // pred_fallthru
    _
  %v33 = vld [vmem:[%s0] sm:$0xff]
  %v34 = vld [vmem:[%s0 + $0x8] sm:$0xff]
  %v35 = vld [vmem:[%s0 + $0x10] sm:$0xff]
  %v36 = vld [vmem:[%s0 + $0x18] sm:$0xff]
  %v37 = vld [vmem:[%s0 + $0x20] sm:$0xff]
  %v38 = vld [vmem:[%s0 + $0x28] sm:$0xff]
  %v39 = vld [vmem:[%s0 + $0x30] sm:$0xff]
  %v40 = vld [vmem:[%s0 + $0x38] sm:$0xff]
  %v41 = vld [vmem:[%s0 + $0x40] sm:$0xff]
  %v42 = vld [vmem:[%s0 + $0x48] sm:$0xff]
  %v43 = vld [vmem:[%s0 + $0x50] sm:$0xff]
  %v44 = vld [vmem:[%s0 + $0x58] sm:$0xff]
  %v45 = vld [vmem:[%s0 + $0x60] sm:$0xff]
  %v46 = vld [vmem:[%s0 + $0x68] sm:$0xff]
  %v47 = vld [vmem:[%s0 + $0x70] sm:$0xff]
  %v48 = vld [vmem:[%s0 + $0x78] sm:$0xff]
  %v49 = vpack.c.bf16 %v33, %v33
  %v50 = vpack.c.bf16 %v34, %v34
  %v51 = vpack.c.bf16 %v35, %v35
  %v52 = vpack.c.bf16 %v36, %v36
  %v53 = vpack.c.bf16 %v37, %v37
  %v54 = vpack.c.bf16 %v38, %v38
  %v55 = vpack.c.bf16 %v39, %v39
  %v56 = vpack.c.bf16 %v40, %v40
  %v57 = vpack.c.bf16 %v41, %v41
  %v58 = vpack.c.bf16 %v42, %v42
  %v59 = vpack.c.bf16 %v43, %v43
  %v60 = vpack.c.bf16 %v44, %v44
  %v61 = vpack.c.bf16 %v45, %v45
  %v62 = vpack.c.bf16 %v46, %v46
  %v63 = vpack.c.bf16 %v47, %v47
  %v64 = vpack.c.bf16 %v48, %v48
  %v81 = vunpack.c.l.b16 %v49
  %v82 = vunpack.c.l.b16 %v50
  %v83 = vunpack.c.l.b16 %v51
  %v84 = vunpack.c.l.b16 %v52
  %v85 = vunpack.c.l.b16 %v53
  %v86 = vunpack.c.l.b16 %v54
  %v87 = vunpack.c.l.b16 %v55
  %v88 = vunpack.c.l.b16 %v56
  %v89 = vunpack.c.l.b16 %v57
  %v90 = vunpack.c.l.b16 %v58
  %v91 = vunpack.c.l.b16 %v59
  %v92 = vunpack.c.l.b16 %v60
  %v93 = vunpack.c.l.b16 %v61
  %v94 = vunpack.c.l.b16 %v62
  %v95 = vunpack.c.l.b16 %v63
  %v96 = vunpack.c.l.b16 %v64
  %v97 = vpack.c.b16 %v81, %v81
  %v98 = vpack.c.b16 %v82, %v82
  %v99 = vpack.c.b16 %v83, %v83
  %v100 = vpack.c.b16 %v84, %v84
  %v101 = vpack.c.b16 %v85, %v85
  %v102 = vpack.c.b16 %v86, %v86
  %v103 = vpack.c.b16 %v87, %v87
  %v104 = vpack.c.b16 %v88, %v88
  %v105 = vpack.c.b16 %v89, %v89
  %v106 = vpack.c.b16 %v90, %v90
  %v107 = vpack.c.b16 %v91, %v91
  %v108 = vpack.c.b16 %v92, %v92
  %v109 = vpack.c.b16 %v93, %v93
  %v110 = vpack.c.b16 %v94, %v94
  %v111 = vpack.c.b16 %v95, %v95
  %v112 = vpack.c.b16 %v96, %v96
  %v114 = vshrl.u32 %v97, 16
  %v116 = vrot.slane %v114, 7
  %v117 = vshll.u32 %v97, 16
  %v119 = vor.u32 %v116, %v117
  %v120 = vrot.slane %v116, 4
  %v122 = vshrl.u32 %v98, 16
  %v124 = vrot.slane %v122, 7
  %v125 = vshll.u32 %v98, 16
  %v127 = vor.u32 %v124, %v125
  %v128 = vrot.slane %v124, 4
  %v130 = vshrl.u32 %v99, 16
  %v132 = vrot.slane %v130, 7
  %v133 = vshll.u32 %v99, 16
  %v135 = vor.u32 %v132, %v133
  %v136 = vrot.slane %v132, 4
  %v138 = vshrl.u32 %v100, 16
  %v140 = vrot.slane %v138, 7
  %v141 = vshll.u32 %v100, 16
  %v143 = vor.u32 %v140, %v141
  %v144 = vrot.slane %v140, 4
  %v146 = vshrl.u32 %v101, 16
  %v148 = vrot.slane %v146, 7
  %v149 = vshll.u32 %v101, 16
  %v151 = vor.u32 %v148, %v149
  %v152 = vrot.slane %v148, 4
  %v154 = vshrl.u32 %v102, 16
  %v156 = vrot.slane %v154, 7
  %v157 = vshll.u32 %v102, 16
  %v159 = vor.u32 %v156, %v157
  %v160 = vrot.slane %v156, 4
  %v162 = vshrl.u32 %v103, 16
  %v164 = vrot.slane %v162, 7
  %v165 = vshll.u32 %v103, 16
  %v167 = vor.u32 %v164, %v165
  %v168 = vrot.slane %v164, 4
  %v170 = vshrl.u32 %v104, 16
  %v172 = vrot.slane %v170, 7
  %v173 = vshll.u32 %v104, 16
  %v175 = vor.u32 %v172, %v173
  %v176 = vrot.slane %v172, 4
  %v178 = vshrl.u32 %v105, 16
  %v180 = vrot.slane %v178, 7
  %v181 = vshll.u32 %v105, 16
  %v183 = vor.u32 %v180, %v181
  %v184 = vrot.slane %v180, 4
  %v186 = vshrl.u32 %v106, 16
  %v188 = vrot.slane %v186, 7
  %v189 = vshll.u32 %v106, 16
  %v191 = vor.u32 %v188, %v189
  %v192 = vrot.slane %v188, 4
  %v194 = vshrl.u32 %v107, 16
  %v196 = vrot.slane %v194, 7
  %v197 = vshll.u32 %v107, 16
  %v199 = vor.u32 %v196, %v197
  %v200 = vrot.slane %v196, 4
  %v202 = vshrl.u32 %v108, 16
  %v204 = vrot.slane %v202, 7
  %v205 = vshll.u32 %v108, 16
  %v207 = vor.u32 %v204, %v205
  %v208 = vrot.slane %v204, 4
  %v210 = vshrl.u32 %v109, 16
  %v212 = vrot.slane %v210, 7
  %v213 = vshll.u32 %v109, 16
  %v215 = vor.u32 %v212, %v213
  %v216 = vrot.slane %v212, 4
  %v218 = vshrl.u32 %v110, 16
  %v220 = vrot.slane %v218, 7
  %v221 = vshll.u32 %v110, 16
  %v223 = vor.u32 %v220, %v221
  %v224 = vrot.slane %v220, 4
  %v226 = vshrl.u32 %v111, 16
  %v228 = vrot.slane %v226, 7
  %v229 = vshll.u32 %v111, 16
  %v231 = vor.u32 %v228, %v229
  %v232 = vrot.slane %v228, 4
  %v234 = vshrl.u32 %v112, 16
  %v236 = vrot.slane %v234, 7
  %v237 = vshll.u32 %v112, 16
  %v239 = vor.u32 %v236, %v237
  %v240 = vrot.slane %v236, 4
  %s273 = scalar_lea.vmem [#allocation2], 8
  %vm274 = vcmask 60416
  %vm275 = vsmask.f32 7938
  %vm276 = vmand %vm274, %vm275
  %v277 = vld [vmem:[%s273] sm:$0xf]
  %v278 = vsel %vm276, %v119, %v277
  %279 = vst [vmem:[%s273] sm:$0xf] %v278
  %vm280 = vcmask 57344
  %vm281 = vsmask.f32 256
  %vm282 = vmand %vm280, %vm281
  %v283 = vld [vmem:[%s273 + $0x4] sm:$0x1]
  %v284 = vsel %vm282, %v120, %v283
  %285 = vst [vmem:[%s273 + $0x4] sm:$0x1] %v284
  %v286 = vld [vmem:[%s273 + $0x8] sm:$0xf]
  %v287 = vsel %vm276, %v127, %v286
  %288 = vst [vmem:[%s273 + $0x8] sm:$0xf] %v287
  %v289 = vld [vmem:[%s273 + $0xc] sm:$0x1]
  %v290 = vsel %vm282, %v128, %v289
  %291 = vst [vmem:[%s273 + $0xc] sm:$0x1] %v290
  %v292 = vld [vmem:[%s273 + $0x10] sm:$0xf]
  %v293 = vsel %vm276, %v135, %v292
  %294 = vst [vmem:[%s273 + $0x10] sm:$0xf] %v293
  %v295 = vld [vmem:[%s273 + $0x14] sm:$0x1]
  %v296 = vsel %vm282, %v136, %v295
  %297 = vst [vmem:[%s273 + $0x14] sm:$0x1] %v296
  %v298 = vld [vmem:[%s273 + $0x18] sm:$0xf]
  %v299 = vsel %vm276, %v143, %v298
  %300 = vst [vmem:[%s273 + $0x18] sm:$0xf] %v299
  %v301 = vld [vmem:[%s273 + $0x1c] sm:$0x1]
  %v302 = vsel %vm282, %v144, %v301
  %303 = vst [vmem:[%s273 + $0x1c] sm:$0x1] %v302
  %v304 = vld [vmem:[%s273 + $0x20] sm:$0xf]
  %v305 = vsel %vm276, %v151, %v304
  %306 = vst [vmem:[%s273 + $0x20] sm:$0xf] %v305
  %v307 = vld [vmem:[%s273 + $0x24] sm:$0x1]
  %v308 = vsel %vm282, %v152, %v307
  %309 = vst [vmem:[%s273 + $0x24] sm:$0x1] %v308
  %v310 = vld [vmem:[%s273 + $0x28] sm:$0xf]
  %v311 = vsel %vm276, %v159, %v310
  %312 = vst [vmem:[%s273 + $0x28] sm:$0xf] %v311
  %v313 = vld [vmem:[%s273 + $0x2c] sm:$0x1]
  %v314 = vsel %vm282, %v160, %v313
  %315 = vst [vmem:[%s273 + $0x2c] sm:$0x1] %v314
  %v316 = vld [vmem:[%s273 + $0x30] sm:$0xf]
  %v317 = vsel %vm276, %v167, %v316
  %318 = vst [vmem:[%s273 + $0x30] sm:$0xf] %v317
  %v319 = vld [vmem:[%s273 + $0x34] sm:$0x1]
  %v320 = vsel %vm282, %v168, %v319
  %321 = vst [vmem:[%s273 + $0x34] sm:$0x1] %v320
  %v322 = vld [vmem:[%s273 + $0x38] sm:$0xf]
  %v323 = vsel %vm276, %v175, %v322
  %324 = vst [vmem:[%s273 + $0x38] sm:$0xf] %v323
  %v325 = vld [vmem:[%s273 + $0x3c] sm:$0x1]
  %v326 = vsel %vm282, %v176, %v325
  %327 = vst [vmem:[%s273 + $0x3c] sm:$0x1] %v326
  %v328 = vld [vmem:[%s273 + $0x50] sm:$0xf]
  %v329 = vsel %vm276, %v183, %v328
  %330 = vst [vmem:[%s273 + $0x50] sm:$0xf] %v329
  %v331 = vld [vmem:[%s273 + $0x54] sm:$0x1]
  %v332 = vsel %vm282, %v184, %v331
  %333 = vst [vmem:[%s273 + $0x54] sm:$0x1] %v332
  %v334 = vld [vmem:[%s273 + $0x58] sm:$0xf]
  %v335 = vsel %vm276, %v191, %v334
  %336 = vst [vmem:[%s273 + $0x58] sm:$0xf] %v335
  %v337 = vld [vmem:[%s273 + $0x5c] sm:$0x1]
  %v338 = vsel %vm282, %v192, %v337
  %339 = vst [vmem:[%s273 + $0x5c] sm:$0x1] %v338
  %v340 = vld [vmem:[%s273 + $0x60] sm:$0xf]
  %v341 = vsel %vm276, %v199, %v340
  %342 = vst [vmem:[%s273 + $0x60] sm:$0xf] %v341
  %v343 = vld [vmem:[%s273 + $0x64] sm:$0x1]
  %v344 = vsel %vm282, %v200, %v343
  %345 = vst [vmem:[%s273 + $0x64] sm:$0x1] %v344
  %v346 = vld [vmem:[%s273 + $0x68] sm:$0xf]
  %v347 = vsel %vm276, %v207, %v346
  %348 = vst [vmem:[%s273 + $0x68] sm:$0xf] %v347
  %v349 = vld [vmem:[%s273 + $0x6c] sm:$0x1]
  %v350 = vsel %vm282, %v208, %v349
  %351 = vst [vmem:[%s273 + $0x6c] sm:$0x1] %v350
  %v352 = vld [vmem:[%s273 + $0x70] sm:$0xf]
  %v353 = vsel %vm276, %v215, %v352
  %354 = vst [vmem:[%s273 + $0x70] sm:$0xf] %v353
  %v355 = vld [vmem:[%s273 + $0x74] sm:$0x1]
  %v356 = vsel %vm282, %v216, %v355
  %357 = vst [vmem:[%s273 + $0x74] sm:$0x1] %v356
  %v358 = vld [vmem:[%s273 + $0x78] sm:$0xf]
  %v359 = vsel %vm276, %v223, %v358
  %360 = vst [vmem:[%s273 + $0x78] sm:$0xf] %v359
  %v361 = vld [vmem:[%s273 + $0x7c] sm:$0x1]
  %v362 = vsel %vm282, %v224, %v361
  %363 = vst [vmem:[%s273 + $0x7c] sm:$0x1] %v362
  %v364 = vld [vmem:[%s273 + $0x80] sm:$0xf]
  %v365 = vsel %vm276, %v231, %v364
  %366 = vst [vmem:[%s273 + $0x80] sm:$0xf] %v365
  %v367 = vld [vmem:[%s273 + $0x84] sm:$0x1]
  %v368 = vsel %vm282, %v232, %v367
  %369 = vst [vmem:[%s273 + $0x84] sm:$0x1] %v368
  %v370 = vld [vmem:[%s273 + $0x88] sm:$0xf]
  %v371 = vsel %vm276, %v239, %v370
  %372 = vst [vmem:[%s273 + $0x88] sm:$0xf] %v371
  %v373 = vld [vmem:[%s273 + $0x8c] sm:$0x1]
  %v374 = vsel %vm282, %v240, %v373
  %375 = vst [vmem:[%s273 + $0x8c] sm:$0x1] %v374
  %vm376 = vcmask 60416
  %377 = vst.msk [vmem:[#allocation2] sm:$0xf] %vm376, 0
  %vm378 = vcmask 57344
  %379 = vst.msk [vmem:[#allocation2 + $0x4] sm:$0x1] %vm378, 0
  %380 = vst.msk [vmem:[#allocation2 + $0x50] sm:$0xf] %vm376, 0
  %381 = vst.msk [vmem:[#allocation2 + $0x54] sm:$0x1] %vm378, 0
  %s382 = scalar_lea.vmem [#allocation2], 72
  %383 = vst.msk [vmem:[%s382] sm:$0xf] %vm376, 0
  %384 = vst.msk [vmem:[%s382 + $0x4] sm:$0x1] %vm378, 0
  %385 = vst.msk [vmem:[%s382 + $0x50] sm:$0xf] %vm376, 0
  %386 = vst.msk [vmem:[%s382 + $0x54] sm:$0x1] %vm378, 0
  %v387 = vld [vmem:[%s273] sm:$0x1]
  %v388 = vsel %vm282, 0, %v387
  %389 = vst [vmem:[%s273] sm:$0x1] %v388
  %v390 = vld [vmem:[%s273 + $0x8] sm:$0x1]
  %v391 = vsel %vm282, 0, %v390
  %392 = vst [vmem:[%s273 + $0x8] sm:$0x1] %v391
  %v393 = vld [vmem:[%s273 + $0x10] sm:$0x1]
  %v394 = vsel %vm282, 0, %v393
  %395 = vst [vmem:[%s273 + $0x10] sm:$0x1] %v394
  %v396 = vld [vmem:[%s273 + $0x18] sm:$0x1]
  %v397 = vsel %vm282, 0, %v396
  %398 = vst [vmem:[%s273 + $0x18] sm:$0x1] %v397
  %v399 = vld [vmem:[%s273 + $0x20] sm:$0x1]
  %v400 = vsel %vm282, 0, %v399
  %401 = vst [vmem:[%s273 + $0x20] sm:$0x1] %v400
  %v402 = vld [vmem:[%s273 + $0x28] sm:$0x1]
  %v403 = vsel %vm282, 0, %v402
  %404 = vst [vmem:[%s273 + $0x28] sm:$0x1] %v403
  %v405 = vld [vmem:[%s273 + $0x30] sm:$0x1]
  %v406 = vsel %vm282, 0, %v405
  %407 = vst [vmem:[%s273 + $0x30] sm:$0x1] %v406
  %v408 = vld [vmem:[%s273 + $0x38] sm:$0x1]
  %v409 = vsel %vm282, 0, %v408
  %410 = vst [vmem:[%s273 + $0x38] sm:$0x1] %v409
  %v411 = vld [vmem:[%s273 + $0x50] sm:$0x1]
  %v412 = vsel %vm282, 0, %v411
  %413 = vst [vmem:[%s273 + $0x50] sm:$0x1] %v412
  %v414 = vld [vmem:[%s273 + $0x58] sm:$0x1]
  %v415 = vsel %vm282, 0, %v414
  %416 = vst [vmem:[%s273 + $0x58] sm:$0x1] %v415
  %v417 = vld [vmem:[%s273 + $0x60] sm:$0x1]
  %v418 = vsel %vm282, 0, %v417
  %419 = vst [vmem:[%s273 + $0x60] sm:$0x1] %v418
  %v420 = vld [vmem:[%s273 + $0x68] sm:$0x1]
  %v421 = vsel %vm282, 0, %v420
  %422 = vst [vmem:[%s273 + $0x68] sm:$0x1] %v421
  %v423 = vld [vmem:[%s273 + $0x70] sm:$0x1]
  %v424 = vsel %vm282, 0, %v423
  %425 = vst [vmem:[%s273 + $0x70] sm:$0x1] %v424
  %v426 = vld [vmem:[%s273 + $0x78] sm:$0x1]
  %v427 = vsel %vm282, 0, %v426
  %428 = vst [vmem:[%s273 + $0x78] sm:$0x1] %v427
  %v429 = vld [vmem:[%s273 + $0x80] sm:$0x1]
  %v430 = vsel %vm282, 0, %v429
  %431 = vst [vmem:[%s273 + $0x80] sm:$0x1] %v430
  %v432 = vld [vmem:[%s273 + $0x88] sm:$0x1]
  %v433 = vsel %vm282, 0, %v432
  %434 = vst [vmem:[%s273 + $0x88] sm:$0x1] %v433
  %vm435 = vmand %vm280, %vm275
  %v436 = vld [vmem:[%s273 + $0x4] sm:$0x1]
  %v437 = vsel %vm435, 0, %v436
  %438 = vst [vmem:[%s273 + $0x4] sm:$0x1] %v437
  %v439 = vld [vmem:[%s273 + $0xc] sm:$0x1]
  %v440 = vsel %vm435, 0, %v439
  %441 = vst [vmem:[%s273 + $0xc] sm:$0x1] %v440
  %v442 = vld [vmem:[%s273 + $0x14] sm:$0x1]
  %v443 = vsel %vm435, 0, %v442
  %444 = vst [vmem:[%s273 + $0x14] sm:$0x1] %v443
  %v445 = vld [vmem:[%s273 + $0x1c] sm:$0x1]
  %v446 = vsel %vm435, 0, %v445
  %447 = vst [vmem:[%s273 + $0x1c] sm:$0x1] %v446
  %v448 = vld [vmem:[%s273 + $0x24] sm:$0x1]
  %v449 = vsel %vm435, 0, %v448
  %450 = vst [vmem:[%s273 + $0x24] sm:$0x1] %v449
  %v451 = vld [vmem:[%s273 + $0x2c] sm:$0x1]
  %v452 = vsel %vm435, 0, %v451
  %453 = vst [vmem:[%s273 + $0x2c] sm:$0x1] %v452
  %v454 = vld [vmem:[%s273 + $0x34] sm:$0x1]
  %v455 = vsel %vm435, 0, %v454
  %456 = vst [vmem:[%s273 + $0x34] sm:$0x1] %v455
  %v457 = vld [vmem:[%s273 + $0x3c] sm:$0x1]
  %v458 = vsel %vm435, 0, %v457
  %459 = vst [vmem:[%s273 + $0x3c] sm:$0x1] %v458
  %v460 = vld [vmem:[%s273 + $0x54] sm:$0x1]
  %v461 = vsel %vm435, 0, %v460
  %462 = vst [vmem:[%s273 + $0x54] sm:$0x1] %v461
  %v463 = vld [vmem:[%s273 + $0x5c] sm:$0x1]
  %v464 = vsel %vm435, 0, %v463
  %465 = vst [vmem:[%s273 + $0x5c] sm:$0x1] %v464
  %v466 = vld [vmem:[%s273 + $0x64] sm:$0x1]
  %v467 = vsel %vm435, 0, %v466
  %468 = vst [vmem:[%s273 + $0x64] sm:$0x1] %v467
  %v469 = vld [vmem:[%s273 + $0x6c] sm:$0x1]
  %v470 = vsel %vm435, 0, %v469
  %471 = vst [vmem:[%s273 + $0x6c] sm:$0x1] %v470
  %v472 = vld [vmem:[%s273 + $0x74] sm:$0x1]
  %v473 = vsel %vm435, 0, %v472
  %474 = vst [vmem:[%s273 + $0x74] sm:$0x1] %v473
  %v475 = vld [vmem:[%s273 + $0x7c] sm:$0x1]
  %v476 = vsel %vm435, 0, %v475
  %477 = vst [vmem:[%s273 + $0x7c] sm:$0x1] %v476
  %v478 = vld [vmem:[%s273 + $0x84] sm:$0x1]
  %v479 = vsel %vm435, 0, %v478
  %480 = vst [vmem:[%s273 + $0x84] sm:$0x1] %v479
  %v481 = vld [vmem:[%s273 + $0x8c] sm:$0x1]
  %v482 = vsel %vm435, 0, %v481
  %483 = vst [vmem:[%s273 + $0x8c] sm:$0x1] %v482
  %v484 = vld [vmem:[#allocation2] sm:$0xf]
  %v485 = vld [vmem:[#allocation2 + $0x8] sm:$0xf]
  %v486 = vld [vmem:[#allocation2 + $0x10] sm:$0xf]
  %v487 = vld [vmem:[#allocation2 + $0x18] sm:$0xf]
  %v488 = vld [vmem:[#allocation2 + $0x20] sm:$0xf]
  %v489 = vld [vmem:[#allocation2 + $0x28] sm:$0xf]
  %v490 = vld [vmem:[#allocation2 + $0x30] sm:$0xf]
  %v491 = vld [vmem:[#allocation2 + $0x38] sm:$0xf]
  %v492 = vld [vmem:[#allocation2 + $0x50] sm:$0xf]
  %v493 = vld [vmem:[#allocation2 + $0x58] sm:$0xf]
  %v494 = vld [vmem:[#allocation2 + $0x60] sm:$0xf]
  %v495 = vld [vmem:[#allocation2 + $0x68] sm:$0xf]
  %v496 = vld [vmem:[#allocation2 + $0x70] sm:$0xf]
  %v497 = vld [vmem:[#allocation2 + $0x78] sm:$0xf]
  %v498 = vld [vmem:[#allocation2 + $0x80] sm:$0xf]
  %v499 = vld [vmem:[#allocation2 + $0x88] sm:$0xf]
  %v500 = vld [vmem:[#allocation2 + $0x4] sm:$0x1]
  %v501 = vld [vmem:[#allocation2 + $0xc] sm:$0x1]
  %v502 = vld [vmem:[#allocation2 + $0x14] sm:$0x1]
  %v503 = vld [vmem:[#allocation2 + $0x1c] sm:$0x1]
  %v504 = vld [vmem:[#allocation2 + $0x24] sm:$0x1]
  %v505 = vld [vmem:[#allocation2 + $0x2c] sm:$0x1]
  %v506 = vld [vmem:[#allocation2 + $0x34] sm:$0x1]
  %v507 = vld [vmem:[#allocation2 + $0x3c] sm:$0x1]
  %v508 = vld [vmem:[#allocation2 + $0x54] sm:$0x1]
  %v509 = vld [vmem:[#allocation2 + $0x5c] sm:$0x1]
  %v510 = vld [vmem:[#allocation2 + $0x64] sm:$0x1]
  %v511 = vld [vmem:[#allocation2 + $0x6c] sm:$0x1]
  %v512 = vld [vmem:[#allocation2 + $0x74] sm:$0x1]
  %v513 = vld [vmem:[#allocation2 + $0x7c] sm:$0x1]
  %v514 = vld [vmem:[#allocation2 + $0x84] sm:$0x1]
  %v515 = vld [vmem:[#allocation2 + $0x8c] sm:$0x1]
  %v516 = vld [vmem:[#allocation2] sm:$0xe]
  %v517 = vld [vmem:[#allocation2 + $0x8] sm:$0xe]
  %v518 = vld [vmem:[#allocation2 + $0x10] sm:$0xe]
  %v519 = vld [vmem:[#allocation2 + $0x18] sm:$0xe]
  %v520 = vld [vmem:[#allocation2 + $0x20] sm:$0xe]
  %v521 = vld [vmem:[#allocation2 + $0x28] sm:$0xe]
  %v522 = vld [vmem:[#allocation2 + $0x30] sm:$0xe]
  %v523 = vld [vmem:[#allocation2 + $0x38] sm:$0xe]
  %v524 = vld [vmem:[#allocation2 + $0x50] sm:$0xe]
  %v525 = vld [vmem:[#allocation2 + $0x58] sm:$0xe]
  %v526 = vld [vmem:[#allocation2 + $0x60] sm:$0xe]
  %v527 = vld [vmem:[#allocation2 + $0x68] sm:$0xe]
  %v528 = vld [vmem:[#allocation2 + $0x70] sm:$0xe]
  %v529 = vld [vmem:[#allocation2 + $0x78] sm:$0xe]
  %v530 = vld [vmem:[#allocation2 + $0x80] sm:$0xe]
  %v531 = vld [vmem:[#allocation2 + $0x88] sm:$0xe]
  %v532 = vld [vmem:[%s273] sm:$0xf]
  %v533 = vld [vmem:[%s273 + $0x8] sm:$0xf]
  %v534 = vld [vmem:[%s273 + $0x10] sm:$0xf]
  %v535 = vld [vmem:[%s273 + $0x18] sm:$0xf]
  %v536 = vld [vmem:[%s273 + $0x20] sm:$0xf]
  %v537 = vld [vmem:[%s273 + $0x28] sm:$0xf]
  %v538 = vld [vmem:[%s273 + $0x30] sm:$0xf]
  %v539 = vld [vmem:[%s273 + $0x38] sm:$0xf]
  %v540 = vld [vmem:[%s273 + $0x50] sm:$0xf]
  %v541 = vld [vmem:[%s273 + $0x58] sm:$0xf]
  %v542 = vld [vmem:[%s273 + $0x60] sm:$0xf]
  %v543 = vld [vmem:[%s273 + $0x68] sm:$0xf]
  %v544 = vld [vmem:[%s273 + $0x70] sm:$0xf]
  %v545 = vld [vmem:[%s273 + $0x78] sm:$0xf]
  %v546 = vld [vmem:[%s273 + $0x80] sm:$0xf]
  %v547 = vld [vmem:[%s273 + $0x88] sm:$0xf]
  %v548 = vld [vmem:[%s273 + $0x4] sm:$0x1]
  %v549 = vld [vmem:[%s273 + $0xc] sm:$0x1]
  %v550 = vld [vmem:[%s273 + $0x14] sm:$0x1]
  %v551 = vld [vmem:[%s273 + $0x1c] sm:$0x1]
  %v552 = vld [vmem:[%s273 + $0x24] sm:$0x1]
  %v553 = vld [vmem:[%s273 + $0x2c] sm:$0x1]
  %v554 = vld [vmem:[%s273 + $0x34] sm:$0x1]
  %v555 = vld [vmem:[%s273 + $0x3c] sm:$0x1]
  %v556 = vld [vmem:[%s273 + $0x54] sm:$0x1]
  %v557 = vld [vmem:[%s273 + $0x5c] sm:$0x1]
  %v558 = vld [vmem:[%s273 + $0x64] sm:$0x1]
  %v559 = vld [vmem:[%s273 + $0x6c] sm:$0x1]
  %v560 = vld [vmem:[%s273 + $0x74] sm:$0x1]
  %v561 = vld [vmem:[%s273 + $0x7c] sm:$0x1]
  %v562 = vld [vmem:[%s273 + $0x84] sm:$0x1]
  %v563 = vld [vmem:[%s273 + $0x8c] sm:$0x1]
  %v564 = vld [vmem:[%s273] sm:$0xe]
  %v565 = vld [vmem:[%s273 + $0x8] sm:$0xe]
  %v566 = vld [vmem:[%s273 + $0x10] sm:$0xe]
  %v567 = vld [vmem:[%s273 + $0x18] sm:$0xe]
  %v568 = vld [vmem:[%s273 + $0x20] sm:$0xe]
  %v569 = vld [vmem:[%s273 + $0x28] sm:$0xe]
  %v570 = vld [vmem:[%s273 + $0x30] sm:$0xe]
  %v571 = vld [vmem:[%s273 + $0x38] sm:$0xe]
  %v572 = vld [vmem:[%s273 + $0x50] sm:$0xe]
  %v573 = vld [vmem:[%s273 + $0x58] sm:$0xe]
  %v574 = vld [vmem:[%s273 + $0x60] sm:$0xe]
  %v575 = vld [vmem:[%s273 + $0x68] sm:$0xe]
  %v576 = vld [vmem:[%s273 + $0x70] sm:$0xe]
  %v577 = vld [vmem:[%s273 + $0x78] sm:$0xe]
  %v578 = vld [vmem:[%s273 + $0x80] sm:$0xe]
  %v579 = vld [vmem:[%s273 + $0x88] sm:$0xe]
  %s580 = scalar_lea.vmem [#allocation2], 16
  %v581 = vld [vmem:[%s580] sm:$0xf]
  %v582 = vld [vmem:[%s580 + $0x8] sm:$0xf]
  %v583 = vld [vmem:[%s580 + $0x10] sm:$0xf]
  %v584 = vld [vmem:[%s580 + $0x18] sm:$0xf]
  %v585 = vld [vmem:[%s580 + $0x20] sm:$0xf]
  %v586 = vld [vmem:[%s580 + $0x28] sm:$0xf]
  %v587 = vld [vmem:[%s580 + $0x30] sm:$0xf]
  %v588 = vld [vmem:[%s580 + $0x38] sm:$0xf]
  %v589 = vld [vmem:[%s580 + $0x50] sm:$0xf]
  %v590 = vld [vmem:[%s580 + $0x58] sm:$0xf]
  %v591 = vld [vmem:[%s580 + $0x60] sm:$0xf]
  %v592 = vld [vmem:[%s580 + $0x68] sm:$0xf]
  %v593 = vld [vmem:[%s580 + $0x70] sm:$0xf]
  %v594 = vld [vmem:[%s580 + $0x78] sm:$0xf]
  %v595 = vld [vmem:[%s580 + $0x80] sm:$0xf]
  %v596 = vld [vmem:[%s580 + $0x88] sm:$0xf]
  %v597 = vld [vmem:[%s580 + $0x4] sm:$0x1]
  %v598 = vld [vmem:[%s580 + $0xc] sm:$0x1]
  %v599 = vld [vmem:[%s580 + $0x14] sm:$0x1]
  %v600 = vld [vmem:[%s580 + $0x1c] sm:$0x1]
  %v601 = vld [vmem:[%s580 + $0x24] sm:$0x1]
  %v602 = vld [vmem:[%s580 + $0x2c] sm:$0x1]
  %v603 = vld [vmem:[%s580 + $0x34] sm:$0x1]
  %v604 = vld [vmem:[%s580 + $0x3c] sm:$0x1]
  %v605 = vld [vmem:[%s580 + $0x54] sm:$0x1]
  %v606 = vld [vmem:[%s580 + $0x5c] sm:$0x1]
  %v607 = vld [vmem:[%s580 + $0x64] sm:$0x1]
  %v608 = vld [vmem:[%s580 + $0x6c] sm:$0x1]
  %v609 = vld [vmem:[%s580 + $0x74] sm:$0x1]
  %v610 = vld [vmem:[%s580 + $0x7c] sm:$0x1]
  %v611 = vld [vmem:[%s580 + $0x84] sm:$0x1]
  %v612 = vld [vmem:[%s580 + $0x8c] sm:$0x1]
  %v613 = vld [vmem:[%s580] sm:$0xe]
  %v614 = vld [vmem:[%s580 + $0x8] sm:$0xe]
  %v615 = vld [vmem:[%s580 + $0x10] sm:$0xe]
  %v616 = vld [vmem:[%s580 + $0x18] sm:$0xe]
  %v617 = vld [vmem:[%s580 + $0x20] sm:$0xe]
  %v618 = vld [vmem:[%s580 + $0x28] sm:$0xe]
  %v619 = vld [vmem:[%s580 + $0x30] sm:$0xe]
  %v620 = vld [vmem:[%s580 + $0x38] sm:$0xe]
  %v621 = vld [vmem:[%s580 + $0x50] sm:$0xe]
  %v622 = vld [vmem:[%s580 + $0x58] sm:$0xe]
  %v623 = vld [vmem:[%s580 + $0x60] sm:$0xe]
  %v624 = vld [vmem:[%s580 + $0x68] sm:$0xe]
  %v625 = vld [vmem:[%s580 + $0x70] sm:$0xe]
  %v626 = vld [vmem:[%s580 + $0x78] sm:$0xe]
  %v627 = vld [vmem:[%s580 + $0x80] sm:$0xe]
  %v628 = vld [vmem:[%s580 + $0x88] sm:$0xe]
  %v629 = vld [vmem:[%s1] sm:$0xf]
  %v630 = vld [vmem:[%s1 + $0x4] sm:$0xf]
  %v631 = vld [vmem:[%s1 + $0x8] sm:$0xf]
  %v632 = vld [vmem:[%s1 + $0xc] sm:$0xf]
  %v633 = vld [vmem:[%s1 + $0x10] sm:$0xf]
  %v634 = vld [vmem:[%s1 + $0x14] sm:$0xf]
  %v635 = vld [vmem:[%s1 + $0x18] sm:$0xf]
  %v636 = vld [vmem:[%s1 + $0x1c] sm:$0xf]
  %v637 = vld [vmem:[%s1 + $0x20] sm:$0xf]
  %v638 = vld [vmem:[%s2] sm:$0x1]
  %v671 = vunpack.c.l.b16 %v484
  %v672 = vunpack.c.l.b16 %v500
  %v673 = vunpack.c.l.b16 %v485
  %v674 = vunpack.c.l.b16 %v501
  %v675 = vunpack.c.l.b16 %v486
  %v676 = vunpack.c.l.b16 %v502
  %v677 = vunpack.c.l.b16 %v487
  %v678 = vunpack.c.l.b16 %v503
  %v679 = vunpack.c.l.b16 %v488
  %v680 = vunpack.c.l.b16 %v504
  %v681 = vunpack.c.l.b16 %v489
  %v682 = vunpack.c.l.b16 %v505
  %v683 = vunpack.c.l.b16 %v490
  %v684 = vunpack.c.l.b16 %v506
  %v685 = vunpack.c.l.b16 %v491
  %v686 = vunpack.c.l.b16 %v507
  %v687 = vunpack.c.l.b16 %v492
  %v688 = vunpack.c.l.b16 %v508
  %v689 = vunpack.c.l.b16 %v493
  %v690 = vunpack.c.l.b16 %v509
  %v691 = vunpack.c.l.b16 %v494
  %v692 = vunpack.c.l.b16 %v510
  %v693 = vunpack.c.l.b16 %v495
  %v694 = vunpack.c.l.b16 %v511
  %v695 = vunpack.c.l.b16 %v496
  %v696 = vunpack.c.l.b16 %v512
  %v697 = vunpack.c.l.b16 %v497
  %v698 = vunpack.c.l.b16 %v513
  %v699 = vunpack.c.l.b16 %v498
  %v700 = vunpack.c.l.b16 %v514
  %v701 = vunpack.c.l.b16 %v499
  %v702 = vunpack.c.l.b16 %v515
  %v703 = vpack.c.b16 %v672, %v671
  %v704 = vpack.c.b16 %v674, %v673
  %v705 = vpack.c.b16 %v676, %v675
  %v706 = vpack.c.b16 %v678, %v677
  %v707 = vpack.c.b16 %v680, %v679
  %v708 = vpack.c.b16 %v682, %v681
  %v709 = vpack.c.b16 %v684, %v683
  %v710 = vpack.c.b16 %v686, %v685
  %v711 = vpack.c.b16 %v688, %v687
  %v712 = vpack.c.b16 %v690, %v689
  %v713 = vpack.c.b16 %v692, %v691
  %v714 = vpack.c.b16 %v694, %v693
  %v715 = vpack.c.b16 %v696, %v695
  %v716 = vpack.c.b16 %v698, %v697
  %v717 = vpack.c.b16 %v700, %v699
  %v718 = vpack.c.b16 %v702, %v701
  %v720 = vshrl.u32 %v703, 16
  %v722 = vshll.u32 %v703, 16
  %v724 = vrot.slane %v722, 1
  %v725 = vor.u32 %v720, %v724
  %v727 = vshrl.u32 %v704, 16
  %v729 = vshll.u32 %v704, 16
  %v731 = vrot.slane %v729, 1
  %v732 = vor.u32 %v727, %v731
  %v734 = vshrl.u32 %v705, 16
  %v736 = vshll.u32 %v705, 16
  %v738 = vrot.slane %v736, 1
  %v739 = vor.u32 %v734, %v738
  %v741 = vshrl.u32 %v706, 16
  %v743 = vshll.u32 %v706, 16
  %v745 = vrot.slane %v743, 1
  %v746 = vor.u32 %v741, %v745
  %v748 = vshrl.u32 %v707, 16
  %v750 = vshll.u32 %v707, 16
  %v752 = vrot.slane %v750, 1
  %v753 = vor.u32 %v748, %v752
  %v755 = vshrl.u32 %v708, 16
  %v757 = vshll.u32 %v708, 16
  %v759 = vrot.slane %v757, 1
  %v760 = vor.u32 %v755, %v759
  %v762 = vshrl.u32 %v709, 16
  %v764 = vshll.u32 %v709, 16
  %v766 = vrot.slane %v764, 1
  %v767 = vor.u32 %v762, %v766
  %v769 = vshrl.u32 %v710, 16
  %v771 = vshll.u32 %v710, 16
  %v773 = vrot.slane %v771, 1
  %v774 = vor.u32 %v769, %v773
  %v776 = vshrl.u32 %v711, 16
  %v778 = vshll.u32 %v711, 16
  %v780 = vrot.slane %v778, 1
  %v781 = vor.u32 %v776, %v780
  %v783 = vshrl.u32 %v712, 16
  %v785 = vshll.u32 %v712, 16
  %v787 = vrot.slane %v785, 1
  %v788 = vor.u32 %v783, %v787
  %v790 = vshrl.u32 %v713, 16
  %v792 = vshll.u32 %v713, 16
  %v794 = vrot.slane %v792, 1
  %v795 = vor.u32 %v790, %v794
  %v797 = vshrl.u32 %v714, 16
  %v799 = vshll.u32 %v714, 16
  %v801 = vrot.slane %v799, 1
  %v802 = vor.u32 %v797, %v801
  %v804 = vshrl.u32 %v715, 16
  %v806 = vshll.u32 %v715, 16
  %v808 = vrot.slane %v806, 1
  %v809 = vor.u32 %v804, %v808
  %v811 = vshrl.u32 %v716, 16
  %v813 = vshll.u32 %v716, 16
  %v815 = vrot.slane %v813, 1
  %v816 = vor.u32 %v811, %v815
  %v818 = vshrl.u32 %v717, 16
  %v820 = vshll.u32 %v717, 16
  %v822 = vrot.slane %v820, 1
  %v823 = vor.u32 %v818, %v822
  %v825 = vshrl.u32 %v718, 16
  %v827 = vshll.u32 %v718, 16
  %v829 = vrot.slane %v827, 1
  %v830 = vor.u32 %v825, %v829
  %831 = vrot.lane.b32.xlu0 %v725, 8
  %v832 = vpop.permute.xlu0 %831
  %833 = vrot.lane.b32.xlu0 %v732, 8
  %v834 = vpop.permute.xlu0 %833
  %835 = vrot.lane.b32.xlu0 %v739, 8
  %v836 = vpop.permute.xlu0 %835
  %837 = vrot.lane.b32.xlu0 %v746, 8
  %v838 = vpop.permute.xlu0 %837
  %839 = vrot.lane.b32.xlu0 %v753, 8
  %v840 = vpop.permute.xlu0 %839
  %841 = vrot.lane.b32.xlu0 %v760, 8
  %v842 = vpop.permute.xlu0 %841
  %843 = vrot.lane.b32.xlu0 %v767, 8
  %v844 = vpop.permute.xlu0 %843
  %845 = vrot.lane.b32.xlu0 %v774, 8
  %v846 = vpop.permute.xlu0 %845
  %847 = vrot.lane.b32.xlu0 %v781, 8
  %v848 = vpop.permute.xlu0 %847
  %849 = vrot.lane.b32.xlu0 %v788, 8
  %v850 = vpop.permute.xlu0 %849
  %851 = vrot.lane.b32.xlu0 %v795, 8
  %v852 = vpop.permute.xlu0 %851
  %853 = vrot.lane.b32.xlu0 %v802, 8
  %v854 = vpop.permute.xlu0 %853
  %855 = vrot.lane.b32.xlu0 %v809, 8
  %v856 = vpop.permute.xlu0 %855
  %857 = vrot.lane.b32.xlu0 %v816, 8
  %v858 = vpop.permute.xlu0 %857
  %859 = vrot.lane.b32.xlu0 %v823, 8
  %v860 = vpop.permute.xlu0 %859
  %861 = vrot.lane.b32.xlu0 %v830, 8
  %v862 = vpop.permute.xlu0 %861
  %v879 = vunpack.c.l.b16 %v516
  %v880 = vunpack.c.l.b16 %v517
  %v881 = vunpack.c.l.b16 %v518
  %v882 = vunpack.c.l.b16 %v519
  %v883 = vunpack.c.l.b16 %v520
  %v884 = vunpack.c.l.b16 %v521
  %v885 = vunpack.c.l.b16 %v522
  %v886 = vunpack.c.l.b16 %v523
  %v887 = vunpack.c.l.b16 %v524
  %v888 = vunpack.c.l.b16 %v525
  %v889 = vunpack.c.l.b16 %v526
  %v890 = vunpack.c.l.b16 %v527
  %v891 = vunpack.c.l.b16 %v528
  %v892 = vunpack.c.l.b16 %v529
  %v893 = vunpack.c.l.b16 %v530
  %v894 = vunpack.c.l.b16 %v531
  %v895 = vpack.c.b16 %v672, %v879
  %v896 = vpack.c.b16 %v674, %v880
  %v897 = vpack.c.b16 %v676, %v881
  %v898 = vpack.c.b16 %v678, %v882
  %v899 = vpack.c.b16 %v680, %v883
  %v900 = vpack.c.b16 %v682, %v884
  %v901 = vpack.c.b16 %v684, %v885
  %v902 = vpack.c.b16 %v686, %v886
  %v903 = vpack.c.b16 %v688, %v887
  %v904 = vpack.c.b16 %v690, %v888
  %v905 = vpack.c.b16 %v692, %v889
  %v906 = vpack.c.b16 %v694, %v890
  %v907 = vpack.c.b16 %v696, %v891
  %v908 = vpack.c.b16 %v698, %v892
  %v909 = vpack.c.b16 %v700, %v893
  %v910 = vpack.c.b16 %v702, %v894
  %v911 = vrot.slane %v895, 1
  %v912 = vrot.slane %v896, 1
  %v913 = vrot.slane %v897, 1
  %v914 = vrot.slane %v898, 1
  %v915 = vrot.slane %v899, 1
  %v916 = vrot.slane %v900, 1
  %v917 = vrot.slane %v901, 1
  %v918 = vrot.slane %v902, 1
  %v919 = vrot.slane %v903, 1
  %v920 = vrot.slane %v904, 1
  %v921 = vrot.slane %v905, 1
  %v922 = vrot.slane %v906, 1
  %v923 = vrot.slane %v907, 1
  %v924 = vrot.slane %v908, 1
  %v925 = vrot.slane %v909, 1
  %v926 = vrot.slane %v910, 1
  %927 = vrot.lane.b32.xlu0 %v911, 16
  %v928 = vpop.permute.xlu0 %927
  %929 = vrot.lane.b32.xlu0 %v912, 16
  %v930 = vpop.permute.xlu0 %929
  %931 = vrot.lane.b32.xlu0 %v913, 16
  %v932 = vpop.permute.xlu0 %931
  %933 = vrot.lane.b32.xlu0 %v914, 16
  %v934 = vpop.permute.xlu0 %933
  %935 = vrot.lane.b32.xlu0 %v915, 16
  %v936 = vpop.permute.xlu0 %935
  %937 = vrot.lane.b32.xlu0 %v916, 16
  %v938 = vpop.permute.xlu0 %937
  %939 = vrot.lane.b32.xlu0 %v917, 16
  %v940 = vpop.permute.xlu0 %939
  %941 = vrot.lane.b32.xlu0 %v918, 16
  %v942 = vpop.permute.xlu0 %941
  %943 = vrot.lane.b32.xlu0 %v919, 16
  %v944 = vpop.permute.xlu0 %943
  %945 = vrot.lane.b32.xlu0 %v920, 16
  %v946 = vpop.permute.xlu0 %945
  %947 = vrot.lane.b32.xlu0 %v921, 16
  %v948 = vpop.permute.xlu0 %947
  %949 = vrot.lane.b32.xlu0 %v922, 16
  %v950 = vpop.permute.xlu0 %949
  %951 = vrot.lane.b32.xlu0 %v923, 16
  %v952 = vpop.permute.xlu0 %951
  %953 = vrot.lane.b32.xlu0 %v924, 16
  %v954 = vpop.permute.xlu0 %953
  %955 = vrot.lane.b32.xlu0 %v925, 16
  %v956 = vpop.permute.xlu0 %955
  %957 = vrot.lane.b32.xlu0 %v926, 16
  %v958 = vpop.permute.xlu0 %957
  %v975 = vunpack.c.l.b16 %v532
  %v976 = vunpack.c.l.b16 %v533
  %v977 = vunpack.c.l.b16 %v534
  %v978 = vunpack.c.l.b16 %v535
  %v979 = vunpack.c.l.b16 %v536
  %v980 = vunpack.c.l.b16 %v537
  %v981 = vunpack.c.l.b16 %v538
  %v982 = vunpack.c.l.b16 %v539
  %v983 = vunpack.c.l.b16 %v540
  %v984 = vunpack.c.l.b16 %v541
  %v985 = vunpack.c.l.b16 %v542
  %v986 = vunpack.c.l.b16 %v543
  %v987 = vunpack.c.l.b16 %v544
  %v988 = vunpack.c.l.b16 %v545
  %v989 = vunpack.c.l.b16 %v546
  %v990 = vunpack.c.l.b16 %v547
  %v991 = vpack.c.b16 %v975, %v975
  %v992 = vpack.c.b16 %v976, %v976
  %v993 = vpack.c.b16 %v977, %v977
  %v994 = vpack.c.b16 %v978, %v978
  %v995 = vpack.c.b16 %v979, %v979
  %v996 = vpack.c.b16 %v980, %v980
  %v997 = vpack.c.b16 %v981, %v981
  %v998 = vpack.c.b16 %v982, %v982
  %v999 = vpack.c.b16 %v983, %v983
  %v1000 = vpack.c.b16 %v984, %v984
  %v1001 = vpack.c.b16 %v985, %v985
  %v1002 = vpack.c.b16 %v986, %v986
  %v1003 = vpack.c.b16 %v987, %v987
  %v1004 = vpack.c.b16 %v988, %v988
  %v1005 = vpack.c.b16 %v989, %v989
  %v1006 = vpack.c.b16 %v990, %v990
  %1007 = vrot.lane.b32.xlu0 %v991, 24
  %v1008 = vpop.permute.xlu0 %1007
  %1009 = vrot.lane.b32.xlu0 %v992, 24
  %v1010 = vpop.permute.xlu0 %1009
  %1011 = vrot.lane.b32.xlu0 %v993, 24
  %v1012 = vpop.permute.xlu0 %1011
  %1013 = vrot.lane.b32.xlu0 %v994, 24
  %v1014 = vpop.permute.xlu0 %1013
  %1015 = vrot.lane.b32.xlu0 %v995, 24
  %v1016 = vpop.permute.xlu0 %1015
  %1017 = vrot.lane.b32.xlu0 %v996, 24
  %v1018 = vpop.permute.xlu0 %1017
  %1019 = vrot.lane.b32.xlu0 %v997, 24
  %v1020 = vpop.permute.xlu0 %1019
  %1021 = vrot.lane.b32.xlu0 %v998, 24
  %v1022 = vpop.permute.xlu0 %1021
  %1023 = vrot.lane.b32.xlu0 %v999, 24
  %v1024 = vpop.permute.xlu0 %1023
  %1025 = vrot.lane.b32.xlu0 %v1000, 24
  %v1026 = vpop.permute.xlu0 %1025
  %1027 = vrot.lane.b32.xlu0 %v1001, 24
  %v1028 = vpop.permute.xlu0 %1027
  %1029 = vrot.lane.b32.xlu0 %v1002, 24
  %v1030 = vpop.permute.xlu0 %1029
  %1031 = vrot.lane.b32.xlu0 %v1003, 24
  %v1032 = vpop.permute.xlu0 %1031
  %1033 = vrot.lane.b32.xlu0 %v1004, 24
  %v1034 = vpop.permute.xlu0 %1033
  %1035 = vrot.lane.b32.xlu0 %v1005, 24
  %v1036 = vpop.permute.xlu0 %1035
  %1037 = vrot.lane.b32.xlu0 %v1006, 24
  %v1038 = vpop.permute.xlu0 %1037
  %v1055 = vunpack.c.l.b16 %v548
  %v1056 = vunpack.c.l.b16 %v549
  %v1057 = vunpack.c.l.b16 %v550
  %v1058 = vunpack.c.l.b16 %v551
  %v1059 = vunpack.c.l.b16 %v552
  %v1060 = vunpack.c.l.b16 %v553
  %v1061 = vunpack.c.l.b16 %v554
  %v1062 = vunpack.c.l.b16 %v555
  %v1063 = vunpack.c.l.b16 %v556
  %v1064 = vunpack.c.l.b16 %v557
  %v1065 = vunpack.c.l.b16 %v558
  %v1066 = vunpack.c.l.b16 %v559
  %v1067 = vunpack.c.l.b16 %v560
  %v1068 = vunpack.c.l.b16 %v561
  %v1069 = vunpack.c.l.b16 %v562
  %v1070 = vunpack.c.l.b16 %v563
  %v1071 = vpack.c.b16 %v1055, %v975
  %v1072 = vpack.c.b16 %v1056, %v976
  %v1073 = vpack.c.b16 %v1057, %v977
  %v1074 = vpack.c.b16 %v1058, %v978
  %v1075 = vpack.c.b16 %v1059, %v979
  %v1076 = vpack.c.b16 %v1060, %v980
  %v1077 = vpack.c.b16 %v1061, %v981
  %v1078 = vpack.c.b16 %v1062, %v982
  %v1079 = vpack.c.b16 %v1063, %v983
  %v1080 = vpack.c.b16 %v1064, %v984
  %v1081 = vpack.c.b16 %v1065, %v985
  %v1082 = vpack.c.b16 %v1066, %v986
  %v1083 = vpack.c.b16 %v1067, %v987
  %v1084 = vpack.c.b16 %v1068, %v988
  %v1085 = vpack.c.b16 %v1069, %v989
  %v1086 = vpack.c.b16 %v1070, %v990
  %v1088 = vshrl.u32 %v1071, 16
  %v1090 = vshll.u32 %v1071, 16
  %v1092 = vrot.slane %v1090, 1
  %v1093 = vor.u32 %v1088, %v1092
  %v1095 = vshrl.u32 %v1072, 16
  %v1097 = vshll.u32 %v1072, 16
  %v1099 = vrot.slane %v1097, 1
  %v1100 = vor.u32 %v1095, %v1099
  %v1102 = vshrl.u32 %v1073, 16
  %v1104 = vshll.u32 %v1073, 16
  %v1106 = vrot.slane %v1104, 1
  %v1107 = vor.u32 %v1102, %v1106
  %v1109 = vshrl.u32 %v1074, 16
  %v1111 = vshll.u32 %v1074, 16
  %v1113 = vrot.slane %v1111, 1
  %v1114 = vor.u32 %v1109, %v1113
  %v1116 = vshrl.u32 %v1075, 16
  %v1118 = vshll.u32 %v1075, 16
  %v1120 = vrot.slane %v1118, 1
  %v1121 = vor.u32 %v1116, %v1120
  %v1123 = vshrl.u32 %v1076, 16
  %v1125 = vshll.u32 %v1076, 16
  %v1127 = vrot.slane %v1125, 1
  %v1128 = vor.u32 %v1123, %v1127
  %v1130 = vshrl.u32 %v1077, 16
  %v1132 = vshll.u32 %v1077, 16
  %v1134 = vrot.slane %v1132, 1
  %v1135 = vor.u32 %v1130, %v1134
  %v1137 = vshrl.u32 %v1078, 16
  %v1139 = vshll.u32 %v1078, 16
  %v1141 = vrot.slane %v1139, 1
  %v1142 = vor.u32 %v1137, %v1141
  %v1144 = vshrl.u32 %v1079, 16
  %v1146 = vshll.u32 %v1079, 16
  %v1148 = vrot.slane %v1146, 1
  %v1149 = vor.u32 %v1144, %v1148
  %v1151 = vshrl.u32 %v1080, 16
  %v1153 = vshll.u32 %v1080, 16
  %v1155 = vrot.slane %v1153, 1
  %v1156 = vor.u32 %v1151, %v1155
  %v1158 = vshrl.u32 %v1081, 16
  %v1160 = vshll.u32 %v1081, 16
  %v1162 = vrot.slane %v1160, 1
  %v1163 = vor.u32 %v1158, %v1162
  %v1165 = vshrl.u32 %v1082, 16
  %v1167 = vshll.u32 %v1082, 16
  %v1169 = vrot.slane %v1167, 1
  %v1170 = vor.u32 %v1165, %v1169
  %v1172 = vshrl.u32 %v1083, 16
  %v1174 = vshll.u32 %v1083, 16
  %v1176 = vrot.slane %v1174, 1
  %v1177 = vor.u32 %v1172, %v1176
  %v1179 = vshrl.u32 %v1084, 16
  %v1181 = vshll.u32 %v1084, 16
  %v1183 = vrot.slane %v1181, 1
  %v1184 = vor.u32 %v1179, %v1183
  %v1186 = vshrl.u32 %v1085, 16
  %v1188 = vshll.u32 %v1085, 16
  %v1190 = vrot.slane %v1188, 1
  %v1191 = vor.u32 %v1186, %v1190
  %v1193 = vshrl.u32 %v1086, 16
  %v1195 = vshll.u32 %v1086, 16
  %v1197 = vrot.slane %v1195, 1
  %v1198 = vor.u32 %v1193, %v1197
  %1199 = vrot.lane.b32.xlu0 %v1093, 32
  %v1200 = vpop.permute.xlu0 %1199
  %1201 = vrot.lane.b32.xlu0 %v1100, 32
  %v1202 = vpop.permute.xlu0 %1201
  %1203 = vrot.lane.b32.xlu0 %v1107, 32
  %v1204 = vpop.permute.xlu0 %1203
  %1205 = vrot.lane.b32.xlu0 %v1114, 32
  %v1206 = vpop.permute.xlu0 %1205
  %1207 = vrot.lane.b32.xlu0 %v1121, 32
  %v1208 = vpop.permute.xlu0 %1207
  %1209 = vrot.lane.b32.xlu0 %v1128, 32
  %v1210 = vpop.permute.xlu0 %1209
  %1211 = vrot.lane.b32.xlu0 %v1135, 32
  %v1212 = vpop.permute.xlu0 %1211
  %1213 = vrot.lane.b32.xlu0 %v1142, 32
  %v1214 = vpop.permute.xlu0 %1213
  %1215 = vrot.lane.b32.xlu0 %v1149, 32
  %v1216 = vpop.permute.xlu0 %1215
  %1217 = vrot.lane.b32.xlu0 %v1156, 32
  %v1218 = vpop.permute.xlu0 %1217
  %1219 = vrot.lane.b32.xlu0 %v1163, 32
  %v1220 = vpop.permute.xlu0 %1219
  %1221 = vrot.lane.b32.xlu0 %v1170, 32
  %v1222 = vpop.permute.xlu0 %1221
  %1223 = vrot.lane.b32.xlu0 %v1177, 32
  %v1224 = vpop.permute.xlu0 %1223
  %1225 = vrot.lane.b32.xlu0 %v1184, 32
  %v1226 = vpop.permute.xlu0 %1225
  %1227 = vrot.lane.b32.xlu0 %v1191, 32
  %v1228 = vpop.permute.xlu0 %1227
  %1229 = vrot.lane.b32.xlu0 %v1198, 32
  %v1230 = vpop.permute.xlu0 %1229
  %v1247 = vunpack.c.l.b16 %v564
  %v1248 = vunpack.c.l.b16 %v565
  %v1249 = vunpack.c.l.b16 %v566
  %v1250 = vunpack.c.l.b16 %v567
  %v1251 = vunpack.c.l.b16 %v568
  %v1252 = vunpack.c.l.b16 %v569
  %v1253 = vunpack.c.l.b16 %v570
  %v1254 = vunpack.c.l.b16 %v571
  %v1255 = vunpack.c.l.b16 %v572
  %v1256 = vunpack.c.l.b16 %v573
  %v1257 = vunpack.c.l.b16 %v574
  %v1258 = vunpack.c.l.b16 %v575
  %v1259 = vunpack.c.l.b16 %v576
  %v1260 = vunpack.c.l.b16 %v577
  %v1261 = vunpack.c.l.b16 %v578
  %v1262 = vunpack.c.l.b16 %v579
  %v1263 = vpack.c.b16 %v1055, %v1247
  %v1264 = vpack.c.b16 %v1056, %v1248
  %v1265 = vpack.c.b16 %v1057, %v1249
  %v1266 = vpack.c.b16 %v1058, %v1250
  %v1267 = vpack.c.b16 %v1059, %v1251
  %v1268 = vpack.c.b16 %v1060, %v1252
  %v1269 = vpack.c.b16 %v1061, %v1253
  %v1270 = vpack.c.b16 %v1062, %v1254
  %v1271 = vpack.c.b16 %v1063, %v1255
  %v1272 = vpack.c.b16 %v1064, %v1256
  %v1273 = vpack.c.b16 %v1065, %v1257
  %v1274 = vpack.c.b16 %v1066, %v1258
  %v1275 = vpack.c.b16 %v1067, %v1259
  %v1276 = vpack.c.b16 %v1068, %v1260
  %v1277 = vpack.c.b16 %v1069, %v1261
  %v1278 = vpack.c.b16 %v1070, %v1262
  %v1279 = vrot.slane %v1263, 1
  %v1280 = vrot.slane %v1264, 1
  %v1281 = vrot.slane %v1265, 1
  %v1282 = vrot.slane %v1266, 1
  %v1283 = vrot.slane %v1267, 1
  %v1284 = vrot.slane %v1268, 1
  %v1285 = vrot.slane %v1269, 1
  %v1286 = vrot.slane %v1270, 1
  %v1287 = vrot.slane %v1271, 1
  %v1288 = vrot.slane %v1272, 1
  %v1289 = vrot.slane %v1273, 1
  %v1290 = vrot.slane %v1274, 1
  %v1291 = vrot.slane %v1275, 1
  %v1292 = vrot.slane %v1276, 1
  %v1293 = vrot.slane %v1277, 1
  %v1294 = vrot.slane %v1278, 1
  %1295 = vrot.lane.b32.xlu0 %v1279, 40
  %v1296 = vpop.permute.xlu0 %1295
  %1297 = vrot.lane.b32.xlu0 %v1280, 40
  %v1298 = vpop.permute.xlu0 %1297
  %1299 = vrot.lane.b32.xlu0 %v1281, 40
  %v1300 = vpop.permute.xlu0 %1299
  %1301 = vrot.lane.b32.xlu0 %v1282, 40
  %v1302 = vpop.permute.xlu0 %1301
  %1303 = vrot.lane.b32.xlu0 %v1283, 40
  %v1304 = vpop.permute.xlu0 %1303
  %1305 = vrot.lane.b32.xlu0 %v1284, 40
  %v1306 = vpop.permute.xlu0 %1305
  %1307 = vrot.lane.b32.xlu0 %v1285, 40
  %v1308 = vpop.permute.xlu0 %1307
  %1309 = vrot.lane.b32.xlu0 %v1286, 40
  %v1310 = vpop.permute.xlu0 %1309
  %1311 = vrot.lane.b32.xlu0 %v1287, 40
  %v1312 = vpop.permute.xlu0 %1311
  %1313 = vrot.lane.b32.xlu0 %v1288, 40
  %v1314 = vpop.permute.xlu0 %1313
  %1315 = vrot.lane.b32.xlu0 %v1289, 40
  %v1316 = vpop.permute.xlu0 %1315
  %1317 = vrot.lane.b32.xlu0 %v1290, 40
  %v1318 = vpop.permute.xlu0 %1317
  %1319 = vrot.lane.b32.xlu0 %v1291, 40
  %v1320 = vpop.permute.xlu0 %1319
  %1321 = vrot.lane.b32.xlu0 %v1292, 40
  %v1322 = vpop.permute.xlu0 %1321
  %1323 = vrot.lane.b32.xlu0 %v1293, 40
  %v1324 = vpop.permute.xlu0 %1323
  %1325 = vrot.lane.b32.xlu0 %v1294, 40
  %v1326 = vpop.permute.xlu0 %1325
  %v1343 = vunpack.c.l.b16 %v581
  %v1344 = vunpack.c.l.b16 %v582
  %v1345 = vunpack.c.l.b16 %v583
  %v1346 = vunpack.c.l.b16 %v584
  %v1347 = vunpack.c.l.b16 %v585
  %v1348 = vunpack.c.l.b16 %v586
  %v1349 = vunpack.c.l.b16 %v587
  %v1350 = vunpack.c.l.b16 %v588
  %v1351 = vunpack.c.l.b16 %v589
  %v1352 = vunpack.c.l.b16 %v590
  %v1353 = vunpack.c.l.b16 %v591
  %v1354 = vunpack.c.l.b16 %v592
  %v1355 = vunpack.c.l.b16 %v593
  %v1356 = vunpack.c.l.b16 %v594
  %v1357 = vunpack.c.l.b16 %v595
  %v1358 = vunpack.c.l.b16 %v596
  %v1359 = vpack.c.b16 %v1343, %v1343
  %v1360 = vpack.c.b16 %v1344, %v1344
  %v1361 = vpack.c.b16 %v1345, %v1345
  %v1362 = vpack.c.b16 %v1346, %v1346
  %v1363 = vpack.c.b16 %v1347, %v1347
  %v1364 = vpack.c.b16 %v1348, %v1348
  %v1365 = vpack.c.b16 %v1349, %v1349
  %v1366 = vpack.c.b16 %v1350, %v1350
  %v1367 = vpack.c.b16 %v1351, %v1351
  %v1368 = vpack.c.b16 %v1352, %v1352
  %v1369 = vpack.c.b16 %v1353, %v1353
  %v1370 = vpack.c.b16 %v1354, %v1354
  %v1371 = vpack.c.b16 %v1355, %v1355
  %v1372 = vpack.c.b16 %v1356, %v1356
  %v1373 = vpack.c.b16 %v1357, %v1357
  %v1374 = vpack.c.b16 %v1358, %v1358
  %1375 = vrot.lane.b32.xlu0 %v1359, 48
  %v1376 = vpop.permute.xlu0 %1375
  %1377 = vrot.lane.b32.xlu0 %v1360, 48
  %v1378 = vpop.permute.xlu0 %1377
  %1379 = vrot.lane.b32.xlu0 %v1361, 48
  %v1380 = vpop.permute.xlu0 %1379
  %1381 = vrot.lane.b32.xlu0 %v1362, 48
  %v1382 = vpop.permute.xlu0 %1381
  %1383 = vrot.lane.b32.xlu0 %v1363, 48
  %v1384 = vpop.permute.xlu0 %1383
  %1385 = vrot.lane.b32.xlu0 %v1364, 48
  %v1386 = vpop.permute.xlu0 %1385
  %1387 = vrot.lane.b32.xlu0 %v1365, 48
  %v1388 = vpop.permute.xlu0 %1387
  %1389 = vrot.lane.b32.xlu0 %v1366, 48
  %v1390 = vpop.permute.xlu0 %1389
  %1391 = vrot.lane.b32.xlu0 %v1367, 48
  %v1392 = vpop.permute.xlu0 %1391
  %1393 = vrot.lane.b32.xlu0 %v1368, 48
  %v1394 = vpop.permute.xlu0 %1393
  %1395 = vrot.lane.b32.xlu0 %v1369, 48
  %v1396 = vpop.permute.xlu0 %1395
  %1397 = vrot.lane.b32.xlu0 %v1370, 48
  %v1398 = vpop.permute.xlu0 %1397
  %1399 = vrot.lane.b32.xlu0 %v1371, 48
  %v1400 = vpop.permute.xlu0 %1399
  %1401 = vrot.lane.b32.xlu0 %v1372, 48
  %v1402 = vpop.permute.xlu0 %1401
  %1403 = vrot.lane.b32.xlu0 %v1373, 48
  %v1404 = vpop.permute.xlu0 %1403
  %1405 = vrot.lane.b32.xlu0 %v1374, 48
  %v1406 = vpop.permute.xlu0 %1405
  %v1423 = vunpack.c.l.b16 %v597
  %v1424 = vunpack.c.l.b16 %v598
  %v1425 = vunpack.c.l.b16 %v599
  %v1426 = vunpack.c.l.b16 %v600
  %v1427 = vunpack.c.l.b16 %v601
  %v1428 = vunpack.c.l.b16 %v602
  %v1429 = vunpack.c.l.b16 %v603
  %v1430 = vunpack.c.l.b16 %v604
  %v1431 = vunpack.c.l.b16 %v605
  %v1432 = vunpack.c.l.b16 %v606
  %v1433 = vunpack.c.l.b16 %v607
  %v1434 = vunpack.c.l.b16 %v608
  %v1435 = vunpack.c.l.b16 %v609
  %v1436 = vunpack.c.l.b16 %v610
  %v1437 = vunpack.c.l.b16 %v611
  %v1438 = vunpack.c.l.b16 %v612
  %v1439 = vpack.c.b16 %v1423, %v1343
  %v1440 = vpack.c.b16 %v1424, %v1344
  %v1441 = vpack.c.b16 %v1425, %v1345
  %v1442 = vpack.c.b16 %v1426, %v1346
  %v1443 = vpack.c.b16 %v1427, %v1347
  %v1444 = vpack.c.b16 %v1428, %v1348
  %v1445 = vpack.c.b16 %v1429, %v1349
  %v1446 = vpack.c.b16 %v1430, %v1350
  %v1447 = vpack.c.b16 %v1431, %v1351
  %v1448 = vpack.c.b16 %v1432, %v1352
  %v1449 = vpack.c.b16 %v1433, %v1353
  %v1450 = vpack.c.b16 %v1434, %v1354
  %v1451 = vpack.c.b16 %v1435, %v1355
  %v1452 = vpack.c.b16 %v1436, %v1356
  %v1453 = vpack.c.b16 %v1437, %v1357
  %v1454 = vpack.c.b16 %v1438, %v1358
  %v1456 = vshrl.u32 %v1439, 16
  %v1458 = vshll.u32 %v1439, 16
  %v1460 = vrot.slane %v1458, 1
  %v1461 = vor.u32 %v1456, %v1460
  %v1463 = vshrl.u32 %v1440, 16
  %v1465 = vshll.u32 %v1440, 16
  %v1467 = vrot.slane %v1465, 1
  %v1468 = vor.u32 %v1463, %v1467
  %v1470 = vshrl.u32 %v1441, 16
  %v1472 = vshll.u32 %v1441, 16
  %v1474 = vrot.slane %v1472, 1
  %v1475 = vor.u32 %v1470, %v1474
  %v1477 = vshrl.u32 %v1442, 16
  %v1479 = vshll.u32 %v1442, 16
  %v1481 = vrot.slane %v1479, 1
  %v1482 = vor.u32 %v1477, %v1481
  %v1484 = vshrl.u32 %v1443, 16
  %v1486 = vshll.u32 %v1443, 16
  %v1488 = vrot.slane %v1486, 1
  %v1489 = vor.u32 %v1484, %v1488
  %v1491 = vshrl.u32 %v1444, 16
  %v1493 = vshll.u32 %v1444, 16
  %v1495 = vrot.slane %v1493, 1
  %v1496 = vor.u32 %v1491, %v1495
  %v1498 = vshrl.u32 %v1445, 16
  %v1500 = vshll.u32 %v1445, 16
  %v1502 = vrot.slane %v1500, 1
  %v1503 = vor.u32 %v1498, %v1502
  %v1505 = vshrl.u32 %v1446, 16
  %v1507 = vshll.u32 %v1446, 16
  %v1509 = vrot.slane %v1507, 1
  %v1510 = vor.u32 %v1505, %v1509
  %v1512 = vshrl.u32 %v1447, 16
  %v1514 = vshll.u32 %v1447, 16
  %v1516 = vrot.slane %v1514, 1
  %v1517 = vor.u32 %v1512, %v1516
  %v1519 = vshrl.u32 %v1448, 16
  %v1521 = vshll.u32 %v1448, 16
  %v1523 = vrot.slane %v1521, 1
  %v1524 = vor.u32 %v1519, %v1523
  %v1526 = vshrl.u32 %v1449, 16
  %v1528 = vshll.u32 %v1449, 16
  %v1530 = vrot.slane %v1528, 1
  %v1531 = vor.u32 %v1526, %v1530
  %v1533 = vshrl.u32 %v1450, 16
  %v1535 = vshll.u32 %v1450, 16
  %v1537 = vrot.slane %v1535, 1
  %v1538 = vor.u32 %v1533, %v1537
  %v1540 = vshrl.u32 %v1451, 16
  %v1542 = vshll.u32 %v1451, 16
  %v1544 = vrot.slane %v1542, 1
  %v1545 = vor.u32 %v1540, %v1544
  %v1547 = vshrl.u32 %v1452, 16
  %v1549 = vshll.u32 %v1452, 16
  %v1551 = vrot.slane %v1549, 1
  %v1552 = vor.u32 %v1547, %v1551
  %v1554 = vshrl.u32 %v1453, 16
  %v1556 = vshll.u32 %v1453, 16
  %v1558 = vrot.slane %v1556, 1
  %v1559 = vor.u32 %v1554, %v1558
  %v1561 = vshrl.u32 %v1454, 16
  %v1563 = vshll.u32 %v1454, 16
  %v1565 = vrot.slane %v1563, 1
  %v1566 = vor.u32 %v1561, %v1565
  %1567 = vrot.lane.b32.xlu0 %v1461, 56
  %v1568 = vpop.permute.xlu0 %1567
  %1569 = vrot.lane.b32.xlu0 %v1468, 56
  %v1570 = vpop.permute.xlu0 %1569
  %1571 = vrot.lane.b32.xlu0 %v1475, 56
  %v1572 = vpop.permute.xlu0 %1571
  %1573 = vrot.lane.b32.xlu0 %v1482, 56
  %v1574 = vpop.permute.xlu0 %1573
  %1575 = vrot.lane.b32.xlu0 %v1489, 56
  %v1576 = vpop.permute.xlu0 %1575
  %1577 = vrot.lane.b32.xlu0 %v1496, 56
  %v1578 = vpop.permute.xlu0 %1577
  %1579 = vrot.lane.b32.xlu0 %v1503, 56
  %v1580 = vpop.permute.xlu0 %1579
  %1581 = vrot.lane.b32.xlu0 %v1510, 56
  %v1582 = vpop.permute.xlu0 %1581
  %1583 = vrot.lane.b32.xlu0 %v1517, 56
  %v1584 = vpop.permute.xlu0 %1583
  %1585 = vrot.lane.b32.xlu0 %v1524, 56
  %v1586 = vpop.permute.xlu0 %1585
  %1587 = vrot.lane.b32.xlu0 %v1531, 56
  %v1588 = vpop.permute.xlu0 %1587
  %1589 = vrot.lane.b32.xlu0 %v1538, 56
  %v1590 = vpop.permute.xlu0 %1589
  %1591 = vrot.lane.b32.xlu0 %v1545, 56
  %v1592 = vpop.permute.xlu0 %1591
  %1593 = vrot.lane.b32.xlu0 %v1552, 56
  %v1594 = vpop.permute.xlu0 %1593
  %1595 = vrot.lane.b32.xlu0 %v1559, 56
  %v1596 = vpop.permute.xlu0 %1595
  %1597 = vrot.lane.b32.xlu0 %v1566, 56
  %v1598 = vpop.permute.xlu0 %1597
  %v1615 = vunpack.c.l.b16 %v613
  %v1616 = vunpack.c.l.b16 %v614
  %v1617 = vunpack.c.l.b16 %v615
  %v1618 = vunpack.c.l.b16 %v616
  %v1619 = vunpack.c.l.b16 %v617
  %v1620 = vunpack.c.l.b16 %v618
  %v1621 = vunpack.c.l.b16 %v619
  %v1622 = vunpack.c.l.b16 %v620
  %v1623 = vunpack.c.l.b16 %v621
  %v1624 = vunpack.c.l.b16 %v622
  %v1625 = vunpack.c.l.b16 %v623
  %v1626 = vunpack.c.l.b16 %v624
  %v1627 = vunpack.c.l.b16 %v625
  %v1628 = vunpack.c.l.b16 %v626
  %v1629 = vunpack.c.l.b16 %v627
  %v1630 = vunpack.c.l.b16 %v628
  %v1631 = vpack.c.b16 %v1423, %v1615
  %v1632 = vpack.c.b16 %v1424, %v1616
  %v1633 = vpack.c.b16 %v1425, %v1617
  %v1634 = vpack.c.b16 %v1426, %v1618
  %v1635 = vpack.c.b16 %v1427, %v1619
  %v1636 = vpack.c.b16 %v1428, %v1620
  %v1637 = vpack.c.b16 %v1429, %v1621
  %v1638 = vpack.c.b16 %v1430, %v1622
  %v1639 = vpack.c.b16 %v1431, %v1623
  %v1640 = vpack.c.b16 %v1432, %v1624
  %v1641 = vpack.c.b16 %v1433, %v1625
  %v1642 = vpack.c.b16 %v1434, %v1626
  %v1643 = vpack.c.b16 %v1435, %v1627
  %v1644 = vpack.c.b16 %v1436, %v1628
  %v1645 = vpack.c.b16 %v1437, %v1629
  %v1646 = vpack.c.b16 %v1438, %v1630
  %v1647 = vrot.slane %v1631, 1
  %v1648 = vrot.slane %v1632, 1
  %v1649 = vrot.slane %v1633, 1
  %v1650 = vrot.slane %v1634, 1
  %v1651 = vrot.slane %v1635, 1
  %v1652 = vrot.slane %v1636, 1
  %v1653 = vrot.slane %v1637, 1
  %v1654 = vrot.slane %v1638, 1
  %v1655 = vrot.slane %v1639, 1
  %v1656 = vrot.slane %v1640, 1
  %v1657 = vrot.slane %v1641, 1
  %v1658 = vrot.slane %v1642, 1
  %v1659 = vrot.slane %v1643, 1
  %v1660 = vrot.slane %v1644, 1
  %v1661 = vrot.slane %v1645, 1
  %v1662 = vrot.slane %v1646, 1
  %1663 = vrot.lane.b32.xlu0 %v1647, 64
  %v1664 = vpop.permute.xlu0 %1663
  %1665 = vrot.lane.b32.xlu0 %v1648, 64
  %v1666 = vpop.permute.xlu0 %1665
  %1667 = vrot.lane.b32.xlu0 %v1649, 64
  %v1668 = vpop.permute.xlu0 %1667
  %1669 = vrot.lane.b32.xlu0 %v1650, 64
  %v1670 = vpop.permute.xlu0 %1669
  %1671 = vrot.lane.b32.xlu0 %v1651, 64
  %v1672 = vpop.permute.xlu0 %1671
  %1673 = vrot.lane.b32.xlu0 %v1652, 64
  %v1674 = vpop.permute.xlu0 %1673
  %1675 = vrot.lane.b32.xlu0 %v1653, 64
  %v1676 = vpop.permute.xlu0 %1675
  %1677 = vrot.lane.b32.xlu0 %v1654, 64
  %v1678 = vpop.permute.xlu0 %1677
  %1679 = vrot.lane.b32.xlu0 %v1655, 64
  %v1680 = vpop.permute.xlu0 %1679
  %1681 = vrot.lane.b32.xlu0 %v1656, 64
  %v1682 = vpop.permute.xlu0 %1681
  %1683 = vrot.lane.b32.xlu0 %v1657, 64
  %v1684 = vpop.permute.xlu0 %1683
  %1685 = vrot.lane.b32.xlu0 %v1658, 64
  %v1686 = vpop.permute.xlu0 %1685
  %1687 = vrot.lane.b32.xlu0 %v1659, 64
  %v1688 = vpop.permute.xlu0 %1687
  %1689 = vrot.lane.b32.xlu0 %v1660, 64
  %v1690 = vpop.permute.xlu0 %1689
  %1691 = vrot.lane.b32.xlu0 %v1661, 64
  %v1692 = vpop.permute.xlu0 %1691
  %1693 = vrot.lane.b32.xlu0 %v1662, 64
  %v1694 = vpop.permute.xlu0 %1693
  %vm1695 = vcmask 64512
  %v1698 = vsel %vm1695, %v484, %v832
  %v1701 = vsel %vm1695, %v485, %v834
  %v1704 = vsel %vm1695, %v486, %v836
  %v1707 = vsel %vm1695, %v487, %v838
  %v1710 = vsel %vm1695, %v488, %v840
  %v1713 = vsel %vm1695, %v489, %v842
  %v1716 = vsel %vm1695, %v490, %v844
  %v1719 = vsel %vm1695, %v491, %v846
  %v1722 = vsel %vm1695, %v492, %v848
  %v1725 = vsel %vm1695, %v493, %v850
  %v1728 = vsel %vm1695, %v494, %v852
  %v1731 = vsel %vm1695, %v495, %v854
  %v1734 = vsel %vm1695, %v496, %v856
  %v1737 = vsel %vm1695, %v497, %v858
  %v1740 = vsel %vm1695, %v498, %v860
  %v1743 = vsel %vm1695, %v499, %v862
  %vm1744 = vcmask 130048
  %v1746 = vsel %vm1744, %v1698, %v928
  %v1748 = vsel %vm1744, %v1701, %v930
  %v1750 = vsel %vm1744, %v1704, %v932
  %v1752 = vsel %vm1744, %v1707, %v934
  %v1754 = vsel %vm1744, %v1710, %v936
  %v1756 = vsel %vm1744, %v1713, %v938
  %v1758 = vsel %vm1744, %v1716, %v940
  %v1760 = vsel %vm1744, %v1719, %v942
  %v1762 = vsel %vm1744, %v1722, %v944
  %v1764 = vsel %vm1744, %v1725, %v946
  %v1766 = vsel %vm1744, %v1728, %v948
  %v1768 = vsel %vm1744, %v1731, %v950
  %v1770 = vsel %vm1744, %v1734, %v952
  %v1772 = vsel %vm1744, %v1737, %v954
  %v1774 = vsel %vm1744, %v1740, %v956
  %v1776 = vsel %vm1744, %v1743, %v958
  %vm1777 = vcmask 195584
  %v1779 = vsel %vm1777, %v1746, %v1008
  %v1781 = vsel %vm1777, %v1748, %v1010
  %v1783 = vsel %vm1777, %v1750, %v1012
  %v1785 = vsel %vm1777, %v1752, %v1014
  %v1787 = vsel %vm1777, %v1754, %v1016
  %v1789 = vsel %vm1777, %v1756, %v1018
  %v1791 = vsel %vm1777, %v1758, %v1020
  %v1793 = vsel %vm1777, %v1760, %v1022
  %v1795 = vsel %vm1777, %v1762, %v1024
  %v1797 = vsel %vm1777, %v1764, %v1026
  %v1799 = vsel %vm1777, %v1766, %v1028
  %v1801 = vsel %vm1777, %v1768, %v1030
  %v1803 = vsel %vm1777, %v1770, %v1032
  %v1805 = vsel %vm1777, %v1772, %v1034
  %v1807 = vsel %vm1777, %v1774, %v1036
  %v1809 = vsel %vm1777, %v1776, %v1038
  %vm1810 = vcmask 261120
  %v1812 = vsel %vm1810, %v1779, %v1200
  %v1814 = vsel %vm1810, %v1781, %v1202
  %v1816 = vsel %vm1810, %v1783, %v1204
  %v1818 = vsel %vm1810, %v1785, %v1206
  %v1820 = vsel %vm1810, %v1787, %v1208
  %v1822 = vsel %vm1810, %v1789, %v1210
  %v1824 = vsel %vm1810, %v1791, %v1212
  %v1826 = vsel %vm1810, %v1793, %v1214
  %v1828 = vsel %vm1810, %v1795, %v1216
  %v1830 = vsel %vm1810, %v1797, %v1218
  %v1832 = vsel %vm1810, %v1799, %v1220
  %v1834 = vsel %vm1810, %v1801, %v1222
  %v1836 = vsel %vm1810, %v1803, %v1224
  %v1838 = vsel %vm1810, %v1805, %v1226
  %v1840 = vsel %vm1810, %v1807, %v1228
  %v1842 = vsel %vm1810, %v1809, %v1230
  %vm1843 = vcmask 326656
  %v1845 = vsel %vm1843, %v1812, %v1296
  %v1847 = vsel %vm1843, %v1814, %v1298
  %v1849 = vsel %vm1843, %v1816, %v1300
  %v1851 = vsel %vm1843, %v1818, %v1302
  %v1853 = vsel %vm1843, %v1820, %v1304
  %v1855 = vsel %vm1843, %v1822, %v1306
  %v1857 = vsel %vm1843, %v1824, %v1308
  %v1859 = vsel %vm1843, %v1826, %v1310
  %v1861 = vsel %vm1843, %v1828, %v1312
  %v1863 = vsel %vm1843, %v1830, %v1314
  %v1865 = vsel %vm1843, %v1832, %v1316
  %v1867 = vsel %vm1843, %v1834, %v1318
  %v1869 = vsel %vm1843, %v1836, %v1320
  %v1871 = vsel %vm1843, %v1838, %v1322
  %v1873 = vsel %vm1843, %v1840, %v1324
  %v1875 = vsel %vm1843, %v1842, %v1326
  %vm1876 = vcmask 392192
  %v1878 = vsel %vm1876, %v1845, %v1376
  %v1880 = vsel %vm1876, %v1847, %v1378
  %v1882 = vsel %vm1876, %v1849, %v1380
  %v1884 = vsel %vm1876, %v1851, %v1382
  %v1886 = vsel %vm1876, %v1853, %v1384
  %v1888 = vsel %vm1876, %v1855, %v1386
  %v1890 = vsel %vm1876, %v1857, %v1388
  %v1892 = vsel %vm1876, %v1859, %v1390
  %v1894 = vsel %vm1876, %v1861, %v1392
  %v1896 = vsel %vm1876, %v1863, %v1394
  %v1898 = vsel %vm1876, %v1865, %v1396
  %v1900 = vsel %vm1876, %v1867, %v1398
  %v1902 = vsel %vm1876, %v1869, %v1400
  %v1904 = vsel %vm1876, %v1871, %v1402
  %v1906 = vsel %vm1876, %v1873, %v1404
  %v1908 = vsel %vm1876, %v1875, %v1406
  %vm1909 = vcmask 457728
  %v1911 = vsel %vm1909, %v1878, %v1568
  %v1913 = vsel %vm1909, %v1880, %v1570
  %v1915 = vsel %vm1909, %v1882, %v1572
  %v1917 = vsel %vm1909, %v1884, %v1574
  %v1919 = vsel %vm1909, %v1886, %v1576
  %v1921 = vsel %vm1909, %v1888, %v1578
  %v1923 = vsel %vm1909, %v1890, %v1580
  %v1925 = vsel %vm1909, %v1892, %v1582
  %v1927 = vsel %vm1909, %v1894, %v1584
  %v1929 = vsel %vm1909, %v1896, %v1586
  %v1931 = vsel %vm1909, %v1898, %v1588
  %v1933 = vsel %vm1909, %v1900, %v1590
  %v1935 = vsel %vm1909, %v1902, %v1592
  %v1937 = vsel %vm1909, %v1904, %v1594
  %v1939 = vsel %vm1909, %v1906, %v1596
  %v1941 = vsel %vm1909, %v1908, %v1598
  %vm1942 = vcmask 523264
  %v1944 = vsel %vm1942, %v1911, %v1664
  %v1946 = vsel %vm1942, %v1913, %v1666
  %v1948 = vsel %vm1942, %v1915, %v1668
  %v1950 = vsel %vm1942, %v1917, %v1670
  %v1952 = vsel %vm1942, %v1919, %v1672
  %v1954 = vsel %vm1942, %v1921, %v1674
  %v1956 = vsel %vm1942, %v1923, %v1676
  %v1958 = vsel %vm1942, %v1925, %v1678
  %v1960 = vsel %vm1942, %v1927, %v1680
  %v1962 = vsel %vm1942, %v1929, %v1682
  %v1964 = vsel %vm1942, %v1931, %v1684
  %v1966 = vsel %vm1942, %v1933, %v1686
  %v1968 = vsel %vm1942, %v1935, %v1688
  %v1970 = vsel %vm1942, %v1937, %v1690
  %v1972 = vsel %vm1942, %v1939, %v1692
  %v1974 = vsel %vm1942, %v1941, %v1694
  %v1976 = vlaneseq
  %v1977 = vshrl.u32 %v1976, 7
  %v1978 = vsub.s32 0, %v1977
  %v1979 = vrot.slane %v638, %v1978
  %v1997 = vunpack.c.l.b16 %v1944
  %v1998 = vunpack.c.l.b16 %v1946
  %v1999 = vunpack.c.l.b16 %v1948
  %v2000 = vunpack.c.l.b16 %v1950
  %v2001 = vunpack.c.l.b16 %v1952
  %v2002 = vunpack.c.l.b16 %v1954
  %v2003 = vunpack.c.l.b16 %v1956
  %v2004 = vunpack.c.l.b16 %v1958
  %v2005 = vunpack.c.l.b16 %v1960
  %v2006 = vunpack.c.l.b16 %v1962
  %v2007 = vunpack.c.l.b16 %v1964
  %v2008 = vunpack.c.l.b16 %v1966
  %v2009 = vunpack.c.l.b16 %v1968
  %v2010 = vunpack.c.l.b16 %v1970
  %v2011 = vunpack.c.l.b16 %v1972
  %v2012 = vunpack.c.l.b16 %v1974
  %v2013 = vpack.c.b16 %v1998, %v1997
  %v2014 = vpack.c.b16 %v2000, %v1999
  %v2015 = vpack.c.b16 %v2002, %v2001
  %v2016 = vpack.c.b16 %v2004, %v2003
  %v2017 = vpack.c.b16 %v2006, %v2005
  %v2018 = vpack.c.b16 %v2008, %v2007
  %v2019 = vpack.c.b16 %v2010, %v2009
  %v2020 = vpack.c.b16 %v2012, %v2011
  %v2030 = vunpack.c.l.b16 %v629
  %v2031 = vunpack.c.l.b16 %v630
  %v2032 = vunpack.c.l.b16 %v631
  %v2033 = vunpack.c.l.b16 %v632
  %v2034 = vunpack.c.l.b16 %v633
  %v2035 = vunpack.c.l.b16 %v634
  %v2036 = vunpack.c.l.b16 %v635
  %v2037 = vunpack.c.l.b16 %v636
  %v2038 = vunpack.c.l.b16 %v637
  %v2039 = vpack.c.b16 %v2031, %v2030
  %v2040 = vpack.c.b16 %v2033, %v2032
  %v2041 = vpack.c.b16 %v2035, %v2034
  %v2042 = vpack.c.b16 %v2037, %v2036
  %v2043 = vpack.c.b16 %v2038, %v2038
  %vm2048 = vcmask 588800
  %v2050 = vsel %vm2048, %v2013, 0
  %v2053 = vsel %vm2048, %v2014, 0
  %v2056 = vsel %vm2048, %v2015, 0
  %v2059 = vsel %vm2048, %v2016, 0
  %v2062 = vsel %vm2048, %v2017, 0
  %v2065 = vsel %vm2048, %v2018, 0
  %v2068 = vsel %vm2048, %v2019, 0
  %v2071 = vsel %vm2048, %v2020, 0
  %vm2073 = vcmask 1043456
  %v2075 = vsel %vm2073, %v2043, 0
  %2077 = vmatprep.subr.bf16.mxu0 0
  %2078 = vmatpush1.bf16.msra.mxu0 0
  %2079 = vmatprep.subr.bf16.mxu0 0
  %2080 = vmatpush1.bf16.msra.mxu0 0
  %2081 = vmatprep.subr.bf16.mxu0 0
  %2082 = vmatpush1.bf16.msra.mxu0 0
  %2083 = vmatprep.subr.bf16.mxu0 0
  %2084 = vmatpush1.bf16.msra.mxu0 %v2075
  %2085 = vmatprep.subr.bf16.mxu0 0
  %2086 = vmatpush1.bf16.msra.mxu0 %v2042
  %2087 = vmatprep.subr.bf16.mxu0 0
  %2088 = vmatpush1.bf16.msra.mxu0 %v2041
  %2089 = vmatprep.subr.bf16.mxu0 0
  %2090 = vmatpush1.bf16.msra.mxu0 %v2040
  %2091 = vmatprep.subr.bf16.mxu0 0
  %2092 = vmatpush1.bf16.msra.mxu0 %v2039
  %2093 = vmatprep.subr.bf16.mxu0 0
  %2094 = vmatpush2.bf16.msra.mxu0 0
  %2095 = vmatprep.subr.bf16.mxu0 0
  %2096 = vmatpush2.bf16.msra.mxu0 0
  %2097 = vmatprep.subr.bf16.mxu0 0
  %2098 = vmatpush2.bf16.msra.mxu0 0
  %2099 = vmatprep.subr.bf16.mxu0 0
  %2100 = vmatpush2.bf16.msra.mxu0 0
  %2101 = vmatprep.subr.bf16.mxu0 0
  %2102 = vmatpush2.bf16.msra.mxu0 0
  %2103 = vmatprep.subr.bf16.mxu0 0
  %2104 = vmatpush2.bf16.msra.mxu0 0
  %2105 = vmatprep.subr.bf16.mxu0 0
  %2106 = vmatpush2.bf16.msra.mxu0 0
  %2107 = vmatprep.subr.bf16.mxu0 0
  %2108 = vmatpush2.bf16.msra.mxu0 0
  %2109 = vmatprep.mubr.bf16.mxu0 0
  %2110 = vmatmul.mubr.bf16.gmra.mxu0 %v2050
  %v2111 = vpop.f32.mrf.mxu0
  %v2112 = vadd.f32 %v1979, %v2111
  %v2113 = vpop.f32.mrf.mxu0
  %v2114 = vpop.f32.mrf.mxu0
  %v2115 = vadd.f32 %v1979, %v2114
  %v2116 = vpop.f32.mrf.mxu0
  %2117 = vmatprep.mubr.bf16.mxu0 0
  %2118 = vmatmul.mubr.bf16.gmra.mxu0 %v2053
  %v2119 = vpop.f32.mrf.mxu0
  %v2120 = vadd.f32 %v1979, %v2119
  %v2121 = vpop.f32.mrf.mxu0
  %v2122 = vpop.f32.mrf.mxu0
  %v2123 = vadd.f32 %v1979, %v2122
  %v2124 = vpop.f32.mrf.mxu0
  %2125 = vmatprep.mubr.bf16.mxu0 0
  %2126 = vmatmul.mubr.bf16.gmra.mxu0 %v2056
  %v2127 = vpop.f32.mrf.mxu0
  %v2128 = vadd.f32 %v1979, %v2127
  %v2129 = vpop.f32.mrf.mxu0
  %v2130 = vpop.f32.mrf.mxu0
  %v2131 = vadd.f32 %v1979, %v2130
  %v2132 = vpop.f32.mrf.mxu0
  %2133 = vmatprep.mubr.bf16.mxu0 0
  %2134 = vmatmul.mubr.bf16.gmra.mxu0 %v2059
  %v2135 = vpop.f32.mrf.mxu0
  %v2136 = vadd.f32 %v1979, %v2135
  %v2137 = vpop.f32.mrf.mxu0
  %v2138 = vpop.f32.mrf.mxu0
  %v2139 = vadd.f32 %v1979, %v2138
  %v2140 = vpop.f32.mrf.mxu0
  %2141 = vmatprep.mubr.bf16.mxu0 0
  %2142 = vmatmul.mubr.bf16.gmra.mxu0 %v2062
  %v2143 = vpop.f32.mrf.mxu0
  %v2144 = vadd.f32 %v1979, %v2143
  %v2145 = vpop.f32.mrf.mxu0
  %v2146 = vpop.f32.mrf.mxu0
  %v2147 = vadd.f32 %v1979, %v2146
  %v2148 = vpop.f32.mrf.mxu0
  %2149 = vmatprep.mubr.bf16.mxu0 0
  %2150 = vmatmul.mubr.bf16.gmra.mxu0 %v2065
  %v2151 = vpop.f32.mrf.mxu0
  %v2152 = vadd.f32 %v1979, %v2151
  %v2153 = vpop.f32.mrf.mxu0
  %v2154 = vpop.f32.mrf.mxu0
  %v2155 = vadd.f32 %v1979, %v2154
  %v2156 = vpop.f32.mrf.mxu0
  %2157 = vmatprep.mubr.bf16.mxu0 0
  %2158 = vmatmul.mubr.bf16.gmra.mxu0 %v2068
  %v2159 = vpop.f32.mrf.mxu0
  %v2160 = vadd.f32 %v1979, %v2159
  %v2161 = vpop.f32.mrf.mxu0
  %v2162 = vpop.f32.mrf.mxu0
  %v2163 = vadd.f32 %v1979, %v2162
  %v2164 = vpop.f32.mrf.mxu0
  %2165 = vmatprep.mubr.bf16.mxu0 0
  %2166 = vmatmul.mubr.bf16.gmra.mxu0 %v2071
  %v2167 = vpop.f32.mrf.mxu0
  %v2168 = vadd.f32 %v1979, %v2167
  %v2169 = vpop.f32.mrf.mxu0
  %v2170 = vpop.f32.mrf.mxu0
  %v2171 = vadd.f32 %v1979, %v2170
  %v2172 = vpop.f32.mrf.mxu0
  %2173 = vdwg.mxu0
  %v2174 = vsel %vm1695, %v2112, 0.0
  %v2175 = vsel %vm1695, %v2115, 0.0
  %v2176 = vadd.f32 %v2174, %v2175
  %v2177 = vsel %vm1695, %v2120, 0.0
  %v2178 = vadd.f32 %v2176, %v2177
  %v2179 = vsel %vm1695, %v2123, 0.0
  %v2180 = vadd.f32 %v2178, %v2179
  %v2181 = vsel %vm1695, %v2128, 0.0
  %v2182 = vadd.f32 %v2180, %v2181
  %v2183 = vsel %vm1695, %v2131, 0.0
  %v2184 = vadd.f32 %v2182, %v2183
  %v2185 = vsel %vm1695, %v2136, 0.0
  %v2186 = vadd.f32 %v2184, %v2185
  %v2187 = vsel %vm1695, %v2139, 0.0
  %v2188 = vadd.f32 %v2186, %v2187
  %v2189 = vsel %vm1695, %v2144, 0.0
  %v2190 = vadd.f32 %v2188, %v2189
  %v2191 = vsel %vm1695, %v2147, 0.0
  %v2192 = vadd.f32 %v2190, %v2191
  %v2193 = vsel %vm1695, %v2152, 0.0
  %v2194 = vadd.f32 %v2192, %v2193
  %v2195 = vsel %vm1695, %v2155, 0.0
  %v2196 = vadd.f32 %v2194, %v2195
  %v2197 = vsel %vm1695, %v2160, 0.0
  %v2198 = vadd.f32 %v2196, %v2197
  %v2199 = vsel %vm1695, %v2163, 0.0
  %v2200 = vadd.f32 %v2198, %v2199
  %v2201 = vsel %vm1695, %v2168, 0.0
  %v2202 = vadd.f32 %v2200, %v2201
  %v2203 = vsel %vm1695, %v2171, 0.0
  %v2204 = vadd.f32 %v2202, %v2203
  %v2205 = vrot.slane %v2204, 4
  %v2206 = vadd.f32 %v2204, %v2205
  %v2207 = vrot.slane %v2206, 2
  %v2208 = vadd.f32 %v2206, %v2207
  %v2209 = vrot.slane %v2208, 1
  %v2210 = vadd.f32 %v2208, %v2209
  %v2211 = vrcp.pop 128.0
  %v2212 = vmul.f32 %v2210, %v2211
  %v2213 = vsub.f32 %v2112, %v2212
  %v2214 = vsub.f32 %v2115, %v2212
  %v2215 = vsub.f32 %v2120, %v2212
  %v2216 = vsub.f32 %v2123, %v2212
  %v2217 = vsub.f32 %v2128, %v2212
  %v2218 = vsub.f32 %v2131, %v2212
  %v2219 = vsub.f32 %v2136, %v2212
  %v2220 = vsub.f32 %v2139, %v2212
  %v2221 = vsub.f32 %v2144, %v2212
  %v2222 = vsub.f32 %v2147, %v2212
  %v2223 = vsub.f32 %v2152, %v2212
  %v2224 = vsub.f32 %v2155, %v2212
  %v2225 = vsub.f32 %v2160, %v2212
  %v2226 = vsub.f32 %v2163, %v2212
  %v2227 = vsub.f32 %v2168, %v2212
  %v2228 = vsub.f32 %v2171, %v2212
  %v2229 = vmul.f32 %v2213, %v2213
  %v2230 = vmul.f32 %v2214, %v2214
  %v2231 = vmul.f32 %v2215, %v2215
  %v2232 = vmul.f32 %v2216, %v2216
  %v2233 = vmul.f32 %v2217, %v2217
  %v2234 = vmul.f32 %v2218, %v2218
  %v2235 = vmul.f32 %v2219, %v2219
  %v2236 = vmul.f32 %v2220, %v2220
  %v2237 = vmul.f32 %v2221, %v2221
  %v2238 = vmul.f32 %v2222, %v2222
  %v2239 = vmul.f32 %v2223, %v2223
  %v2240 = vmul.f32 %v2224, %v2224
  %v2241 = vmul.f32 %v2225, %v2225
  %v2242 = vmul.f32 %v2226, %v2226
  %v2243 = vmul.f32 %v2227, %v2227
  %v2244 = vmul.f32 %v2228, %v2228
  %v2245 = vsel %vm1695, %v2229, 0.0
  %v2246 = vsel %vm1695, %v2230, 0.0
  %v2247 = vadd.f32 %v2245, %v2246
  %v2248 = vsel %vm1695, %v2231, 0.0
  %v2249 = vadd.f32 %v2247, %v2248
  %v2250 = vsel %vm1695, %v2232, 0.0
  %v2251 = vadd.f32 %v2249, %v2250
  %v2252 = vsel %vm1695, %v2233, 0.0
  %v2253 = vadd.f32 %v2251, %v2252
  %v2254 = vsel %vm1695, %v2234, 0.0
  %v2255 = vadd.f32 %v2253, %v2254
  %v2256 = vsel %vm1695, %v2235, 0.0
  %v2257 = vadd.f32 %v2255, %v2256
  %v2258 = vsel %vm1695, %v2236, 0.0
  %v2259 = vadd.f32 %v2257, %v2258
  %v2260 = vsel %vm1695, %v2237, 0.0
  %v2261 = vadd.f32 %v2259, %v2260
  %v2262 = vsel %vm1695, %v2238, 0.0
  %v2263 = vadd.f32 %v2261, %v2262
  %v2264 = vsel %vm1695, %v2239, 0.0
  %v2265 = vadd.f32 %v2263, %v2264
  %v2266 = vsel %vm1695, %v2240, 0.0
  %v2267 = vadd.f32 %v2265, %v2266
  %v2268 = vsel %vm1695, %v2241, 0.0
  %v2269 = vadd.f32 %v2267, %v2268
  %v2270 = vsel %vm1695, %v2242, 0.0
  %v2271 = vadd.f32 %v2269, %v2270
  %v2272 = vsel %vm1695, %v2243, 0.0
  %v2273 = vadd.f32 %v2271, %v2272
  %v2274 = vsel %vm1695, %v2244, 0.0
  %v2275 = vadd.f32 %v2273, %v2274
  %v2276 = vrot.slane %v2275, 4
  %v2277 = vadd.f32 %v2275, %v2276
  %v2278 = vrot.slane %v2277, 2
  %v2279 = vadd.f32 %v2277, %v2278
  %v2280 = vrot.slane %v2279, 1
  %v2281 = vadd.f32 %v2279, %v2280
  %v2282 = vmul.f32 %v2281, %v2211
  %v2283 = vld [vmem:[%s3] sm:$0x1]
  %v2284 = vadd.f32 %v2282, 1e-05
  %v2285 = vrsqrt.pop %v2284
  %v2286 = vmul.f32 %v2283, %v2285
  %v2287 = vld [vmem:[%s4] sm:$0x1]
  %v2288 = vmul.f32 %v2212, %v2286
  %v2289 = vsub.f32 %v2287, %v2288
  %v2291 = vlaneseq
  %v2292 = vshrl.u32 %v2291, 7
  %v2293 = vsub.s32 0, %v2292
  %v2294 = vrot.slane %v2286, %v2293
  %v2296 = vmul.f32 %v2112, %v2294
  %v2297 = vmul.f32 %v2115, %v2294
  %v2298 = vmul.f32 %v2120, %v2294
  %v2299 = vmul.f32 %v2123, %v2294
  %v2300 = vmul.f32 %v2128, %v2294
  %v2301 = vmul.f32 %v2131, %v2294
  %v2302 = vmul.f32 %v2136, %v2294
  %v2303 = vmul.f32 %v2139, %v2294
  %v2304 = vmul.f32 %v2144, %v2294
  %v2305 = vmul.f32 %v2147, %v2294
  %v2306 = vmul.f32 %v2152, %v2294
  %v2307 = vmul.f32 %v2155, %v2294
  %v2308 = vmul.f32 %v2160, %v2294
  %v2309 = vmul.f32 %v2163, %v2294
  %v2310 = vmul.f32 %v2168, %v2294
  %v2311 = vmul.f32 %v2171, %v2294
  %v2313 = vlaneseq
  %v2314 = vshrl.u32 %v2313, 7
  %v2315 = vsub.s32 0, %v2314
  %v2316 = vrot.slane %v2289, %v2315
  %v2318 = vadd.f32 %v2296, %v2316
  %v2319 = vadd.f32 %v2297, %v2316
  %v2320 = vadd.f32 %v2298, %v2316
  %v2321 = vadd.f32 %v2299, %v2316
  %v2322 = vadd.f32 %v2300, %v2316
  %v2323 = vadd.f32 %v2301, %v2316
  %v2324 = vadd.f32 %v2302, %v2316
  %v2325 = vadd.f32 %v2303, %v2316
  %v2326 = vadd.f32 %v2304, %v2316
  %v2327 = vadd.f32 %v2305, %v2316
  %v2328 = vadd.f32 %v2306, %v2316
  %v2329 = vadd.f32 %v2307, %v2316
  %v2330 = vadd.f32 %v2308, %v2316
  %v2331 = vadd.f32 %v2309, %v2316
  %v2332 = vadd.f32 %v2310, %v2316
  %v2333 = vadd.f32 %v2311, %v2316
  %v2334 = vmax.f32 %v2318, 0.0
  %v2335 = vmax.f32 %v2319, 0.0
  %v2336 = vmax.f32 %v2320, 0.0
  %v2337 = vmax.f32 %v2321, 0.0
  %v2338 = vmax.f32 %v2322, 0.0
  %v2339 = vmax.f32 %v2323, 0.0
  %v2340 = vmax.f32 %v2324, 0.0
  %v2341 = vmax.f32 %v2325, 0.0
  %v2342 = vmax.f32 %v2326, 0.0
  %v2343 = vmax.f32 %v2327, 0.0
  %v2344 = vmax.f32 %v2328, 0.0
  %v2345 = vmax.f32 %v2329, 0.0
  %v2346 = vmax.f32 %v2330, 0.0
  %v2347 = vmax.f32 %v2331, 0.0
  %v2348 = vmax.f32 %v2332, 0.0
  %v2349 = vmax.f32 %v2333, 0.0
  %v2350 = vpack.c.bf16 %v2334, %v2334
  %v2351 = vpack.c.bf16 %v2335, %v2335
  %v2352 = vpack.c.bf16 %v2336, %v2336
  %v2353 = vpack.c.bf16 %v2337, %v2337
  %v2354 = vpack.c.bf16 %v2338, %v2338
  %v2355 = vpack.c.bf16 %v2339, %v2339
  %v2356 = vpack.c.bf16 %v2340, %v2340
  %v2357 = vpack.c.bf16 %v2341, %v2341
  %v2358 = vpack.c.bf16 %v2342, %v2342
  %v2359 = vpack.c.bf16 %v2343, %v2343
  %v2360 = vpack.c.bf16 %v2344, %v2344
  %v2361 = vpack.c.bf16 %v2345, %v2345
  %v2362 = vpack.c.bf16 %v2346, %v2346
  %v2363 = vpack.c.bf16 %v2347, %v2347
  %v2364 = vpack.c.bf16 %v2348, %v2348
  %v2365 = vpack.c.bf16 %v2349, %v2349
  %v2382 = vunpack.c.l.b16 %v2350
  %v2383 = vunpack.c.l.b16 %v2351
  %v2384 = vunpack.c.l.b16 %v2352
  %v2385 = vunpack.c.l.b16 %v2353
  %v2386 = vunpack.c.l.b16 %v2354
  %v2387 = vunpack.c.l.b16 %v2355
  %v2388 = vunpack.c.l.b16 %v2356
  %v2389 = vunpack.c.l.b16 %v2357
  %v2390 = vunpack.c.l.b16 %v2358
  %v2391 = vunpack.c.l.b16 %v2359
  %v2392 = vunpack.c.l.b16 %v2360
  %v2393 = vunpack.c.l.b16 %v2361
  %v2394 = vunpack.c.l.b16 %v2362
  %v2395 = vunpack.c.l.b16 %v2363
  %v2396 = vunpack.c.l.b16 %v2364
  %v2397 = vunpack.c.l.b16 %v2365
  %v2398 = vpack.c.b16 %v2382, %v2382
  %v2399 = vpack.c.b16 %v2383, %v2383
  %v2400 = vpack.c.b16 %v2384, %v2384
  %v2401 = vpack.c.b16 %v2385, %v2385
  %v2402 = vpack.c.b16 %v2386, %v2386
  %v2403 = vpack.c.b16 %v2387, %v2387
  %v2404 = vpack.c.b16 %v2388, %v2388
  %v2405 = vpack.c.b16 %v2389, %v2389
  %v2406 = vpack.c.b16 %v2390, %v2390
  %v2407 = vpack.c.b16 %v2391, %v2391
  %v2408 = vpack.c.b16 %v2392, %v2392
  %v2409 = vpack.c.b16 %v2393, %v2393
  %v2410 = vpack.c.b16 %v2394, %v2394
  %v2411 = vpack.c.b16 %v2395, %v2395
  %v2412 = vpack.c.b16 %v2396, %v2396
  %v2413 = vpack.c.b16 %v2397, %v2397
  %v2415 = vshrl.u32 %v2398, 16
  %v2417 = vrot.slane %v2415, 7
  %v2418 = vshll.u32 %v2398, 16
  %v2420 = vor.u32 %v2417, %v2418
  %v2421 = vrot.slane %v2417, 4
  %v2423 = vshrl.u32 %v2399, 16
  %v2425 = vrot.slane %v2423, 7
  %v2426 = vshll.u32 %v2399, 16
  %v2428 = vor.u32 %v2425, %v2426
  %v2429 = vrot.slane %v2425, 4
  %v2431 = vshrl.u32 %v2400, 16
  %v2433 = vrot.slane %v2431, 7
  %v2434 = vshll.u32 %v2400, 16
  %v2436 = vor.u32 %v2433, %v2434
  %v2437 = vrot.slane %v2433, 4
  %v2439 = vshrl.u32 %v2401, 16
  %v2441 = vrot.slane %v2439, 7
  %v2442 = vshll.u32 %v2401, 16
  %v2444 = vor.u32 %v2441, %v2442
  %v2445 = vrot.slane %v2441, 4
  %v2447 = vshrl.u32 %v2402, 16
  %v2449 = vrot.slane %v2447, 7
  %v2450 = vshll.u32 %v2402, 16
  %v2452 = vor.u32 %v2449, %v2450
  %v2453 = vrot.slane %v2449, 4
  %v2455 = vshrl.u32 %v2403, 16
  %v2457 = vrot.slane %v2455, 7
  %v2458 = vshll.u32 %v2403, 16
  %v2460 = vor.u32 %v2457, %v2458
  %v2461 = vrot.slane %v2457, 4
  %v2463 = vshrl.u32 %v2404, 16
  %v2465 = vrot.slane %v2463, 7
  %v2466 = vshll.u32 %v2404, 16
  %v2468 = vor.u32 %v2465, %v2466
  %v2469 = vrot.slane %v2465, 4
  %v2471 = vshrl.u32 %v2405, 16
  %v2473 = vrot.slane %v2471, 7
  %v2474 = vshll.u32 %v2405, 16
  %v2476 = vor.u32 %v2473, %v2474
  %v2477 = vrot.slane %v2473, 4
  %v2479 = vshrl.u32 %v2406, 16
  %v2481 = vrot.slane %v2479, 7
  %v2482 = vshll.u32 %v2406, 16
  %v2484 = vor.u32 %v2481, %v2482
  %v2485 = vrot.slane %v2481, 4
  %v2487 = vshrl.u32 %v2407, 16
  %v2489 = vrot.slane %v2487, 7
  %v2490 = vshll.u32 %v2407, 16
  %v2492 = vor.u32 %v2489, %v2490
  %v2493 = vrot.slane %v2489, 4
  %v2495 = vshrl.u32 %v2408, 16
  %v2497 = vrot.slane %v2495, 7
  %v2498 = vshll.u32 %v2408, 16
  %v2500 = vor.u32 %v2497, %v2498
  %v2501 = vrot.slane %v2497, 4
  %v2503 = vshrl.u32 %v2409, 16
  %v2505 = vrot.slane %v2503, 7
  %v2506 = vshll.u32 %v2409, 16
  %v2508 = vor.u32 %v2505, %v2506
  %v2509 = vrot.slane %v2505, 4
  %v2511 = vshrl.u32 %v2410, 16
  %v2513 = vrot.slane %v2511, 7
  %v2514 = vshll.u32 %v2410, 16
  %v2516 = vor.u32 %v2513, %v2514
  %v2517 = vrot.slane %v2513, 4
  %v2519 = vshrl.u32 %v2411, 16
  %v2521 = vrot.slane %v2519, 7
  %v2522 = vshll.u32 %v2411, 16
  %v2524 = vor.u32 %v2521, %v2522
  %v2525 = vrot.slane %v2521, 4
  %v2527 = vshrl.u32 %v2412, 16
  %v2529 = vrot.slane %v2527, 7
  %v2530 = vshll.u32 %v2412, 16
  %v2532 = vor.u32 %v2529, %v2530
  %v2533 = vrot.slane %v2529, 4
  %v2535 = vshrl.u32 %v2413, 16
  %v2537 = vrot.slane %v2535, 7
  %v2538 = vshll.u32 %v2413, 16
  %v2540 = vor.u32 %v2537, %v2538
  %v2541 = vrot.slane %v2537, 4
  %s2574 = scalar_lea.vmem [#allocation3], 8
  %v2575 = vld [vmem:[%s2574] sm:$0xf]
  %v2576 = vsel %vm276, %v2420, %v2575
  %2577 = vst [vmem:[%s2574] sm:$0xf] %v2576
  %v2578 = vld [vmem:[%s2574 + $0x4] sm:$0x1]
  %v2579 = vsel %vm282, %v2421, %v2578
  %2580 = vst [vmem:[%s2574 + $0x4] sm:$0x1] %v2579
  %v2581 = vld [vmem:[%s2574 + $0x8] sm:$0xf]
  %v2582 = vsel %vm276, %v2428, %v2581
  %2583 = vst [vmem:[%s2574 + $0x8] sm:$0xf] %v2582
  %v2584 = vld [vmem:[%s2574 + $0xc] sm:$0x1]
  %v2585 = vsel %vm282, %v2429, %v2584
  %2586 = vst [vmem:[%s2574 + $0xc] sm:$0x1] %v2585
  %v2587 = vld [vmem:[%s2574 + $0x10] sm:$0xf]
  %v2588 = vsel %vm276, %v2436, %v2587
  %2589 = vst [vmem:[%s2574 + $0x10] sm:$0xf] %v2588
  %v2590 = vld [vmem:[%s2574 + $0x14] sm:$0x1]
  %v2591 = vsel %vm282, %v2437, %v2590
  %2592 = vst [vmem:[%s2574 + $0x14] sm:$0x1] %v2591
  %v2593 = vld [vmem:[%s2574 + $0x18] sm:$0xf]
  %v2594 = vsel %vm276, %v2444, %v2593
  %2595 = vst [vmem:[%s2574 + $0x18] sm:$0xf] %v2594
  %v2596 = vld [vmem:[%s2574 + $0x1c] sm:$0x1]
  %v2597 = vsel %vm282, %v2445, %v2596
  %2598 = vst [vmem:[%s2574 + $0x1c] sm:$0x1] %v2597
  %v2599 = vld [vmem:[%s2574 + $0x20] sm:$0xf]
  %v2600 = vsel %vm276, %v2452, %v2599
  %2601 = vst [vmem:[%s2574 + $0x20] sm:$0xf] %v2600
  %v2602 = vld [vmem:[%s2574 + $0x24] sm:$0x1]
  %v2603 = vsel %vm282, %v2453, %v2602
  %2604 = vst [vmem:[%s2574 + $0x24] sm:$0x1] %v2603
  %v2605 = vld [vmem:[%s2574 + $0x28] sm:$0xf]
  %v2606 = vsel %vm276, %v2460, %v2605
  %2607 = vst [vmem:[%s2574 + $0x28] sm:$0xf] %v2606
  %v2608 = vld [vmem:[%s2574 + $0x2c] sm:$0x1]
  %v2609 = vsel %vm282, %v2461, %v2608
  %2610 = vst [vmem:[%s2574 + $0x2c] sm:$0x1] %v2609
  %v2611 = vld [vmem:[%s2574 + $0x30] sm:$0xf]
  %v2612 = vsel %vm276, %v2468, %v2611
  %2613 = vst [vmem:[%s2574 + $0x30] sm:$0xf] %v2612
  %v2614 = vld [vmem:[%s2574 + $0x34] sm:$0x1]
  %v2615 = vsel %vm282, %v2469, %v2614
  %2616 = vst [vmem:[%s2574 + $0x34] sm:$0x1] %v2615
  %v2617 = vld [vmem:[%s2574 + $0x38] sm:$0xf]
  %v2618 = vsel %vm276, %v2476, %v2617
  %2619 = vst [vmem:[%s2574 + $0x38] sm:$0xf] %v2618
  %v2620 = vld [vmem:[%s2574 + $0x3c] sm:$0x1]
  %v2621 = vsel %vm282, %v2477, %v2620
  %2622 = vst [vmem:[%s2574 + $0x3c] sm:$0x1] %v2621
  %v2623 = vld [vmem:[%s2574 + $0x50] sm:$0xf]
  %v2624 = vsel %vm276, %v2484, %v2623
  %2625 = vst [vmem:[%s2574 + $0x50] sm:$0xf] %v2624
  %v2626 = vld [vmem:[%s2574 + $0x54] sm:$0x1]
  %v2627 = vsel %vm282, %v2485, %v2626
  %2628 = vst [vmem:[%s2574 + $0x54] sm:$0x1] %v2627
  %v2629 = vld [vmem:[%s2574 + $0x58] sm:$0xf]
  %v2630 = vsel %vm276, %v2492, %v2629
  %2631 = vst [vmem:[%s2574 + $0x58] sm:$0xf] %v2630
  %v2632 = vld [vmem:[%s2574 + $0x5c] sm:$0x1]
  %v2633 = vsel %vm282, %v2493, %v2632
  %2634 = vst [vmem:[%s2574 + $0x5c] sm:$0x1] %v2633
  %v2635 = vld [vmem:[%s2574 + $0x60] sm:$0xf]
  %v2636 = vsel %vm276, %v2500, %v2635
  %2637 = vst [vmem:[%s2574 + $0x60] sm:$0xf] %v2636
  %v2638 = vld [vmem:[%s2574 + $0x64] sm:$0x1]
  %v2639 = vsel %vm282, %v2501, %v2638
  %2640 = vst [vmem:[%s2574 + $0x64] sm:$0x1] %v2639
  %v2641 = vld [vmem:[%s2574 + $0x68] sm:$0xf]
  %v2642 = vsel %vm276, %v2508, %v2641
  %2643 = vst [vmem:[%s2574 + $0x68] sm:$0xf] %v2642
  %v2644 = vld [vmem:[%s2574 + $0x6c] sm:$0x1]
  %v2645 = vsel %vm282, %v2509, %v2644
  %2646 = vst [vmem:[%s2574 + $0x6c] sm:$0x1] %v2645
  %v2647 = vld [vmem:[%s2574 + $0x70] sm:$0xf]
  %v2648 = vsel %vm276, %v2516, %v2647
  %2649 = vst [vmem:[%s2574 + $0x70] sm:$0xf] %v2648
  %v2650 = vld [vmem:[%s2574 + $0x74] sm:$0x1]
  %v2651 = vsel %vm282, %v2517, %v2650
  %2652 = vst [vmem:[%s2574 + $0x74] sm:$0x1] %v2651
  %v2653 = vld [vmem:[%s2574 + $0x78] sm:$0xf]
  %v2654 = vsel %vm276, %v2524, %v2653
  %2655 = vst [vmem:[%s2574 + $0x78] sm:$0xf] %v2654
  %v2656 = vld [vmem:[%s2574 + $0x7c] sm:$0x1]
  %v2657 = vsel %vm282, %v2525, %v2656
  %2658 = vst [vmem:[%s2574 + $0x7c] sm:$0x1] %v2657
  %v2659 = vld [vmem:[%s2574 + $0x80] sm:$0xf]
  %v2660 = vsel %vm276, %v2532, %v2659
  %2661 = vst [vmem:[%s2574 + $0x80] sm:$0xf] %v2660
  %v2662 = vld [vmem:[%s2574 + $0x84] sm:$0x1]
  %v2663 = vsel %vm282, %v2533, %v2662
  %2664 = vst [vmem:[%s2574 + $0x84] sm:$0x1] %v2663
  %v2665 = vld [vmem:[%s2574 + $0x88] sm:$0xf]
  %v2666 = vsel %vm276, %v2540, %v2665
  %2667 = vst [vmem:[%s2574 + $0x88] sm:$0xf] %v2666
  %v2668 = vld [vmem:[%s2574 + $0x8c] sm:$0x1]
  %v2669 = vsel %vm282, %v2541, %v2668
  %2670 = vst [vmem:[%s2574 + $0x8c] sm:$0x1] %v2669
  %2671 = vst.msk [vmem:[#allocation3] sm:$0xf] %vm376, 0
  %2672 = vst.msk [vmem:[#allocation3 + $0x4] sm:$0x1] %vm378, 0
  %2673 = vst.msk [vmem:[#allocation3 + $0x50] sm:$0xf] %vm376, 0
  %2674 = vst.msk [vmem:[#allocation3 + $0x54] sm:$0x1] %vm378, 0
  %s2675 = scalar_lea.vmem [#allocation3], 72
  %2676 = vst.msk [vmem:[%s2675] sm:$0xf] %vm376, 0
  %2677 = vst.msk [vmem:[%s2675 + $0x4] sm:$0x1] %vm378, 0
  %2678 = vst.msk [vmem:[%s2675 + $0x50] sm:$0xf] %vm376, 0
  %2679 = vst.msk [vmem:[%s2675 + $0x54] sm:$0x1] %vm378, 0
  %v2680 = vld [vmem:[%s2574] sm:$0x1]
  %v2681 = vsel %vm282, 0, %v2680
  %2682 = vst [vmem:[%s2574] sm:$0x1] %v2681
  %v2683 = vld [vmem:[%s2574 + $0x8] sm:$0x1]
  %v2684 = vsel %vm282, 0, %v2683
  %2685 = vst [vmem:[%s2574 + $0x8] sm:$0x1] %v2684
  %v2686 = vld [vmem:[%s2574 + $0x10] sm:$0x1]
  %v2687 = vsel %vm282, 0, %v2686
  %2688 = vst [vmem:[%s2574 + $0x10] sm:$0x1] %v2687
  %v2689 = vld [vmem:[%s2574 + $0x18] sm:$0x1]
  %v2690 = vsel %vm282, 0, %v2689
  %2691 = vst [vmem:[%s2574 + $0x18] sm:$0x1] %v2690
  %v2692 = vld [vmem:[%s2574 + $0x20] sm:$0x1]
  %v2693 = vsel %vm282, 0, %v2692
  %2694 = vst [vmem:[%s2574 + $0x20] sm:$0x1] %v2693
  %v2695 = vld [vmem:[%s2574 + $0x28] sm:$0x1]
  %v2696 = vsel %vm282, 0, %v2695
  %2697 = vst [vmem:[%s2574 + $0x28] sm:$0x1] %v2696
  %v2698 = vld [vmem:[%s2574 + $0x30] sm:$0x1]
  %v2699 = vsel %vm282, 0, %v2698
  %2700 = vst [vmem:[%s2574 + $0x30] sm:$0x1] %v2699
  %v2701 = vld [vmem:[%s2574 + $0x38] sm:$0x1]
  %v2702 = vsel %vm282, 0, %v2701
  %2703 = vst [vmem:[%s2574 + $0x38] sm:$0x1] %v2702
  %v2704 = vld [vmem:[%s2574 + $0x50] sm:$0x1]
  %v2705 = vsel %vm282, 0, %v2704
  %2706 = vst [vmem:[%s2574 + $0x50] sm:$0x1] %v2705
  %v2707 = vld [vmem:[%s2574 + $0x58] sm:$0x1]
  %v2708 = vsel %vm282, 0, %v2707
  %2709 = vst [vmem:[%s2574 + $0x58] sm:$0x1] %v2708
  %v2710 = vld [vmem:[%s2574 + $0x60] sm:$0x1]
  %v2711 = vsel %vm282, 0, %v2710
  %2712 = vst [vmem:[%s2574 + $0x60] sm:$0x1] %v2711
  %v2713 = vld [vmem:[%s2574 + $0x68] sm:$0x1]
  %v2714 = vsel %vm282, 0, %v2713
  %2715 = vst [vmem:[%s2574 + $0x68] sm:$0x1] %v2714
  %v2716 = vld [vmem:[%s2574 + $0x70] sm:$0x1]
  %v2717 = vsel %vm282, 0, %v2716
  %2718 = vst [vmem:[%s2574 + $0x70] sm:$0x1] %v2717
  %v2719 = vld [vmem:[%s2574 + $0x78] sm:$0x1]
  %v2720 = vsel %vm282, 0, %v2719
  %2721 = vst [vmem:[%s2574 + $0x78] sm:$0x1] %v2720
  %v2722 = vld [vmem:[%s2574 + $0x80] sm:$0x1]
  %v2723 = vsel %vm282, 0, %v2722
  %2724 = vst [vmem:[%s2574 + $0x80] sm:$0x1] %v2723
  %v2725 = vld [vmem:[%s2574 + $0x88] sm:$0x1]
  %v2726 = vsel %vm282, 0, %v2725
  %2727 = vst [vmem:[%s2574 + $0x88] sm:$0x1] %v2726
  %v2728 = vld [vmem:[%s2574 + $0x4] sm:$0x1]
  %v2729 = vsel %vm435, 0, %v2728
  %2730 = vst [vmem:[%s2574 + $0x4] sm:$0x1] %v2729
  %v2731 = vld [vmem:[%s2574 + $0xc] sm:$0x1]
  %v2732 = vsel %vm435, 0, %v2731
  %2733 = vst [vmem:[%s2574 + $0xc] sm:$0x1] %v2732
  %v2734 = vld [vmem:[%s2574 + $0x14] sm:$0x1]
  %v2735 = vsel %vm435, 0, %v2734
  %2736 = vst [vmem:[%s2574 + $0x14] sm:$0x1] %v2735
  %v2737 = vld [vmem:[%s2574 + $0x1c] sm:$0x1]
  %v2738 = vsel %vm435, 0, %v2737
  %2739 = vst [vmem:[%s2574 + $0x1c] sm:$0x1] %v2738
  %v2740 = vld [vmem:[%s2574 + $0x24] sm:$0x1]
  %v2741 = vsel %vm435, 0, %v2740
  %2742 = vst [vmem:[%s2574 + $0x24] sm:$0x1] %v2741
  %v2743 = vld [vmem:[%s2574 + $0x2c] sm:$0x1]
  %v2744 = vsel %vm435, 0, %v2743
  %2745 = vst [vmem:[%s2574 + $0x2c] sm:$0x1] %v2744
  %v2746 = vld [vmem:[%s2574 + $0x34] sm:$0x1]
  %v2747 = vsel %vm435, 0, %v2746
  %2748 = vst [vmem:[%s2574 + $0x34] sm:$0x1] %v2747
  %v2749 = vld [vmem:[%s2574 + $0x3c] sm:$0x1]
  %v2750 = vsel %vm435, 0, %v2749
  %2751 = vst [vmem:[%s2574 + $0x3c] sm:$0x1] %v2750
  %v2752 = vld [vmem:[%s2574 + $0x54] sm:$0x1]
  %v2753 = vsel %vm435, 0, %v2752
  %2754 = vst [vmem:[%s2574 + $0x54] sm:$0x1] %v2753
  %v2755 = vld [vmem:[%s2574 + $0x5c] sm:$0x1]
  %v2756 = vsel %vm435, 0, %v2755
  %2757 = vst [vmem:[%s2574 + $0x5c] sm:$0x1] %v2756
  %v2758 = vld [vmem:[%s2574 + $0x64] sm:$0x1]
  %v2759 = vsel %vm435, 0, %v2758
  %2760 = vst [vmem:[%s2574 + $0x64] sm:$0x1] %v2759
  %v2761 = vld [vmem:[%s2574 + $0x6c] sm:$0x1]
  %v2762 = vsel %vm435, 0, %v2761
  %2763 = vst [vmem:[%s2574 + $0x6c] sm:$0x1] %v2762
  %v2764 = vld [vmem:[%s2574 + $0x74] sm:$0x1]
  %v2765 = vsel %vm435, 0, %v2764
  %2766 = vst [vmem:[%s2574 + $0x74] sm:$0x1] %v2765
  %v2767 = vld [vmem:[%s2574 + $0x7c] sm:$0x1]
  %v2768 = vsel %vm435, 0, %v2767
  %2769 = vst [vmem:[%s2574 + $0x7c] sm:$0x1] %v2768
  %v2770 = vld [vmem:[%s2574 + $0x84] sm:$0x1]
  %v2771 = vsel %vm435, 0, %v2770
  %2772 = vst [vmem:[%s2574 + $0x84] sm:$0x1] %v2771
  %v2773 = vld [vmem:[%s2574 + $0x8c] sm:$0x1]
  %v2774 = vsel %vm435, 0, %v2773
  %2775 = vst [vmem:[%s2574 + $0x8c] sm:$0x1] %v2774
  %v2776 = vld [vmem:[#allocation3] sm:$0xf]
  %v2777 = vld [vmem:[#allocation3 + $0x8] sm:$0xf]
  %v2778 = vld [vmem:[#allocation3 + $0x10] sm:$0xf]
  %v2779 = vld [vmem:[#allocation3 + $0x18] sm:$0xf]
  %v2780 = vld [vmem:[#allocation3 + $0x20] sm:$0xf]
  %v2781 = vld [vmem:[#allocation3 + $0x28] sm:$0xf]
  %v2782 = vld [vmem:[#allocation3 + $0x30] sm:$0xf]
  %v2783 = vld [vmem:[#allocation3 + $0x38] sm:$0xf]
  %v2784 = vld [vmem:[#allocation3 + $0x50] sm:$0xf]
  %v2785 = vld [vmem:[#allocation3 + $0x58] sm:$0xf]
  %v2786 = vld [vmem:[#allocation3 + $0x60] sm:$0xf]
  %v2787 = vld [vmem:[#allocation3 + $0x68] sm:$0xf]
  %v2788 = vld [vmem:[#allocation3 + $0x70] sm:$0xf]
  %v2789 = vld [vmem:[#allocation3 + $0x78] sm:$0xf]
  %v2790 = vld [vmem:[#allocation3 + $0x80] sm:$0xf]
  %v2791 = vld [vmem:[#allocation3 + $0x88] sm:$0xf]
  %v2792 = vld [vmem:[#allocation3 + $0x4] sm:$0x1]
  %v2793 = vld [vmem:[#allocation3 + $0xc] sm:$0x1]
  %v2794 = vld [vmem:[#allocation3 + $0x14] sm:$0x1]
  %v2795 = vld [vmem:[#allocation3 + $0x1c] sm:$0x1]
  %v2796 = vld [vmem:[#allocation3 + $0x24] sm:$0x1]
  %v2797 = vld [vmem:[#allocation3 + $0x2c] sm:$0x1]
  %v2798 = vld [vmem:[#allocation3 + $0x34] sm:$0x1]
  %v2799 = vld [vmem:[#allocation3 + $0x3c] sm:$0x1]
  %v2800 = vld [vmem:[#allocation3 + $0x54] sm:$0x1]
  %v2801 = vld [vmem:[#allocation3 + $0x5c] sm:$0x1]
  %v2802 = vld [vmem:[#allocation3 + $0x64] sm:$0x1]
  %v2803 = vld [vmem:[#allocation3 + $0x6c] sm:$0x1]
  %v2804 = vld [vmem:[#allocation3 + $0x74] sm:$0x1]
  %v2805 = vld [vmem:[#allocation3 + $0x7c] sm:$0x1]
  %v2806 = vld [vmem:[#allocation3 + $0x84] sm:$0x1]
  %v2807 = vld [vmem:[#allocation3 + $0x8c] sm:$0x1]
  %v2808 = vld [vmem:[#allocation3] sm:$0xe]
  %v2809 = vld [vmem:[#allocation3 + $0x8] sm:$0xe]
  %v2810 = vld [vmem:[#allocation3 + $0x10] sm:$0xe]
  %v2811 = vld [vmem:[#allocation3 + $0x18] sm:$0xe]
  %v2812 = vld [vmem:[#allocation3 + $0x20] sm:$0xe]
  %v2813 = vld [vmem:[#allocation3 + $0x28] sm:$0xe]
  %v2814 = vld [vmem:[#allocation3 + $0x30] sm:$0xe]
  %v2815 = vld [vmem:[#allocation3 + $0x38] sm:$0xe]
  %v2816 = vld [vmem:[#allocation3 + $0x50] sm:$0xe]
  %v2817 = vld [vmem:[#allocation3 + $0x58] sm:$0xe]
  %v2818 = vld [vmem:[#allocation3 + $0x60] sm:$0xe]
  %v2819 = vld [vmem:[#allocation3 + $0x68] sm:$0xe]
  %v2820 = vld [vmem:[#allocation3 + $0x70] sm:$0xe]
  %v2821 = vld [vmem:[#allocation3 + $0x78] sm:$0xe]
  %v2822 = vld [vmem:[#allocation3 + $0x80] sm:$0xe]
  %v2823 = vld [vmem:[#allocation3 + $0x88] sm:$0xe]
  %v2824 = vld [vmem:[%s2574] sm:$0xf]
  %v2825 = vld [vmem:[%s2574 + $0x8] sm:$0xf]
  %v2826 = vld [vmem:[%s2574 + $0x10] sm:$0xf]
  %v2827 = vld [vmem:[%s2574 + $0x18] sm:$0xf]
  %v2828 = vld [vmem:[%s2574 + $0x20] sm:$0xf]
  %v2829 = vld [vmem:[%s2574 + $0x28] sm:$0xf]
  %v2830 = vld [vmem:[%s2574 + $0x30] sm:$0xf]
  %v2831 = vld [vmem:[%s2574 + $0x38] sm:$0xf]
  %v2832 = vld [vmem:[%s2574 + $0x50] sm:$0xf]
  %v2833 = vld [vmem:[%s2574 + $0x58] sm:$0xf]
  %v2834 = vld [vmem:[%s2574 + $0x60] sm:$0xf]
  %v2835 = vld [vmem:[%s2574 + $0x68] sm:$0xf]
  %v2836 = vld [vmem:[%s2574 + $0x70] sm:$0xf]
  %v2837 = vld [vmem:[%s2574 + $0x78] sm:$0xf]
  %v2838 = vld [vmem:[%s2574 + $0x80] sm:$0xf]
  %v2839 = vld [vmem:[%s2574 + $0x88] sm:$0xf]
  %v2840 = vld [vmem:[%s2574 + $0x4] sm:$0x1]
  %v2841 = vld [vmem:[%s2574 + $0xc] sm:$0x1]
  %v2842 = vld [vmem:[%s2574 + $0x14] sm:$0x1]
  %v2843 = vld [vmem:[%s2574 + $0x1c] sm:$0x1]
  %v2844 = vld [vmem:[%s2574 + $0x24] sm:$0x1]
  %v2845 = vld [vmem:[%s2574 + $0x2c] sm:$0x1]
  %v2846 = vld [vmem:[%s2574 + $0x34] sm:$0x1]
  %v2847 = vld [vmem:[%s2574 + $0x3c] sm:$0x1]
  %v2848 = vld [vmem:[%s2574 + $0x54] sm:$0x1]
  %v2849 = vld [vmem:[%s2574 + $0x5c] sm:$0x1]
  %v2850 = vld [vmem:[%s2574 + $0x64] sm:$0x1]
  %v2851 = vld [vmem:[%s2574 + $0x6c] sm:$0x1]
  %v2852 = vld [vmem:[%s2574 + $0x74] sm:$0x1]
  %v2853 = vld [vmem:[%s2574 + $0x7c] sm:$0x1]
  %v2854 = vld [vmem:[%s2574 + $0x84] sm:$0x1]
  %v2855 = vld [vmem:[%s2574 + $0x8c] sm:$0x1]
  %v2856 = vld [vmem:[%s2574] sm:$0xe]
  %v2857 = vld [vmem:[%s2574 + $0x8] sm:$0xe]
  %v2858 = vld [vmem:[%s2574 + $0x10] sm:$0xe]
  %v2859 = vld [vmem:[%s2574 + $0x18] sm:$0xe]
  %v2860 = vld [vmem:[%s2574 + $0x20] sm:$0xe]
  %v2861 = vld [vmem:[%s2574 + $0x28] sm:$0xe]
  %v2862 = vld [vmem:[%s2574 + $0x30] sm:$0xe]
  %v2863 = vld [vmem:[%s2574 + $0x38] sm:$0xe]
  %v2864 = vld [vmem:[%s2574 + $0x50] sm:$0xe]
  %v2865 = vld [vmem:[%s2574 + $0x58] sm:$0xe]
  %v2866 = vld [vmem:[%s2574 + $0x60] sm:$0xe]
  %v2867 = vld [vmem:[%s2574 + $0x68] sm:$0xe]
  %v2868 = vld [vmem:[%s2574 + $0x70] sm:$0xe]
  %v2869 = vld [vmem:[%s2574 + $0x78] sm:$0xe]
  %v2870 = vld [vmem:[%s2574 + $0x80] sm:$0xe]
  %v2871 = vld [vmem:[%s2574 + $0x88] sm:$0xe]
  %s2872 = scalar_lea.vmem [#allocation3], 16
  %v2873 = vld [vmem:[%s2872] sm:$0xf]
  %v2874 = vld [vmem:[%s2872 + $0x8] sm:$0xf]
  %v2875 = vld [vmem:[%s2872 + $0x10] sm:$0xf]
  %v2876 = vld [vmem:[%s2872 + $0x18] sm:$0xf]
  %v2877 = vld [vmem:[%s2872 + $0x20] sm:$0xf]
  %v2878 = vld [vmem:[%s2872 + $0x28] sm:$0xf]
  %v2879 = vld [vmem:[%s2872 + $0x30] sm:$0xf]
  %v2880 = vld [vmem:[%s2872 + $0x38] sm:$0xf]
  %v2881 = vld [vmem:[%s2872 + $0x50] sm:$0xf]
  %v2882 = vld [vmem:[%s2872 + $0x58] sm:$0xf]
  %v2883 = vld [vmem:[%s2872 + $0x60] sm:$0xf]
  %v2884 = vld [vmem:[%s2872 + $0x68] sm:$0xf]
  %v2885 = vld [vmem:[%s2872 + $0x70] sm:$0xf]
  %v2886 = vld [vmem:[%s2872 + $0x78] sm:$0xf]
  %v2887 = vld [vmem:[%s2872 + $0x80] sm:$0xf]
  %v2888 = vld [vmem:[%s2872 + $0x88] sm:$0xf]
  %v2889 = vld [vmem:[%s2872 + $0x4] sm:$0x1]
  %v2890 = vld [vmem:[%s2872 + $0xc] sm:$0x1]
  %v2891 = vld [vmem:[%s2872 + $0x14] sm:$0x1]
  %v2892 = vld [vmem:[%s2872 + $0x1c] sm:$0x1]
  %v2893 = vld [vmem:[%s2872 + $0x24] sm:$0x1]
  %v2894 = vld [vmem:[%s2872 + $0x2c] sm:$0x1]
  %v2895 = vld [vmem:[%s2872 + $0x34] sm:$0x1]
  %v2896 = vld [vmem:[%s2872 + $0x3c] sm:$0x1]
  %v2897 = vld [vmem:[%s2872 + $0x54] sm:$0x1]
  %v2898 = vld [vmem:[%s2872 + $0x5c] sm:$0x1]
  %v2899 = vld [vmem:[%s2872 + $0x64] sm:$0x1]
  %v2900 = vld [vmem:[%s2872 + $0x6c] sm:$0x1]
  %v2901 = vld [vmem:[%s2872 + $0x74] sm:$0x1]
  %v2902 = vld [vmem:[%s2872 + $0x7c] sm:$0x1]
  %v2903 = vld [vmem:[%s2872 + $0x84] sm:$0x1]
  %v2904 = vld [vmem:[%s2872 + $0x8c] sm:$0x1]
  %v2905 = vld [vmem:[%s2872] sm:$0xe]
  %v2906 = vld [vmem:[%s2872 + $0x8] sm:$0xe]
  %v2907 = vld [vmem:[%s2872 + $0x10] sm:$0xe]
  %v2908 = vld [vmem:[%s2872 + $0x18] sm:$0xe]
  %v2909 = vld [vmem:[%s2872 + $0x20] sm:$0xe]
  %v2910 = vld [vmem:[%s2872 + $0x28] sm:$0xe]
  %v2911 = vld [vmem:[%s2872 + $0x30] sm:$0xe]
  %v2912 = vld [vmem:[%s2872 + $0x38] sm:$0xe]
  %v2913 = vld [vmem:[%s2872 + $0x50] sm:$0xe]
  %v2914 = vld [vmem:[%s2872 + $0x58] sm:$0xe]
  %v2915 = vld [vmem:[%s2872 + $0x60] sm:$0xe]
  %v2916 = vld [vmem:[%s2872 + $0x68] sm:$0xe]
  %v2917 = vld [vmem:[%s2872 + $0x70] sm:$0xe]
  %v2918 = vld [vmem:[%s2872 + $0x78] sm:$0xe]
  %v2919 = vld [vmem:[%s2872 + $0x80] sm:$0xe]
  %v2920 = vld [vmem:[%s2872 + $0x88] sm:$0xe]
  %v2921 = vld [vmem:[%s5] sm:$0xf]
  %v2922 = vld [vmem:[%s5 + $0x4] sm:$0xf]
  %v2923 = vld [vmem:[%s5 + $0x8] sm:$0xf]
  %v2924 = vld [vmem:[%s5 + $0xc] sm:$0xf]
  %v2925 = vld [vmem:[%s5 + $0x10] sm:$0xf]
  %v2926 = vld [vmem:[%s5 + $0x14] sm:$0xf]
  %v2927 = vld [vmem:[%s5 + $0x18] sm:$0xf]
  %v2928 = vld [vmem:[%s5 + $0x1c] sm:$0xf]
  %v2929 = vld [vmem:[%s5 + $0x20] sm:$0xf]
  %v2930 = vld [vmem:[%s6] sm:$0x1]
  %v2963 = vunpack.c.l.b16 %v2776
  %v2964 = vunpack.c.l.b16 %v2792
  %v2965 = vunpack.c.l.b16 %v2777
  %v2966 = vunpack.c.l.b16 %v2793
  %v2967 = vunpack.c.l.b16 %v2778
  %v2968 = vunpack.c.l.b16 %v2794
  %v2969 = vunpack.c.l.b16 %v2779
  %v2970 = vunpack.c.l.b16 %v2795
  %v2971 = vunpack.c.l.b16 %v2780
  %v2972 = vunpack.c.l.b16 %v2796
  %v2973 = vunpack.c.l.b16 %v2781
  %v2974 = vunpack.c.l.b16 %v2797
  %v2975 = vunpack.c.l.b16 %v2782
  %v2976 = vunpack.c.l.b16 %v2798
  %v2977 = vunpack.c.l.b16 %v2783
  %v2978 = vunpack.c.l.b16 %v2799
  %v2979 = vunpack.c.l.b16 %v2784
  %v2980 = vunpack.c.l.b16 %v2800
  %v2981 = vunpack.c.l.b16 %v2785
  %v2982 = vunpack.c.l.b16 %v2801
  %v2983 = vunpack.c.l.b16 %v2786
  %v2984 = vunpack.c.l.b16 %v2802
  %v2985 = vunpack.c.l.b16 %v2787
  %v2986 = vunpack.c.l.b16 %v2803
  %v2987 = vunpack.c.l.b16 %v2788
  %v2988 = vunpack.c.l.b16 %v2804
  %v2989 = vunpack.c.l.b16 %v2789
  %v2990 = vunpack.c.l.b16 %v2805
  %v2991 = vunpack.c.l.b16 %v2790
  %v2992 = vunpack.c.l.b16 %v2806
  %v2993 = vunpack.c.l.b16 %v2791
  %v2994 = vunpack.c.l.b16 %v2807
  %v2995 = vpack.c.b16 %v2964, %v2963
  %v2996 = vpack.c.b16 %v2966, %v2965
  %v2997 = vpack.c.b16 %v2968, %v2967
  %v2998 = vpack.c.b16 %v2970, %v2969
  %v2999 = vpack.c.b16 %v2972, %v2971
  %v3000 = vpack.c.b16 %v2974, %v2973
  %v3001 = vpack.c.b16 %v2976, %v2975
  %v3002 = vpack.c.b16 %v2978, %v2977
  %v3003 = vpack.c.b16 %v2980, %v2979
  %v3004 = vpack.c.b16 %v2982, %v2981
  %v3005 = vpack.c.b16 %v2984, %v2983
  %v3006 = vpack.c.b16 %v2986, %v2985
  %v3007 = vpack.c.b16 %v2988, %v2987
  %v3008 = vpack.c.b16 %v2990, %v2989
  %v3009 = vpack.c.b16 %v2992, %v2991
  %v3010 = vpack.c.b16 %v2994, %v2993
  %v3012 = vshrl.u32 %v2995, 16
  %v3014 = vshll.u32 %v2995, 16
  %v3016 = vrot.slane %v3014, 1
  %v3017 = vor.u32 %v3012, %v3016
  %v3019 = vshrl.u32 %v2996, 16
  %v3021 = vshll.u32 %v2996, 16
  %v3023 = vrot.slane %v3021, 1
  %v3024 = vor.u32 %v3019, %v3023
  %v3026 = vshrl.u32 %v2997, 16
  %v3028 = vshll.u32 %v2997, 16
  %v3030 = vrot.slane %v3028, 1
  %v3031 = vor.u32 %v3026, %v3030
  %v3033 = vshrl.u32 %v2998, 16
  %v3035 = vshll.u32 %v2998, 16
  %v3037 = vrot.slane %v3035, 1
  %v3038 = vor.u32 %v3033, %v3037
  %v3040 = vshrl.u32 %v2999, 16
  %v3042 = vshll.u32 %v2999, 16
  %v3044 = vrot.slane %v3042, 1
  %v3045 = vor.u32 %v3040, %v3044
  %v3047 = vshrl.u32 %v3000, 16
  %v3049 = vshll.u32 %v3000, 16
  %v3051 = vrot.slane %v3049, 1
  %v3052 = vor.u32 %v3047, %v3051
  %v3054 = vshrl.u32 %v3001, 16
  %v3056 = vshll.u32 %v3001, 16
  %v3058 = vrot.slane %v3056, 1
  %v3059 = vor.u32 %v3054, %v3058
  %v3061 = vshrl.u32 %v3002, 16
  %v3063 = vshll.u32 %v3002, 16
  %v3065 = vrot.slane %v3063, 1
  %v3066 = vor.u32 %v3061, %v3065
  %v3068 = vshrl.u32 %v3003, 16
  %v3070 = vshll.u32 %v3003, 16
  %v3072 = vrot.slane %v3070, 1
  %v3073 = vor.u32 %v3068, %v3072
  %v3075 = vshrl.u32 %v3004, 16
  %v3077 = vshll.u32 %v3004, 16
  %v3079 = vrot.slane %v3077, 1
  %v3080 = vor.u32 %v3075, %v3079
  %v3082 = vshrl.u32 %v3005, 16
  %v3084 = vshll.u32 %v3005, 16
  %v3086 = vrot.slane %v3084, 1
  %v3087 = vor.u32 %v3082, %v3086
  %v3089 = vshrl.u32 %v3006, 16
  %v3091 = vshll.u32 %v3006, 16
  %v3093 = vrot.slane %v3091, 1
  %v3094 = vor.u32 %v3089, %v3093
  %v3096 = vshrl.u32 %v3007, 16
  %v3098 = vshll.u32 %v3007, 16
  %v3100 = vrot.slane %v3098, 1
  %v3101 = vor.u32 %v3096, %v3100
  %v3103 = vshrl.u32 %v3008, 16
  %v3105 = vshll.u32 %v3008, 16
  %v3107 = vrot.slane %v3105, 1
  %v3108 = vor.u32 %v3103, %v3107
  %v3110 = vshrl.u32 %v3009, 16
  %v3112 = vshll.u32 %v3009, 16
  %v3114 = vrot.slane %v3112, 1
  %v3115 = vor.u32 %v3110, %v3114
  %v3117 = vshrl.u32 %v3010, 16
  %v3119 = vshll.u32 %v3010, 16
  %v3121 = vrot.slane %v3119, 1
  %v3122 = vor.u32 %v3117, %v3121
  %3123 = vrot.lane.b32.xlu0 %v3017, 8
  %v3124 = vpop.permute.xlu0 %3123
  %3125 = vrot.lane.b32.xlu0 %v3024, 8
  %v3126 = vpop.permute.xlu0 %3125
  %3127 = vrot.lane.b32.xlu0 %v3031, 8
  %v3128 = vpop.permute.xlu0 %3127
  %3129 = vrot.lane.b32.xlu0 %v3038, 8
  %v3130 = vpop.permute.xlu0 %3129
  %3131 = vrot.lane.b32.xlu0 %v3045, 8
  %v3132 = vpop.permute.xlu0 %3131
  %3133 = vrot.lane.b32.xlu0 %v3052, 8
  %v3134 = vpop.permute.xlu0 %3133
  %3135 = vrot.lane.b32.xlu0 %v3059, 8
  %v3136 = vpop.permute.xlu0 %3135
  %3137 = vrot.lane.b32.xlu0 %v3066, 8
  %v3138 = vpop.permute.xlu0 %3137
  %3139 = vrot.lane.b32.xlu0 %v3073, 8
  %v3140 = vpop.permute.xlu0 %3139
  %3141 = vrot.lane.b32.xlu0 %v3080, 8
  %v3142 = vpop.permute.xlu0 %3141
  %3143 = vrot.lane.b32.xlu0 %v3087, 8
  %v3144 = vpop.permute.xlu0 %3143
  %3145 = vrot.lane.b32.xlu0 %v3094, 8
  %v3146 = vpop.permute.xlu0 %3145
  %3147 = vrot.lane.b32.xlu0 %v3101, 8
  %v3148 = vpop.permute.xlu0 %3147
  %3149 = vrot.lane.b32.xlu0 %v3108, 8
  %v3150 = vpop.permute.xlu0 %3149
  %3151 = vrot.lane.b32.xlu0 %v3115, 8
  %v3152 = vpop.permute.xlu0 %3151
  %3153 = vrot.lane.b32.xlu0 %v3122, 8
  %v3154 = vpop.permute.xlu0 %3153
  %v3171 = vunpack.c.l.b16 %v2808
  %v3172 = vunpack.c.l.b16 %v2809
  %v3173 = vunpack.c.l.b16 %v2810
  %v3174 = vunpack.c.l.b16 %v2811
  %v3175 = vunpack.c.l.b16 %v2812
  %v3176 = vunpack.c.l.b16 %v2813
  %v3177 = vunpack.c.l.b16 %v2814
  %v3178 = vunpack.c.l.b16 %v2815
  %v3179 = vunpack.c.l.b16 %v2816
  %v3180 = vunpack.c.l.b16 %v2817
  %v3181 = vunpack.c.l.b16 %v2818
  %v3182 = vunpack.c.l.b16 %v2819
  %v3183 = vunpack.c.l.b16 %v2820
  %v3184 = vunpack.c.l.b16 %v2821
  %v3185 = vunpack.c.l.b16 %v2822
  %v3186 = vunpack.c.l.b16 %v2823
  %v3187 = vpack.c.b16 %v2964, %v3171
  %v3188 = vpack.c.b16 %v2966, %v3172
  %v3189 = vpack.c.b16 %v2968, %v3173
  %v3190 = vpack.c.b16 %v2970, %v3174
  %v3191 = vpack.c.b16 %v2972, %v3175
  %v3192 = vpack.c.b16 %v2974, %v3176
  %v3193 = vpack.c.b16 %v2976, %v3177
  %v3194 = vpack.c.b16 %v2978, %v3178
  %v3195 = vpack.c.b16 %v2980, %v3179
  %v3196 = vpack.c.b16 %v2982, %v3180
  %v3197 = vpack.c.b16 %v2984, %v3181
  %v3198 = vpack.c.b16 %v2986, %v3182
  %v3199 = vpack.c.b16 %v2988, %v3183
  %v3200 = vpack.c.b16 %v2990, %v3184
  %v3201 = vpack.c.b16 %v2992, %v3185
  %v3202 = vpack.c.b16 %v2994, %v3186
  %v3203 = vrot.slane %v3187, 1
  %v3204 = vrot.slane %v3188, 1
  %v3205 = vrot.slane %v3189, 1
  %v3206 = vrot.slane %v3190, 1
  %v3207 = vrot.slane %v3191, 1
  %v3208 = vrot.slane %v3192, 1
  %v3209 = vrot.slane %v3193, 1
  %v3210 = vrot.slane %v3194, 1
  %v3211 = vrot.slane %v3195, 1
  %v3212 = vrot.slane %v3196, 1
  %v3213 = vrot.slane %v3197, 1
  %v3214 = vrot.slane %v3198, 1
  %v3215 = vrot.slane %v3199, 1
  %v3216 = vrot.slane %v3200, 1
  %v3217 = vrot.slane %v3201, 1
  %v3218 = vrot.slane %v3202, 1
  %3219 = vrot.lane.b32.xlu0 %v3203, 16
  %v3220 = vpop.permute.xlu0 %3219
  %3221 = vrot.lane.b32.xlu0 %v3204, 16
  %v3222 = vpop.permute.xlu0 %3221
  %3223 = vrot.lane.b32.xlu0 %v3205, 16
  %v3224 = vpop.permute.xlu0 %3223
  %3225 = vrot.lane.b32.xlu0 %v3206, 16
  %v3226 = vpop.permute.xlu0 %3225
  %3227 = vrot.lane.b32.xlu0 %v3207, 16
  %v3228 = vpop.permute.xlu0 %3227
  %3229 = vrot.lane.b32.xlu0 %v3208, 16
  %v3230 = vpop.permute.xlu0 %3229
  %3231 = vrot.lane.b32.xlu0 %v3209, 16
  %v3232 = vpop.permute.xlu0 %3231
  %3233 = vrot.lane.b32.xlu0 %v3210, 16
  %v3234 = vpop.permute.xlu0 %3233
  %3235 = vrot.lane.b32.xlu0 %v3211, 16
  %v3236 = vpop.permute.xlu0 %3235
  %3237 = vrot.lane.b32.xlu0 %v3212, 16
  %v3238 = vpop.permute.xlu0 %3237
  %3239 = vrot.lane.b32.xlu0 %v3213, 16
  %v3240 = vpop.permute.xlu0 %3239
  %3241 = vrot.lane.b32.xlu0 %v3214, 16
  %v3242 = vpop.permute.xlu0 %3241
  %3243 = vrot.lane.b32.xlu0 %v3215, 16
  %v3244 = vpop.permute.xlu0 %3243
  %3245 = vrot.lane.b32.xlu0 %v3216, 16
  %v3246 = vpop.permute.xlu0 %3245
  %3247 = vrot.lane.b32.xlu0 %v3217, 16
  %v3248 = vpop.permute.xlu0 %3247
  %3249 = vrot.lane.b32.xlu0 %v3218, 16
  %v3250 = vpop.permute.xlu0 %3249
  %v3267 = vunpack.c.l.b16 %v2824
  %v3268 = vunpack.c.l.b16 %v2825
  %v3269 = vunpack.c.l.b16 %v2826
  %v3270 = vunpack.c.l.b16 %v2827
  %v3271 = vunpack.c.l.b16 %v2828
  %v3272 = vunpack.c.l.b16 %v2829
  %v3273 = vunpack.c.l.b16 %v2830
  %v3274 = vunpack.c.l.b16 %v2831
  %v3275 = vunpack.c.l.b16 %v2832
  %v3276 = vunpack.c.l.b16 %v2833
  %v3277 = vunpack.c.l.b16 %v2834
  %v3278 = vunpack.c.l.b16 %v2835
  %v3279 = vunpack.c.l.b16 %v2836
  %v3280 = vunpack.c.l.b16 %v2837
  %v3281 = vunpack.c.l.b16 %v2838
  %v3282 = vunpack.c.l.b16 %v2839
  %v3283 = vpack.c.b16 %v3267, %v3267
  %v3284 = vpack.c.b16 %v3268, %v3268
  %v3285 = vpack.c.b16 %v3269, %v3269
  %v3286 = vpack.c.b16 %v3270, %v3270
  %v3287 = vpack.c.b16 %v3271, %v3271
  %v3288 = vpack.c.b16 %v3272, %v3272
  %v3289 = vpack.c.b16 %v3273, %v3273
  %v3290 = vpack.c.b16 %v3274, %v3274
  %v3291 = vpack.c.b16 %v3275, %v3275
  %v3292 = vpack.c.b16 %v3276, %v3276
  %v3293 = vpack.c.b16 %v3277, %v3277
  %v3294 = vpack.c.b16 %v3278, %v3278
  %v3295 = vpack.c.b16 %v3279, %v3279
  %v3296 = vpack.c.b16 %v3280, %v3280
  %v3297 = vpack.c.b16 %v3281, %v3281
  %v3298 = vpack.c.b16 %v3282, %v3282
  %3299 = vrot.lane.b32.xlu0 %v3283, 24
  %v3300 = vpop.permute.xlu0 %3299
  %3301 = vrot.lane.b32.xlu0 %v3284, 24
  %v3302 = vpop.permute.xlu0 %3301
  %3303 = vrot.lane.b32.xlu0 %v3285, 24
  %v3304 = vpop.permute.xlu0 %3303
  %3305 = vrot.lane.b32.xlu0 %v3286, 24
  %v3306 = vpop.permute.xlu0 %3305
  %3307 = vrot.lane.b32.xlu0 %v3287, 24
  %v3308 = vpop.permute.xlu0 %3307
  %3309 = vrot.lane.b32.xlu0 %v3288, 24
  %v3310 = vpop.permute.xlu0 %3309
  %3311 = vrot.lane.b32.xlu0 %v3289, 24
  %v3312 = vpop.permute.xlu0 %3311
  %3313 = vrot.lane.b32.xlu0 %v3290, 24
  %v3314 = vpop.permute.xlu0 %3313
  %3315 = vrot.lane.b32.xlu0 %v3291, 24
  %v3316 = vpop.permute.xlu0 %3315
  %3317 = vrot.lane.b32.xlu0 %v3292, 24
  %v3318 = vpop.permute.xlu0 %3317
  %3319 = vrot.lane.b32.xlu0 %v3293, 24
  %v3320 = vpop.permute.xlu0 %3319
  %3321 = vrot.lane.b32.xlu0 %v3294, 24
  %v3322 = vpop.permute.xlu0 %3321
  %3323 = vrot.lane.b32.xlu0 %v3295, 24
  %v3324 = vpop.permute.xlu0 %3323
  %3325 = vrot.lane.b32.xlu0 %v3296, 24
  %v3326 = vpop.permute.xlu0 %3325
  %3327 = vrot.lane.b32.xlu0 %v3297, 24
  %v3328 = vpop.permute.xlu0 %3327
  %3329 = vrot.lane.b32.xlu0 %v3298, 24
  %v3330 = vpop.permute.xlu0 %3329
  %v3347 = vunpack.c.l.b16 %v2840
  %v3348 = vunpack.c.l.b16 %v2841
  %v3349 = vunpack.c.l.b16 %v2842
  %v3350 = vunpack.c.l.b16 %v2843
  %v3351 = vunpack.c.l.b16 %v2844
  %v3352 = vunpack.c.l.b16 %v2845
  %v3353 = vunpack.c.l.b16 %v2846
  %v3354 = vunpack.c.l.b16 %v2847
  %v3355 = vunpack.c.l.b16 %v2848
  %v3356 = vunpack.c.l.b16 %v2849
  %v3357 = vunpack.c.l.b16 %v2850
  %v3358 = vunpack.c.l.b16 %v2851
  %v3359 = vunpack.c.l.b16 %v2852
  %v3360 = vunpack.c.l.b16 %v2853
  %v3361 = vunpack.c.l.b16 %v2854
  %v3362 = vunpack.c.l.b16 %v2855
  %v3363 = vpack.c.b16 %v3347, %v3267
  %v3364 = vpack.c.b16 %v3348, %v3268
  %v3365 = vpack.c.b16 %v3349, %v3269
  %v3366 = vpack.c.b16 %v3350, %v3270
  %v3367 = vpack.c.b16 %v3351, %v3271
  %v3368 = vpack.c.b16 %v3352, %v3272
  %v3369 = vpack.c.b16 %v3353, %v3273
  %v3370 = vpack.c.b16 %v3354, %v3274
  %v3371 = vpack.c.b16 %v3355, %v3275
  %v3372 = vpack.c.b16 %v3356, %v3276
  %v3373 = vpack.c.b16 %v3357, %v3277
  %v3374 = vpack.c.b16 %v3358, %v3278
  %v3375 = vpack.c.b16 %v3359, %v3279
  %v3376 = vpack.c.b16 %v3360, %v3280
  %v3377 = vpack.c.b16 %v3361, %v3281
  %v3378 = vpack.c.b16 %v3362, %v3282
  %v3380 = vshrl.u32 %v3363, 16
  %v3382 = vshll.u32 %v3363, 16
  %v3384 = vrot.slane %v3382, 1
  %v3385 = vor.u32 %v3380, %v3384
  %v3387 = vshrl.u32 %v3364, 16
  %v3389 = vshll.u32 %v3364, 16
  %v3391 = vrot.slane %v3389, 1
  %v3392 = vor.u32 %v3387, %v3391
  %v3394 = vshrl.u32 %v3365, 16
  %v3396 = vshll.u32 %v3365, 16
  %v3398 = vrot.slane %v3396, 1
  %v3399 = vor.u32 %v3394, %v3398
  %v3401 = vshrl.u32 %v3366, 16
  %v3403 = vshll.u32 %v3366, 16
  %v3405 = vrot.slane %v3403, 1
  %v3406 = vor.u32 %v3401, %v3405
  %v3408 = vshrl.u32 %v3367, 16
  %v3410 = vshll.u32 %v3367, 16
  %v3412 = vrot.slane %v3410, 1
  %v3413 = vor.u32 %v3408, %v3412
  %v3415 = vshrl.u32 %v3368, 16
  %v3417 = vshll.u32 %v3368, 16
  %v3419 = vrot.slane %v3417, 1
  %v3420 = vor.u32 %v3415, %v3419
  %v3422 = vshrl.u32 %v3369, 16
  %v3424 = vshll.u32 %v3369, 16
  %v3426 = vrot.slane %v3424, 1
  %v3427 = vor.u32 %v3422, %v3426
  %v3429 = vshrl.u32 %v3370, 16
  %v3431 = vshll.u32 %v3370, 16
  %v3433 = vrot.slane %v3431, 1
  %v3434 = vor.u32 %v3429, %v3433
  %v3436 = vshrl.u32 %v3371, 16
  %v3438 = vshll.u32 %v3371, 16
  %v3440 = vrot.slane %v3438, 1
  %v3441 = vor.u32 %v3436, %v3440
  %v3443 = vshrl.u32 %v3372, 16
  %v3445 = vshll.u32 %v3372, 16
  %v3447 = vrot.slane %v3445, 1
  %v3448 = vor.u32 %v3443, %v3447
  %v3450 = vshrl.u32 %v3373, 16
  %v3452 = vshll.u32 %v3373, 16
  %v3454 = vrot.slane %v3452, 1
  %v3455 = vor.u32 %v3450, %v3454
  %v3457 = vshrl.u32 %v3374, 16
  %v3459 = vshll.u32 %v3374, 16
  %v3461 = vrot.slane %v3459, 1
  %v3462 = vor.u32 %v3457, %v3461
  %v3464 = vshrl.u32 %v3375, 16
  %v3466 = vshll.u32 %v3375, 16
  %v3468 = vrot.slane %v3466, 1
  %v3469 = vor.u32 %v3464, %v3468
  %v3471 = vshrl.u32 %v3376, 16
  %v3473 = vshll.u32 %v3376, 16
  %v3475 = vrot.slane %v3473, 1
  %v3476 = vor.u32 %v3471, %v3475
  %v3478 = vshrl.u32 %v3377, 16
  %v3480 = vshll.u32 %v3377, 16
  %v3482 = vrot.slane %v3480, 1
  %v3483 = vor.u32 %v3478, %v3482
  %v3485 = vshrl.u32 %v3378, 16
  %v3487 = vshll.u32 %v3378, 16
  %v3489 = vrot.slane %v3487, 1
  %v3490 = vor.u32 %v3485, %v3489
  %3491 = vrot.lane.b32.xlu0 %v3385, 32
  %v3492 = vpop.permute.xlu0 %3491
  %3493 = vrot.lane.b32.xlu0 %v3392, 32
  %v3494 = vpop.permute.xlu0 %3493
  %3495 = vrot.lane.b32.xlu0 %v3399, 32
  %v3496 = vpop.permute.xlu0 %3495
  %3497 = vrot.lane.b32.xlu0 %v3406, 32
  %v3498 = vpop.permute.xlu0 %3497
  %3499 = vrot.lane.b32.xlu0 %v3413, 32
  %v3500 = vpop.permute.xlu0 %3499
  %3501 = vrot.lane.b32.xlu0 %v3420, 32
  %v3502 = vpop.permute.xlu0 %3501
  %3503 = vrot.lane.b32.xlu0 %v3427, 32
  %v3504 = vpop.permute.xlu0 %3503
  %3505 = vrot.lane.b32.xlu0 %v3434, 32
  %v3506 = vpop.permute.xlu0 %3505
  %3507 = vrot.lane.b32.xlu0 %v3441, 32
  %v3508 = vpop.permute.xlu0 %3507
  %3509 = vrot.lane.b32.xlu0 %v3448, 32
  %v3510 = vpop.permute.xlu0 %3509
  %3511 = vrot.lane.b32.xlu0 %v3455, 32
  %v3512 = vpop.permute.xlu0 %3511
  %3513 = vrot.lane.b32.xlu0 %v3462, 32
  %v3514 = vpop.permute.xlu0 %3513
  %3515 = vrot.lane.b32.xlu0 %v3469, 32
  %v3516 = vpop.permute.xlu0 %3515
  %3517 = vrot.lane.b32.xlu0 %v3476, 32
  %v3518 = vpop.permute.xlu0 %3517
  %3519 = vrot.lane.b32.xlu0 %v3483, 32
  %v3520 = vpop.permute.xlu0 %3519
  %3521 = vrot.lane.b32.xlu0 %v3490, 32
  %v3522 = vpop.permute.xlu0 %3521
  %v3539 = vunpack.c.l.b16 %v2856
  %v3540 = vunpack.c.l.b16 %v2857
  %v3541 = vunpack.c.l.b16 %v2858
  %v3542 = vunpack.c.l.b16 %v2859
  %v3543 = vunpack.c.l.b16 %v2860
  %v3544 = vunpack.c.l.b16 %v2861
  %v3545 = vunpack.c.l.b16 %v2862
  %v3546 = vunpack.c.l.b16 %v2863
  %v3547 = vunpack.c.l.b16 %v2864
  %v3548 = vunpack.c.l.b16 %v2865
  %v3549 = vunpack.c.l.b16 %v2866
  %v3550 = vunpack.c.l.b16 %v2867
  %v3551 = vunpack.c.l.b16 %v2868
  %v3552 = vunpack.c.l.b16 %v2869
  %v3553 = vunpack.c.l.b16 %v2870
  %v3554 = vunpack.c.l.b16 %v2871
  %v3555 = vpack.c.b16 %v3347, %v3539
  %v3556 = vpack.c.b16 %v3348, %v3540
  %v3557 = vpack.c.b16 %v3349, %v3541
  %v3558 = vpack.c.b16 %v3350, %v3542
  %v3559 = vpack.c.b16 %v3351, %v3543
  %v3560 = vpack.c.b16 %v3352, %v3544
  %v3561 = vpack.c.b16 %v3353, %v3545
  %v3562 = vpack.c.b16 %v3354, %v3546
  %v3563 = vpack.c.b16 %v3355, %v3547
  %v3564 = vpack.c.b16 %v3356, %v3548
  %v3565 = vpack.c.b16 %v3357, %v3549
  %v3566 = vpack.c.b16 %v3358, %v3550
  %v3567 = vpack.c.b16 %v3359, %v3551
  %v3568 = vpack.c.b16 %v3360, %v3552
  %v3569 = vpack.c.b16 %v3361, %v3553
  %v3570 = vpack.c.b16 %v3362, %v3554
  %v3571 = vrot.slane %v3555, 1
  %v3572 = vrot.slane %v3556, 1
  %v3573 = vrot.slane %v3557, 1
  %v3574 = vrot.slane %v3558, 1
  %v3575 = vrot.slane %v3559, 1
  %v3576 = vrot.slane %v3560, 1
  %v3577 = vrot.slane %v3561, 1
  %v3578 = vrot.slane %v3562, 1
  %v3579 = vrot.slane %v3563, 1
  %v3580 = vrot.slane %v3564, 1
  %v3581 = vrot.slane %v3565, 1
  %v3582 = vrot.slane %v3566, 1
  %v3583 = vrot.slane %v3567, 1
  %v3584 = vrot.slane %v3568, 1
  %v3585 = vrot.slane %v3569, 1
  %v3586 = vrot.slane %v3570, 1
  %3587 = vrot.lane.b32.xlu0 %v3571, 40
  %v3588 = vpop.permute.xlu0 %3587
  %3589 = vrot.lane.b32.xlu0 %v3572, 40
  %v3590 = vpop.permute.xlu0 %3589
  %3591 = vrot.lane.b32.xlu0 %v3573, 40
  %v3592 = vpop.permute.xlu0 %3591
  %3593 = vrot.lane.b32.xlu0 %v3574, 40
  %v3594 = vpop.permute.xlu0 %3593
  %3595 = vrot.lane.b32.xlu0 %v3575, 40
  %v3596 = vpop.permute.xlu0 %3595
  %3597 = vrot.lane.b32.xlu0 %v3576, 40
  %v3598 = vpop.permute.xlu0 %3597
  %3599 = vrot.lane.b32.xlu0 %v3577, 40
  %v3600 = vpop.permute.xlu0 %3599
  %3601 = vrot.lane.b32.xlu0 %v3578, 40
  %v3602 = vpop.permute.xlu0 %3601
  %3603 = vrot.lane.b32.xlu0 %v3579, 40
  %v3604 = vpop.permute.xlu0 %3603
  %3605 = vrot.lane.b32.xlu0 %v3580, 40
  %v3606 = vpop.permute.xlu0 %3605
  %3607 = vrot.lane.b32.xlu0 %v3581, 40
  %v3608 = vpop.permute.xlu0 %3607
  %3609 = vrot.lane.b32.xlu0 %v3582, 40
  %v3610 = vpop.permute.xlu0 %3609
  %3611 = vrot.lane.b32.xlu0 %v3583, 40
  %v3612 = vpop.permute.xlu0 %3611
  %3613 = vrot.lane.b32.xlu0 %v3584, 40
  %v3614 = vpop.permute.xlu0 %3613
  %3615 = vrot.lane.b32.xlu0 %v3585, 40
  %v3616 = vpop.permute.xlu0 %3615
  %3617 = vrot.lane.b32.xlu0 %v3586, 40
  %v3618 = vpop.permute.xlu0 %3617
  %v3635 = vunpack.c.l.b16 %v2873
  %v3636 = vunpack.c.l.b16 %v2874
  %v3637 = vunpack.c.l.b16 %v2875
  %v3638 = vunpack.c.l.b16 %v2876
  %v3639 = vunpack.c.l.b16 %v2877
  %v3640 = vunpack.c.l.b16 %v2878
  %v3641 = vunpack.c.l.b16 %v2879
  %v3642 = vunpack.c.l.b16 %v2880
  %v3643 = vunpack.c.l.b16 %v2881
  %v3644 = vunpack.c.l.b16 %v2882
  %v3645 = vunpack.c.l.b16 %v2883
  %v3646 = vunpack.c.l.b16 %v2884
  %v3647 = vunpack.c.l.b16 %v2885
  %v3648 = vunpack.c.l.b16 %v2886
  %v3649 = vunpack.c.l.b16 %v2887
  %v3650 = vunpack.c.l.b16 %v2888
  %v3651 = vpack.c.b16 %v3635, %v3635
  %v3652 = vpack.c.b16 %v3636, %v3636
  %v3653 = vpack.c.b16 %v3637, %v3637
  %v3654 = vpack.c.b16 %v3638, %v3638
  %v3655 = vpack.c.b16 %v3639, %v3639
  %v3656 = vpack.c.b16 %v3640, %v3640
  %v3657 = vpack.c.b16 %v3641, %v3641
  %v3658 = vpack.c.b16 %v3642, %v3642
  %v3659 = vpack.c.b16 %v3643, %v3643
  %v3660 = vpack.c.b16 %v3644, %v3644
  %v3661 = vpack.c.b16 %v3645, %v3645
  %v3662 = vpack.c.b16 %v3646, %v3646
  %v3663 = vpack.c.b16 %v3647, %v3647
  %v3664 = vpack.c.b16 %v3648, %v3648
  %v3665 = vpack.c.b16 %v3649, %v3649
  %v3666 = vpack.c.b16 %v3650, %v3650
  %3667 = vrot.lane.b32.xlu0 %v3651, 48
  %v3668 = vpop.permute.xlu0 %3667
  %3669 = vrot.lane.b32.xlu0 %v3652, 48
  %v3670 = vpop.permute.xlu0 %3669
  %3671 = vrot.lane.b32.xlu0 %v3653, 48
  %v3672 = vpop.permute.xlu0 %3671
  %3673 = vrot.lane.b32.xlu0 %v3654, 48
  %v3674 = vpop.permute.xlu0 %3673
  %3675 = vrot.lane.b32.xlu0 %v3655, 48
  %v3676 = vpop.permute.xlu0 %3675
  %3677 = vrot.lane.b32.xlu0 %v3656, 48
  %v3678 = vpop.permute.xlu0 %3677
  %3679 = vrot.lane.b32.xlu0 %v3657, 48
  %v3680 = vpop.permute.xlu0 %3679
  %3681 = vrot.lane.b32.xlu0 %v3658, 48
  %v3682 = vpop.permute.xlu0 %3681
  %3683 = vrot.lane.b32.xlu0 %v3659, 48
  %v3684 = vpop.permute.xlu0 %3683
  %3685 = vrot.lane.b32.xlu0 %v3660, 48
  %v3686 = vpop.permute.xlu0 %3685
  %3687 = vrot.lane.b32.xlu0 %v3661, 48
  %v3688 = vpop.permute.xlu0 %3687
  %3689 = vrot.lane.b32.xlu0 %v3662, 48
  %v3690 = vpop.permute.xlu0 %3689
  %3691 = vrot.lane.b32.xlu0 %v3663, 48
  %v3692 = vpop.permute.xlu0 %3691
  %3693 = vrot.lane.b32.xlu0 %v3664, 48
  %v3694 = vpop.permute.xlu0 %3693
  %3695 = vrot.lane.b32.xlu0 %v3665, 48
  %v3696 = vpop.permute.xlu0 %3695
  %3697 = vrot.lane.b32.xlu0 %v3666, 48
  %v3698 = vpop.permute.xlu0 %3697
  %v3715 = vunpack.c.l.b16 %v2889
  %v3716 = vunpack.c.l.b16 %v2890
  %v3717 = vunpack.c.l.b16 %v2891
  %v3718 = vunpack.c.l.b16 %v2892
  %v3719 = vunpack.c.l.b16 %v2893
  %v3720 = vunpack.c.l.b16 %v2894
  %v3721 = vunpack.c.l.b16 %v2895
  %v3722 = vunpack.c.l.b16 %v2896
  %v3723 = vunpack.c.l.b16 %v2897
  %v3724 = vunpack.c.l.b16 %v2898
  %v3725 = vunpack.c.l.b16 %v2899
  %v3726 = vunpack.c.l.b16 %v2900
  %v3727 = vunpack.c.l.b16 %v2901
  %v3728 = vunpack.c.l.b16 %v2902
  %v3729 = vunpack.c.l.b16 %v2903
  %v3730 = vunpack.c.l.b16 %v2904
  %v3731 = vpack.c.b16 %v3715, %v3635
  %v3732 = vpack.c.b16 %v3716, %v3636
  %v3733 = vpack.c.b16 %v3717, %v3637
  %v3734 = vpack.c.b16 %v3718, %v3638
  %v3735 = vpack.c.b16 %v3719, %v3639
  %v3736 = vpack.c.b16 %v3720, %v3640
  %v3737 = vpack.c.b16 %v3721, %v3641
  %v3738 = vpack.c.b16 %v3722, %v3642
  %v3739 = vpack.c.b16 %v3723, %v3643
  %v3740 = vpack.c.b16 %v3724, %v3644
  %v3741 = vpack.c.b16 %v3725, %v3645
  %v3742 = vpack.c.b16 %v3726, %v3646
  %v3743 = vpack.c.b16 %v3727, %v3647
  %v3744 = vpack.c.b16 %v3728, %v3648
  %v3745 = vpack.c.b16 %v3729, %v3649
  %v3746 = vpack.c.b16 %v3730, %v3650
  %v3748 = vshrl.u32 %v3731, 16
  %v3750 = vshll.u32 %v3731, 16
  %v3752 = vrot.slane %v3750, 1
  %v3753 = vor.u32 %v3748, %v3752
  %v3755 = vshrl.u32 %v3732, 16
  %v3757 = vshll.u32 %v3732, 16
  %v3759 = vrot.slane %v3757, 1
  %v3760 = vor.u32 %v3755, %v3759
  %v3762 = vshrl.u32 %v3733, 16
  %v3764 = vshll.u32 %v3733, 16
  %v3766 = vrot.slane %v3764, 1
  %v3767 = vor.u32 %v3762, %v3766
  %v3769 = vshrl.u32 %v3734, 16
  %v3771 = vshll.u32 %v3734, 16
  %v3773 = vrot.slane %v3771, 1
  %v3774 = vor.u32 %v3769, %v3773
  %v3776 = vshrl.u32 %v3735, 16
  %v3778 = vshll.u32 %v3735, 16
  %v3780 = vrot.slane %v3778, 1
  %v3781 = vor.u32 %v3776, %v3780
  %v3783 = vshrl.u32 %v3736, 16
  %v3785 = vshll.u32 %v3736, 16
  %v3787 = vrot.slane %v3785, 1
  %v3788 = vor.u32 %v3783, %v3787
  %v3790 = vshrl.u32 %v3737, 16
  %v3792 = vshll.u32 %v3737, 16
  %v3794 = vrot.slane %v3792, 1
  %v3795 = vor.u32 %v3790, %v3794
  %v3797 = vshrl.u32 %v3738, 16
  %v3799 = vshll.u32 %v3738, 16
  %v3801 = vrot.slane %v3799, 1
  %v3802 = vor.u32 %v3797, %v3801
  %v3804 = vshrl.u32 %v3739, 16
  %v3806 = vshll.u32 %v3739, 16
  %v3808 = vrot.slane %v3806, 1
  %v3809 = vor.u32 %v3804, %v3808
  %v3811 = vshrl.u32 %v3740, 16
  %v3813 = vshll.u32 %v3740, 16
  %v3815 = vrot.slane %v3813, 1
  %v3816 = vor.u32 %v3811, %v3815
  %v3818 = vshrl.u32 %v3741, 16
  %v3820 = vshll.u32 %v3741, 16
  %v3822 = vrot.slane %v3820, 1
  %v3823 = vor.u32 %v3818, %v3822
  %v3825 = vshrl.u32 %v3742, 16
  %v3827 = vshll.u32 %v3742, 16
  %v3829 = vrot.slane %v3827, 1
  %v3830 = vor.u32 %v3825, %v3829
  %v3832 = vshrl.u32 %v3743, 16
  %v3834 = vshll.u32 %v3743, 16
  %v3836 = vrot.slane %v3834, 1
  %v3837 = vor.u32 %v3832, %v3836
  %v3839 = vshrl.u32 %v3744, 16
  %v3841 = vshll.u32 %v3744, 16
  %v3843 = vrot.slane %v3841, 1
  %v3844 = vor.u32 %v3839, %v3843
  %v3846 = vshrl.u32 %v3745, 16
  %v3848 = vshll.u32 %v3745, 16
  %v3850 = vrot.slane %v3848, 1
  %v3851 = vor.u32 %v3846, %v3850
  %v3853 = vshrl.u32 %v3746, 16
  %v3855 = vshll.u32 %v3746, 16
  %v3857 = vrot.slane %v3855, 1
  %v3858 = vor.u32 %v3853, %v3857
  %3859 = vrot.lane.b32.xlu0 %v3753, 56
  %v3860 = vpop.permute.xlu0 %3859
  %3861 = vrot.lane.b32.xlu0 %v3760, 56
  %v3862 = vpop.permute.xlu0 %3861
  %3863 = vrot.lane.b32.xlu0 %v3767, 56
  %v3864 = vpop.permute.xlu0 %3863
  %3865 = vrot.lane.b32.xlu0 %v3774, 56
  %v3866 = vpop.permute.xlu0 %3865
  %3867 = vrot.lane.b32.xlu0 %v3781, 56
  %v3868 = vpop.permute.xlu0 %3867
  %3869 = vrot.lane.b32.xlu0 %v3788, 56
  %v3870 = vpop.permute.xlu0 %3869
  %3871 = vrot.lane.b32.xlu0 %v3795, 56
  %v3872 = vpop.permute.xlu0 %3871
  %3873 = vrot.lane.b32.xlu0 %v3802, 56
  %v3874 = vpop.permute.xlu0 %3873
  %3875 = vrot.lane.b32.xlu0 %v3809, 56
  %v3876 = vpop.permute.xlu0 %3875
  %3877 = vrot.lane.b32.xlu0 %v3816, 56
  %v3878 = vpop.permute.xlu0 %3877
  %3879 = vrot.lane.b32.xlu0 %v3823, 56
  %v3880 = vpop.permute.xlu0 %3879
  %3881 = vrot.lane.b32.xlu0 %v3830, 56
  %v3882 = vpop.permute.xlu0 %3881
  %3883 = vrot.lane.b32.xlu0 %v3837, 56
  %v3884 = vpop.permute.xlu0 %3883
  %3885 = vrot.lane.b32.xlu0 %v3844, 56
  %v3886 = vpop.permute.xlu0 %3885
  %3887 = vrot.lane.b32.xlu0 %v3851, 56
  %v3888 = vpop.permute.xlu0 %3887
  %3889 = vrot.lane.b32.xlu0 %v3858, 56
  %v3890 = vpop.permute.xlu0 %3889
  %v3907 = vunpack.c.l.b16 %v2905
  %v3908 = vunpack.c.l.b16 %v2906
  %v3909 = vunpack.c.l.b16 %v2907
  %v3910 = vunpack.c.l.b16 %v2908
  %v3911 = vunpack.c.l.b16 %v2909
  %v3912 = vunpack.c.l.b16 %v2910
  %v3913 = vunpack.c.l.b16 %v2911
  %v3914 = vunpack.c.l.b16 %v2912
  %v3915 = vunpack.c.l.b16 %v2913
  %v3916 = vunpack.c.l.b16 %v2914
  %v3917 = vunpack.c.l.b16 %v2915
  %v3918 = vunpack.c.l.b16 %v2916
  %v3919 = vunpack.c.l.b16 %v2917
  %v3920 = vunpack.c.l.b16 %v2918
  %v3921 = vunpack.c.l.b16 %v2919
  %v3922 = vunpack.c.l.b16 %v2920
  %v3923 = vpack.c.b16 %v3715, %v3907
  %v3924 = vpack.c.b16 %v3716, %v3908
  %v3925 = vpack.c.b16 %v3717, %v3909
  %v3926 = vpack.c.b16 %v3718, %v3910
  %v3927 = vpack.c.b16 %v3719, %v3911
  %v3928 = vpack.c.b16 %v3720, %v3912
  %v3929 = vpack.c.b16 %v3721, %v3913
  %v3930 = vpack.c.b16 %v3722, %v3914
  %v3931 = vpack.c.b16 %v3723, %v3915
  %v3932 = vpack.c.b16 %v3724, %v3916
  %v3933 = vpack.c.b16 %v3725, %v3917
  %v3934 = vpack.c.b16 %v3726, %v3918
  %v3935 = vpack.c.b16 %v3727, %v3919
  %v3936 = vpack.c.b16 %v3728, %v3920
  %v3937 = vpack.c.b16 %v3729, %v3921
  %v3938 = vpack.c.b16 %v3730, %v3922
  %v3939 = vrot.slane %v3923, 1
  %v3940 = vrot.slane %v3924, 1
  %v3941 = vrot.slane %v3925, 1
  %v3942 = vrot.slane %v3926, 1
  %v3943 = vrot.slane %v3927, 1
  %v3944 = vrot.slane %v3928, 1
  %v3945 = vrot.slane %v3929, 1
  %v3946 = vrot.slane %v3930, 1
  %v3947 = vrot.slane %v3931, 1
  %v3948 = vrot.slane %v3932, 1
  %v3949 = vrot.slane %v3933, 1
  %v3950 = vrot.slane %v3934, 1
  %v3951 = vrot.slane %v3935, 1
  %v3952 = vrot.slane %v3936, 1
  %v3953 = vrot.slane %v3937, 1
  %v3954 = vrot.slane %v3938, 1
  %3955 = vrot.lane.b32.xlu0 %v3939, 64
  %v3956 = vpop.permute.xlu0 %3955
  %3957 = vrot.lane.b32.xlu0 %v3940, 64
  %v3958 = vpop.permute.xlu0 %3957
  %3959 = vrot.lane.b32.xlu0 %v3941, 64
  %v3960 = vpop.permute.xlu0 %3959
  %3961 = vrot.lane.b32.xlu0 %v3942, 64
  %v3962 = vpop.permute.xlu0 %3961
  %3963 = vrot.lane.b32.xlu0 %v3943, 64
  %v3964 = vpop.permute.xlu0 %3963
  %3965 = vrot.lane.b32.xlu0 %v3944, 64
  %v3966 = vpop.permute.xlu0 %3965
  %3967 = vrot.lane.b32.xlu0 %v3945, 64
  %v3968 = vpop.permute.xlu0 %3967
  %3969 = vrot.lane.b32.xlu0 %v3946, 64
  %v3970 = vpop.permute.xlu0 %3969
  %3971 = vrot.lane.b32.xlu0 %v3947, 64
  %v3972 = vpop.permute.xlu0 %3971
  %3973 = vrot.lane.b32.xlu0 %v3948, 64
  %v3974 = vpop.permute.xlu0 %3973
  %3975 = vrot.lane.b32.xlu0 %v3949, 64
  %v3976 = vpop.permute.xlu0 %3975
  %3977 = vrot.lane.b32.xlu0 %v3950, 64
  %v3978 = vpop.permute.xlu0 %3977
  %3979 = vrot.lane.b32.xlu0 %v3951, 64
  %v3980 = vpop.permute.xlu0 %3979
  %3981 = vrot.lane.b32.xlu0 %v3952, 64
  %v3982 = vpop.permute.xlu0 %3981
  %3983 = vrot.lane.b32.xlu0 %v3953, 64
  %v3984 = vpop.permute.xlu0 %3983
  %3985 = vrot.lane.b32.xlu0 %v3954, 64
  %v3986 = vpop.permute.xlu0 %3985
  %v3989 = vsel %vm1695, %v2776, %v3124
  %v3992 = vsel %vm1695, %v2777, %v3126
  %v3995 = vsel %vm1695, %v2778, %v3128
  %v3998 = vsel %vm1695, %v2779, %v3130
  %v4001 = vsel %vm1695, %v2780, %v3132
  %v4004 = vsel %vm1695, %v2781, %v3134
  %v4007 = vsel %vm1695, %v2782, %v3136
  %v4010 = vsel %vm1695, %v2783, %v3138
  %v4013 = vsel %vm1695, %v2784, %v3140
  %v4016 = vsel %vm1695, %v2785, %v3142
  %v4019 = vsel %vm1695, %v2786, %v3144
  %v4022 = vsel %vm1695, %v2787, %v3146
  %v4025 = vsel %vm1695, %v2788, %v3148
  %v4028 = vsel %vm1695, %v2789, %v3150
  %v4031 = vsel %vm1695, %v2790, %v3152
  %v4034 = vsel %vm1695, %v2791, %v3154
  %v4036 = vsel %vm1744, %v3989, %v3220
  %v4038 = vsel %vm1744, %v3992, %v3222
  %v4040 = vsel %vm1744, %v3995, %v3224
  %v4042 = vsel %vm1744, %v3998, %v3226
  %v4044 = vsel %vm1744, %v4001, %v3228
  %v4046 = vsel %vm1744, %v4004, %v3230
  %v4048 = vsel %vm1744, %v4007, %v3232
  %v4050 = vsel %vm1744, %v4010, %v3234
  %v4052 = vsel %vm1744, %v4013, %v3236
  %v4054 = vsel %vm1744, %v4016, %v3238
  %v4056 = vsel %vm1744, %v4019, %v3240
  %v4058 = vsel %vm1744, %v4022, %v3242
  %v4060 = vsel %vm1744, %v4025, %v3244
  %v4062 = vsel %vm1744, %v4028, %v3246
  %v4064 = vsel %vm1744, %v4031, %v3248
  %v4066 = vsel %vm1744, %v4034, %v3250
  %v4068 = vsel %vm1777, %v4036, %v3300
  %v4070 = vsel %vm1777, %v4038, %v3302
  %v4072 = vsel %vm1777, %v4040, %v3304
  %v4074 = vsel %vm1777, %v4042, %v3306
  %v4076 = vsel %vm1777, %v4044, %v3308
  %v4078 = vsel %vm1777, %v4046, %v3310
  %v4080 = vsel %vm1777, %v4048, %v3312
  %v4082 = vsel %vm1777, %v4050, %v3314
  %v4084 = vsel %vm1777, %v4052, %v3316
  %v4086 = vsel %vm1777, %v4054, %v3318
  %v4088 = vsel %vm1777, %v4056, %v3320
  %v4090 = vsel %vm1777, %v4058, %v3322
  %v4092 = vsel %vm1777, %v4060, %v3324
  %v4094 = vsel %vm1777, %v4062, %v3326
  %v4096 = vsel %vm1777, %v4064, %v3328
  %v4098 = vsel %vm1777, %v4066, %v3330
  %v4100 = vsel %vm1810, %v4068, %v3492
  %v4102 = vsel %vm1810, %v4070, %v3494
  %v4104 = vsel %vm1810, %v4072, %v3496
  %v4106 = vsel %vm1810, %v4074, %v3498
  %v4108 = vsel %vm1810, %v4076, %v3500
  %v4110 = vsel %vm1810, %v4078, %v3502
  %v4112 = vsel %vm1810, %v4080, %v3504
  %v4114 = vsel %vm1810, %v4082, %v3506
  %v4116 = vsel %vm1810, %v4084, %v3508
  %v4118 = vsel %vm1810, %v4086, %v3510
  %v4120 = vsel %vm1810, %v4088, %v3512
  %v4122 = vsel %vm1810, %v4090, %v3514
  %v4124 = vsel %vm1810, %v4092, %v3516
  %v4126 = vsel %vm1810, %v4094, %v3518
  %v4128 = vsel %vm1810, %v4096, %v3520
  %v4130 = vsel %vm1810, %v4098, %v3522
  %v4132 = vsel %vm1843, %v4100, %v3588
  %v4134 = vsel %vm1843, %v4102, %v3590
  %v4136 = vsel %vm1843, %v4104, %v3592
  %v4138 = vsel %vm1843, %v4106, %v3594
  %v4140 = vsel %vm1843, %v4108, %v3596
  %v4142 = vsel %vm1843, %v4110, %v3598
  %v4144 = vsel %vm1843, %v4112, %v3600
  %v4146 = vsel %vm1843, %v4114, %v3602
  %v4148 = vsel %vm1843, %v4116, %v3604
  %v4150 = vsel %vm1843, %v4118, %v3606
  %v4152 = vsel %vm1843, %v4120, %v3608
  %v4154 = vsel %vm1843, %v4122, %v3610
  %v4156 = vsel %vm1843, %v4124, %v3612
  %v4158 = vsel %vm1843, %v4126, %v3614
  %v4160 = vsel %vm1843, %v4128, %v3616
  %v4162 = vsel %vm1843, %v4130, %v3618
  %v4164 = vsel %vm1876, %v4132, %v3668
  %v4166 = vsel %vm1876, %v4134, %v3670
  %v4168 = vsel %vm1876, %v4136, %v3672
  %v4170 = vsel %vm1876, %v4138, %v3674
  %v4172 = vsel %vm1876, %v4140, %v3676
  %v4174 = vsel %vm1876, %v4142, %v3678
  %v4176 = vsel %vm1876, %v4144, %v3680
  %v4178 = vsel %vm1876, %v4146, %v3682
  %v4180 = vsel %vm1876, %v4148, %v3684
  %v4182 = vsel %vm1876, %v4150, %v3686
  %v4184 = vsel %vm1876, %v4152, %v3688
  %v4186 = vsel %vm1876, %v4154, %v3690
  %v4188 = vsel %vm1876, %v4156, %v3692
  %v4190 = vsel %vm1876, %v4158, %v3694
  %v4192 = vsel %vm1876, %v4160, %v3696
  %v4194 = vsel %vm1876, %v4162, %v3698
  %v4196 = vsel %vm1909, %v4164, %v3860
  %v4198 = vsel %vm1909, %v4166, %v3862
  %v4200 = vsel %vm1909, %v4168, %v3864
  %v4202 = vsel %vm1909, %v4170, %v3866
  %v4204 = vsel %vm1909, %v4172, %v3868
  %v4206 = vsel %vm1909, %v4174, %v3870
  %v4208 = vsel %vm1909, %v4176, %v3872
  %v4210 = vsel %vm1909, %v4178, %v3874
  %v4212 = vsel %vm1909, %v4180, %v3876
  %v4214 = vsel %vm1909, %v4182, %v3878
  %v4216 = vsel %vm1909, %v4184, %v3880
  %v4218 = vsel %vm1909, %v4186, %v3882
  %v4220 = vsel %vm1909, %v4188, %v3884
  %v4222 = vsel %vm1909, %v4190, %v3886
  %v4224 = vsel %vm1909, %v4192, %v3888
  %v4226 = vsel %vm1909, %v4194, %v3890
  %v4228 = vsel %vm1942, %v4196, %v3956
  %v4230 = vsel %vm1942, %v4198, %v3958
  %v4232 = vsel %vm1942, %v4200, %v3960
  %v4234 = vsel %vm1942, %v4202, %v3962
  %v4236 = vsel %vm1942, %v4204, %v3964
  %v4238 = vsel %vm1942, %v4206, %v3966
  %v4240 = vsel %vm1942, %v4208, %v3968
  %v4242 = vsel %vm1942, %v4210, %v3970
  %v4244 = vsel %vm1942, %v4212, %v3972
  %v4246 = vsel %vm1942, %v4214, %v3974
  %v4248 = vsel %vm1942, %v4216, %v3976
  %v4250 = vsel %vm1942, %v4218, %v3978
  %v4252 = vsel %vm1942, %v4220, %v3980
  %v4254 = vsel %vm1942, %v4222, %v3982
  %v4256 = vsel %vm1942, %v4224, %v3984
  %v4258 = vsel %vm1942, %v4226, %v3986
  %v4260 = vlaneseq
  %v4261 = vshrl.u32 %v4260, 7
  %v4262 = vsub.s32 0, %v4261
  %v4263 = vrot.slane %v2930, %v4262
  %v4281 = vunpack.c.l.b16 %v4228
  %v4282 = vunpack.c.l.b16 %v4230
  %v4283 = vunpack.c.l.b16 %v4232
  %v4284 = vunpack.c.l.b16 %v4234
  %v4285 = vunpack.c.l.b16 %v4236
  %v4286 = vunpack.c.l.b16 %v4238
  %v4287 = vunpack.c.l.b16 %v4240
  %v4288 = vunpack.c.l.b16 %v4242
  %v4289 = vunpack.c.l.b16 %v4244
  %v4290 = vunpack.c.l.b16 %v4246
  %v4291 = vunpack.c.l.b16 %v4248
  %v4292 = vunpack.c.l.b16 %v4250
  %v4293 = vunpack.c.l.b16 %v4252
  %v4294 = vunpack.c.l.b16 %v4254
  %v4295 = vunpack.c.l.b16 %v4256
  %v4296 = vunpack.c.l.b16 %v4258
  %v4297 = vpack.c.b16 %v4282, %v4281
  %v4298 = vpack.c.b16 %v4284, %v4283
  %v4299 = vpack.c.b16 %v4286, %v4285
  %v4300 = vpack.c.b16 %v4288, %v4287
  %v4301 = vpack.c.b16 %v4290, %v4289
  %v4302 = vpack.c.b16 %v4292, %v4291
  %v4303 = vpack.c.b16 %v4294, %v4293
  %v4304 = vpack.c.b16 %v4296, %v4295
  %v4314 = vunpack.c.l.b16 %v2921
  %v4315 = vunpack.c.l.b16 %v2922
  %v4316 = vunpack.c.l.b16 %v2923
  %v4317 = vunpack.c.l.b16 %v2924
  %v4318 = vunpack.c.l.b16 %v2925
  %v4319 = vunpack.c.l.b16 %v2926
  %v4320 = vunpack.c.l.b16 %v2927
  %v4321 = vunpack.c.l.b16 %v2928
  %v4322 = vunpack.c.l.b16 %v2929
  %v4323 = vpack.c.b16 %v4315, %v4314
  %v4324 = vpack.c.b16 %v4317, %v4316
  %v4325 = vpack.c.b16 %v4319, %v4318
  %v4326 = vpack.c.b16 %v4321, %v4320
  %v4327 = vpack.c.b16 %v4322, %v4322
  %v4333 = vsel %vm2048, %v4297, 0
  %v4336 = vsel %vm2048, %v4298, 0
  %v4339 = vsel %vm2048, %v4299, 0
  %v4342 = vsel %vm2048, %v4300, 0
  %v4345 = vsel %vm2048, %v4301, 0
  %v4348 = vsel %vm2048, %v4302, 0
  %v4351 = vsel %vm2048, %v4303, 0
  %v4354 = vsel %vm2048, %v4304, 0
  %v4357 = vsel %vm2073, %v4327, 0
  %4359 = vmatprep.subr.bf16.mxu0 0
  %4360 = vmatpush1.bf16.msra.mxu0 0
  %4361 = vmatprep.subr.bf16.mxu0 0
  %4362 = vmatpush1.bf16.msra.mxu0 0
  %4363 = vmatprep.subr.bf16.mxu0 0
  %4364 = vmatpush1.bf16.msra.mxu0 0
  %4365 = vmatprep.subr.bf16.mxu0 0
  %4366 = vmatpush1.bf16.msra.mxu0 %v4357
  %4367 = vmatprep.subr.bf16.mxu0 0
  %4368 = vmatpush1.bf16.msra.mxu0 %v4326
  %4369 = vmatprep.subr.bf16.mxu0 0
  %4370 = vmatpush1.bf16.msra.mxu0 %v4325
  %4371 = vmatprep.subr.bf16.mxu0 0
  %4372 = vmatpush1.bf16.msra.mxu0 %v4324
  %4373 = vmatprep.subr.bf16.mxu0 0
  %4374 = vmatpush1.bf16.msra.mxu0 %v4323
  %4375 = vmatprep.subr.bf16.mxu0 0
  %4376 = vmatpush2.bf16.msra.mxu0 0
  %4377 = vmatprep.subr.bf16.mxu0 0
  %4378 = vmatpush2.bf16.msra.mxu0 0
  %4379 = vmatprep.subr.bf16.mxu0 0
  %4380 = vmatpush2.bf16.msra.mxu0 0
  %4381 = vmatprep.subr.bf16.mxu0 0
  %4382 = vmatpush2.bf16.msra.mxu0 0
  %4383 = vmatprep.subr.bf16.mxu0 0
  %4384 = vmatpush2.bf16.msra.mxu0 0
  %4385 = vmatprep.subr.bf16.mxu0 0
  %4386 = vmatpush2.bf16.msra.mxu0 0
  %4387 = vmatprep.subr.bf16.mxu0 0
  %4388 = vmatpush2.bf16.msra.mxu0 0
  %4389 = vmatprep.subr.bf16.mxu0 0
  %4390 = vmatpush2.bf16.msra.mxu0 0
  %4391 = vmatprep.mubr.bf16.mxu0 0
  %4392 = vmatmul.mubr.bf16.gmra.mxu0 %v4333
  %v4393 = vpop.f32.mrf.mxu0
  %v4394 = vadd.f32 %v4263, %v4393
  %v4395 = vpop.f32.mrf.mxu0
  %v4396 = vpop.f32.mrf.mxu0
  %v4397 = vadd.f32 %v4263, %v4396
  %v4398 = vpop.f32.mrf.mxu0
  %4399 = vmatprep.mubr.bf16.mxu0 0
  %4400 = vmatmul.mubr.bf16.gmra.mxu0 %v4336
  %v4401 = vpop.f32.mrf.mxu0
  %v4402 = vadd.f32 %v4263, %v4401
  %v4403 = vpop.f32.mrf.mxu0
  %v4404 = vpop.f32.mrf.mxu0
  %v4405 = vadd.f32 %v4263, %v4404
  %v4406 = vpop.f32.mrf.mxu0
  %4407 = vmatprep.mubr.bf16.mxu0 0
  %4408 = vmatmul.mubr.bf16.gmra.mxu0 %v4339
  %v4409 = vpop.f32.mrf.mxu0
  %v4410 = vadd.f32 %v4263, %v4409
  %v4411 = vpop.f32.mrf.mxu0
  %v4412 = vpop.f32.mrf.mxu0
  %v4413 = vadd.f32 %v4263, %v4412
  %v4414 = vpop.f32.mrf.mxu0
  %4415 = vmatprep.mubr.bf16.mxu0 0
  %4416 = vmatmul.mubr.bf16.gmra.mxu0 %v4342
  %v4417 = vpop.f32.mrf.mxu0
  %v4418 = vadd.f32 %v4263, %v4417
  %v4419 = vpop.f32.mrf.mxu0
  %v4420 = vpop.f32.mrf.mxu0
  %v4421 = vadd.f32 %v4263, %v4420
  %v4422 = vpop.f32.mrf.mxu0
  %4423 = vmatprep.mubr.bf16.mxu0 0
  %4424 = vmatmul.mubr.bf16.gmra.mxu0 %v4345
  %v4425 = vpop.f32.mrf.mxu0
  %v4426 = vadd.f32 %v4263, %v4425
  %v4427 = vpop.f32.mrf.mxu0
  %v4428 = vpop.f32.mrf.mxu0
  %v4429 = vadd.f32 %v4263, %v4428
  %v4430 = vpop.f32.mrf.mxu0
  %4431 = vmatprep.mubr.bf16.mxu0 0
  %4432 = vmatmul.mubr.bf16.gmra.mxu0 %v4348
  %v4433 = vpop.f32.mrf.mxu0
  %v4434 = vadd.f32 %v4263, %v4433
  %v4435 = vpop.f32.mrf.mxu0
  %v4436 = vpop.f32.mrf.mxu0
  %v4437 = vadd.f32 %v4263, %v4436
  %v4438 = vpop.f32.mrf.mxu0
  %4439 = vmatprep.mubr.bf16.mxu0 0
  %4440 = vmatmul.mubr.bf16.gmra.mxu0 %v4351
  %v4441 = vpop.f32.mrf.mxu0
  %v4442 = vadd.f32 %v4263, %v4441
  %v4443 = vpop.f32.mrf.mxu0
  %v4444 = vpop.f32.mrf.mxu0
  %v4445 = vadd.f32 %v4263, %v4444
  %v4446 = vpop.f32.mrf.mxu0
  %4447 = vmatprep.mubr.bf16.mxu0 0
  %4448 = vmatmul.mubr.bf16.gmra.mxu0 %v4354
  %v4449 = vpop.f32.mrf.mxu0
  %v4450 = vadd.f32 %v4263, %v4449
  %v4451 = vpop.f32.mrf.mxu0
  %v4452 = vpop.f32.mrf.mxu0
  %v4453 = vadd.f32 %v4263, %v4452
  %v4454 = vpop.f32.mrf.mxu0
  %4455 = vdwg.mxu0
  %v4456 = vsel %vm1695, %v4394, 0.0
  %v4457 = vsel %vm1695, %v4397, 0.0
  %v4458 = vadd.f32 %v4456, %v4457
  %v4459 = vsel %vm1695, %v4402, 0.0
  %v4460 = vadd.f32 %v4458, %v4459
  %v4461 = vsel %vm1695, %v4405, 0.0
  %v4462 = vadd.f32 %v4460, %v4461
  %v4463 = vsel %vm1695, %v4410, 0.0
  %v4464 = vadd.f32 %v4462, %v4463
  %v4465 = vsel %vm1695, %v4413, 0.0
  %v4466 = vadd.f32 %v4464, %v4465
  %v4467 = vsel %vm1695, %v4418, 0.0
  %v4468 = vadd.f32 %v4466, %v4467
  %v4469 = vsel %vm1695, %v4421, 0.0
  %v4470 = vadd.f32 %v4468, %v4469
  %v4471 = vsel %vm1695, %v4426, 0.0
  %v4472 = vadd.f32 %v4470, %v4471
  %v4473 = vsel %vm1695, %v4429, 0.0
  %v4474 = vadd.f32 %v4472, %v4473
  %v4475 = vsel %vm1695, %v4434, 0.0
  %v4476 = vadd.f32 %v4474, %v4475
  %v4477 = vsel %vm1695, %v4437, 0.0
  %v4478 = vadd.f32 %v4476, %v4477
  %v4479 = vsel %vm1695, %v4442, 0.0
  %v4480 = vadd.f32 %v4478, %v4479
  %v4481 = vsel %vm1695, %v4445, 0.0
  %v4482 = vadd.f32 %v4480, %v4481
  %v4483 = vsel %vm1695, %v4450, 0.0
  %v4484 = vadd.f32 %v4482, %v4483
  %v4485 = vsel %vm1695, %v4453, 0.0
  %v4486 = vadd.f32 %v4484, %v4485
  %v4487 = vrot.slane %v4486, 4
  %v4488 = vadd.f32 %v4486, %v4487
  %v4489 = vrot.slane %v4488, 2
  %v4490 = vadd.f32 %v4488, %v4489
  %v4491 = vrot.slane %v4490, 1
  %v4492 = vadd.f32 %v4490, %v4491
  %v4493 = vmul.f32 %v4492, %v2211
  %v4494 = vsub.f32 %v4394, %v4493
  %v4495 = vsub.f32 %v4397, %v4493
  %v4496 = vsub.f32 %v4402, %v4493
  %v4497 = vsub.f32 %v4405, %v4493
  %v4498 = vsub.f32 %v4410, %v4493
  %v4499 = vsub.f32 %v4413, %v4493
  %v4500 = vsub.f32 %v4418, %v4493
  %v4501 = vsub.f32 %v4421, %v4493
  %v4502 = vsub.f32 %v4426, %v4493
  %v4503 = vsub.f32 %v4429, %v4493
  %v4504 = vsub.f32 %v4434, %v4493
  %v4505 = vsub.f32 %v4437, %v4493
  %v4506 = vsub.f32 %v4442, %v4493
  %v4507 = vsub.f32 %v4445, %v4493
  %v4508 = vsub.f32 %v4450, %v4493
  %v4509 = vsub.f32 %v4453, %v4493
  %v4510 = vmul.f32 %v4494, %v4494
  %v4511 = vmul.f32 %v4495, %v4495
  %v4512 = vmul.f32 %v4496, %v4496
  %v4513 = vmul.f32 %v4497, %v4497
  %v4514 = vmul.f32 %v4498, %v4498
  %v4515 = vmul.f32 %v4499, %v4499
  %v4516 = vmul.f32 %v4500, %v4500
  %v4517 = vmul.f32 %v4501, %v4501
  %v4518 = vmul.f32 %v4502, %v4502
  %v4519 = vmul.f32 %v4503, %v4503
  %v4520 = vmul.f32 %v4504, %v4504
  %v4521 = vmul.f32 %v4505, %v4505
  %v4522 = vmul.f32 %v4506, %v4506
  %v4523 = vmul.f32 %v4507, %v4507
  %v4524 = vmul.f32 %v4508, %v4508
  %v4525 = vmul.f32 %v4509, %v4509
  %v4526 = vsel %vm1695, %v4510, 0.0
  %v4527 = vsel %vm1695, %v4511, 0.0
  %v4528 = vadd.f32 %v4526, %v4527
  %v4529 = vsel %vm1695, %v4512, 0.0
  %v4530 = vadd.f32 %v4528, %v4529
  %v4531 = vsel %vm1695, %v4513, 0.0
  %v4532 = vadd.f32 %v4530, %v4531
  %v4533 = vsel %vm1695, %v4514, 0.0
  %v4534 = vadd.f32 %v4532, %v4533
  %v4535 = vsel %vm1695, %v4515, 0.0
  %v4536 = vadd.f32 %v4534, %v4535
  %v4537 = vsel %vm1695, %v4516, 0.0
  %v4538 = vadd.f32 %v4536, %v4537
  %v4539 = vsel %vm1695, %v4517, 0.0
  %v4540 = vadd.f32 %v4538, %v4539
  %v4541 = vsel %vm1695, %v4518, 0.0
  %v4542 = vadd.f32 %v4540, %v4541
  %v4543 = vsel %vm1695, %v4519, 0.0
  %v4544 = vadd.f32 %v4542, %v4543
  %v4545 = vsel %vm1695, %v4520, 0.0
  %v4546 = vadd.f32 %v4544, %v4545
  %v4547 = vsel %vm1695, %v4521, 0.0
  %v4548 = vadd.f32 %v4546, %v4547
  %v4549 = vsel %vm1695, %v4522, 0.0
  %v4550 = vadd.f32 %v4548, %v4549
  %v4551 = vsel %vm1695, %v4523, 0.0
  %v4552 = vadd.f32 %v4550, %v4551
  %v4553 = vsel %vm1695, %v4524, 0.0
  %v4554 = vadd.f32 %v4552, %v4553
  %v4555 = vsel %vm1695, %v4525, 0.0
  %v4556 = vadd.f32 %v4554, %v4555
  %v4557 = vrot.slane %v4556, 4
  %v4558 = vadd.f32 %v4556, %v4557
  %v4559 = vrot.slane %v4558, 2
  %v4560 = vadd.f32 %v4558, %v4559
  %v4561 = vrot.slane %v4560, 1
  %v4562 = vadd.f32 %v4560, %v4561
  %v4563 = vmul.f32 %v4562, %v2211
  %v4564 = vld [vmem:[%s7] sm:$0x1]
  %v4565 = vadd.f32 %v4563, 1e-05
  %v4566 = vrsqrt.pop %v4565
  %v4567 = vmul.f32 %v4564, %v4566
  %v4568 = vld [vmem:[%s8] sm:$0x1]
  %v4569 = vmul.f32 %v4493, %v4567
  %v4570 = vsub.f32 %v4568, %v4569
  %v4572 = vlaneseq
  %v4573 = vshrl.u32 %v4572, 7
  %v4574 = vsub.s32 0, %v4573
  %v4575 = vrot.slane %v4567, %v4574
  %v4577 = vmul.f32 %v4394, %v4575
  %v4578 = vmul.f32 %v4397, %v4575
  %v4579 = vmul.f32 %v4402, %v4575
  %v4580 = vmul.f32 %v4405, %v4575
  %v4581 = vmul.f32 %v4410, %v4575
  %v4582 = vmul.f32 %v4413, %v4575
  %v4583 = vmul.f32 %v4418, %v4575
  %v4584 = vmul.f32 %v4421, %v4575
  %v4585 = vmul.f32 %v4426, %v4575
  %v4586 = vmul.f32 %v4429, %v4575
  %v4587 = vmul.f32 %v4434, %v4575
  %v4588 = vmul.f32 %v4437, %v4575
  %v4589 = vmul.f32 %v4442, %v4575
  %v4590 = vmul.f32 %v4445, %v4575
  %v4591 = vmul.f32 %v4450, %v4575
  %v4592 = vmul.f32 %v4453, %v4575
  %v4594 = vlaneseq
  %v4595 = vshrl.u32 %v4594, 7
  %v4596 = vsub.s32 0, %v4595
  %v4597 = vrot.slane %v4570, %v4596
  %v4599 = vadd.f32 %v4577, %v4597
  %v4600 = vadd.f32 %v4578, %v4597
  %v4601 = vadd.f32 %v4579, %v4597
  %v4602 = vadd.f32 %v4580, %v4597
  %v4603 = vadd.f32 %v4581, %v4597
  %v4604 = vadd.f32 %v4582, %v4597
  %v4605 = vadd.f32 %v4583, %v4597
  %v4606 = vadd.f32 %v4584, %v4597
  %v4607 = vadd.f32 %v4585, %v4597
  %v4608 = vadd.f32 %v4586, %v4597
  %v4609 = vadd.f32 %v4587, %v4597
  %v4610 = vadd.f32 %v4588, %v4597
  %v4611 = vadd.f32 %v4589, %v4597
  %v4612 = vadd.f32 %v4590, %v4597
  %v4613 = vadd.f32 %v4591, %v4597
  %v4614 = vadd.f32 %v4592, %v4597
  %v4615 = vld [vmem:[%s0] sm:$0xff]
  %v4616 = vld [vmem:[%s0 + $0x8] sm:$0xff]
  %v4617 = vld [vmem:[%s0 + $0x10] sm:$0xff]
  %v4618 = vld [vmem:[%s0 + $0x18] sm:$0xff]
  %v4619 = vld [vmem:[%s0 + $0x20] sm:$0xff]
  %v4620 = vld [vmem:[%s0 + $0x28] sm:$0xff]
  %v4621 = vld [vmem:[%s0 + $0x30] sm:$0xff]
  %v4622 = vld [vmem:[%s0 + $0x38] sm:$0xff]
  %v4623 = vld [vmem:[%s0 + $0x40] sm:$0xff]
  %v4624 = vld [vmem:[%s0 + $0x48] sm:$0xff]
  %v4625 = vld [vmem:[%s0 + $0x50] sm:$0xff]
  %v4626 = vld [vmem:[%s0 + $0x58] sm:$0xff]
  %v4627 = vld [vmem:[%s0 + $0x60] sm:$0xff]
  %v4628 = vld [vmem:[%s0 + $0x68] sm:$0xff]
  %v4629 = vld [vmem:[%s0 + $0x70] sm:$0xff]
  %v4630 = vld [vmem:[%s0 + $0x78] sm:$0xff]
  %v4631 = vadd.f32 %v4599, %v4615
  %v4632 = vadd.f32 %v4600, %v4616
  %v4633 = vadd.f32 %v4601, %v4617
  %v4634 = vadd.f32 %v4602, %v4618
  %v4635 = vadd.f32 %v4603, %v4619
  %v4636 = vadd.f32 %v4604, %v4620
  %v4637 = vadd.f32 %v4605, %v4621
  %v4638 = vadd.f32 %v4606, %v4622
  %v4639 = vadd.f32 %v4607, %v4623
  %v4640 = vadd.f32 %v4608, %v4624
  %v4641 = vadd.f32 %v4609, %v4625
  %v4642 = vadd.f32 %v4610, %v4626
  %v4643 = vadd.f32 %v4611, %v4627
  %v4644 = vadd.f32 %v4612, %v4628
  %v4645 = vadd.f32 %v4613, %v4629
  %v4646 = vadd.f32 %v4614, %v4630
  %v4647 = vmax.f32 %v4631, 0.0
  %v4648 = vmax.f32 %v4632, 0.0
  %v4649 = vmax.f32 %v4633, 0.0
  %v4650 = vmax.f32 %v4634, 0.0
  %v4651 = vmax.f32 %v4635, 0.0
  %v4652 = vmax.f32 %v4636, 0.0
  %v4653 = vmax.f32 %v4637, 0.0
  %v4654 = vmax.f32 %v4638, 0.0
  %v4655 = vmax.f32 %v4639, 0.0
  %v4656 = vmax.f32 %v4640, 0.0
  %v4657 = vmax.f32 %v4641, 0.0
  %v4658 = vmax.f32 %v4642, 0.0
  %v4659 = vmax.f32 %v4643, 0.0
  %v4660 = vmax.f32 %v4644, 0.0
  %v4661 = vmax.f32 %v4645, 0.0
  %v4662 = vmax.f32 %v4646, 0.0
  %4663 = vst.msk [vmem:[%s9] sm:$0xff] %vm1695, %v4647
  %4664 = vst.msk [vmem:[%s9 + $0x8] sm:$0xff] %vm1695, %v4648
  %4665 = vst.msk [vmem:[%s9 + $0x10] sm:$0xff] %vm1695, %v4649
  %4666 = vst.msk [vmem:[%s9 + $0x18] sm:$0xff] %vm1695, %v4650
  %4667 = vst.msk [vmem:[%s9 + $0x20] sm:$0xff] %vm1695, %v4651
  %4668 = vst.msk [vmem:[%s9 + $0x28] sm:$0xff] %vm1695, %v4652
  %4669 = vst.msk [vmem:[%s9 + $0x30] sm:$0xff] %vm1695, %v4653
  %4670 = vst.msk [vmem:[%s9 + $0x38] sm:$0xff] %vm1695, %v4654
  %4671 = vst.msk [vmem:[%s9 + $0x40] sm:$0xff] %vm1695, %v4655
  %4672 = vst.msk [vmem:[%s9 + $0x48] sm:$0xff] %vm1695, %v4656
  %4673 = vst.msk [vmem:[%s9 + $0x50] sm:$0xff] %vm1695, %v4657
  %4674 = vst.msk [vmem:[%s9 + $0x58] sm:$0xff] %vm1695, %v4658
  %4675 = vst.msk [vmem:[%s9 + $0x60] sm:$0xff] %vm1695, %v4659
  %4676 = vst.msk [vmem:[%s9 + $0x68] sm:$0xff] %vm1695, %v4660
  %4677 = vst.msk [vmem:[%s9 + $0x70] sm:$0xff] %vm1695, %v4661
  %4678 = vst.msk [vmem:[%s9 + $0x78] sm:$0xff] %vm1695, %v4662
  // Predicated region
  $region38: #{_forward.3} parent=0 // pred_check
    _
  $region39: #{_forward.3} parent=0 // pred_check_branch
    %4680 = sbr.rel (0) target = $region41
  $region40: #{_forward.3} parent=0 // pred_region
    _
  $region41: #{_forward.3} parent=0 // pred_fallthru
    _
  // Predicated region
  $region42: #{_forward.3} parent=0 // pred_check
    _
  $region43: #{_forward.3} parent=0 // pred_check_branch
    %4682 = sbr.rel (0) target = $region45
  $region44: #{_forward.3} parent=0 // pred_region
    _
  $region45: #{_forward.3} parent=0 // pred_fallthru
    _

// kernel: _forward.2
$region0: #{_forward.2}
  #allocation0 [shape = 'u32[]', space=smem, size = 0x4, offset = 0x4, fixed_abs, tag = 'smem constant byte address 0x4 - core index']
  #allocation1 [shape = 'u32[144,128]{1,0:T(1,128)}', space=vmem, size = 0x12000, scoped, tag = 'internal scratch']
  #allocation2 [shape = 'bf16[2,9,2,9,8]{4,3,2,1,0:T(8,128)(2,1)}', space=vmem, size = 0x24000, scoped, tag = 'scratch operand']
  #allocation3 [shape = 'bf16[2,10,10,8]{3,2,1,0:T(8,128)(2,1)}', space=vmem, size = 0x14000, scoped, tag = 'scratch operand']
  %s0 = inlined_call_operand.vmem [shape: f32[2,8,2,8,8], index: 0, kind: input, shape index: {}]
  %s1 = inlined_call_operand.vmem [shape: bf16[36,8], index: 1, kind: input, shape index: {}]
  %s2 = inlined_call_operand.vmem [shape: f32[1,8], index: 2, kind: input, shape index: {}]
  %s3 = inlined_call_operand.vmem [shape: f32[1,8], index: 3, kind: input, shape index: {}]
  %s4 = inlined_call_operand.vmem [shape: f32[1,8], index: 4, kind: input, shape index: {}]
  %s5 = inlined_call_operand.vmem [shape: bf16[72,8], index: 5, kind: input, shape index: {}]
  %s6 = inlined_call_operand.vmem [shape: f32[1,8], index: 6, kind: input, shape index: {}]
  %s7 = inlined_call_operand.vmem [shape: f32[1,8], index: 7, kind: input, shape index: {}]
  %s8 = inlined_call_operand.vmem [shape: f32[1,8], index: 8, kind: input, shape index: {}]
  %s9 = inlined_call_operand.vmem [shape: bf16[4,8], index: 9, kind: input, shape index: {}]
  %s10 = inlined_call_operand.vmem [shape: f32[1,8], index: 10, kind: input, shape index: {}]
  %s11 = inlined_call_operand.vmem [shape: f32[2,8,8,8], index: 11, kind: output, shape index: {}]
  %s12 = sld [smem:[#allocation0]]
  $region54: #{_forward.2} parent=0
    _
  %s14 = ssub.s32 1, %s12
  %s15 = scalar_select 0, %s14, %s12
  // Predicated region
  $region2: #{_forward.2} parent=0 // pred_check
    _
  $region3: #{_forward.2} parent=0 // pred_check_branch
    %17 = sbr.rel (0) target = $region5
  $region4: #{_forward.2} parent=0 // pred_region
    _
  $region5: #{_forward.2} parent=0 // pred_fallthru
    _
  // Predicated region
  $region6: #{_forward.2} parent=0 // pred_check
    _
  $region7: #{_forward.2} parent=0 // pred_check_branch
    %19 = sbr.rel (0) target = $region9
  $region8: #{_forward.2} parent=0 // pred_region
    _
  $region9: #{_forward.2} parent=0 // pred_fallthru
    _
  // Predicated region
  $region10: #{_forward.2} parent=0 // pred_check
    _
  $region11: #{_forward.2} parent=0 // pred_check_branch
    %21 = sbr.rel (0) target = $region13
  $region12: #{_forward.2} parent=0 // pred_region
    _
  $region13: #{_forward.2} parent=0 // pred_fallthru
    _
  // Predicated region
  $region14: #{_forward.2} parent=0 // pred_check
    _
  $region15: #{_forward.2} parent=0 // pred_check_branch
    %23 = sbr.rel (0) target = $region17
  $region16: #{_forward.2} parent=0 // pred_region
    _
  $region17: #{_forward.2} parent=0 // pred_fallthru
    _
  // Predicated region
  $region18: #{_forward.2} parent=0 // pred_check
    _
  $region19: #{_forward.2} parent=0 // pred_check_branch
    %25 = sbr.rel (0) target = $region21
  $region20: #{_forward.2} parent=0 // pred_region
    _
  $region21: #{_forward.2} parent=0 // pred_fallthru
    _
  // Predicated region
  $region22: #{_forward.2} parent=0 // pred_check
    _
  $region23: #{_forward.2} parent=0 // pred_check_branch
    %27 = sbr.rel (0) target = $region25
  $region24: #{_forward.2} parent=0 // pred_region
    _
  $region25: #{_forward.2} parent=0 // pred_fallthru
    _
  // Predicated region
  $region26: #{_forward.2} parent=0 // pred_check
    _
  $region27: #{_forward.2} parent=0 // pred_check_branch
    %29 = sbr.rel (0) target = $region29
  $region28: #{_forward.2} parent=0 // pred_region
    _
  $region29: #{_forward.2} parent=0 // pred_fallthru
    _
  // Predicated region
  $region30: #{_forward.2} parent=0 // pred_check
    _
  $region31: #{_forward.2} parent=0 // pred_check_branch
    %31 = sbr.rel (0) target = $region33
  $region32: #{_forward.2} parent=0 // pred_region
    _
  $region33: #{_forward.2} parent=0 // pred_fallthru
    _
  // Predicated region
  $region34: #{_forward.2} parent=0 // pred_check
    _
  $region35: #{_forward.2} parent=0 // pred_check_branch
    %33 = sbr.rel (0) target = $region37
  $region36: #{_forward.2} parent=0 // pred_region
    _
  $region37: #{_forward.2} parent=0 // pred_fallthru
    _
  // Predicated region
  $region38: #{_forward.2} parent=0 // pred_check
    _
  $region39: #{_forward.2} parent=0 // pred_check_branch
    %35 = sbr.rel (0) target = $region41
  $region40: #{_forward.2} parent=0 // pred_region
    _
  $region41: #{_forward.2} parent=0 // pred_fallthru
    _
  // Predicated region
  $region42: #{_forward.2} parent=0 // pred_check
    _
  $region43: #{_forward.2} parent=0 // pred_check_branch
    %37 = sbr.rel (0) target = $region45
  $region44: #{_forward.2} parent=0 // pred_region
    _
  $region45: #{_forward.2} parent=0 // pred_fallthru
    _
  %v39 = vld [vmem:[%s0] sm:$0xff]
  %v40 = vld [vmem:[%s0 + $0x8] sm:$0xff]
  %v41 = vld [vmem:[%s0 + $0x10] sm:$0xff]
  %v42 = vld [vmem:[%s0 + $0x18] sm:$0xff]
  %v43 = vld [vmem:[%s0 + $0x20] sm:$0xff]
  %v44 = vld [vmem:[%s0 + $0x28] sm:$0xff]
  %v45 = vld [vmem:[%s0 + $0x30] sm:$0xff]
  %v46 = vld [vmem:[%s0 + $0x38] sm:$0xff]
  %v47 = vld [vmem:[%s0 + $0x40] sm:$0xff]
  %v48 = vld [vmem:[%s0 + $0x48] sm:$0xff]
  %v49 = vld [vmem:[%s0 + $0x50] sm:$0xff]
  %v50 = vld [vmem:[%s0 + $0x58] sm:$0xff]
  %v51 = vld [vmem:[%s0 + $0x60] sm:$0xff]
  %v52 = vld [vmem:[%s0 + $0x68] sm:$0xff]
  %v53 = vld [vmem:[%s0 + $0x70] sm:$0xff]
  %v54 = vld [vmem:[%s0 + $0x78] sm:$0xff]
  %v55 = vld [vmem:[%s0 + $0x80] sm:$0xff]
  %v56 = vld [vmem:[%s0 + $0x88] sm:$0xff]
  %v57 = vld [vmem:[%s0 + $0x90] sm:$0xff]
  %v58 = vld [vmem:[%s0 + $0x98] sm:$0xff]
  %v59 = vld [vmem:[%s0 + $0xa0] sm:$0xff]
  %v60 = vld [vmem:[%s0 + $0xa8] sm:$0xff]
  %v61 = vld [vmem:[%s0 + $0xb0] sm:$0xff]
  %v62 = vld [vmem:[%s0 + $0xb8] sm:$0xff]
  %v63 = vld [vmem:[%s0 + $0xc0] sm:$0xff]
  %v64 = vld [vmem:[%s0 + $0xc8] sm:$0xff]
  %v65 = vld [vmem:[%s0 + $0xd0] sm:$0xff]
  %v66 = vld [vmem:[%s0 + $0xd8] sm:$0xff]
  %v67 = vld [vmem:[%s0 + $0xe0] sm:$0xff]
  %v68 = vld [vmem:[%s0 + $0xe8] sm:$0xff]
  %v69 = vld [vmem:[%s0 + $0xf0] sm:$0xff]
  %v70 = vld [vmem:[%s0 + $0xf8] sm:$0xff]
  %v71 = vpack.c.bf16 %v39, %v39
  %v72 = vpack.c.bf16 %v40, %v40
  %v73 = vpack.c.bf16 %v41, %v41
  %v74 = vpack.c.bf16 %v42, %v42
  %v75 = vpack.c.bf16 %v43, %v43
  %v76 = vpack.c.bf16 %v44, %v44
  %v77 = vpack.c.bf16 %v45, %v45
  %v78 = vpack.c.bf16 %v46, %v46
  %v79 = vpack.c.bf16 %v47, %v47
  %v80 = vpack.c.bf16 %v48, %v48
  %v81 = vpack.c.bf16 %v49, %v49
  %v82 = vpack.c.bf16 %v50, %v50
  %v83 = vpack.c.bf16 %v51, %v51
  %v84 = vpack.c.bf16 %v52, %v52
  %v85 = vpack.c.bf16 %v53, %v53
  %v86 = vpack.c.bf16 %v54, %v54
  %v87 = vpack.c.bf16 %v55, %v55
  %v88 = vpack.c.bf16 %v56, %v56
  %v89 = vpack.c.bf16 %v57, %v57
  %v90 = vpack.c.bf16 %v58, %v58
  %v91 = vpack.c.bf16 %v59, %v59
  %v92 = vpack.c.bf16 %v60, %v60
  %v93 = vpack.c.bf16 %v61, %v61
  %v94 = vpack.c.bf16 %v62, %v62
  %v95 = vpack.c.bf16 %v63, %v63
  %v96 = vpack.c.bf16 %v64, %v64
  %v97 = vpack.c.bf16 %v65, %v65
  %v98 = vpack.c.bf16 %v66, %v66
  %v99 = vpack.c.bf16 %v67, %v67
  %v100 = vpack.c.bf16 %v68, %v68
  %v101 = vpack.c.bf16 %v69, %v69
  %v102 = vpack.c.bf16 %v70, %v70
  %v135 = vunpack.c.l.b16 %v71
  %v136 = vunpack.c.l.b16 %v72
  %v137 = vunpack.c.l.b16 %v73
  %v138 = vunpack.c.l.b16 %v74
  %v139 = vunpack.c.l.b16 %v75
  %v140 = vunpack.c.l.b16 %v76
  %v141 = vunpack.c.l.b16 %v77
  %v142 = vunpack.c.l.b16 %v78
  %v143 = vunpack.c.l.b16 %v79
  %v144 = vunpack.c.l.b16 %v80
  %v145 = vunpack.c.l.b16 %v81
  %v146 = vunpack.c.l.b16 %v82
  %v147 = vunpack.c.l.b16 %v83
  %v148 = vunpack.c.l.b16 %v84
  %v149 = vunpack.c.l.b16 %v85
  %v150 = vunpack.c.l.b16 %v86
  %v151 = vunpack.c.l.b16 %v87
  %v152 = vunpack.c.l.b16 %v88
  %v153 = vunpack.c.l.b16 %v89
  %v154 = vunpack.c.l.b16 %v90
  %v155 = vunpack.c.l.b16 %v91
  %v156 = vunpack.c.l.b16 %v92
  %v157 = vunpack.c.l.b16 %v93
  %v158 = vunpack.c.l.b16 %v94
  %v159 = vunpack.c.l.b16 %v95
  %v160 = vunpack.c.l.b16 %v96
  %v161 = vunpack.c.l.b16 %v97
  %v162 = vunpack.c.l.b16 %v98
  %v163 = vunpack.c.l.b16 %v99
  %v164 = vunpack.c.l.b16 %v100
  %v165 = vunpack.c.l.b16 %v101
  %v166 = vunpack.c.l.b16 %v102
  %v167 = vpack.c.b16 %v135, %v135
  %v168 = vpack.c.b16 %v136, %v136
  %v169 = vpack.c.b16 %v137, %v137
  %v170 = vpack.c.b16 %v138, %v138
  %v171 = vpack.c.b16 %v139, %v139
  %v172 = vpack.c.b16 %v140, %v140
  %v173 = vpack.c.b16 %v141, %v141
  %v174 = vpack.c.b16 %v142, %v142
  %v175 = vpack.c.b16 %v143, %v143
  %v176 = vpack.c.b16 %v144, %v144
  %v177 = vpack.c.b16 %v145, %v145
  %v178 = vpack.c.b16 %v146, %v146
  %v179 = vpack.c.b16 %v147, %v147
  %v180 = vpack.c.b16 %v148, %v148
  %v181 = vpack.c.b16 %v149, %v149
  %v182 = vpack.c.b16 %v150, %v150
  %v183 = vpack.c.b16 %v151, %v151
  %v184 = vpack.c.b16 %v152, %v152
  %v185 = vpack.c.b16 %v153, %v153
  %v186 = vpack.c.b16 %v154, %v154
  %v187 = vpack.c.b16 %v155, %v155
  %v188 = vpack.c.b16 %v156, %v156
  %v189 = vpack.c.b16 %v157, %v157
  %v190 = vpack.c.b16 %v158, %v158
  %v191 = vpack.c.b16 %v159, %v159
  %v192 = vpack.c.b16 %v160, %v160
  %v193 = vpack.c.b16 %v161, %v161
  %v194 = vpack.c.b16 %v162, %v162
  %v195 = vpack.c.b16 %v163, %v163
  %v196 = vpack.c.b16 %v164, %v164
  %v197 = vpack.c.b16 %v165, %v165
  %v198 = vpack.c.b16 %v166, %v166
  %v200 = vshrl.u32 %v167, 16
  %v202 = vrot.slane %v200, 7
  %v203 = vshll.u32 %v167, 16
  %v205 = vor.u32 %v202, %v203
  %v206 = vrot.slane %v202, 4
  %v208 = vshrl.u32 %v168, 16
  %v210 = vrot.slane %v208, 7
  %v211 = vshll.u32 %v168, 16
  %v213 = vor.u32 %v210, %v211
  %v214 = vrot.slane %v210, 4
  %v216 = vshrl.u32 %v169, 16
  %v218 = vrot.slane %v216, 7
  %v219 = vshll.u32 %v169, 16
  %v221 = vor.u32 %v218, %v219
  %v222 = vrot.slane %v218, 4
  %v224 = vshrl.u32 %v170, 16
  %v226 = vrot.slane %v224, 7
  %v227 = vshll.u32 %v170, 16
  %v229 = vor.u32 %v226, %v227
  %v230 = vrot.slane %v226, 4
  %v232 = vshrl.u32 %v171, 16
  %v234 = vrot.slane %v232, 7
  %v235 = vshll.u32 %v171, 16
  %v237 = vor.u32 %v234, %v235
  %v238 = vrot.slane %v234, 4
  %v240 = vshrl.u32 %v172, 16
  %v242 = vrot.slane %v240, 7
  %v243 = vshll.u32 %v172, 16
  %v245 = vor.u32 %v242, %v243
  %v246 = vrot.slane %v242, 4
  %v248 = vshrl.u32 %v173, 16
  %v250 = vrot.slane %v248, 7
  %v251 = vshll.u32 %v173, 16
  %v253 = vor.u32 %v250, %v251
  %v254 = vrot.slane %v250, 4
  %v256 = vshrl.u32 %v174, 16
  %v258 = vrot.slane %v256, 7
  %v259 = vshll.u32 %v174, 16
  %v261 = vor.u32 %v258, %v259
  %v262 = vrot.slane %v258, 4
  %v264 = vshrl.u32 %v175, 16
  %v266 = vrot.slane %v264, 7
  %v267 = vshll.u32 %v175, 16
  %v269 = vor.u32 %v266, %v267
  %v270 = vrot.slane %v266, 4
  %v272 = vshrl.u32 %v176, 16
  %v274 = vrot.slane %v272, 7
  %v275 = vshll.u32 %v176, 16
  %v277 = vor.u32 %v274, %v275
  %v278 = vrot.slane %v274, 4
  %v280 = vshrl.u32 %v177, 16
  %v282 = vrot.slane %v280, 7
  %v283 = vshll.u32 %v177, 16
  %v285 = vor.u32 %v282, %v283
  %v286 = vrot.slane %v282, 4
  %v288 = vshrl.u32 %v178, 16
  %v290 = vrot.slane %v288, 7
  %v291 = vshll.u32 %v178, 16
  %v293 = vor.u32 %v290, %v291
  %v294 = vrot.slane %v290, 4
  %v296 = vshrl.u32 %v179, 16
  %v298 = vrot.slane %v296, 7
  %v299 = vshll.u32 %v179, 16
  %v301 = vor.u32 %v298, %v299
  %v302 = vrot.slane %v298, 4
  %v304 = vshrl.u32 %v180, 16
  %v306 = vrot.slane %v304, 7
  %v307 = vshll.u32 %v180, 16
  %v309 = vor.u32 %v306, %v307
  %v310 = vrot.slane %v306, 4
  %v312 = vshrl.u32 %v181, 16
  %v314 = vrot.slane %v312, 7
  %v315 = vshll.u32 %v181, 16
  %v317 = vor.u32 %v314, %v315
  %v318 = vrot.slane %v314, 4
  %v320 = vshrl.u32 %v182, 16
  %v322 = vrot.slane %v320, 7
  %v323 = vshll.u32 %v182, 16
  %v325 = vor.u32 %v322, %v323
  %v326 = vrot.slane %v322, 4
  %v328 = vshrl.u32 %v183, 16
  %v330 = vrot.slane %v328, 7
  %v331 = vshll.u32 %v183, 16
  %v333 = vor.u32 %v330, %v331
  %v334 = vrot.slane %v330, 4
  %v336 = vshrl.u32 %v184, 16
  %v338 = vrot.slane %v336, 7
  %v339 = vshll.u32 %v184, 16
  %v341 = vor.u32 %v338, %v339
  %v342 = vrot.slane %v338, 4
  %v344 = vshrl.u32 %v185, 16
  %v346 = vrot.slane %v344, 7
  %v347 = vshll.u32 %v185, 16
  %v349 = vor.u32 %v346, %v347
  %v350 = vrot.slane %v346, 4
  %v352 = vshrl.u32 %v186, 16
  %v354 = vrot.slane %v352, 7
  %v355 = vshll.u32 %v186, 16
  %v357 = vor.u32 %v354, %v355
  %v358 = vrot.slane %v354, 4
  %v360 = vshrl.u32 %v187, 16
  %v362 = vrot.slane %v360, 7
  %v363 = vshll.u32 %v187, 16
  %v365 = vor.u32 %v362, %v363
  %v366 = vrot.slane %v362, 4
  %v368 = vshrl.u32 %v188, 16
  %v370 = vrot.slane %v368, 7
  %v371 = vshll.u32 %v188, 16
  %v373 = vor.u32 %v370, %v371
  %v374 = vrot.slane %v370, 4
  %v376 = vshrl.u32 %v189, 16
  %v378 = vrot.slane %v376, 7
  %v379 = vshll.u32 %v189, 16
  %v381 = vor.u32 %v378, %v379
  %v382 = vrot.slane %v378, 4
  %v384 = vshrl.u32 %v190, 16
  %v386 = vrot.slane %v384, 7
  %v387 = vshll.u32 %v190, 16
  %v389 = vor.u32 %v386, %v387
  %v390 = vrot.slane %v386, 4
  %v392 = vshrl.u32 %v191, 16
  %v394 = vrot.slane %v392, 7
  %v395 = vshll.u32 %v191, 16
  %v397 = vor.u32 %v394, %v395
  %v398 = vrot.slane %v394, 4
  %v400 = vshrl.u32 %v192, 16
  %v402 = vrot.slane %v400, 7
  %v403 = vshll.u32 %v192, 16
  %v405 = vor.u32 %v402, %v403
  %v406 = vrot.slane %v402, 4
  %v408 = vshrl.u32 %v193, 16
  %v410 = vrot.slane %v408, 7
  %v411 = vshll.u32 %v193, 16
  %v413 = vor.u32 %v410, %v411
  %v414 = vrot.slane %v410, 4
  %v416 = vshrl.u32 %v194, 16
  %v418 = vrot.slane %v416, 7
  %v419 = vshll.u32 %v194, 16
  %v421 = vor.u32 %v418, %v419
  %v422 = vrot.slane %v418, 4
  %v424 = vshrl.u32 %v195, 16
  %v426 = vrot.slane %v424, 7
  %v427 = vshll.u32 %v195, 16
  %v429 = vor.u32 %v426, %v427
  %v430 = vrot.slane %v426, 4
  %v432 = vshrl.u32 %v196, 16
  %v434 = vrot.slane %v432, 7
  %v435 = vshll.u32 %v196, 16
  %v437 = vor.u32 %v434, %v435
  %v438 = vrot.slane %v434, 4
  %v440 = vshrl.u32 %v197, 16
  %v442 = vrot.slane %v440, 7
  %v443 = vshll.u32 %v197, 16
  %v445 = vor.u32 %v442, %v443
  %v446 = vrot.slane %v442, 4
  %v448 = vshrl.u32 %v198, 16
  %v450 = vrot.slane %v448, 7
  %v451 = vshll.u32 %v198, 16
  %v453 = vor.u32 %v450, %v451
  %v454 = vrot.slane %v450, 4
  %s519 = scalar_lea.vmem [#allocation2], 16
  %vm520 = vcmask 60416
  %vm521 = vsmask.f32 7938
  %vm522 = vmand %vm520, %vm521
  %v523 = vld [vmem:[%s519] sm:$0xf]
  %v524 = vsel %vm522, %v205, %v523
  %525 = vst [vmem:[%s519] sm:$0xf] %v524
  %vm526 = vcmask 57344
  %vm527 = vsmask.f32 256
  %vm528 = vmand %vm526, %vm527
  %v529 = vld [vmem:[%s519 + $0x4] sm:$0x1]
  %v530 = vsel %vm528, %v206, %v529
  %531 = vst [vmem:[%s519 + $0x4] sm:$0x1] %v530
  %v532 = vld [vmem:[%s519 + $0x8] sm:$0xf]
  %v533 = vsel %vm522, %v213, %v532
  %534 = vst [vmem:[%s519 + $0x8] sm:$0xf] %v533
  %v535 = vld [vmem:[%s519 + $0xc] sm:$0x1]
  %v536 = vsel %vm528, %v214, %v535
  %537 = vst [vmem:[%s519 + $0xc] sm:$0x1] %v536
  %v538 = vld [vmem:[%s519 + $0x10] sm:$0xf]
  %v539 = vsel %vm522, %v221, %v538
  %540 = vst [vmem:[%s519 + $0x10] sm:$0xf] %v539
  %v541 = vld [vmem:[%s519 + $0x14] sm:$0x1]
  %v542 = vsel %vm528, %v222, %v541
  %543 = vst [vmem:[%s519 + $0x14] sm:$0x1] %v542
  %v544 = vld [vmem:[%s519 + $0x18] sm:$0xf]
  %v545 = vsel %vm522, %v229, %v544
  %546 = vst [vmem:[%s519 + $0x18] sm:$0xf] %v545
  %v547 = vld [vmem:[%s519 + $0x1c] sm:$0x1]
  %v548 = vsel %vm528, %v230, %v547
  %549 = vst [vmem:[%s519 + $0x1c] sm:$0x1] %v548
  %v550 = vld [vmem:[%s519 + $0x20] sm:$0xf]
  %v551 = vsel %vm522, %v237, %v550
  %552 = vst [vmem:[%s519 + $0x20] sm:$0xf] %v551
  %v553 = vld [vmem:[%s519 + $0x24] sm:$0x1]
  %v554 = vsel %vm528, %v238, %v553
  %555 = vst [vmem:[%s519 + $0x24] sm:$0x1] %v554
  %v556 = vld [vmem:[%s519 + $0x28] sm:$0xf]
  %v557 = vsel %vm522, %v245, %v556
  %558 = vst [vmem:[%s519 + $0x28] sm:$0xf] %v557
  %v559 = vld [vmem:[%s519 + $0x2c] sm:$0x1]
  %v560 = vsel %vm528, %v246, %v559
  %561 = vst [vmem:[%s519 + $0x2c] sm:$0x1] %v560
  %v562 = vld [vmem:[%s519 + $0x30] sm:$0xf]
  %v563 = vsel %vm522, %v253, %v562
  %564 = vst [vmem:[%s519 + $0x30] sm:$0xf] %v563
  %v565 = vld [vmem:[%s519 + $0x34] sm:$0x1]
  %v566 = vsel %vm528, %v254, %v565
  %567 = vst [vmem:[%s519 + $0x34] sm:$0x1] %v566
  %v568 = vld [vmem:[%s519 + $0x38] sm:$0xf]
  %v569 = vsel %vm522, %v261, %v568
  %570 = vst [vmem:[%s519 + $0x38] sm:$0xf] %v569
  %v571 = vld [vmem:[%s519 + $0x3c] sm:$0x1]
  %v572 = vsel %vm528, %v262, %v571
  %573 = vst [vmem:[%s519 + $0x3c] sm:$0x1] %v572
  %v574 = vld [vmem:[%s519 + $0x40] sm:$0xf]
  %v575 = vsel %vm522, %v269, %v574
  %576 = vst [vmem:[%s519 + $0x40] sm:$0xf] %v575
  %v577 = vld [vmem:[%s519 + $0x44] sm:$0x1]
  %v578 = vsel %vm528, %v270, %v577
  %579 = vst [vmem:[%s519 + $0x44] sm:$0x1] %v578
  %v580 = vld [vmem:[%s519 + $0x48] sm:$0xf]
  %v581 = vsel %vm522, %v277, %v580
  %582 = vst [vmem:[%s519 + $0x48] sm:$0xf] %v581
  %v583 = vld [vmem:[%s519 + $0x4c] sm:$0x1]
  %v584 = vsel %vm528, %v278, %v583
  %585 = vst [vmem:[%s519 + $0x4c] sm:$0x1] %v584
  %v586 = vld [vmem:[%s519 + $0x50] sm:$0xf]
  %v587 = vsel %vm522, %v285, %v586
  %588 = vst [vmem:[%s519 + $0x50] sm:$0xf] %v587
  %v589 = vld [vmem:[%s519 + $0x54] sm:$0x1]
  %v590 = vsel %vm528, %v286, %v589
  %591 = vst [vmem:[%s519 + $0x54] sm:$0x1] %v590
  %v592 = vld [vmem:[%s519 + $0x58] sm:$0xf]
  %v593 = vsel %vm522, %v293, %v592
  %594 = vst [vmem:[%s519 + $0x58] sm:$0xf] %v593
  %v595 = vld [vmem:[%s519 + $0x5c] sm:$0x1]
  %v596 = vsel %vm528, %v294, %v595
  %597 = vst [vmem:[%s519 + $0x5c] sm:$0x1] %v596
  %v598 = vld [vmem:[%s519 + $0x60] sm:$0xf]
  %v599 = vsel %vm522, %v301, %v598
  %600 = vst [vmem:[%s519 + $0x60] sm:$0xf] %v599
  %v601 = vld [vmem:[%s519 + $0x64] sm:$0x1]
  %v602 = vsel %vm528, %v302, %v601
  %603 = vst [vmem:[%s519 + $0x64] sm:$0x1] %v602
  %v604 = vld [vmem:[%s519 + $0x68] sm:$0xf]
  %v605 = vsel %vm522, %v309, %v604
  %606 = vst [vmem:[%s519 + $0x68] sm:$0xf] %v605
  %v607 = vld [vmem:[%s519 + $0x6c] sm:$0x1]
  %v608 = vsel %vm528, %v310, %v607
  %609 = vst [vmem:[%s519 + $0x6c] sm:$0x1] %v608
  %v610 = vld [vmem:[%s519 + $0x70] sm:$0xf]
  %v611 = vsel %vm522, %v317, %v610
  %612 = vst [vmem:[%s519 + $0x70] sm:$0xf] %v611
  %v613 = vld [vmem:[%s519 + $0x74] sm:$0x1]
  %v614 = vsel %vm528, %v318, %v613
  %615 = vst [vmem:[%s519 + $0x74] sm:$0x1] %v614
  %v616 = vld [vmem:[%s519 + $0x78] sm:$0xf]
  %v617 = vsel %vm522, %v325, %v616
  %618 = vst [vmem:[%s519 + $0x78] sm:$0xf] %v617
  %v619 = vld [vmem:[%s519 + $0x7c] sm:$0x1]
  %v620 = vsel %vm528, %v326, %v619
  %621 = vst [vmem:[%s519 + $0x7c] sm:$0x1] %v620
  %v622 = vld [vmem:[%s519 + $0x90] sm:$0xf]
  %v623 = vsel %vm522, %v333, %v622
  %624 = vst [vmem:[%s519 + $0x90] sm:$0xf] %v623
  %v625 = vld [vmem:[%s519 + $0x94] sm:$0x1]
  %v626 = vsel %vm528, %v334, %v625
  %627 = vst [vmem:[%s519 + $0x94] sm:$0x1] %v626
  %v628 = vld [vmem:[%s519 + $0x98] sm:$0xf]
  %v629 = vsel %vm522, %v341, %v628
  %630 = vst [vmem:[%s519 + $0x98] sm:$0xf] %v629
  %v631 = vld [vmem:[%s519 + $0x9c] sm:$0x1]
  %v632 = vsel %vm528, %v342, %v631
  %633 = vst [vmem:[%s519 + $0x9c] sm:$0x1] %v632
  %v634 = vld [vmem:[%s519 + $0xa0] sm:$0xf]
  %v635 = vsel %vm522, %v349, %v634
  %636 = vst [vmem:[%s519 + $0xa0] sm:$0xf] %v635
  %v637 = vld [vmem:[%s519 + $0xa4] sm:$0x1]
  %v638 = vsel %vm528, %v350, %v637
  %639 = vst [vmem:[%s519 + $0xa4] sm:$0x1] %v638
  %v640 = vld [vmem:[%s519 + $0xa8] sm:$0xf]
  %v641 = vsel %vm522, %v357, %v640
  %642 = vst [vmem:[%s519 + $0xa8] sm:$0xf] %v641
  %v643 = vld [vmem:[%s519 + $0xac] sm:$0x1]
  %v644 = vsel %vm528, %v358, %v643
  %645 = vst [vmem:[%s519 + $0xac] sm:$0x1] %v644
  %v646 = vld [vmem:[%s519 + $0xb0] sm:$0xf]
  %v647 = vsel %vm522, %v365, %v646
  %648 = vst [vmem:[%s519 + $0xb0] sm:$0xf] %v647
  %v649 = vld [vmem:[%s519 + $0xb4] sm:$0x1]
  %v650 = vsel %vm528, %v366, %v649
  %651 = vst [vmem:[%s519 + $0xb4] sm:$0x1] %v650
  %v652 = vld [vmem:[%s519 + $0xb8] sm:$0xf]
  %v653 = vsel %vm522, %v373, %v652
  %654 = vst [vmem:[%s519 + $0xb8] sm:$0xf] %v653
  %v655 = vld [vmem:[%s519 + $0xbc] sm:$0x1]
  %v656 = vsel %vm528, %v374, %v655
  %657 = vst [vmem:[%s519 + $0xbc] sm:$0x1] %v656
  %v658 = vld [vmem:[%s519 + $0xc0] sm:$0xf]
  %v659 = vsel %vm522, %v381, %v658
  %660 = vst [vmem:[%s519 + $0xc0] sm:$0xf] %v659
  %v661 = vld [vmem:[%s519 + $0xc4] sm:$0x1]
  %v662 = vsel %vm528, %v382, %v661
  %663 = vst [vmem:[%s519 + $0xc4] sm:$0x1] %v662
  %v664 = vld [vmem:[%s519 + $0xc8] sm:$0xf]
  %v665 = vsel %vm522, %v389, %v664
  %666 = vst [vmem:[%s519 + $0xc8] sm:$0xf] %v665
  %v667 = vld [vmem:[%s519 + $0xcc] sm:$0x1]
  %v668 = vsel %vm528, %v390, %v667
  %669 = vst [vmem:[%s519 + $0xcc] sm:$0x1] %v668
  %v670 = vld [vmem:[%s519 + $0xd0] sm:$0xf]
  %v671 = vsel %vm522, %v397, %v670
  %672 = vst [vmem:[%s519 + $0xd0] sm:$0xf] %v671
  %v673 = vld [vmem:[%s519 + $0xd4] sm:$0x1]
  %v674 = vsel %vm528, %v398, %v673
  %675 = vst [vmem:[%s519 + $0xd4] sm:$0x1] %v674
  %v676 = vld [vmem:[%s519 + $0xd8] sm:$0xf]
  %v677 = vsel %vm522, %v405, %v676
  %678 = vst [vmem:[%s519 + $0xd8] sm:$0xf] %v677
  %v679 = vld [vmem:[%s519 + $0xdc] sm:$0x1]
  %v680 = vsel %vm528, %v406, %v679
  %681 = vst [vmem:[%s519 + $0xdc] sm:$0x1] %v680
  %v682 = vld [vmem:[%s519 + $0xe0] sm:$0xf]
  %v683 = vsel %vm522, %v413, %v682
  %684 = vst [vmem:[%s519 + $0xe0] sm:$0xf] %v683
  %v685 = vld [vmem:[%s519 + $0xe4] sm:$0x1]
  %v686 = vsel %vm528, %v414, %v685
  %687 = vst [vmem:[%s519 + $0xe4] sm:$0x1] %v686
  %v688 = vld [vmem:[%s519 + $0xe8] sm:$0xf]
  %v689 = vsel %vm522, %v421, %v688
  %690 = vst [vmem:[%s519 + $0xe8] sm:$0xf] %v689
  %v691 = vld [vmem:[%s519 + $0xec] sm:$0x1]
  %v692 = vsel %vm528, %v422, %v691
  %693 = vst [vmem:[%s519 + $0xec] sm:$0x1] %v692
  %v694 = vld [vmem:[%s519 + $0xf0] sm:$0xf]
  %v695 = vsel %vm522, %v429, %v694
  %696 = vst [vmem:[%s519 + $0xf0] sm:$0xf] %v695
  %v697 = vld [vmem:[%s519 + $0xf4] sm:$0x1]
  %v698 = vsel %vm528, %v430, %v697
  %699 = vst [vmem:[%s519 + $0xf4] sm:$0x1] %v698
  %v700 = vld [vmem:[%s519 + $0xf8] sm:$0xf]
  %v701 = vsel %vm522, %v437, %v700
  %702 = vst [vmem:[%s519 + $0xf8] sm:$0xf] %v701
  %v703 = vld [vmem:[%s519 + $0xfc] sm:$0x1]
  %v704 = vsel %vm528, %v438, %v703
  %705 = vst [vmem:[%s519 + $0xfc] sm:$0x1] %v704
  %v706 = vld [vmem:[%s519 + $0x100] sm:$0xf]
  %v707 = vsel %vm522, %v445, %v706
  %708 = vst [vmem:[%s519 + $0x100] sm:$0xf] %v707
  %v709 = vld [vmem:[%s519 + $0x104] sm:$0x1]
  %v710 = vsel %vm528, %v446, %v709
  %711 = vst [vmem:[%s519 + $0x104] sm:$0x1] %v710
  %v712 = vld [vmem:[%s519 + $0x108] sm:$0xf]
  %v713 = vsel %vm522, %v453, %v712
  %714 = vst [vmem:[%s519 + $0x108] sm:$0xf] %v713
  %v715 = vld [vmem:[%s519 + $0x10c] sm:$0x1]
  %v716 = vsel %vm528, %v454, %v715
  %717 = vst [vmem:[%s519 + $0x10c] sm:$0x1] %v716
  %vm718 = vcmask 60416
  %719 = vst.msk [vmem:[#allocation2] sm:$0xf] %vm718, 0
  %v720 = vld [vmem:[#allocation2 + $0x4] sm:$0x1]
  %v721 = vsel %vm528, 0, %v720
  %722 = vst [vmem:[#allocation2 + $0x4] sm:$0x1] %v721
  %723 = vst.msk [vmem:[#allocation2 + $0x8] sm:$0xf] %vm718, 0
  %v724 = vld [vmem:[#allocation2 + $0xc] sm:$0x1]
  %v725 = vsel %vm528, 0, %v724
  %726 = vst [vmem:[#allocation2 + $0xc] sm:$0x1] %v725
  %727 = vst.msk [vmem:[#allocation2 + $0x90] sm:$0xf] %vm718, 0
  %v728 = vld [vmem:[#allocation2 + $0x94] sm:$0x1]
  %v729 = vsel %vm528, 0, %v728
  %730 = vst [vmem:[#allocation2 + $0x94] sm:$0x1] %v729
  %731 = vst.msk [vmem:[#allocation2 + $0x98] sm:$0xf] %vm718, 0
  %v732 = vld [vmem:[#allocation2 + $0x9c] sm:$0x1]
  %v733 = vsel %vm528, 0, %v732
  %734 = vst [vmem:[#allocation2 + $0x9c] sm:$0x1] %v733
  %v735 = vld [vmem:[%s519] sm:$0x1]
  %v736 = vsel %vm528, 0, %v735
  %737 = vst [vmem:[%s519] sm:$0x1] %v736
  %v738 = vld [vmem:[%s519 + $0x8] sm:$0x1]
  %v739 = vsel %vm528, 0, %v738
  %740 = vst [vmem:[%s519 + $0x8] sm:$0x1] %v739
  %v741 = vld [vmem:[%s519 + $0x10] sm:$0x1]
  %v742 = vsel %vm528, 0, %v741
  %743 = vst [vmem:[%s519 + $0x10] sm:$0x1] %v742
  %v744 = vld [vmem:[%s519 + $0x18] sm:$0x1]
  %v745 = vsel %vm528, 0, %v744
  %746 = vst [vmem:[%s519 + $0x18] sm:$0x1] %v745
  %v747 = vld [vmem:[%s519 + $0x20] sm:$0x1]
  %v748 = vsel %vm528, 0, %v747
  %749 = vst [vmem:[%s519 + $0x20] sm:$0x1] %v748
  %v750 = vld [vmem:[%s519 + $0x28] sm:$0x1]
  %v751 = vsel %vm528, 0, %v750
  %752 = vst [vmem:[%s519 + $0x28] sm:$0x1] %v751
  %v753 = vld [vmem:[%s519 + $0x30] sm:$0x1]
  %v754 = vsel %vm528, 0, %v753
  %755 = vst [vmem:[%s519 + $0x30] sm:$0x1] %v754
  %v756 = vld [vmem:[%s519 + $0x38] sm:$0x1]
  %v757 = vsel %vm528, 0, %v756
  %758 = vst [vmem:[%s519 + $0x38] sm:$0x1] %v757
  %v759 = vld [vmem:[%s519 + $0x40] sm:$0x1]
  %v760 = vsel %vm528, 0, %v759
  %761 = vst [vmem:[%s519 + $0x40] sm:$0x1] %v760
  %v762 = vld [vmem:[%s519 + $0x48] sm:$0x1]
  %v763 = vsel %vm528, 0, %v762
  %764 = vst [vmem:[%s519 + $0x48] sm:$0x1] %v763
  %v765 = vld [vmem:[%s519 + $0x50] sm:$0x1]
  %v766 = vsel %vm528, 0, %v765
  %767 = vst [vmem:[%s519 + $0x50] sm:$0x1] %v766
  %v768 = vld [vmem:[%s519 + $0x58] sm:$0x1]
  %v769 = vsel %vm528, 0, %v768
  %770 = vst [vmem:[%s519 + $0x58] sm:$0x1] %v769
  %v771 = vld [vmem:[%s519 + $0x60] sm:$0x1]
  %v772 = vsel %vm528, 0, %v771
  %773 = vst [vmem:[%s519 + $0x60] sm:$0x1] %v772
  %v774 = vld [vmem:[%s519 + $0x68] sm:$0x1]
  %v775 = vsel %vm528, 0, %v774
  %776 = vst [vmem:[%s519 + $0x68] sm:$0x1] %v775
  %v777 = vld [vmem:[%s519 + $0x70] sm:$0x1]
  %v778 = vsel %vm528, 0, %v777
  %779 = vst [vmem:[%s519 + $0x70] sm:$0x1] %v778
  %v780 = vld [vmem:[%s519 + $0x78] sm:$0x1]
  %v781 = vsel %vm528, 0, %v780
  %782 = vst [vmem:[%s519 + $0x78] sm:$0x1] %v781
  %v783 = vld [vmem:[%s519 + $0x90] sm:$0x1]
  %v784 = vsel %vm528, 0, %v783
  %785 = vst [vmem:[%s519 + $0x90] sm:$0x1] %v784
  %v786 = vld [vmem:[%s519 + $0x98] sm:$0x1]
  %v787 = vsel %vm528, 0, %v786
  %788 = vst [vmem:[%s519 + $0x98] sm:$0x1] %v787
  %v789 = vld [vmem:[%s519 + $0xa0] sm:$0x1]
  %v790 = vsel %vm528, 0, %v789
  %791 = vst [vmem:[%s519 + $0xa0] sm:$0x1] %v790
  %v792 = vld [vmem:[%s519 + $0xa8] sm:$0x1]
  %v793 = vsel %vm528, 0, %v792
  %794 = vst [vmem:[%s519 + $0xa8] sm:$0x1] %v793
  %v795 = vld [vmem:[%s519 + $0xb0] sm:$0x1]
  %v796 = vsel %vm528, 0, %v795
  %797 = vst [vmem:[%s519 + $0xb0] sm:$0x1] %v796
  %v798 = vld [vmem:[%s519 + $0xb8] sm:$0x1]
  %v799 = vsel %vm528, 0, %v798
  %800 = vst [vmem:[%s519 + $0xb8] sm:$0x1] %v799
  %v801 = vld [vmem:[%s519 + $0xc0] sm:$0x1]
  %v802 = vsel %vm528, 0, %v801
  %803 = vst [vmem:[%s519 + $0xc0] sm:$0x1] %v802
  %v804 = vld [vmem:[%s519 + $0xc8] sm:$0x1]
  %v805 = vsel %vm528, 0, %v804
  %806 = vst [vmem:[%s519 + $0xc8] sm:$0x1] %v805
  %v807 = vld [vmem:[%s519 + $0xd0] sm:$0x1]
  %v808 = vsel %vm528, 0, %v807
  %809 = vst [vmem:[%s519 + $0xd0] sm:$0x1] %v808
  %v810 = vld [vmem:[%s519 + $0xd8] sm:$0x1]
  %v811 = vsel %vm528, 0, %v810
  %812 = vst [vmem:[%s519 + $0xd8] sm:$0x1] %v811
  %v813 = vld [vmem:[%s519 + $0xe0] sm:$0x1]
  %v814 = vsel %vm528, 0, %v813
  %815 = vst [vmem:[%s519 + $0xe0] sm:$0x1] %v814
  %v816 = vld [vmem:[%s519 + $0xe8] sm:$0x1]
  %v817 = vsel %vm528, 0, %v816
  %818 = vst [vmem:[%s519 + $0xe8] sm:$0x1] %v817
  %v819 = vld [vmem:[%s519 + $0xf0] sm:$0x1]
  %v820 = vsel %vm528, 0, %v819
  %821 = vst [vmem:[%s519 + $0xf0] sm:$0x1] %v820
  %v822 = vld [vmem:[%s519 + $0xf8] sm:$0x1]
  %v823 = vsel %vm528, 0, %v822
  %824 = vst [vmem:[%s519 + $0xf8] sm:$0x1] %v823
  %v825 = vld [vmem:[%s519 + $0x100] sm:$0x1]
  %v826 = vsel %vm528, 0, %v825
  %827 = vst [vmem:[%s519 + $0x100] sm:$0x1] %v826
  %v828 = vld [vmem:[%s519 + $0x108] sm:$0x1]
  %v829 = vsel %vm528, 0, %v828
  %830 = vst [vmem:[%s519 + $0x108] sm:$0x1] %v829
  %s831 = scalar_lea.vmem [#allocation2], 8
  %v832 = vld [vmem:[%s831] sm:$0xf]
  %v833 = vld [vmem:[%s831 + $0x10] sm:$0xf]
  %v834 = vld [vmem:[%s831 + $0x20] sm:$0xf]
  %v835 = vld [vmem:[%s831 + $0x30] sm:$0xf]
  %v836 = vld [vmem:[%s831 + $0x40] sm:$0xf]
  %v837 = vld [vmem:[%s831 + $0x50] sm:$0xf]
  %v838 = vld [vmem:[%s831 + $0x60] sm:$0xf]
  %v839 = vld [vmem:[%s831 + $0x70] sm:$0xf]
  %v840 = vld [vmem:[%s831 + $0x90] sm:$0xf]
  %v841 = vld [vmem:[%s831 + $0xa0] sm:$0xf]
  %v842 = vld [vmem:[%s831 + $0xb0] sm:$0xf]
  %v843 = vld [vmem:[%s831 + $0xc0] sm:$0xf]
  %v844 = vld [vmem:[%s831 + $0xd0] sm:$0xf]
  %v845 = vld [vmem:[%s831 + $0xe0] sm:$0xf]
  %v846 = vld [vmem:[%s831 + $0xf0] sm:$0xf]
  %v847 = vld [vmem:[%s831 + $0x100] sm:$0xf]
  %v848 = vld [vmem:[%s831 + $0x4] sm:$0x1]
  %v849 = vld [vmem:[%s831 + $0x14] sm:$0x1]
  %v850 = vld [vmem:[%s831 + $0x24] sm:$0x1]
  %v851 = vld [vmem:[%s831 + $0x34] sm:$0x1]
  %v852 = vld [vmem:[%s831 + $0x44] sm:$0x1]
  %v853 = vld [vmem:[%s831 + $0x54] sm:$0x1]
  %v854 = vld [vmem:[%s831 + $0x64] sm:$0x1]
  %v855 = vld [vmem:[%s831 + $0x74] sm:$0x1]
  %v856 = vld [vmem:[%s831 + $0x94] sm:$0x1]
  %v857 = vld [vmem:[%s831 + $0xa4] sm:$0x1]
  %v858 = vld [vmem:[%s831 + $0xb4] sm:$0x1]
  %v859 = vld [vmem:[%s831 + $0xc4] sm:$0x1]
  %v860 = vld [vmem:[%s831 + $0xd4] sm:$0x1]
  %v861 = vld [vmem:[%s831 + $0xe4] sm:$0x1]
  %v862 = vld [vmem:[%s831 + $0xf4] sm:$0x1]
  %v863 = vld [vmem:[%s831 + $0x104] sm:$0x1]
  %v864 = vld [vmem:[%s519] sm:$0xf]
  %v865 = vld [vmem:[%s519 + $0x10] sm:$0xf]
  %v866 = vld [vmem:[%s519 + $0x20] sm:$0xf]
  %v867 = vld [vmem:[%s519 + $0x30] sm:$0xf]
  %v868 = vld [vmem:[%s519 + $0x40] sm:$0xf]
  %v869 = vld [vmem:[%s519 + $0x50] sm:$0xf]
  %v870 = vld [vmem:[%s519 + $0x60] sm:$0xf]
  %v871 = vld [vmem:[%s519 + $0x70] sm:$0xf]
  %v872 = vld [vmem:[%s519 + $0x90] sm:$0xf]
  %v873 = vld [vmem:[%s519 + $0xa0] sm:$0xf]
  %v874 = vld [vmem:[%s519 + $0xb0] sm:$0xf]
  %v875 = vld [vmem:[%s519 + $0xc0] sm:$0xf]
  %v876 = vld [vmem:[%s519 + $0xd0] sm:$0xf]
  %v877 = vld [vmem:[%s519 + $0xe0] sm:$0xf]
  %v878 = vld [vmem:[%s519 + $0xf0] sm:$0xf]
  %v879 = vld [vmem:[%s519 + $0x100] sm:$0xf]
  %v880 = vld [vmem:[%s519 + $0x4] sm:$0x1]
  %v881 = vld [vmem:[%s519 + $0x14] sm:$0x1]
  %v882 = vld [vmem:[%s519 + $0x24] sm:$0x1]
  %v883 = vld [vmem:[%s519 + $0x34] sm:$0x1]
  %v884 = vld [vmem:[%s519 + $0x44] sm:$0x1]
  %v885 = vld [vmem:[%s519 + $0x54] sm:$0x1]
  %v886 = vld [vmem:[%s519 + $0x64] sm:$0x1]
  %v887 = vld [vmem:[%s519 + $0x74] sm:$0x1]
  %v888 = vld [vmem:[%s519 + $0x94] sm:$0x1]
  %v889 = vld [vmem:[%s519 + $0xa4] sm:$0x1]
  %v890 = vld [vmem:[%s519 + $0xb4] sm:$0x1]
  %v891 = vld [vmem:[%s519 + $0xc4] sm:$0x1]
  %v892 = vld [vmem:[%s519 + $0xd4] sm:$0x1]
  %v893 = vld [vmem:[%s519 + $0xe4] sm:$0x1]
  %v894 = vld [vmem:[%s519 + $0xf4] sm:$0x1]
  %v895 = vld [vmem:[%s519 + $0x104] sm:$0x1]
  %s896 = scalar_lea.vmem [#allocation2], 24
  %v897 = vld [vmem:[%s896] sm:$0xf]
  %v898 = vld [vmem:[%s896 + $0x10] sm:$0xf]
  %v899 = vld [vmem:[%s896 + $0x20] sm:$0xf]
  %v900 = vld [vmem:[%s896 + $0x30] sm:$0xf]
  %v901 = vld [vmem:[%s896 + $0x40] sm:$0xf]
  %v902 = vld [vmem:[%s896 + $0x50] sm:$0xf]
  %v903 = vld [vmem:[%s896 + $0x60] sm:$0xf]
  %v904 = vld [vmem:[%s896 + $0x70] sm:$0xf]
  %v905 = vld [vmem:[%s896 + $0x90] sm:$0xf]
  %v906 = vld [vmem:[%s896 + $0xa0] sm:$0xf]
  %v907 = vld [vmem:[%s896 + $0xb0] sm:$0xf]
  %v908 = vld [vmem:[%s896 + $0xc0] sm:$0xf]
  %v909 = vld [vmem:[%s896 + $0xd0] sm:$0xf]
  %v910 = vld [vmem:[%s896 + $0xe0] sm:$0xf]
  %v911 = vld [vmem:[%s896 + $0xf0] sm:$0xf]
  %v912 = vld [vmem:[%s896 + $0x100] sm:$0xf]
  %v913 = vld [vmem:[%s896 + $0x4] sm:$0x1]
  %v914 = vld [vmem:[%s896 + $0x14] sm:$0x1]
  %v915 = vld [vmem:[%s896 + $0x24] sm:$0x1]
  %v916 = vld [vmem:[%s896 + $0x34] sm:$0x1]
  %v917 = vld [vmem:[%s896 + $0x44] sm:$0x1]
  %v918 = vld [vmem:[%s896 + $0x54] sm:$0x1]
  %v919 = vld [vmem:[%s896 + $0x64] sm:$0x1]
  %v920 = vld [vmem:[%s896 + $0x74] sm:$0x1]
  %v921 = vld [vmem:[%s896 + $0x94] sm:$0x1]
  %v922 = vld [vmem:[%s896 + $0xa4] sm:$0x1]
  %v923 = vld [vmem:[%s896 + $0xb4] sm:$0x1]
  %v924 = vld [vmem:[%s896 + $0xc4] sm:$0x1]
  %v925 = vld [vmem:[%s896 + $0xd4] sm:$0x1]
  %v926 = vld [vmem:[%s896 + $0xe4] sm:$0x1]
  %v927 = vld [vmem:[%s896 + $0xf4] sm:$0x1]
  %v928 = vld [vmem:[%s896 + $0x104] sm:$0x1]
  %v929 = vld [vmem:[%s1] sm:$0xf]
  %v930 = vld [vmem:[%s1 + $0x4] sm:$0xf]
  %v931 = vld [vmem:[%s1 + $0x8] sm:$0xf]
  %v932 = vld [vmem:[%s1 + $0xc] sm:$0xf]
  %v933 = vld [vmem:[%s1 + $0x10] sm:$0x3]
  %v934 = vld [vmem:[%s2] sm:$0x1]
  %v951 = vunpack.c.l.b16 %v832
  %v952 = vunpack.c.l.b16 %v833
  %v953 = vunpack.c.l.b16 %v834
  %v954 = vunpack.c.l.b16 %v835
  %v955 = vunpack.c.l.b16 %v836
  %v956 = vunpack.c.l.b16 %v837
  %v957 = vunpack.c.l.b16 %v838
  %v958 = vunpack.c.l.b16 %v839
  %v959 = vunpack.c.l.b16 %v840
  %v960 = vunpack.c.l.b16 %v841
  %v961 = vunpack.c.l.b16 %v842
  %v962 = vunpack.c.l.b16 %v843
  %v963 = vunpack.c.l.b16 %v844
  %v964 = vunpack.c.l.b16 %v845
  %v965 = vunpack.c.l.b16 %v846
  %v966 = vunpack.c.l.b16 %v847
  %v967 = vpack.c.b16 %v951, %v951
  %v968 = vpack.c.b16 %v952, %v952
  %v969 = vpack.c.b16 %v953, %v953
  %v970 = vpack.c.b16 %v954, %v954
  %v971 = vpack.c.b16 %v955, %v955
  %v972 = vpack.c.b16 %v956, %v956
  %v973 = vpack.c.b16 %v957, %v957
  %v974 = vpack.c.b16 %v958, %v958
  %v975 = vpack.c.b16 %v959, %v959
  %v976 = vpack.c.b16 %v960, %v960
  %v977 = vpack.c.b16 %v961, %v961
  %v978 = vpack.c.b16 %v962, %v962
  %v979 = vpack.c.b16 %v963, %v963
  %v980 = vpack.c.b16 %v964, %v964
  %v981 = vpack.c.b16 %v965, %v965
  %v982 = vpack.c.b16 %v966, %v966
  %983 = vrot.lane.b32.xlu0 %v967, 124
  %v984 = vpop.permute.xlu0 %983
  %985 = vrot.lane.b32.xlu0 %v968, 124
  %v986 = vpop.permute.xlu0 %985
  %987 = vrot.lane.b32.xlu0 %v969, 124
  %v988 = vpop.permute.xlu0 %987
  %989 = vrot.lane.b32.xlu0 %v970, 124
  %v990 = vpop.permute.xlu0 %989
  %991 = vrot.lane.b32.xlu0 %v971, 124
  %v992 = vpop.permute.xlu0 %991
  %993 = vrot.lane.b32.xlu0 %v972, 124
  %v994 = vpop.permute.xlu0 %993
  %995 = vrot.lane.b32.xlu0 %v973, 124
  %v996 = vpop.permute.xlu0 %995
  %997 = vrot.lane.b32.xlu0 %v974, 124
  %v998 = vpop.permute.xlu0 %997
  %999 = vrot.lane.b32.xlu0 %v975, 124
  %v1000 = vpop.permute.xlu0 %999
  %1001 = vrot.lane.b32.xlu0 %v976, 124
  %v1002 = vpop.permute.xlu0 %1001
  %1003 = vrot.lane.b32.xlu0 %v977, 124
  %v1004 = vpop.permute.xlu0 %1003
  %1005 = vrot.lane.b32.xlu0 %v978, 124
  %v1006 = vpop.permute.xlu0 %1005
  %1007 = vrot.lane.b32.xlu0 %v979, 124
  %v1008 = vpop.permute.xlu0 %1007
  %1009 = vrot.lane.b32.xlu0 %v980, 124
  %v1010 = vpop.permute.xlu0 %1009
  %1011 = vrot.lane.b32.xlu0 %v981, 124
  %v1012 = vpop.permute.xlu0 %1011
  %1013 = vrot.lane.b32.xlu0 %v982, 124
  %v1014 = vpop.permute.xlu0 %1013
  %v1031 = vunpack.c.l.b16 %v848
  %v1032 = vunpack.c.l.b16 %v849
  %v1033 = vunpack.c.l.b16 %v850
  %v1034 = vunpack.c.l.b16 %v851
  %v1035 = vunpack.c.l.b16 %v852
  %v1036 = vunpack.c.l.b16 %v853
  %v1037 = vunpack.c.l.b16 %v854
  %v1038 = vunpack.c.l.b16 %v855
  %v1039 = vunpack.c.l.b16 %v856
  %v1040 = vunpack.c.l.b16 %v857
  %v1041 = vunpack.c.l.b16 %v858
  %v1042 = vunpack.c.l.b16 %v859
  %v1043 = vunpack.c.l.b16 %v860
  %v1044 = vunpack.c.l.b16 %v861
  %v1045 = vunpack.c.l.b16 %v862
  %v1046 = vunpack.c.l.b16 %v863
  %v1047 = vpack.c.b16 %v1031, %v951
  %v1048 = vpack.c.b16 %v1032, %v952
  %v1049 = vpack.c.b16 %v1033, %v953
  %v1050 = vpack.c.b16 %v1034, %v954
  %v1051 = vpack.c.b16 %v1035, %v955
  %v1052 = vpack.c.b16 %v1036, %v956
  %v1053 = vpack.c.b16 %v1037, %v957
  %v1054 = vpack.c.b16 %v1038, %v958
  %v1055 = vpack.c.b16 %v1039, %v959
  %v1056 = vpack.c.b16 %v1040, %v960
  %v1057 = vpack.c.b16 %v1041, %v961
  %v1058 = vpack.c.b16 %v1042, %v962
  %v1059 = vpack.c.b16 %v1043, %v963
  %v1060 = vpack.c.b16 %v1044, %v964
  %v1061 = vpack.c.b16 %v1045, %v965
  %v1062 = vpack.c.b16 %v1046, %v966
  %v1064 = vshrl.u32 %v1047, 16
  %v1066 = vshll.u32 %v1047, 16
  %v1068 = vrot.slane %v1066, 1
  %v1069 = vor.u32 %v1064, %v1068
  %v1071 = vshrl.u32 %v1048, 16
  %v1073 = vshll.u32 %v1048, 16
  %v1075 = vrot.slane %v1073, 1
  %v1076 = vor.u32 %v1071, %v1075
  %v1078 = vshrl.u32 %v1049, 16
  %v1080 = vshll.u32 %v1049, 16
  %v1082 = vrot.slane %v1080, 1
  %v1083 = vor.u32 %v1078, %v1082
  %v1085 = vshrl.u32 %v1050, 16
  %v1087 = vshll.u32 %v1050, 16
  %v1089 = vrot.slane %v1087, 1
  %v1090 = vor.u32 %v1085, %v1089
  %v1092 = vshrl.u32 %v1051, 16
  %v1094 = vshll.u32 %v1051, 16
  %v1096 = vrot.slane %v1094, 1
  %v1097 = vor.u32 %v1092, %v1096
  %v1099 = vshrl.u32 %v1052, 16
  %v1101 = vshll.u32 %v1052, 16
  %v1103 = vrot.slane %v1101, 1
  %v1104 = vor.u32 %v1099, %v1103
  %v1106 = vshrl.u32 %v1053, 16
  %v1108 = vshll.u32 %v1053, 16
  %v1110 = vrot.slane %v1108, 1
  %v1111 = vor.u32 %v1106, %v1110
  %v1113 = vshrl.u32 %v1054, 16
  %v1115 = vshll.u32 %v1054, 16
  %v1117 = vrot.slane %v1115, 1
  %v1118 = vor.u32 %v1113, %v1117
  %v1120 = vshrl.u32 %v1055, 16
  %v1122 = vshll.u32 %v1055, 16
  %v1124 = vrot.slane %v1122, 1
  %v1125 = vor.u32 %v1120, %v1124
  %v1127 = vshrl.u32 %v1056, 16
  %v1129 = vshll.u32 %v1056, 16
  %v1131 = vrot.slane %v1129, 1
  %v1132 = vor.u32 %v1127, %v1131
  %v1134 = vshrl.u32 %v1057, 16
  %v1136 = vshll.u32 %v1057, 16
  %v1138 = vrot.slane %v1136, 1
  %v1139 = vor.u32 %v1134, %v1138
  %v1141 = vshrl.u32 %v1058, 16
  %v1143 = vshll.u32 %v1058, 16
  %v1145 = vrot.slane %v1143, 1
  %v1146 = vor.u32 %v1141, %v1145
  %v1148 = vshrl.u32 %v1059, 16
  %v1150 = vshll.u32 %v1059, 16
  %v1152 = vrot.slane %v1150, 1
  %v1153 = vor.u32 %v1148, %v1152
  %v1155 = vshrl.u32 %v1060, 16
  %v1157 = vshll.u32 %v1060, 16
  %v1159 = vrot.slane %v1157, 1
  %v1160 = vor.u32 %v1155, %v1159
  %v1162 = vshrl.u32 %v1061, 16
  %v1164 = vshll.u32 %v1061, 16
  %v1166 = vrot.slane %v1164, 1
  %v1167 = vor.u32 %v1162, %v1166
  %v1169 = vshrl.u32 %v1062, 16
  %v1171 = vshll.u32 %v1062, 16
  %v1173 = vrot.slane %v1171, 1
  %v1174 = vor.u32 %v1169, %v1173
  %1175 = vrot.lane.b32.xlu0 %v1069, 4
  %v1176 = vpop.permute.xlu0 %1175
  %1177 = vrot.lane.b32.xlu0 %v1076, 4
  %v1178 = vpop.permute.xlu0 %1177
  %1179 = vrot.lane.b32.xlu0 %v1083, 4
  %v1180 = vpop.permute.xlu0 %1179
  %1181 = vrot.lane.b32.xlu0 %v1090, 4
  %v1182 = vpop.permute.xlu0 %1181
  %1183 = vrot.lane.b32.xlu0 %v1097, 4
  %v1184 = vpop.permute.xlu0 %1183
  %1185 = vrot.lane.b32.xlu0 %v1104, 4
  %v1186 = vpop.permute.xlu0 %1185
  %1187 = vrot.lane.b32.xlu0 %v1111, 4
  %v1188 = vpop.permute.xlu0 %1187
  %1189 = vrot.lane.b32.xlu0 %v1118, 4
  %v1190 = vpop.permute.xlu0 %1189
  %1191 = vrot.lane.b32.xlu0 %v1125, 4
  %v1192 = vpop.permute.xlu0 %1191
  %1193 = vrot.lane.b32.xlu0 %v1132, 4
  %v1194 = vpop.permute.xlu0 %1193
  %1195 = vrot.lane.b32.xlu0 %v1139, 4
  %v1196 = vpop.permute.xlu0 %1195
  %1197 = vrot.lane.b32.xlu0 %v1146, 4
  %v1198 = vpop.permute.xlu0 %1197
  %1199 = vrot.lane.b32.xlu0 %v1153, 4
  %v1200 = vpop.permute.xlu0 %1199
  %1201 = vrot.lane.b32.xlu0 %v1160, 4
  %v1202 = vpop.permute.xlu0 %1201
  %1203 = vrot.lane.b32.xlu0 %v1167, 4
  %v1204 = vpop.permute.xlu0 %1203
  %1205 = vrot.lane.b32.xlu0 %v1174, 4
  %v1206 = vpop.permute.xlu0 %1205
  %v1223 = vunpack.c.l.b16 %v864
  %v1224 = vunpack.c.l.b16 %v865
  %v1225 = vunpack.c.l.b16 %v866
  %v1226 = vunpack.c.l.b16 %v867
  %v1227 = vunpack.c.l.b16 %v868
  %v1228 = vunpack.c.l.b16 %v869
  %v1229 = vunpack.c.l.b16 %v870
  %v1230 = vunpack.c.l.b16 %v871
  %v1231 = vunpack.c.l.b16 %v872
  %v1232 = vunpack.c.l.b16 %v873
  %v1233 = vunpack.c.l.b16 %v874
  %v1234 = vunpack.c.l.b16 %v875
  %v1235 = vunpack.c.l.b16 %v876
  %v1236 = vunpack.c.l.b16 %v877
  %v1237 = vunpack.c.l.b16 %v878
  %v1238 = vunpack.c.l.b16 %v879
  %v1239 = vpack.c.b16 %v1223, %v1223
  %v1240 = vpack.c.b16 %v1224, %v1224
  %v1241 = vpack.c.b16 %v1225, %v1225
  %v1242 = vpack.c.b16 %v1226, %v1226
  %v1243 = vpack.c.b16 %v1227, %v1227
  %v1244 = vpack.c.b16 %v1228, %v1228
  %v1245 = vpack.c.b16 %v1229, %v1229
  %v1246 = vpack.c.b16 %v1230, %v1230
  %v1247 = vpack.c.b16 %v1231, %v1231
  %v1248 = vpack.c.b16 %v1232, %v1232
  %v1249 = vpack.c.b16 %v1233, %v1233
  %v1250 = vpack.c.b16 %v1234, %v1234
  %v1251 = vpack.c.b16 %v1235, %v1235
  %v1252 = vpack.c.b16 %v1236, %v1236
  %v1253 = vpack.c.b16 %v1237, %v1237
  %v1254 = vpack.c.b16 %v1238, %v1238
  %1255 = vrot.lane.b32.xlu0 %v1239, 8
  %v1256 = vpop.permute.xlu0 %1255
  %1257 = vrot.lane.b32.xlu0 %v1240, 8
  %v1258 = vpop.permute.xlu0 %1257
  %1259 = vrot.lane.b32.xlu0 %v1241, 8
  %v1260 = vpop.permute.xlu0 %1259
  %1261 = vrot.lane.b32.xlu0 %v1242, 8
  %v1262 = vpop.permute.xlu0 %1261
  %1263 = vrot.lane.b32.xlu0 %v1243, 8
  %v1264 = vpop.permute.xlu0 %1263
  %1265 = vrot.lane.b32.xlu0 %v1244, 8
  %v1266 = vpop.permute.xlu0 %1265
  %1267 = vrot.lane.b32.xlu0 %v1245, 8
  %v1268 = vpop.permute.xlu0 %1267
  %1269 = vrot.lane.b32.xlu0 %v1246, 8
  %v1270 = vpop.permute.xlu0 %1269
  %1271 = vrot.lane.b32.xlu0 %v1247, 8
  %v1272 = vpop.permute.xlu0 %1271
  %1273 = vrot.lane.b32.xlu0 %v1248, 8
  %v1274 = vpop.permute.xlu0 %1273
  %1275 = vrot.lane.b32.xlu0 %v1249, 8
  %v1276 = vpop.permute.xlu0 %1275
  %1277 = vrot.lane.b32.xlu0 %v1250, 8
  %v1278 = vpop.permute.xlu0 %1277
  %1279 = vrot.lane.b32.xlu0 %v1251, 8
  %v1280 = vpop.permute.xlu0 %1279
  %1281 = vrot.lane.b32.xlu0 %v1252, 8
  %v1282 = vpop.permute.xlu0 %1281
  %1283 = vrot.lane.b32.xlu0 %v1253, 8
  %v1284 = vpop.permute.xlu0 %1283
  %1285 = vrot.lane.b32.xlu0 %v1254, 8
  %v1286 = vpop.permute.xlu0 %1285
  %v1303 = vunpack.c.l.b16 %v880
  %v1304 = vunpack.c.l.b16 %v881
  %v1305 = vunpack.c.l.b16 %v882
  %v1306 = vunpack.c.l.b16 %v883
  %v1307 = vunpack.c.l.b16 %v884
  %v1308 = vunpack.c.l.b16 %v885
  %v1309 = vunpack.c.l.b16 %v886
  %v1310 = vunpack.c.l.b16 %v887
  %v1311 = vunpack.c.l.b16 %v888
  %v1312 = vunpack.c.l.b16 %v889
  %v1313 = vunpack.c.l.b16 %v890
  %v1314 = vunpack.c.l.b16 %v891
  %v1315 = vunpack.c.l.b16 %v892
  %v1316 = vunpack.c.l.b16 %v893
  %v1317 = vunpack.c.l.b16 %v894
  %v1318 = vunpack.c.l.b16 %v895
  %v1319 = vpack.c.b16 %v1303, %v1223
  %v1320 = vpack.c.b16 %v1304, %v1224
  %v1321 = vpack.c.b16 %v1305, %v1225
  %v1322 = vpack.c.b16 %v1306, %v1226
  %v1323 = vpack.c.b16 %v1307, %v1227
  %v1324 = vpack.c.b16 %v1308, %v1228
  %v1325 = vpack.c.b16 %v1309, %v1229
  %v1326 = vpack.c.b16 %v1310, %v1230
  %v1327 = vpack.c.b16 %v1311, %v1231
  %v1328 = vpack.c.b16 %v1312, %v1232
  %v1329 = vpack.c.b16 %v1313, %v1233
  %v1330 = vpack.c.b16 %v1314, %v1234
  %v1331 = vpack.c.b16 %v1315, %v1235
  %v1332 = vpack.c.b16 %v1316, %v1236
  %v1333 = vpack.c.b16 %v1317, %v1237
  %v1334 = vpack.c.b16 %v1318, %v1238
  %v1336 = vshrl.u32 %v1319, 16
  %v1338 = vshll.u32 %v1319, 16
  %v1340 = vrot.slane %v1338, 1
  %v1341 = vor.u32 %v1336, %v1340
  %v1343 = vshrl.u32 %v1320, 16
  %v1345 = vshll.u32 %v1320, 16
  %v1347 = vrot.slane %v1345, 1
  %v1348 = vor.u32 %v1343, %v1347
  %v1350 = vshrl.u32 %v1321, 16
  %v1352 = vshll.u32 %v1321, 16
  %v1354 = vrot.slane %v1352, 1
  %v1355 = vor.u32 %v1350, %v1354
  %v1357 = vshrl.u32 %v1322, 16
  %v1359 = vshll.u32 %v1322, 16
  %v1361 = vrot.slane %v1359, 1
  %v1362 = vor.u32 %v1357, %v1361
  %v1364 = vshrl.u32 %v1323, 16
  %v1366 = vshll.u32 %v1323, 16
  %v1368 = vrot.slane %v1366, 1
  %v1369 = vor.u32 %v1364, %v1368
  %v1371 = vshrl.u32 %v1324, 16
  %v1373 = vshll.u32 %v1324, 16
  %v1375 = vrot.slane %v1373, 1
  %v1376 = vor.u32 %v1371, %v1375
  %v1378 = vshrl.u32 %v1325, 16
  %v1380 = vshll.u32 %v1325, 16
  %v1382 = vrot.slane %v1380, 1
  %v1383 = vor.u32 %v1378, %v1382
  %v1385 = vshrl.u32 %v1326, 16
  %v1387 = vshll.u32 %v1326, 16
  %v1389 = vrot.slane %v1387, 1
  %v1390 = vor.u32 %v1385, %v1389
  %v1392 = vshrl.u32 %v1327, 16
  %v1394 = vshll.u32 %v1327, 16
  %v1396 = vrot.slane %v1394, 1
  %v1397 = vor.u32 %v1392, %v1396
  %v1399 = vshrl.u32 %v1328, 16
  %v1401 = vshll.u32 %v1328, 16
  %v1403 = vrot.slane %v1401, 1
  %v1404 = vor.u32 %v1399, %v1403
  %v1406 = vshrl.u32 %v1329, 16
  %v1408 = vshll.u32 %v1329, 16
  %v1410 = vrot.slane %v1408, 1
  %v1411 = vor.u32 %v1406, %v1410
  %v1413 = vshrl.u32 %v1330, 16
  %v1415 = vshll.u32 %v1330, 16
  %v1417 = vrot.slane %v1415, 1
  %v1418 = vor.u32 %v1413, %v1417
  %v1420 = vshrl.u32 %v1331, 16
  %v1422 = vshll.u32 %v1331, 16
  %v1424 = vrot.slane %v1422, 1
  %v1425 = vor.u32 %v1420, %v1424
  %v1427 = vshrl.u32 %v1332, 16
  %v1429 = vshll.u32 %v1332, 16
  %v1431 = vrot.slane %v1429, 1
  %v1432 = vor.u32 %v1427, %v1431
  %v1434 = vshrl.u32 %v1333, 16
  %v1436 = vshll.u32 %v1333, 16
  %v1438 = vrot.slane %v1436, 1
  %v1439 = vor.u32 %v1434, %v1438
  %v1441 = vshrl.u32 %v1334, 16
  %v1443 = vshll.u32 %v1334, 16
  %v1445 = vrot.slane %v1443, 1
  %v1446 = vor.u32 %v1441, %v1445
  %1447 = vrot.lane.b32.xlu0 %v1341, 16
  %v1448 = vpop.permute.xlu0 %1447
  %1449 = vrot.lane.b32.xlu0 %v1348, 16
  %v1450 = vpop.permute.xlu0 %1449
  %1451 = vrot.lane.b32.xlu0 %v1355, 16
  %v1452 = vpop.permute.xlu0 %1451
  %1453 = vrot.lane.b32.xlu0 %v1362, 16
  %v1454 = vpop.permute.xlu0 %1453
  %1455 = vrot.lane.b32.xlu0 %v1369, 16
  %v1456 = vpop.permute.xlu0 %1455
  %1457 = vrot.lane.b32.xlu0 %v1376, 16
  %v1458 = vpop.permute.xlu0 %1457
  %1459 = vrot.lane.b32.xlu0 %v1383, 16
  %v1460 = vpop.permute.xlu0 %1459
  %1461 = vrot.lane.b32.xlu0 %v1390, 16
  %v1462 = vpop.permute.xlu0 %1461
  %1463 = vrot.lane.b32.xlu0 %v1397, 16
  %v1464 = vpop.permute.xlu0 %1463
  %1465 = vrot.lane.b32.xlu0 %v1404, 16
  %v1466 = vpop.permute.xlu0 %1465
  %1467 = vrot.lane.b32.xlu0 %v1411, 16
  %v1468 = vpop.permute.xlu0 %1467
  %1469 = vrot.lane.b32.xlu0 %v1418, 16
  %v1470 = vpop.permute.xlu0 %1469
  %1471 = vrot.lane.b32.xlu0 %v1425, 16
  %v1472 = vpop.permute.xlu0 %1471
  %1473 = vrot.lane.b32.xlu0 %v1432, 16
  %v1474 = vpop.permute.xlu0 %1473
  %1475 = vrot.lane.b32.xlu0 %v1439, 16
  %v1476 = vpop.permute.xlu0 %1475
  %1477 = vrot.lane.b32.xlu0 %v1446, 16
  %v1478 = vpop.permute.xlu0 %1477
  %v1495 = vunpack.c.l.b16 %v897
  %v1496 = vunpack.c.l.b16 %v898
  %v1497 = vunpack.c.l.b16 %v899
  %v1498 = vunpack.c.l.b16 %v900
  %v1499 = vunpack.c.l.b16 %v901
  %v1500 = vunpack.c.l.b16 %v902
  %v1501 = vunpack.c.l.b16 %v903
  %v1502 = vunpack.c.l.b16 %v904
  %v1503 = vunpack.c.l.b16 %v905
  %v1504 = vunpack.c.l.b16 %v906
  %v1505 = vunpack.c.l.b16 %v907
  %v1506 = vunpack.c.l.b16 %v908
  %v1507 = vunpack.c.l.b16 %v909
  %v1508 = vunpack.c.l.b16 %v910
  %v1509 = vunpack.c.l.b16 %v911
  %v1510 = vunpack.c.l.b16 %v912
  %v1511 = vpack.c.b16 %v1495, %v1495
  %v1512 = vpack.c.b16 %v1496, %v1496
  %v1513 = vpack.c.b16 %v1497, %v1497
  %v1514 = vpack.c.b16 %v1498, %v1498
  %v1515 = vpack.c.b16 %v1499, %v1499
  %v1516 = vpack.c.b16 %v1500, %v1500
  %v1517 = vpack.c.b16 %v1501, %v1501
  %v1518 = vpack.c.b16 %v1502, %v1502
  %v1519 = vpack.c.b16 %v1503, %v1503
  %v1520 = vpack.c.b16 %v1504, %v1504
  %v1521 = vpack.c.b16 %v1505, %v1505
  %v1522 = vpack.c.b16 %v1506, %v1506
  %v1523 = vpack.c.b16 %v1507, %v1507
  %v1524 = vpack.c.b16 %v1508, %v1508
  %v1525 = vpack.c.b16 %v1509, %v1509
  %v1526 = vpack.c.b16 %v1510, %v1510
  %1527 = vrot.lane.b32.xlu0 %v1511, 20
  %v1528 = vpop.permute.xlu0 %1527
  %1529 = vrot.lane.b32.xlu0 %v1512, 20
  %v1530 = vpop.permute.xlu0 %1529
  %1531 = vrot.lane.b32.xlu0 %v1513, 20
  %v1532 = vpop.permute.xlu0 %1531
  %1533 = vrot.lane.b32.xlu0 %v1514, 20
  %v1534 = vpop.permute.xlu0 %1533
  %1535 = vrot.lane.b32.xlu0 %v1515, 20
  %v1536 = vpop.permute.xlu0 %1535
  %1537 = vrot.lane.b32.xlu0 %v1516, 20
  %v1538 = vpop.permute.xlu0 %1537
  %1539 = vrot.lane.b32.xlu0 %v1517, 20
  %v1540 = vpop.permute.xlu0 %1539
  %1541 = vrot.lane.b32.xlu0 %v1518, 20
  %v1542 = vpop.permute.xlu0 %1541
  %1543 = vrot.lane.b32.xlu0 %v1519, 20
  %v1544 = vpop.permute.xlu0 %1543
  %1545 = vrot.lane.b32.xlu0 %v1520, 20
  %v1546 = vpop.permute.xlu0 %1545
  %1547 = vrot.lane.b32.xlu0 %v1521, 20
  %v1548 = vpop.permute.xlu0 %1547
  %1549 = vrot.lane.b32.xlu0 %v1522, 20
  %v1550 = vpop.permute.xlu0 %1549
  %1551 = vrot.lane.b32.xlu0 %v1523, 20
  %v1552 = vpop.permute.xlu0 %1551
  %1553 = vrot.lane.b32.xlu0 %v1524, 20
  %v1554 = vpop.permute.xlu0 %1553
  %1555 = vrot.lane.b32.xlu0 %v1525, 20
  %v1556 = vpop.permute.xlu0 %1555
  %1557 = vrot.lane.b32.xlu0 %v1526, 20
  %v1558 = vpop.permute.xlu0 %1557
  %v1575 = vunpack.c.l.b16 %v913
  %v1576 = vunpack.c.l.b16 %v914
  %v1577 = vunpack.c.l.b16 %v915
  %v1578 = vunpack.c.l.b16 %v916
  %v1579 = vunpack.c.l.b16 %v917
  %v1580 = vunpack.c.l.b16 %v918
  %v1581 = vunpack.c.l.b16 %v919
  %v1582 = vunpack.c.l.b16 %v920
  %v1583 = vunpack.c.l.b16 %v921
  %v1584 = vunpack.c.l.b16 %v922
  %v1585 = vunpack.c.l.b16 %v923
  %v1586 = vunpack.c.l.b16 %v924
  %v1587 = vunpack.c.l.b16 %v925
  %v1588 = vunpack.c.l.b16 %v926
  %v1589 = vunpack.c.l.b16 %v927
  %v1590 = vunpack.c.l.b16 %v928
  %v1591 = vpack.c.b16 %v1575, %v1495
  %v1592 = vpack.c.b16 %v1576, %v1496
  %v1593 = vpack.c.b16 %v1577, %v1497
  %v1594 = vpack.c.b16 %v1578, %v1498
  %v1595 = vpack.c.b16 %v1579, %v1499
  %v1596 = vpack.c.b16 %v1580, %v1500
  %v1597 = vpack.c.b16 %v1581, %v1501
  %v1598 = vpack.c.b16 %v1582, %v1502
  %v1599 = vpack.c.b16 %v1583, %v1503
  %v1600 = vpack.c.b16 %v1584, %v1504
  %v1601 = vpack.c.b16 %v1585, %v1505
  %v1602 = vpack.c.b16 %v1586, %v1506
  %v1603 = vpack.c.b16 %v1587, %v1507
  %v1604 = vpack.c.b16 %v1588, %v1508
  %v1605 = vpack.c.b16 %v1589, %v1509
  %v1606 = vpack.c.b16 %v1590, %v1510
  %v1608 = vshrl.u32 %v1591, 16
  %v1610 = vshll.u32 %v1591, 16
  %v1612 = vrot.slane %v1610, 1
  %v1613 = vor.u32 %v1608, %v1612
  %v1615 = vshrl.u32 %v1592, 16
  %v1617 = vshll.u32 %v1592, 16
  %v1619 = vrot.slane %v1617, 1
  %v1620 = vor.u32 %v1615, %v1619
  %v1622 = vshrl.u32 %v1593, 16
  %v1624 = vshll.u32 %v1593, 16
  %v1626 = vrot.slane %v1624, 1
  %v1627 = vor.u32 %v1622, %v1626
  %v1629 = vshrl.u32 %v1594, 16
  %v1631 = vshll.u32 %v1594, 16
  %v1633 = vrot.slane %v1631, 1
  %v1634 = vor.u32 %v1629, %v1633
  %v1636 = vshrl.u32 %v1595, 16
  %v1638 = vshll.u32 %v1595, 16
  %v1640 = vrot.slane %v1638, 1
  %v1641 = vor.u32 %v1636, %v1640
  %v1643 = vshrl.u32 %v1596, 16
  %v1645 = vshll.u32 %v1596, 16
  %v1647 = vrot.slane %v1645, 1
  %v1648 = vor.u32 %v1643, %v1647
  %v1650 = vshrl.u32 %v1597, 16
  %v1652 = vshll.u32 %v1597, 16
  %v1654 = vrot.slane %v1652, 1
  %v1655 = vor.u32 %v1650, %v1654
  %v1657 = vshrl.u32 %v1598, 16
  %v1659 = vshll.u32 %v1598, 16
  %v1661 = vrot.slane %v1659, 1
  %v1662 = vor.u32 %v1657, %v1661
  %v1664 = vshrl.u32 %v1599, 16
  %v1666 = vshll.u32 %v1599, 16
  %v1668 = vrot.slane %v1666, 1
  %v1669 = vor.u32 %v1664, %v1668
  %v1671 = vshrl.u32 %v1600, 16
  %v1673 = vshll.u32 %v1600, 16
  %v1675 = vrot.slane %v1673, 1
  %v1676 = vor.u32 %v1671, %v1675
  %v1678 = vshrl.u32 %v1601, 16
  %v1680 = vshll.u32 %v1601, 16
  %v1682 = vrot.slane %v1680, 1
  %v1683 = vor.u32 %v1678, %v1682
  %v1685 = vshrl.u32 %v1602, 16
  %v1687 = vshll.u32 %v1602, 16
  %v1689 = vrot.slane %v1687, 1
  %v1690 = vor.u32 %v1685, %v1689
  %v1692 = vshrl.u32 %v1603, 16
  %v1694 = vshll.u32 %v1603, 16
  %v1696 = vrot.slane %v1694, 1
  %v1697 = vor.u32 %v1692, %v1696
  %v1699 = vshrl.u32 %v1604, 16
  %v1701 = vshll.u32 %v1604, 16
  %v1703 = vrot.slane %v1701, 1
  %v1704 = vor.u32 %v1699, %v1703
  %v1706 = vshrl.u32 %v1605, 16
  %v1708 = vshll.u32 %v1605, 16
  %v1710 = vrot.slane %v1708, 1
  %v1711 = vor.u32 %v1706, %v1710
  %v1713 = vshrl.u32 %v1606, 16
  %v1715 = vshll.u32 %v1606, 16
  %v1717 = vrot.slane %v1715, 1
  %v1718 = vor.u32 %v1713, %v1717
  %1719 = vrot.lane.b32.xlu0 %v1613, 28
  %v1720 = vpop.permute.xlu0 %1719
  %1721 = vrot.lane.b32.xlu0 %v1620, 28
  %v1722 = vpop.permute.xlu0 %1721
  %1723 = vrot.lane.b32.xlu0 %v1627, 28
  %v1724 = vpop.permute.xlu0 %1723
  %1725 = vrot.lane.b32.xlu0 %v1634, 28
  %v1726 = vpop.permute.xlu0 %1725
  %1727 = vrot.lane.b32.xlu0 %v1641, 28
  %v1728 = vpop.permute.xlu0 %1727
  %1729 = vrot.lane.b32.xlu0 %v1648, 28
  %v1730 = vpop.permute.xlu0 %1729
  %1731 = vrot.lane.b32.xlu0 %v1655, 28
  %v1732 = vpop.permute.xlu0 %1731
  %1733 = vrot.lane.b32.xlu0 %v1662, 28
  %v1734 = vpop.permute.xlu0 %1733
  %1735 = vrot.lane.b32.xlu0 %v1669, 28
  %v1736 = vpop.permute.xlu0 %1735
  %1737 = vrot.lane.b32.xlu0 %v1676, 28
  %v1738 = vpop.permute.xlu0 %1737
  %1739 = vrot.lane.b32.xlu0 %v1683, 28
  %v1740 = vpop.permute.xlu0 %1739
  %1741 = vrot.lane.b32.xlu0 %v1690, 28
  %v1742 = vpop.permute.xlu0 %1741
  %1743 = vrot.lane.b32.xlu0 %v1697, 28
  %v1744 = vpop.permute.xlu0 %1743
  %1745 = vrot.lane.b32.xlu0 %v1704, 28
  %v1746 = vpop.permute.xlu0 %1745
  %1747 = vrot.lane.b32.xlu0 %v1711, 28
  %v1748 = vpop.permute.xlu0 %1747
  %1749 = vrot.lane.b32.xlu0 %v1718, 28
  %v1750 = vpop.permute.xlu0 %1749
  %vm1751 = vcmask 31744
  %v1754 = vsel %vm1751, %v984, %v1176
  %v1757 = vsel %vm1751, %v986, %v1178
  %v1760 = vsel %vm1751, %v988, %v1180
  %v1763 = vsel %vm1751, %v990, %v1182
  %v1766 = vsel %vm1751, %v992, %v1184
  %v1769 = vsel %vm1751, %v994, %v1186
  %v1772 = vsel %vm1751, %v996, %v1188
  %v1775 = vsel %vm1751, %v998, %v1190
  %v1778 = vsel %vm1751, %v1000, %v1192
  %v1781 = vsel %vm1751, %v1002, %v1194
  %v1784 = vsel %vm1751, %v1004, %v1196
  %v1787 = vsel %vm1751, %v1006, %v1198
  %v1790 = vsel %vm1751, %v1008, %v1200
  %v1793 = vsel %vm1751, %v1010, %v1202
  %v1796 = vsel %vm1751, %v1012, %v1204
  %v1799 = vsel %vm1751, %v1014, %v1206
  %vm1800 = vcmask 64512
  %v1801 = vsel %vm1800, %v1754, %v1176
  %v1802 = vsel %vm1800, %v1757, %v1178
  %v1803 = vsel %vm1800, %v1760, %v1180
  %v1804 = vsel %vm1800, %v1763, %v1182
  %v1805 = vsel %vm1800, %v1766, %v1184
  %v1806 = vsel %vm1800, %v1769, %v1186
  %v1807 = vsel %vm1800, %v1772, %v1188
  %v1808 = vsel %vm1800, %v1775, %v1190
  %v1809 = vsel %vm1800, %v1778, %v1192
  %v1810 = vsel %vm1800, %v1781, %v1194
  %v1811 = vsel %vm1800, %v1784, %v1196
  %v1812 = vsel %vm1800, %v1787, %v1198
  %v1813 = vsel %vm1800, %v1790, %v1200
  %v1814 = vsel %vm1800, %v1793, %v1202
  %v1815 = vsel %vm1800, %v1796, %v1204
  %v1816 = vsel %vm1800, %v1799, %v1206
  %vm1817 = vcmask 97280
  %v1819 = vsel %vm1817, %v1801, %v1256
  %v1821 = vsel %vm1817, %v1802, %v1258
  %v1823 = vsel %vm1817, %v1803, %v1260
  %v1825 = vsel %vm1817, %v1804, %v1262
  %v1827 = vsel %vm1817, %v1805, %v1264
  %v1829 = vsel %vm1817, %v1806, %v1266
  %v1831 = vsel %vm1817, %v1807, %v1268
  %v1833 = vsel %vm1817, %v1808, %v1270
  %v1835 = vsel %vm1817, %v1809, %v1272
  %v1837 = vsel %vm1817, %v1810, %v1274
  %v1839 = vsel %vm1817, %v1811, %v1276
  %v1841 = vsel %vm1817, %v1812, %v1278
  %v1843 = vsel %vm1817, %v1813, %v1280
  %v1845 = vsel %vm1817, %v1814, %v1282
  %v1847 = vsel %vm1817, %v1815, %v1284
  %v1849 = vsel %vm1817, %v1816, %v1286
  %vm1850 = vcmask 130048
  %v1852 = vsel %vm1850, %v1819, %v1448
  %v1854 = vsel %vm1850, %v1821, %v1450
  %v1856 = vsel %vm1850, %v1823, %v1452
  %v1858 = vsel %vm1850, %v1825, %v1454
  %v1860 = vsel %vm1850, %v1827, %v1456
  %v1862 = vsel %vm1850, %v1829, %v1458
  %v1864 = vsel %vm1850, %v1831, %v1460
  %v1866 = vsel %vm1850, %v1833, %v1462
  %v1868 = vsel %vm1850, %v1835, %v1464
  %v1870 = vsel %vm1850, %v1837, %v1466
  %v1872 = vsel %vm1850, %v1839, %v1468
  %v1874 = vsel %vm1850, %v1841, %v1470
  %v1876 = vsel %vm1850, %v1843, %v1472
  %v1878 = vsel %vm1850, %v1845, %v1474
  %v1880 = vsel %vm1850, %v1847, %v1476
  %v1882 = vsel %vm1850, %v1849, %v1478
  %vm1883 = vcmask 162816
  %v1884 = vsel %vm1883, %v1852, %v1448
  %v1885 = vsel %vm1883, %v1854, %v1450
  %v1886 = vsel %vm1883, %v1856, %v1452
  %v1887 = vsel %vm1883, %v1858, %v1454
  %v1888 = vsel %vm1883, %v1860, %v1456
  %v1889 = vsel %vm1883, %v1862, %v1458
  %v1890 = vsel %vm1883, %v1864, %v1460
  %v1891 = vsel %vm1883, %v1866, %v1462
  %v1892 = vsel %vm1883, %v1868, %v1464
  %v1893 = vsel %vm1883, %v1870, %v1466
  %v1894 = vsel %vm1883, %v1872, %v1468
  %v1895 = vsel %vm1883, %v1874, %v1470
  %v1896 = vsel %vm1883, %v1876, %v1472
  %v1897 = vsel %vm1883, %v1878, %v1474
  %v1898 = vsel %vm1883, %v1880, %v1476
  %v1899 = vsel %vm1883, %v1882, %v1478
  %vm1900 = vcmask 195584
  %v1902 = vsel %vm1900, %v1884, %v1528
  %v1904 = vsel %vm1900, %v1885, %v1530
  %v1906 = vsel %vm1900, %v1886, %v1532
  %v1908 = vsel %vm1900, %v1887, %v1534
  %v1910 = vsel %vm1900, %v1888, %v1536
  %v1912 = vsel %vm1900, %v1889, %v1538
  %v1914 = vsel %vm1900, %v1890, %v1540
  %v1916 = vsel %vm1900, %v1891, %v1542
  %v1918 = vsel %vm1900, %v1892, %v1544
  %v1920 = vsel %vm1900, %v1893, %v1546
  %v1922 = vsel %vm1900, %v1894, %v1548
  %v1924 = vsel %vm1900, %v1895, %v1550
  %v1926 = vsel %vm1900, %v1896, %v1552
  %v1928 = vsel %vm1900, %v1897, %v1554
  %v1930 = vsel %vm1900, %v1898, %v1556
  %v1932 = vsel %vm1900, %v1899, %v1558
  %vm1933 = vcmask 228352
  %v1935 = vsel %vm1933, %v1902, %v1720
  %v1937 = vsel %vm1933, %v1904, %v1722
  %v1939 = vsel %vm1933, %v1906, %v1724
  %v1941 = vsel %vm1933, %v1908, %v1726
  %v1943 = vsel %vm1933, %v1910, %v1728
  %v1945 = vsel %vm1933, %v1912, %v1730
  %v1947 = vsel %vm1933, %v1914, %v1732
  %v1949 = vsel %vm1933, %v1916, %v1734
  %v1951 = vsel %vm1933, %v1918, %v1736
  %v1953 = vsel %vm1933, %v1920, %v1738
  %v1955 = vsel %vm1933, %v1922, %v1740
  %v1957 = vsel %vm1933, %v1924, %v1742
  %v1959 = vsel %vm1933, %v1926, %v1744
  %v1961 = vsel %vm1933, %v1928, %v1746
  %v1963 = vsel %vm1933, %v1930, %v1748
  %v1965 = vsel %vm1933, %v1932, %v1750
  %vm1966 = vcmask 261120
  %v1967 = vsel %vm1966, %v1935, %v1720
  %v1968 = vsel %vm1966, %v1937, %v1722
  %v1969 = vsel %vm1966, %v1939, %v1724
  %v1970 = vsel %vm1966, %v1941, %v1726
  %v1971 = vsel %vm1966, %v1943, %v1728
  %v1972 = vsel %vm1966, %v1945, %v1730
  %v1973 = vsel %vm1966, %v1947, %v1732
  %v1974 = vsel %vm1966, %v1949, %v1734
  %v1975 = vsel %vm1966, %v1951, %v1736
  %v1976 = vsel %vm1966, %v1953, %v1738
  %v1977 = vsel %vm1966, %v1955, %v1740
  %v1978 = vsel %vm1966, %v1957, %v1742
  %v1979 = vsel %vm1966, %v1959, %v1744
  %v1980 = vsel %vm1966, %v1961, %v1746
  %v1981 = vsel %vm1966, %v1963, %v1748
  %v1982 = vsel %vm1966, %v1965, %v1750
  %v1984 = vlaneseq
  %v1985 = vshrl.u32 %v1984, 7
  %v1986 = vsub.s32 0, %v1985
  %v1987 = vrot.slane %v934, %v1986
  %v2005 = vunpack.c.l.b16 %v1967
  %v2006 = vunpack.c.l.b16 %v1968
  %v2007 = vunpack.c.l.b16 %v1969
  %v2008 = vunpack.c.l.b16 %v1970
  %v2009 = vunpack.c.l.b16 %v1971
  %v2010 = vunpack.c.l.b16 %v1972
  %v2011 = vunpack.c.l.b16 %v1973
  %v2012 = vunpack.c.l.b16 %v1974
  %v2013 = vunpack.c.l.b16 %v1975
  %v2014 = vunpack.c.l.b16 %v1976
  %v2015 = vunpack.c.l.b16 %v1977
  %v2016 = vunpack.c.l.b16 %v1978
  %v2017 = vunpack.c.l.b16 %v1979
  %v2018 = vunpack.c.l.b16 %v1980
  %v2019 = vunpack.c.l.b16 %v1981
  %v2020 = vunpack.c.l.b16 %v1982
  %v2021 = vpack.c.b16 %v2006, %v2005
  %v2022 = vpack.c.b16 %v2008, %v2007
  %v2023 = vpack.c.b16 %v2010, %v2009
  %v2024 = vpack.c.b16 %v2012, %v2011
  %v2025 = vpack.c.b16 %v2014, %v2013
  %v2026 = vpack.c.b16 %v2016, %v2015
  %v2027 = vpack.c.b16 %v2018, %v2017
  %v2028 = vpack.c.b16 %v2020, %v2019
  %v2034 = vunpack.c.l.b16 %v929
  %v2035 = vunpack.c.l.b16 %v930
  %v2036 = vunpack.c.l.b16 %v931
  %v2037 = vunpack.c.l.b16 %v932
  %v2038 = vunpack.c.l.b16 %v933
  %v2039 = vpack.c.b16 %v2035, %v2034
  %v2040 = vpack.c.b16 %v2037, %v2036
  %v2041 = vpack.c.b16 %v2038, %v2038
  %vm2044 = vcmask 293888
  %v2046 = vsel %vm2044, %v2021, 0
  %v2049 = vsel %vm2044, %v2022, 0
  %v2052 = vsel %vm2044, %v2023, 0
  %v2055 = vsel %vm2044, %v2024, 0
  %v2058 = vsel %vm2044, %v2025, 0
  %v2061 = vsel %vm2044, %v2026, 0
  %v2064 = vsel %vm2044, %v2027, 0
  %v2067 = vsel %vm2044, %v2028, 0
  %vm2069 = vcmask 1041408
  %v2071 = vsel %vm2069, %v2041, 0
  %2073 = vmatprep.subr.bf16.mxu0 0
  %2074 = vmatpush1.bf16.msra.mxu0 0
  %2075 = vmatprep.subr.bf16.mxu0 0
  %2076 = vmatpush1.bf16.msra.mxu0 0
  %2077 = vmatprep.subr.bf16.mxu0 0
  %2078 = vmatpush1.bf16.msra.mxu0 0
  %2079 = vmatprep.subr.bf16.mxu0 0
  %2080 = vmatpush1.bf16.msra.mxu0 0
  %2081 = vmatprep.subr.bf16.mxu0 0
  %2082 = vmatpush1.bf16.msra.mxu0 0
  %2083 = vmatprep.subr.bf16.mxu0 0
  %2084 = vmatpush1.bf16.msra.mxu0 %v2071
  %2085 = vmatprep.subr.bf16.mxu0 0
  %2086 = vmatpush1.bf16.msra.mxu0 %v2040
  %2087 = vmatprep.subr.bf16.mxu0 0
  %2088 = vmatpush1.bf16.msra.mxu0 %v2039
  %2089 = vmatprep.subr.bf16.mxu0 0
  %2090 = vmatpush2.bf16.msra.mxu0 0
  %2091 = vmatprep.subr.bf16.mxu0 0
  %2092 = vmatpush2.bf16.msra.mxu0 0
  %2093 = vmatprep.subr.bf16.mxu0 0
  %2094 = vmatpush2.bf16.msra.mxu0 0
  %2095 = vmatprep.subr.bf16.mxu0 0
  %2096 = vmatpush2.bf16.msra.mxu0 0
  %2097 = vmatprep.subr.bf16.mxu0 0
  %2098 = vmatpush2.bf16.msra.mxu0 0
  %2099 = vmatprep.subr.bf16.mxu0 0
  %2100 = vmatpush2.bf16.msra.mxu0 0
  %2101 = vmatprep.subr.bf16.mxu0 0
  %2102 = vmatpush2.bf16.msra.mxu0 0
  %2103 = vmatprep.subr.bf16.mxu0 0
  %2104 = vmatpush2.bf16.msra.mxu0 0
  %2105 = vmatprep.mubr.bf16.mxu0 0
  %2106 = vmatmul.mubr.bf16.gmra.mxu0 %v2046
  %v2107 = vpop.f32.mrf.mxu0
  %v2108 = vadd.f32 %v1987, %v2107
  %v2109 = vpop.f32.mrf.mxu0
  %v2110 = vpop.f32.mrf.mxu0
  %v2111 = vadd.f32 %v1987, %v2110
  %v2112 = vpop.f32.mrf.mxu0
  %2113 = vmatprep.mubr.bf16.mxu0 0
  %2114 = vmatmul.mubr.bf16.gmra.mxu0 %v2049
  %v2115 = vpop.f32.mrf.mxu0
  %v2116 = vadd.f32 %v1987, %v2115
  %v2117 = vpop.f32.mrf.mxu0
  %v2118 = vpop.f32.mrf.mxu0
  %v2119 = vadd.f32 %v1987, %v2118
  %v2120 = vpop.f32.mrf.mxu0
  %2121 = vmatprep.mubr.bf16.mxu0 0
  %2122 = vmatmul.mubr.bf16.gmra.mxu0 %v2052
  %v2123 = vpop.f32.mrf.mxu0
  %v2124 = vadd.f32 %v1987, %v2123
  %v2125 = vpop.f32.mrf.mxu0
  %v2126 = vpop.f32.mrf.mxu0
  %v2127 = vadd.f32 %v1987, %v2126
  %v2128 = vpop.f32.mrf.mxu0
  %2129 = vmatprep.mubr.bf16.mxu0 0
  %2130 = vmatmul.mubr.bf16.gmra.mxu0 %v2055
  %v2131 = vpop.f32.mrf.mxu0
  %v2132 = vadd.f32 %v1987, %v2131
  %v2133 = vpop.f32.mrf.mxu0
  %v2134 = vpop.f32.mrf.mxu0
  %v2135 = vadd.f32 %v1987, %v2134
  %v2136 = vpop.f32.mrf.mxu0
  %2137 = vmatprep.mubr.bf16.mxu0 0
  %2138 = vmatmul.mubr.bf16.gmra.mxu0 %v2058
  %v2139 = vpop.f32.mrf.mxu0
  %v2140 = vadd.f32 %v1987, %v2139
  %v2141 = vpop.f32.mrf.mxu0
  %v2142 = vpop.f32.mrf.mxu0
  %v2143 = vadd.f32 %v1987, %v2142
  %v2144 = vpop.f32.mrf.mxu0
  %2145 = vmatprep.mubr.bf16.mxu0 0
  %2146 = vmatmul.mubr.bf16.gmra.mxu0 %v2061
  %v2147 = vpop.f32.mrf.mxu0
  %v2148 = vadd.f32 %v1987, %v2147
  %v2149 = vpop.f32.mrf.mxu0
  %v2150 = vpop.f32.mrf.mxu0
  %v2151 = vadd.f32 %v1987, %v2150
  %v2152 = vpop.f32.mrf.mxu0
  %2153 = vmatprep.mubr.bf16.mxu0 0
  %2154 = vmatmul.mubr.bf16.gmra.mxu0 %v2064
  %v2155 = vpop.f32.mrf.mxu0
  %v2156 = vadd.f32 %v1987, %v2155
  %v2157 = vpop.f32.mrf.mxu0
  %v2158 = vpop.f32.mrf.mxu0
  %v2159 = vadd.f32 %v1987, %v2158
  %v2160 = vpop.f32.mrf.mxu0
  %2161 = vmatprep.mubr.bf16.mxu0 0
  %2162 = vmatmul.mubr.bf16.gmra.mxu0 %v2067
  %v2163 = vpop.f32.mrf.mxu0
  %v2164 = vadd.f32 %v1987, %v2163
  %v2165 = vpop.f32.mrf.mxu0
  %v2166 = vpop.f32.mrf.mxu0
  %v2167 = vadd.f32 %v1987, %v2166
  %v2168 = vpop.f32.mrf.mxu0
  %2169 = vdwg.mxu0
  %v2170 = vsel %vm1800, %v2108, 0.0
  %v2171 = vsel %vm1800, %v2111, 0.0
  %v2172 = vadd.f32 %v2170, %v2171
  %v2173 = vsel %vm1800, %v2116, 0.0
  %v2174 = vadd.f32 %v2172, %v2173
  %v2175 = vsel %vm1800, %v2119, 0.0
  %v2176 = vadd.f32 %v2174, %v2175
  %v2177 = vsel %vm1800, %v2124, 0.0
  %v2178 = vadd.f32 %v2176, %v2177
  %v2179 = vsel %vm1800, %v2127, 0.0
  %v2180 = vadd.f32 %v2178, %v2179
  %v2181 = vsel %vm1800, %v2132, 0.0
  %v2182 = vadd.f32 %v2180, %v2181
  %v2183 = vsel %vm1800, %v2135, 0.0
  %v2184 = vadd.f32 %v2182, %v2183
  %v2185 = vsel %vm1800, %v2140, 0.0
  %v2186 = vadd.f32 %v2184, %v2185
  %v2187 = vsel %vm1800, %v2143, 0.0
  %v2188 = vadd.f32 %v2186, %v2187
  %v2189 = vsel %vm1800, %v2148, 0.0
  %v2190 = vadd.f32 %v2188, %v2189
  %v2191 = vsel %vm1800, %v2151, 0.0
  %v2192 = vadd.f32 %v2190, %v2191
  %v2193 = vsel %vm1800, %v2156, 0.0
  %v2194 = vadd.f32 %v2192, %v2193
  %v2195 = vsel %vm1800, %v2159, 0.0
  %v2196 = vadd.f32 %v2194, %v2195
  %v2197 = vsel %vm1800, %v2164, 0.0
  %v2198 = vadd.f32 %v2196, %v2197
  %v2199 = vsel %vm1800, %v2167, 0.0
  %v2200 = vadd.f32 %v2198, %v2199
  %v2201 = vrot.slane %v2200, 4
  %v2202 = vadd.f32 %v2200, %v2201
  %v2203 = vrot.slane %v2202, 2
  %v2204 = vadd.f32 %v2202, %v2203
  %v2205 = vrot.slane %v2204, 1
  %v2206 = vadd.f32 %v2204, %v2205
  %v2207 = vrcp.pop 128.0
  %v2208 = vmul.f32 %v2206, %v2207
  %v2209 = vsub.f32 %v2108, %v2208
  %v2210 = vsub.f32 %v2111, %v2208
  %v2211 = vsub.f32 %v2116, %v2208
  %v2212 = vsub.f32 %v2119, %v2208
  %v2213 = vsub.f32 %v2124, %v2208
  %v2214 = vsub.f32 %v2127, %v2208
  %v2215 = vsub.f32 %v2132, %v2208
  %v2216 = vsub.f32 %v2135, %v2208
  %v2217 = vsub.f32 %v2140, %v2208
  %v2218 = vsub.f32 %v2143, %v2208
  %v2219 = vsub.f32 %v2148, %v2208
  %v2220 = vsub.f32 %v2151, %v2208
  %v2221 = vsub.f32 %v2156, %v2208
  %v2222 = vsub.f32 %v2159, %v2208
  %v2223 = vsub.f32 %v2164, %v2208
  %v2224 = vsub.f32 %v2167, %v2208
  %v2225 = vmul.f32 %v2209, %v2209
  %v2226 = vmul.f32 %v2210, %v2210
  %v2227 = vmul.f32 %v2211, %v2211
  %v2228 = vmul.f32 %v2212, %v2212
  %v2229 = vmul.f32 %v2213, %v2213
  %v2230 = vmul.f32 %v2214, %v2214
  %v2231 = vmul.f32 %v2215, %v2215
  %v2232 = vmul.f32 %v2216, %v2216
  %v2233 = vmul.f32 %v2217, %v2217
  %v2234 = vmul.f32 %v2218, %v2218
  %v2235 = vmul.f32 %v2219, %v2219
  %v2236 = vmul.f32 %v2220, %v2220
  %v2237 = vmul.f32 %v2221, %v2221
  %v2238 = vmul.f32 %v2222, %v2222
  %v2239 = vmul.f32 %v2223, %v2223
  %v2240 = vmul.f32 %v2224, %v2224
  %v2241 = vsel %vm1800, %v2225, 0.0
  %v2242 = vsel %vm1800, %v2226, 0.0
  %v2243 = vadd.f32 %v2241, %v2242
  %v2244 = vsel %vm1800, %v2227, 0.0
  %v2245 = vadd.f32 %v2243, %v2244
  %v2246 = vsel %vm1800, %v2228, 0.0
  %v2247 = vadd.f32 %v2245, %v2246
  %v2248 = vsel %vm1800, %v2229, 0.0
  %v2249 = vadd.f32 %v2247, %v2248
  %v2250 = vsel %vm1800, %v2230, 0.0
  %v2251 = vadd.f32 %v2249, %v2250
  %v2252 = vsel %vm1800, %v2231, 0.0
  %v2253 = vadd.f32 %v2251, %v2252
  %v2254 = vsel %vm1800, %v2232, 0.0
  %v2255 = vadd.f32 %v2253, %v2254
  %v2256 = vsel %vm1800, %v2233, 0.0
  %v2257 = vadd.f32 %v2255, %v2256
  %v2258 = vsel %vm1800, %v2234, 0.0
  %v2259 = vadd.f32 %v2257, %v2258
  %v2260 = vsel %vm1800, %v2235, 0.0
  %v2261 = vadd.f32 %v2259, %v2260
  %v2262 = vsel %vm1800, %v2236, 0.0
  %v2263 = vadd.f32 %v2261, %v2262
  %v2264 = vsel %vm1800, %v2237, 0.0
  %v2265 = vadd.f32 %v2263, %v2264
  %v2266 = vsel %vm1800, %v2238, 0.0
  %v2267 = vadd.f32 %v2265, %v2266
  %v2268 = vsel %vm1800, %v2239, 0.0
  %v2269 = vadd.f32 %v2267, %v2268
  %v2270 = vsel %vm1800, %v2240, 0.0
  %v2271 = vadd.f32 %v2269, %v2270
  %v2272 = vrot.slane %v2271, 4
  %v2273 = vadd.f32 %v2271, %v2272
  %v2274 = vrot.slane %v2273, 2
  %v2275 = vadd.f32 %v2273, %v2274
  %v2276 = vrot.slane %v2275, 1
  %v2277 = vadd.f32 %v2275, %v2276
  %v2278 = vmul.f32 %v2277, %v2207
  %v2279 = vld [vmem:[%s3] sm:$0x1]
  %v2280 = vadd.f32 %v2278, 1e-05
  %v2281 = vrsqrt.pop %v2280
  %v2282 = vmul.f32 %v2279, %v2281
  %v2283 = vld [vmem:[%s4] sm:$0x1]
  %v2284 = vmul.f32 %v2208, %v2282
  %v2285 = vsub.f32 %v2283, %v2284
  %v2287 = vlaneseq
  %v2288 = vshrl.u32 %v2287, 7
  %v2289 = vsub.s32 0, %v2288
  %v2290 = vrot.slane %v2282, %v2289
  %v2292 = vmul.f32 %v2108, %v2290
  %v2293 = vmul.f32 %v2111, %v2290
  %v2294 = vmul.f32 %v2116, %v2290
  %v2295 = vmul.f32 %v2119, %v2290
  %v2296 = vmul.f32 %v2124, %v2290
  %v2297 = vmul.f32 %v2127, %v2290
  %v2298 = vmul.f32 %v2132, %v2290
  %v2299 = vmul.f32 %v2135, %v2290
  %v2300 = vmul.f32 %v2140, %v2290
  %v2301 = vmul.f32 %v2143, %v2290
  %v2302 = vmul.f32 %v2148, %v2290
  %v2303 = vmul.f32 %v2151, %v2290
  %v2304 = vmul.f32 %v2156, %v2290
  %v2305 = vmul.f32 %v2159, %v2290
  %v2306 = vmul.f32 %v2164, %v2290
  %v2307 = vmul.f32 %v2167, %v2290
  %v2309 = vlaneseq
  %v2310 = vshrl.u32 %v2309, 7
  %v2311 = vsub.s32 0, %v2310
  %v2312 = vrot.slane %v2285, %v2311
  %v2314 = vadd.f32 %v2292, %v2312
  %v2315 = vadd.f32 %v2293, %v2312
  %v2316 = vadd.f32 %v2294, %v2312
  %v2317 = vadd.f32 %v2295, %v2312
  %v2318 = vadd.f32 %v2296, %v2312
  %v2319 = vadd.f32 %v2297, %v2312
  %v2320 = vadd.f32 %v2298, %v2312
  %v2321 = vadd.f32 %v2299, %v2312
  %v2322 = vadd.f32 %v2300, %v2312
  %v2323 = vadd.f32 %v2301, %v2312
  %v2324 = vadd.f32 %v2302, %v2312
  %v2325 = vadd.f32 %v2303, %v2312
  %v2326 = vadd.f32 %v2304, %v2312
  %v2327 = vadd.f32 %v2305, %v2312
  %v2328 = vadd.f32 %v2306, %v2312
  %v2329 = vadd.f32 %v2307, %v2312
  %v2330 = vmax.f32 %v2314, 0.0
  %v2331 = vmax.f32 %v2315, 0.0
  %v2332 = vmax.f32 %v2316, 0.0
  %v2333 = vmax.f32 %v2317, 0.0
  %v2334 = vmax.f32 %v2318, 0.0
  %v2335 = vmax.f32 %v2319, 0.0
  %v2336 = vmax.f32 %v2320, 0.0
  %v2337 = vmax.f32 %v2321, 0.0
  %v2338 = vmax.f32 %v2322, 0.0
  %v2339 = vmax.f32 %v2323, 0.0
  %v2340 = vmax.f32 %v2324, 0.0
  %v2341 = vmax.f32 %v2325, 0.0
  %v2342 = vmax.f32 %v2326, 0.0
  %v2343 = vmax.f32 %v2327, 0.0
  %v2344 = vmax.f32 %v2328, 0.0
  %v2345 = vmax.f32 %v2329, 0.0
  %v2346 = vpack.c.bf16 %v2330, %v2330
  %v2347 = vpack.c.bf16 %v2331, %v2331
  %v2348 = vpack.c.bf16 %v2332, %v2332
  %v2349 = vpack.c.bf16 %v2333, %v2333
  %v2350 = vpack.c.bf16 %v2334, %v2334
  %v2351 = vpack.c.bf16 %v2335, %v2335
  %v2352 = vpack.c.bf16 %v2336, %v2336
  %v2353 = vpack.c.bf16 %v2337, %v2337
  %v2354 = vpack.c.bf16 %v2338, %v2338
  %v2355 = vpack.c.bf16 %v2339, %v2339
  %v2356 = vpack.c.bf16 %v2340, %v2340
  %v2357 = vpack.c.bf16 %v2341, %v2341
  %v2358 = vpack.c.bf16 %v2342, %v2342
  %v2359 = vpack.c.bf16 %v2343, %v2343
  %v2360 = vpack.c.bf16 %v2344, %v2344
  %v2361 = vpack.c.bf16 %v2345, %v2345
  %v2378 = vunpack.c.l.b16 %v2346
  %v2379 = vunpack.c.l.b16 %v2347
  %v2380 = vunpack.c.l.b16 %v2348
  %v2381 = vunpack.c.l.b16 %v2349
  %v2382 = vunpack.c.l.b16 %v2350
  %v2383 = vunpack.c.l.b16 %v2351
  %v2384 = vunpack.c.l.b16 %v2352
  %v2385 = vunpack.c.l.b16 %v2353
  %v2386 = vunpack.c.l.b16 %v2354
  %v2387 = vunpack.c.l.b16 %v2355
  %v2388 = vunpack.c.l.b16 %v2356
  %v2389 = vunpack.c.l.b16 %v2357
  %v2390 = vunpack.c.l.b16 %v2358
  %v2391 = vunpack.c.l.b16 %v2359
  %v2392 = vunpack.c.l.b16 %v2360
  %v2393 = vunpack.c.l.b16 %v2361
  %v2394 = vpack.c.b16 %v2378, %v2378
  %v2395 = vpack.c.b16 %v2379, %v2379
  %v2396 = vpack.c.b16 %v2380, %v2380
  %v2397 = vpack.c.b16 %v2381, %v2381
  %v2398 = vpack.c.b16 %v2382, %v2382
  %v2399 = vpack.c.b16 %v2383, %v2383
  %v2400 = vpack.c.b16 %v2384, %v2384
  %v2401 = vpack.c.b16 %v2385, %v2385
  %v2402 = vpack.c.b16 %v2386, %v2386
  %v2403 = vpack.c.b16 %v2387, %v2387
  %v2404 = vpack.c.b16 %v2388, %v2388
  %v2405 = vpack.c.b16 %v2389, %v2389
  %v2406 = vpack.c.b16 %v2390, %v2390
  %v2407 = vpack.c.b16 %v2391, %v2391
  %v2408 = vpack.c.b16 %v2392, %v2392
  %v2409 = vpack.c.b16 %v2393, %v2393
  %v2411 = vshrl.u32 %v2394, 16
  %v2413 = vrot.slane %v2411, 7
  %v2414 = vshll.u32 %v2394, 16
  %v2416 = vor.u32 %v2413, %v2414
  %v2417 = vrot.slane %v2413, 4
  %v2419 = vshrl.u32 %v2395, 16
  %v2421 = vrot.slane %v2419, 7
  %v2422 = vshll.u32 %v2395, 16
  %v2424 = vor.u32 %v2421, %v2422
  %v2425 = vrot.slane %v2421, 4
  %v2427 = vshrl.u32 %v2396, 16
  %v2429 = vrot.slane %v2427, 7
  %v2430 = vshll.u32 %v2396, 16
  %v2432 = vor.u32 %v2429, %v2430
  %v2433 = vrot.slane %v2429, 4
  %v2435 = vshrl.u32 %v2397, 16
  %v2437 = vrot.slane %v2435, 7
  %v2438 = vshll.u32 %v2397, 16
  %v2440 = vor.u32 %v2437, %v2438
  %v2441 = vrot.slane %v2437, 4
  %v2443 = vshrl.u32 %v2398, 16
  %v2445 = vrot.slane %v2443, 7
  %v2446 = vshll.u32 %v2398, 16
  %v2448 = vor.u32 %v2445, %v2446
  %v2449 = vrot.slane %v2445, 4
  %v2451 = vshrl.u32 %v2399, 16
  %v2453 = vrot.slane %v2451, 7
  %v2454 = vshll.u32 %v2399, 16
  %v2456 = vor.u32 %v2453, %v2454
  %v2457 = vrot.slane %v2453, 4
  %v2459 = vshrl.u32 %v2400, 16
  %v2461 = vrot.slane %v2459, 7
  %v2462 = vshll.u32 %v2400, 16
  %v2464 = vor.u32 %v2461, %v2462
  %v2465 = vrot.slane %v2461, 4
  %v2467 = vshrl.u32 %v2401, 16
  %v2469 = vrot.slane %v2467, 7
  %v2470 = vshll.u32 %v2401, 16
  %v2472 = vor.u32 %v2469, %v2470
  %v2473 = vrot.slane %v2469, 4
  %v2475 = vshrl.u32 %v2402, 16
  %v2477 = vrot.slane %v2475, 7
  %v2478 = vshll.u32 %v2402, 16
  %v2480 = vor.u32 %v2477, %v2478
  %v2481 = vrot.slane %v2477, 4
  %v2483 = vshrl.u32 %v2403, 16
  %v2485 = vrot.slane %v2483, 7
  %v2486 = vshll.u32 %v2403, 16
  %v2488 = vor.u32 %v2485, %v2486
  %v2489 = vrot.slane %v2485, 4
  %v2491 = vshrl.u32 %v2404, 16
  %v2493 = vrot.slane %v2491, 7
  %v2494 = vshll.u32 %v2404, 16
  %v2496 = vor.u32 %v2493, %v2494
  %v2497 = vrot.slane %v2493, 4
  %v2499 = vshrl.u32 %v2405, 16
  %v2501 = vrot.slane %v2499, 7
  %v2502 = vshll.u32 %v2405, 16
  %v2504 = vor.u32 %v2501, %v2502
  %v2505 = vrot.slane %v2501, 4
  %v2507 = vshrl.u32 %v2406, 16
  %v2509 = vrot.slane %v2507, 7
  %v2510 = vshll.u32 %v2406, 16
  %v2512 = vor.u32 %v2509, %v2510
  %v2513 = vrot.slane %v2509, 4
  %v2515 = vshrl.u32 %v2407, 16
  %v2517 = vrot.slane %v2515, 7
  %v2518 = vshll.u32 %v2407, 16
  %v2520 = vor.u32 %v2517, %v2518
  %v2521 = vrot.slane %v2517, 4
  %v2523 = vshrl.u32 %v2408, 16
  %v2525 = vrot.slane %v2523, 7
  %v2526 = vshll.u32 %v2408, 16
  %v2528 = vor.u32 %v2525, %v2526
  %v2529 = vrot.slane %v2525, 4
  %v2531 = vshrl.u32 %v2409, 16
  %v2533 = vrot.slane %v2531, 7
  %v2534 = vshll.u32 %v2409, 16
  %v2536 = vor.u32 %v2533, %v2534
  %v2537 = vrot.slane %v2533, 4
  %s2570 = scalar_lea.vmem [#allocation3], 8
  %v2571 = vld [vmem:[%s2570] sm:$0xf]
  %v2572 = vsel %vm522, %v2416, %v2571
  %2573 = vst [vmem:[%s2570] sm:$0xf] %v2572
  %v2574 = vld [vmem:[%s2570 + $0x4] sm:$0x1]
  %v2575 = vsel %vm528, %v2417, %v2574
  %2576 = vst [vmem:[%s2570 + $0x4] sm:$0x1] %v2575
  %v2577 = vld [vmem:[%s2570 + $0x8] sm:$0xf]
  %v2578 = vsel %vm522, %v2424, %v2577
  %2579 = vst [vmem:[%s2570 + $0x8] sm:$0xf] %v2578
  %v2580 = vld [vmem:[%s2570 + $0xc] sm:$0x1]
  %v2581 = vsel %vm528, %v2425, %v2580
  %2582 = vst [vmem:[%s2570 + $0xc] sm:$0x1] %v2581
  %v2583 = vld [vmem:[%s2570 + $0x10] sm:$0xf]
  %v2584 = vsel %vm522, %v2432, %v2583
  %2585 = vst [vmem:[%s2570 + $0x10] sm:$0xf] %v2584
  %v2586 = vld [vmem:[%s2570 + $0x14] sm:$0x1]
  %v2587 = vsel %vm528, %v2433, %v2586
  %2588 = vst [vmem:[%s2570 + $0x14] sm:$0x1] %v2587
  %v2589 = vld [vmem:[%s2570 + $0x18] sm:$0xf]
  %v2590 = vsel %vm522, %v2440, %v2589
  %2591 = vst [vmem:[%s2570 + $0x18] sm:$0xf] %v2590
  %v2592 = vld [vmem:[%s2570 + $0x1c] sm:$0x1]
  %v2593 = vsel %vm528, %v2441, %v2592
  %2594 = vst [vmem:[%s2570 + $0x1c] sm:$0x1] %v2593
  %v2595 = vld [vmem:[%s2570 + $0x20] sm:$0xf]
  %v2596 = vsel %vm522, %v2448, %v2595
  %2597 = vst [vmem:[%s2570 + $0x20] sm:$0xf] %v2596
  %v2598 = vld [vmem:[%s2570 + $0x24] sm:$0x1]
  %v2599 = vsel %vm528, %v2449, %v2598
  %2600 = vst [vmem:[%s2570 + $0x24] sm:$0x1] %v2599
  %v2601 = vld [vmem:[%s2570 + $0x28] sm:$0xf]
  %v2602 = vsel %vm522, %v2456, %v2601
  %2603 = vst [vmem:[%s2570 + $0x28] sm:$0xf] %v2602
  %v2604 = vld [vmem:[%s2570 + $0x2c] sm:$0x1]
  %v2605 = vsel %vm528, %v2457, %v2604
  %2606 = vst [vmem:[%s2570 + $0x2c] sm:$0x1] %v2605
  %v2607 = vld [vmem:[%s2570 + $0x30] sm:$0xf]
  %v2608 = vsel %vm522, %v2464, %v2607
  %2609 = vst [vmem:[%s2570 + $0x30] sm:$0xf] %v2608
  %v2610 = vld [vmem:[%s2570 + $0x34] sm:$0x1]
  %v2611 = vsel %vm528, %v2465, %v2610
  %2612 = vst [vmem:[%s2570 + $0x34] sm:$0x1] %v2611
  %v2613 = vld [vmem:[%s2570 + $0x38] sm:$0xf]
  %v2614 = vsel %vm522, %v2472, %v2613
  %2615 = vst [vmem:[%s2570 + $0x38] sm:$0xf] %v2614
  %v2616 = vld [vmem:[%s2570 + $0x3c] sm:$0x1]
  %v2617 = vsel %vm528, %v2473, %v2616
  %2618 = vst [vmem:[%s2570 + $0x3c] sm:$0x1] %v2617
  %v2619 = vld [vmem:[%s2570 + $0x50] sm:$0xf]
  %v2620 = vsel %vm522, %v2480, %v2619
  %2621 = vst [vmem:[%s2570 + $0x50] sm:$0xf] %v2620
  %v2622 = vld [vmem:[%s2570 + $0x54] sm:$0x1]
  %v2623 = vsel %vm528, %v2481, %v2622
  %2624 = vst [vmem:[%s2570 + $0x54] sm:$0x1] %v2623
  %v2625 = vld [vmem:[%s2570 + $0x58] sm:$0xf]
  %v2626 = vsel %vm522, %v2488, %v2625
  %2627 = vst [vmem:[%s2570 + $0x58] sm:$0xf] %v2626
  %v2628 = vld [vmem:[%s2570 + $0x5c] sm:$0x1]
  %v2629 = vsel %vm528, %v2489, %v2628
  %2630 = vst [vmem:[%s2570 + $0x5c] sm:$0x1] %v2629
  %v2631 = vld [vmem:[%s2570 + $0x60] sm:$0xf]
  %v2632 = vsel %vm522, %v2496, %v2631
  %2633 = vst [vmem:[%s2570 + $0x60] sm:$0xf] %v2632
  %v2634 = vld [vmem:[%s2570 + $0x64] sm:$0x1]
  %v2635 = vsel %vm528, %v2497, %v2634
  %2636 = vst [vmem:[%s2570 + $0x64] sm:$0x1] %v2635
  %v2637 = vld [vmem:[%s2570 + $0x68] sm:$0xf]
  %v2638 = vsel %vm522, %v2504, %v2637
  %2639 = vst [vmem:[%s2570 + $0x68] sm:$0xf] %v2638
  %v2640 = vld [vmem:[%s2570 + $0x6c] sm:$0x1]
  %v2641 = vsel %vm528, %v2505, %v2640
  %2642 = vst [vmem:[%s2570 + $0x6c] sm:$0x1] %v2641
  %v2643 = vld [vmem:[%s2570 + $0x70] sm:$0xf]
  %v2644 = vsel %vm522, %v2512, %v2643
  %2645 = vst [vmem:[%s2570 + $0x70] sm:$0xf] %v2644
  %v2646 = vld [vmem:[%s2570 + $0x74] sm:$0x1]
  %v2647 = vsel %vm528, %v2513, %v2646
  %2648 = vst [vmem:[%s2570 + $0x74] sm:$0x1] %v2647
  %v2649 = vld [vmem:[%s2570 + $0x78] sm:$0xf]
  %v2650 = vsel %vm522, %v2520, %v2649
  %2651 = vst [vmem:[%s2570 + $0x78] sm:$0xf] %v2650
  %v2652 = vld [vmem:[%s2570 + $0x7c] sm:$0x1]
  %v2653 = vsel %vm528, %v2521, %v2652
  %2654 = vst [vmem:[%s2570 + $0x7c] sm:$0x1] %v2653
  %v2655 = vld [vmem:[%s2570 + $0x80] sm:$0xf]
  %v2656 = vsel %vm522, %v2528, %v2655
  %2657 = vst [vmem:[%s2570 + $0x80] sm:$0xf] %v2656
  %v2658 = vld [vmem:[%s2570 + $0x84] sm:$0x1]
  %v2659 = vsel %vm528, %v2529, %v2658
  %2660 = vst [vmem:[%s2570 + $0x84] sm:$0x1] %v2659
  %v2661 = vld [vmem:[%s2570 + $0x88] sm:$0xf]
  %v2662 = vsel %vm522, %v2536, %v2661
  %2663 = vst [vmem:[%s2570 + $0x88] sm:$0xf] %v2662
  %v2664 = vld [vmem:[%s2570 + $0x8c] sm:$0x1]
  %v2665 = vsel %vm528, %v2537, %v2664
  %2666 = vst [vmem:[%s2570 + $0x8c] sm:$0x1] %v2665
  %2667 = vst.msk [vmem:[#allocation3] sm:$0xf] %vm718, 0
  %vm2668 = vcmask 57344
  %2669 = vst.msk [vmem:[#allocation3 + $0x4] sm:$0x1] %vm2668, 0
  %2670 = vst.msk [vmem:[#allocation3 + $0x50] sm:$0xf] %vm718, 0
  %2671 = vst.msk [vmem:[#allocation3 + $0x54] sm:$0x1] %vm2668, 0
  %s2672 = scalar_lea.vmem [#allocation3], 72
  %2673 = vst.msk [vmem:[%s2672] sm:$0xf] %vm718, 0
  %2674 = vst.msk [vmem:[%s2672 + $0x4] sm:$0x1] %vm2668, 0
  %2675 = vst.msk [vmem:[%s2672 + $0x50] sm:$0xf] %vm718, 0
  %2676 = vst.msk [vmem:[%s2672 + $0x54] sm:$0x1] %vm2668, 0
  %v2677 = vld [vmem:[%s2570] sm:$0x1]
  %v2678 = vsel %vm528, 0, %v2677
  %2679 = vst [vmem:[%s2570] sm:$0x1] %v2678
  %v2680 = vld [vmem:[%s2570 + $0x8] sm:$0x1]
  %v2681 = vsel %vm528, 0, %v2680
  %2682 = vst [vmem:[%s2570 + $0x8] sm:$0x1] %v2681
  %v2683 = vld [vmem:[%s2570 + $0x10] sm:$0x1]
  %v2684 = vsel %vm528, 0, %v2683
  %2685 = vst [vmem:[%s2570 + $0x10] sm:$0x1] %v2684
  %v2686 = vld [vmem:[%s2570 + $0x18] sm:$0x1]
  %v2687 = vsel %vm528, 0, %v2686
  %2688 = vst [vmem:[%s2570 + $0x18] sm:$0x1] %v2687
  %v2689 = vld [vmem:[%s2570 + $0x20] sm:$0x1]
  %v2690 = vsel %vm528, 0, %v2689
  %2691 = vst [vmem:[%s2570 + $0x20] sm:$0x1] %v2690
  %v2692 = vld [vmem:[%s2570 + $0x28] sm:$0x1]
  %v2693 = vsel %vm528, 0, %v2692
  %2694 = vst [vmem:[%s2570 + $0x28] sm:$0x1] %v2693
  %v2695 = vld [vmem:[%s2570 + $0x30] sm:$0x1]
  %v2696 = vsel %vm528, 0, %v2695
  %2697 = vst [vmem:[%s2570 + $0x30] sm:$0x1] %v2696
  %v2698 = vld [vmem:[%s2570 + $0x38] sm:$0x1]
  %v2699 = vsel %vm528, 0, %v2698
  %2700 = vst [vmem:[%s2570 + $0x38] sm:$0x1] %v2699
  %v2701 = vld [vmem:[%s2570 + $0x50] sm:$0x1]
  %v2702 = vsel %vm528, 0, %v2701
  %2703 = vst [vmem:[%s2570 + $0x50] sm:$0x1] %v2702
  %v2704 = vld [vmem:[%s2570 + $0x58] sm:$0x1]
  %v2705 = vsel %vm528, 0, %v2704
  %2706 = vst [vmem:[%s2570 + $0x58] sm:$0x1] %v2705
  %v2707 = vld [vmem:[%s2570 + $0x60] sm:$0x1]
  %v2708 = vsel %vm528, 0, %v2707
  %2709 = vst [vmem:[%s2570 + $0x60] sm:$0x1] %v2708
  %v2710 = vld [vmem:[%s2570 + $0x68] sm:$0x1]
  %v2711 = vsel %vm528, 0, %v2710
  %2712 = vst [vmem:[%s2570 + $0x68] sm:$0x1] %v2711
  %v2713 = vld [vmem:[%s2570 + $0x70] sm:$0x1]
  %v2714 = vsel %vm528, 0, %v2713
  %2715 = vst [vmem:[%s2570 + $0x70] sm:$0x1] %v2714
  %v2716 = vld [vmem:[%s2570 + $0x78] sm:$0x1]
  %v2717 = vsel %vm528, 0, %v2716
  %2718 = vst [vmem:[%s2570 + $0x78] sm:$0x1] %v2717
  %v2719 = vld [vmem:[%s2570 + $0x80] sm:$0x1]
  %v2720 = vsel %vm528, 0, %v2719
  %2721 = vst [vmem:[%s2570 + $0x80] sm:$0x1] %v2720
  %v2722 = vld [vmem:[%s2570 + $0x88] sm:$0x1]
  %v2723 = vsel %vm528, 0, %v2722
  %2724 = vst [vmem:[%s2570 + $0x88] sm:$0x1] %v2723
  %vm2725 = vmand %vm526, %vm521
  %v2726 = vld [vmem:[%s2570 + $0x4] sm:$0x1]
  %v2727 = vsel %vm2725, 0, %v2726
  %2728 = vst [vmem:[%s2570 + $0x4] sm:$0x1] %v2727
  %v2729 = vld [vmem:[%s2570 + $0xc] sm:$0x1]
  %v2730 = vsel %vm2725, 0, %v2729
  %2731 = vst [vmem:[%s2570 + $0xc] sm:$0x1] %v2730
  %v2732 = vld [vmem:[%s2570 + $0x14] sm:$0x1]
  %v2733 = vsel %vm2725, 0, %v2732
  %2734 = vst [vmem:[%s2570 + $0x14] sm:$0x1] %v2733
  %v2735 = vld [vmem:[%s2570 + $0x1c] sm:$0x1]
  %v2736 = vsel %vm2725, 0, %v2735
  %2737 = vst [vmem:[%s2570 + $0x1c] sm:$0x1] %v2736
  %v2738 = vld [vmem:[%s2570 + $0x24] sm:$0x1]
  %v2739 = vsel %vm2725, 0, %v2738
  %2740 = vst [vmem:[%s2570 + $0x24] sm:$0x1] %v2739
  %v2741 = vld [vmem:[%s2570 + $0x2c] sm:$0x1]
  %v2742 = vsel %vm2725, 0, %v2741
  %2743 = vst [vmem:[%s2570 + $0x2c] sm:$0x1] %v2742
  %v2744 = vld [vmem:[%s2570 + $0x34] sm:$0x1]
  %v2745 = vsel %vm2725, 0, %v2744
  %2746 = vst [vmem:[%s2570 + $0x34] sm:$0x1] %v2745
  %v2747 = vld [vmem:[%s2570 + $0x3c] sm:$0x1]
  %v2748 = vsel %vm2725, 0, %v2747
  %2749 = vst [vmem:[%s2570 + $0x3c] sm:$0x1] %v2748
  %v2750 = vld [vmem:[%s2570 + $0x54] sm:$0x1]
  %v2751 = vsel %vm2725, 0, %v2750
  %2752 = vst [vmem:[%s2570 + $0x54] sm:$0x1] %v2751
  %v2753 = vld [vmem:[%s2570 + $0x5c] sm:$0x1]
  %v2754 = vsel %vm2725, 0, %v2753
  %2755 = vst [vmem:[%s2570 + $0x5c] sm:$0x1] %v2754
  %v2756 = vld [vmem:[%s2570 + $0x64] sm:$0x1]
  %v2757 = vsel %vm2725, 0, %v2756
  %2758 = vst [vmem:[%s2570 + $0x64] sm:$0x1] %v2757
  %v2759 = vld [vmem:[%s2570 + $0x6c] sm:$0x1]
  %v2760 = vsel %vm2725, 0, %v2759
  %2761 = vst [vmem:[%s2570 + $0x6c] sm:$0x1] %v2760
  %v2762 = vld [vmem:[%s2570 + $0x74] sm:$0x1]
  %v2763 = vsel %vm2725, 0, %v2762
  %2764 = vst [vmem:[%s2570 + $0x74] sm:$0x1] %v2763
  %v2765 = vld [vmem:[%s2570 + $0x7c] sm:$0x1]
  %v2766 = vsel %vm2725, 0, %v2765
  %2767 = vst [vmem:[%s2570 + $0x7c] sm:$0x1] %v2766
  %v2768 = vld [vmem:[%s2570 + $0x84] sm:$0x1]
  %v2769 = vsel %vm2725, 0, %v2768
  %2770 = vst [vmem:[%s2570 + $0x84] sm:$0x1] %v2769
  %v2771 = vld [vmem:[%s2570 + $0x8c] sm:$0x1]
  %v2772 = vsel %vm2725, 0, %v2771
  %2773 = vst [vmem:[%s2570 + $0x8c] sm:$0x1] %v2772
  %v2774 = vld [vmem:[#allocation3] sm:$0xf]
  %v2775 = vld [vmem:[#allocation3 + $0x8] sm:$0xf]
  %v2776 = vld [vmem:[#allocation3 + $0x10] sm:$0xf]
  %v2777 = vld [vmem:[#allocation3 + $0x18] sm:$0xf]
  %v2778 = vld [vmem:[#allocation3 + $0x20] sm:$0xf]
  %v2779 = vld [vmem:[#allocation3 + $0x28] sm:$0xf]
  %v2780 = vld [vmem:[#allocation3 + $0x30] sm:$0xf]
  %v2781 = vld [vmem:[#allocation3 + $0x38] sm:$0xf]
  %v2782 = vld [vmem:[#allocation3 + $0x50] sm:$0xf]
  %v2783 = vld [vmem:[#allocation3 + $0x58] sm:$0xf]
  %v2784 = vld [vmem:[#allocation3 + $0x60] sm:$0xf]
  %v2785 = vld [vmem:[#allocation3 + $0x68] sm:$0xf]
  %v2786 = vld [vmem:[#allocation3 + $0x70] sm:$0xf]
  %v2787 = vld [vmem:[#allocation3 + $0x78] sm:$0xf]
  %v2788 = vld [vmem:[#allocation3 + $0x80] sm:$0xf]
  %v2789 = vld [vmem:[#allocation3 + $0x88] sm:$0xf]
  %v2790 = vld [vmem:[#allocation3 + $0x4] sm:$0x1]
  %v2791 = vld [vmem:[#allocation3 + $0xc] sm:$0x1]
  %v2792 = vld [vmem:[#allocation3 + $0x14] sm:$0x1]
  %v2793 = vld [vmem:[#allocation3 + $0x1c] sm:$0x1]
  %v2794 = vld [vmem:[#allocation3 + $0x24] sm:$0x1]
  %v2795 = vld [vmem:[#allocation3 + $0x2c] sm:$0x1]
  %v2796 = vld [vmem:[#allocation3 + $0x34] sm:$0x1]
  %v2797 = vld [vmem:[#allocation3 + $0x3c] sm:$0x1]
  %v2798 = vld [vmem:[#allocation3 + $0x54] sm:$0x1]
  %v2799 = vld [vmem:[#allocation3 + $0x5c] sm:$0x1]
  %v2800 = vld [vmem:[#allocation3 + $0x64] sm:$0x1]
  %v2801 = vld [vmem:[#allocation3 + $0x6c] sm:$0x1]
  %v2802 = vld [vmem:[#allocation3 + $0x74] sm:$0x1]
  %v2803 = vld [vmem:[#allocation3 + $0x7c] sm:$0x1]
  %v2804 = vld [vmem:[#allocation3 + $0x84] sm:$0x1]
  %v2805 = vld [vmem:[#allocation3 + $0x8c] sm:$0x1]
  %v2806 = vld [vmem:[#allocation3] sm:$0xe]
  %v2807 = vld [vmem:[#allocation3 + $0x8] sm:$0xe]
  %v2808 = vld [vmem:[#allocation3 + $0x10] sm:$0xe]
  %v2809 = vld [vmem:[#allocation3 + $0x18] sm:$0xe]
  %v2810 = vld [vmem:[#allocation3 + $0x20] sm:$0xe]
  %v2811 = vld [vmem:[#allocation3 + $0x28] sm:$0xe]
  %v2812 = vld [vmem:[#allocation3 + $0x30] sm:$0xe]
  %v2813 = vld [vmem:[#allocation3 + $0x38] sm:$0xe]
  %v2814 = vld [vmem:[#allocation3 + $0x50] sm:$0xe]
  %v2815 = vld [vmem:[#allocation3 + $0x58] sm:$0xe]
  %v2816 = vld [vmem:[#allocation3 + $0x60] sm:$0xe]
  %v2817 = vld [vmem:[#allocation3 + $0x68] sm:$0xe]
  %v2818 = vld [vmem:[#allocation3 + $0x70] sm:$0xe]
  %v2819 = vld [vmem:[#allocation3 + $0x78] sm:$0xe]
  %v2820 = vld [vmem:[#allocation3 + $0x80] sm:$0xe]
  %v2821 = vld [vmem:[#allocation3 + $0x88] sm:$0xe]
  %v2822 = vld [vmem:[%s2570] sm:$0xf]
  %v2823 = vld [vmem:[%s2570 + $0x8] sm:$0xf]
  %v2824 = vld [vmem:[%s2570 + $0x10] sm:$0xf]
  %v2825 = vld [vmem:[%s2570 + $0x18] sm:$0xf]
  %v2826 = vld [vmem:[%s2570 + $0x20] sm:$0xf]
  %v2827 = vld [vmem:[%s2570 + $0x28] sm:$0xf]
  %v2828 = vld [vmem:[%s2570 + $0x30] sm:$0xf]
  %v2829 = vld [vmem:[%s2570 + $0x38] sm:$0xf]
  %v2830 = vld [vmem:[%s2570 + $0x50] sm:$0xf]
  %v2831 = vld [vmem:[%s2570 + $0x58] sm:$0xf]
  %v2832 = vld [vmem:[%s2570 + $0x60] sm:$0xf]
  %v2833 = vld [vmem:[%s2570 + $0x68] sm:$0xf]
  %v2834 = vld [vmem:[%s2570 + $0x70] sm:$0xf]
  %v2835 = vld [vmem:[%s2570 + $0x78] sm:$0xf]
  %v2836 = vld [vmem:[%s2570 + $0x80] sm:$0xf]
  %v2837 = vld [vmem:[%s2570 + $0x88] sm:$0xf]
  %v2838 = vld [vmem:[%s2570 + $0x4] sm:$0x1]
  %v2839 = vld [vmem:[%s2570 + $0xc] sm:$0x1]
  %v2840 = vld [vmem:[%s2570 + $0x14] sm:$0x1]
  %v2841 = vld [vmem:[%s2570 + $0x1c] sm:$0x1]
  %v2842 = vld [vmem:[%s2570 + $0x24] sm:$0x1]
  %v2843 = vld [vmem:[%s2570 + $0x2c] sm:$0x1]
  %v2844 = vld [vmem:[%s2570 + $0x34] sm:$0x1]
  %v2845 = vld [vmem:[%s2570 + $0x3c] sm:$0x1]
  %v2846 = vld [vmem:[%s2570 + $0x54] sm:$0x1]
  %v2847 = vld [vmem:[%s2570 + $0x5c] sm:$0x1]
  %v2848 = vld [vmem:[%s2570 + $0x64] sm:$0x1]
  %v2849 = vld [vmem:[%s2570 + $0x6c] sm:$0x1]
  %v2850 = vld [vmem:[%s2570 + $0x74] sm:$0x1]
  %v2851 = vld [vmem:[%s2570 + $0x7c] sm:$0x1]
  %v2852 = vld [vmem:[%s2570 + $0x84] sm:$0x1]
  %v2853 = vld [vmem:[%s2570 + $0x8c] sm:$0x1]
  %v2854 = vld [vmem:[%s2570] sm:$0xe]
  %v2855 = vld [vmem:[%s2570 + $0x8] sm:$0xe]
  %v2856 = vld [vmem:[%s2570 + $0x10] sm:$0xe]
  %v2857 = vld [vmem:[%s2570 + $0x18] sm:$0xe]
  %v2858 = vld [vmem:[%s2570 + $0x20] sm:$0xe]
  %v2859 = vld [vmem:[%s2570 + $0x28] sm:$0xe]
  %v2860 = vld [vmem:[%s2570 + $0x30] sm:$0xe]
  %v2861 = vld [vmem:[%s2570 + $0x38] sm:$0xe]
  %v2862 = vld [vmem:[%s2570 + $0x50] sm:$0xe]
  %v2863 = vld [vmem:[%s2570 + $0x58] sm:$0xe]
  %v2864 = vld [vmem:[%s2570 + $0x60] sm:$0xe]
  %v2865 = vld [vmem:[%s2570 + $0x68] sm:$0xe]
  %v2866 = vld [vmem:[%s2570 + $0x70] sm:$0xe]
  %v2867 = vld [vmem:[%s2570 + $0x78] sm:$0xe]
  %v2868 = vld [vmem:[%s2570 + $0x80] sm:$0xe]
  %v2869 = vld [vmem:[%s2570 + $0x88] sm:$0xe]
  %s2870 = scalar_lea.vmem [#allocation3], 16
  %v2871 = vld [vmem:[%s2870] sm:$0xf]
  %v2872 = vld [vmem:[%s2870 + $0x8] sm:$0xf]
  %v2873 = vld [vmem:[%s2870 + $0x10] sm:$0xf]
  %v2874 = vld [vmem:[%s2870 + $0x18] sm:$0xf]
  %v2875 = vld [vmem:[%s2870 + $0x20] sm:$0xf]
  %v2876 = vld [vmem:[%s2870 + $0x28] sm:$0xf]
  %v2877 = vld [vmem:[%s2870 + $0x30] sm:$0xf]
  %v2878 = vld [vmem:[%s2870 + $0x38] sm:$0xf]
  %v2879 = vld [vmem:[%s2870 + $0x50] sm:$0xf]
  %v2880 = vld [vmem:[%s2870 + $0x58] sm:$0xf]
  %v2881 = vld [vmem:[%s2870 + $0x60] sm:$0xf]
  %v2882 = vld [vmem:[%s2870 + $0x68] sm:$0xf]
  %v2883 = vld [vmem:[%s2870 + $0x70] sm:$0xf]
  %v2884 = vld [vmem:[%s2870 + $0x78] sm:$0xf]
  %v2885 = vld [vmem:[%s2870 + $0x80] sm:$0xf]
  %v2886 = vld [vmem:[%s2870 + $0x88] sm:$0xf]
  %v2887 = vld [vmem:[%s2870 + $0x4] sm:$0x1]
  %v2888 = vld [vmem:[%s2870 + $0xc] sm:$0x1]
  %v2889 = vld [vmem:[%s2870 + $0x14] sm:$0x1]
  %v2890 = vld [vmem:[%s2870 + $0x1c] sm:$0x1]
  %v2891 = vld [vmem:[%s2870 + $0x24] sm:$0x1]
  %v2892 = vld [vmem:[%s2870 + $0x2c] sm:$0x1]
  %v2893 = vld [vmem:[%s2870 + $0x34] sm:$0x1]
  %v2894 = vld [vmem:[%s2870 + $0x3c] sm:$0x1]
  %v2895 = vld [vmem:[%s2870 + $0x54] sm:$0x1]
  %v2896 = vld [vmem:[%s2870 + $0x5c] sm:$0x1]
  %v2897 = vld [vmem:[%s2870 + $0x64] sm:$0x1]
  %v2898 = vld [vmem:[%s2870 + $0x6c] sm:$0x1]
  %v2899 = vld [vmem:[%s2870 + $0x74] sm:$0x1]
  %v2900 = vld [vmem:[%s2870 + $0x7c] sm:$0x1]
  %v2901 = vld [vmem:[%s2870 + $0x84] sm:$0x1]
  %v2902 = vld [vmem:[%s2870 + $0x8c] sm:$0x1]
  %v2903 = vld [vmem:[%s2870] sm:$0xe]
  %v2904 = vld [vmem:[%s2870 + $0x8] sm:$0xe]
  %v2905 = vld [vmem:[%s2870 + $0x10] sm:$0xe]
  %v2906 = vld [vmem:[%s2870 + $0x18] sm:$0xe]
  %v2907 = vld [vmem:[%s2870 + $0x20] sm:$0xe]
  %v2908 = vld [vmem:[%s2870 + $0x28] sm:$0xe]
  %v2909 = vld [vmem:[%s2870 + $0x30] sm:$0xe]
  %v2910 = vld [vmem:[%s2870 + $0x38] sm:$0xe]
  %v2911 = vld [vmem:[%s2870 + $0x50] sm:$0xe]
  %v2912 = vld [vmem:[%s2870 + $0x58] sm:$0xe]
  %v2913 = vld [vmem:[%s2870 + $0x60] sm:$0xe]
  %v2914 = vld [vmem:[%s2870 + $0x68] sm:$0xe]
  %v2915 = vld [vmem:[%s2870 + $0x70] sm:$0xe]
  %v2916 = vld [vmem:[%s2870 + $0x78] sm:$0xe]
  %v2917 = vld [vmem:[%s2870 + $0x80] sm:$0xe]
  %v2918 = vld [vmem:[%s2870 + $0x88] sm:$0xe]
  %v2919 = vld [vmem:[%s5] sm:$0xf]
  %v2920 = vld [vmem:[%s5 + $0x4] sm:$0xf]
  %v2921 = vld [vmem:[%s5 + $0x8] sm:$0xf]
  %v2922 = vld [vmem:[%s5 + $0xc] sm:$0xf]
  %v2923 = vld [vmem:[%s5 + $0x10] sm:$0xf]
  %v2924 = vld [vmem:[%s5 + $0x14] sm:$0xf]
  %v2925 = vld [vmem:[%s5 + $0x18] sm:$0xf]
  %v2926 = vld [vmem:[%s5 + $0x1c] sm:$0xf]
  %v2927 = vld [vmem:[%s5 + $0x20] sm:$0xf]
  %v2928 = vld [vmem:[%s6] sm:$0x1]
  %v2961 = vunpack.c.l.b16 %v2774
  %v2962 = vunpack.c.l.b16 %v2790
  %v2963 = vunpack.c.l.b16 %v2775
  %v2964 = vunpack.c.l.b16 %v2791
  %v2965 = vunpack.c.l.b16 %v2776
  %v2966 = vunpack.c.l.b16 %v2792
  %v2967 = vunpack.c.l.b16 %v2777
  %v2968 = vunpack.c.l.b16 %v2793
  %v2969 = vunpack.c.l.b16 %v2778
  %v2970 = vunpack.c.l.b16 %v2794
  %v2971 = vunpack.c.l.b16 %v2779
  %v2972 = vunpack.c.l.b16 %v2795
  %v2973 = vunpack.c.l.b16 %v2780
  %v2974 = vunpack.c.l.b16 %v2796
  %v2975 = vunpack.c.l.b16 %v2781
  %v2976 = vunpack.c.l.b16 %v2797
  %v2977 = vunpack.c.l.b16 %v2782
  %v2978 = vunpack.c.l.b16 %v2798
  %v2979 = vunpack.c.l.b16 %v2783
  %v2980 = vunpack.c.l.b16 %v2799
  %v2981 = vunpack.c.l.b16 %v2784
  %v2982 = vunpack.c.l.b16 %v2800
  %v2983 = vunpack.c.l.b16 %v2785
  %v2984 = vunpack.c.l.b16 %v2801
  %v2985 = vunpack.c.l.b16 %v2786
  %v2986 = vunpack.c.l.b16 %v2802
  %v2987 = vunpack.c.l.b16 %v2787
  %v2988 = vunpack.c.l.b16 %v2803
  %v2989 = vunpack.c.l.b16 %v2788
  %v2990 = vunpack.c.l.b16 %v2804
  %v2991 = vunpack.c.l.b16 %v2789
  %v2992 = vunpack.c.l.b16 %v2805
  %v2993 = vpack.c.b16 %v2962, %v2961
  %v2994 = vpack.c.b16 %v2964, %v2963
  %v2995 = vpack.c.b16 %v2966, %v2965
  %v2996 = vpack.c.b16 %v2968, %v2967
  %v2997 = vpack.c.b16 %v2970, %v2969
  %v2998 = vpack.c.b16 %v2972, %v2971
  %v2999 = vpack.c.b16 %v2974, %v2973
  %v3000 = vpack.c.b16 %v2976, %v2975
  %v3001 = vpack.c.b16 %v2978, %v2977
  %v3002 = vpack.c.b16 %v2980, %v2979
  %v3003 = vpack.c.b16 %v2982, %v2981
  %v3004 = vpack.c.b16 %v2984, %v2983
  %v3005 = vpack.c.b16 %v2986, %v2985
  %v3006 = vpack.c.b16 %v2988, %v2987
  %v3007 = vpack.c.b16 %v2990, %v2989
  %v3008 = vpack.c.b16 %v2992, %v2991
  %v3010 = vshrl.u32 %v2993, 16
  %v3012 = vshll.u32 %v2993, 16
  %v3014 = vrot.slane %v3012, 1
  %v3015 = vor.u32 %v3010, %v3014
  %v3017 = vshrl.u32 %v2994, 16
  %v3019 = vshll.u32 %v2994, 16
  %v3021 = vrot.slane %v3019, 1
  %v3022 = vor.u32 %v3017, %v3021
  %v3024 = vshrl.u32 %v2995, 16
  %v3026 = vshll.u32 %v2995, 16
  %v3028 = vrot.slane %v3026, 1
  %v3029 = vor.u32 %v3024, %v3028
  %v3031 = vshrl.u32 %v2996, 16
  %v3033 = vshll.u32 %v2996, 16
  %v3035 = vrot.slane %v3033, 1
  %v3036 = vor.u32 %v3031, %v3035
  %v3038 = vshrl.u32 %v2997, 16
  %v3040 = vshll.u32 %v2997, 16
  %v3042 = vrot.slane %v3040, 1
  %v3043 = vor.u32 %v3038, %v3042
  %v3045 = vshrl.u32 %v2998, 16
  %v3047 = vshll.u32 %v2998, 16
  %v3049 = vrot.slane %v3047, 1
  %v3050 = vor.u32 %v3045, %v3049
  %v3052 = vshrl.u32 %v2999, 16
  %v3054 = vshll.u32 %v2999, 16
  %v3056 = vrot.slane %v3054, 1
  %v3057 = vor.u32 %v3052, %v3056
  %v3059 = vshrl.u32 %v3000, 16
  %v3061 = vshll.u32 %v3000, 16
  %v3063 = vrot.slane %v3061, 1
  %v3064 = vor.u32 %v3059, %v3063
  %v3066 = vshrl.u32 %v3001, 16
  %v3068 = vshll.u32 %v3001, 16
  %v3070 = vrot.slane %v3068, 1
  %v3071 = vor.u32 %v3066, %v3070
  %v3073 = vshrl.u32 %v3002, 16
  %v3075 = vshll.u32 %v3002, 16
  %v3077 = vrot.slane %v3075, 1
  %v3078 = vor.u32 %v3073, %v3077
  %v3080 = vshrl.u32 %v3003, 16
  %v3082 = vshll.u32 %v3003, 16
  %v3084 = vrot.slane %v3082, 1
  %v3085 = vor.u32 %v3080, %v3084
  %v3087 = vshrl.u32 %v3004, 16
  %v3089 = vshll.u32 %v3004, 16
  %v3091 = vrot.slane %v3089, 1
  %v3092 = vor.u32 %v3087, %v3091
  %v3094 = vshrl.u32 %v3005, 16
  %v3096 = vshll.u32 %v3005, 16
  %v3098 = vrot.slane %v3096, 1
  %v3099 = vor.u32 %v3094, %v3098
  %v3101 = vshrl.u32 %v3006, 16
  %v3103 = vshll.u32 %v3006, 16
  %v3105 = vrot.slane %v3103, 1
  %v3106 = vor.u32 %v3101, %v3105
  %v3108 = vshrl.u32 %v3007, 16
  %v3110 = vshll.u32 %v3007, 16
  %v3112 = vrot.slane %v3110, 1
  %v3113 = vor.u32 %v3108, %v3112
  %v3115 = vshrl.u32 %v3008, 16
  %v3117 = vshll.u32 %v3008, 16
  %v3119 = vrot.slane %v3117, 1
  %v3120 = vor.u32 %v3115, %v3119
  %3121 = vrot.lane.b32.xlu0 %v3015, 8
  %v3122 = vpop.permute.xlu0 %3121
  %3123 = vrot.lane.b32.xlu0 %v3022, 8
  %v3124 = vpop.permute.xlu0 %3123
  %3125 = vrot.lane.b32.xlu0 %v3029, 8
  %v3126 = vpop.permute.xlu0 %3125
  %3127 = vrot.lane.b32.xlu0 %v3036, 8
  %v3128 = vpop.permute.xlu0 %3127
  %3129 = vrot.lane.b32.xlu0 %v3043, 8
  %v3130 = vpop.permute.xlu0 %3129
  %3131 = vrot.lane.b32.xlu0 %v3050, 8
  %v3132 = vpop.permute.xlu0 %3131
  %3133 = vrot.lane.b32.xlu0 %v3057, 8
  %v3134 = vpop.permute.xlu0 %3133
  %3135 = vrot.lane.b32.xlu0 %v3064, 8
  %v3136 = vpop.permute.xlu0 %3135
  %3137 = vrot.lane.b32.xlu0 %v3071, 8
  %v3138 = vpop.permute.xlu0 %3137
  %3139 = vrot.lane.b32.xlu0 %v3078, 8
  %v3140 = vpop.permute.xlu0 %3139
  %3141 = vrot.lane.b32.xlu0 %v3085, 8
  %v3142 = vpop.permute.xlu0 %3141
  %3143 = vrot.lane.b32.xlu0 %v3092, 8
  %v3144 = vpop.permute.xlu0 %3143
  %3145 = vrot.lane.b32.xlu0 %v3099, 8
  %v3146 = vpop.permute.xlu0 %3145
  %3147 = vrot.lane.b32.xlu0 %v3106, 8
  %v3148 = vpop.permute.xlu0 %3147
  %3149 = vrot.lane.b32.xlu0 %v3113, 8
  %v3150 = vpop.permute.xlu0 %3149
  %3151 = vrot.lane.b32.xlu0 %v3120, 8
  %v3152 = vpop.permute.xlu0 %3151
  %v3169 = vunpack.c.l.b16 %v2806
  %v3170 = vunpack.c.l.b16 %v2807
  %v3171 = vunpack.c.l.b16 %v2808
  %v3172 = vunpack.c.l.b16 %v2809
  %v3173 = vunpack.c.l.b16 %v2810
  %v3174 = vunpack.c.l.b16 %v2811
  %v3175 = vunpack.c.l.b16 %v2812
  %v3176 = vunpack.c.l.b16 %v2813
  %v3177 = vunpack.c.l.b16 %v2814
  %v3178 = vunpack.c.l.b16 %v2815
  %v3179 = vunpack.c.l.b16 %v2816
  %v3180 = vunpack.c.l.b16 %v2817
  %v3181 = vunpack.c.l.b16 %v2818
  %v3182 = vunpack.c.l.b16 %v2819
  %v3183 = vunpack.c.l.b16 %v2820
  %v3184 = vunpack.c.l.b16 %v2821
  %v3185 = vpack.c.b16 %v2962, %v3169
  %v3186 = vpack.c.b16 %v2964, %v3170
  %v3187 = vpack.c.b16 %v2966, %v3171
  %v3188 = vpack.c.b16 %v2968, %v3172
  %v3189 = vpack.c.b16 %v2970, %v3173
  %v3190 = vpack.c.b16 %v2972, %v3174
  %v3191 = vpack.c.b16 %v2974, %v3175
  %v3192 = vpack.c.b16 %v2976, %v3176
  %v3193 = vpack.c.b16 %v2978, %v3177
  %v3194 = vpack.c.b16 %v2980, %v3178
  %v3195 = vpack.c.b16 %v2982, %v3179
  %v3196 = vpack.c.b16 %v2984, %v3180
  %v3197 = vpack.c.b16 %v2986, %v3181
  %v3198 = vpack.c.b16 %v2988, %v3182
  %v3199 = vpack.c.b16 %v2990, %v3183
  %v3200 = vpack.c.b16 %v2992, %v3184
  %v3201 = vrot.slane %v3185, 1
  %v3202 = vrot.slane %v3186, 1
  %v3203 = vrot.slane %v3187, 1
  %v3204 = vrot.slane %v3188, 1
  %v3205 = vrot.slane %v3189, 1
  %v3206 = vrot.slane %v3190, 1
  %v3207 = vrot.slane %v3191, 1
  %v3208 = vrot.slane %v3192, 1
  %v3209 = vrot.slane %v3193, 1
  %v3210 = vrot.slane %v3194, 1
  %v3211 = vrot.slane %v3195, 1
  %v3212 = vrot.slane %v3196, 1
  %v3213 = vrot.slane %v3197, 1
  %v3214 = vrot.slane %v3198, 1
  %v3215 = vrot.slane %v3199, 1
  %v3216 = vrot.slane %v3200, 1
  %3217 = vrot.lane.b32.xlu0 %v3201, 16
  %v3218 = vpop.permute.xlu0 %3217
  %3219 = vrot.lane.b32.xlu0 %v3202, 16
  %v3220 = vpop.permute.xlu0 %3219
  %3221 = vrot.lane.b32.xlu0 %v3203, 16
  %v3222 = vpop.permute.xlu0 %3221
  %3223 = vrot.lane.b32.xlu0 %v3204, 16
  %v3224 = vpop.permute.xlu0 %3223
  %3225 = vrot.lane.b32.xlu0 %v3205, 16
  %v3226 = vpop.permute.xlu0 %3225
  %3227 = vrot.lane.b32.xlu0 %v3206, 16
  %v3228 = vpop.permute.xlu0 %3227
  %3229 = vrot.lane.b32.xlu0 %v3207, 16
  %v3230 = vpop.permute.xlu0 %3229
  %3231 = vrot.lane.b32.xlu0 %v3208, 16
  %v3232 = vpop.permute.xlu0 %3231
  %3233 = vrot.lane.b32.xlu0 %v3209, 16
  %v3234 = vpop.permute.xlu0 %3233
  %3235 = vrot.lane.b32.xlu0 %v3210, 16
  %v3236 = vpop.permute.xlu0 %3235
  %3237 = vrot.lane.b32.xlu0 %v3211, 16
  %v3238 = vpop.permute.xlu0 %3237
  %3239 = vrot.lane.b32.xlu0 %v3212, 16
  %v3240 = vpop.permute.xlu0 %3239
  %3241 = vrot.lane.b32.xlu0 %v3213, 16
  %v3242 = vpop.permute.xlu0 %3241
  %3243 = vrot.lane.b32.xlu0 %v3214, 16
  %v3244 = vpop.permute.xlu0 %3243
  %3245 = vrot.lane.b32.xlu0 %v3215, 16
  %v3246 = vpop.permute.xlu0 %3245
  %3247 = vrot.lane.b32.xlu0 %v3216, 16
  %v3248 = vpop.permute.xlu0 %3247
  %v3265 = vunpack.c.l.b16 %v2822
  %v3266 = vunpack.c.l.b16 %v2823
  %v3267 = vunpack.c.l.b16 %v2824
  %v3268 = vunpack.c.l.b16 %v2825
  %v3269 = vunpack.c.l.b16 %v2826
  %v3270 = vunpack.c.l.b16 %v2827
  %v3271 = vunpack.c.l.b16 %v2828
  %v3272 = vunpack.c.l.b16 %v2829
  %v3273 = vunpack.c.l.b16 %v2830
  %v3274 = vunpack.c.l.b16 %v2831
  %v3275 = vunpack.c.l.b16 %v2832
  %v3276 = vunpack.c.l.b16 %v2833
  %v3277 = vunpack.c.l.b16 %v2834
  %v3278 = vunpack.c.l.b16 %v2835
  %v3279 = vunpack.c.l.b16 %v2836
  %v3280 = vunpack.c.l.b16 %v2837
  %v3281 = vpack.c.b16 %v3265, %v3265
  %v3282 = vpack.c.b16 %v3266, %v3266
  %v3283 = vpack.c.b16 %v3267, %v3267
  %v3284 = vpack.c.b16 %v3268, %v3268
  %v3285 = vpack.c.b16 %v3269, %v3269
  %v3286 = vpack.c.b16 %v3270, %v3270
  %v3287 = vpack.c.b16 %v3271, %v3271
  %v3288 = vpack.c.b16 %v3272, %v3272
  %v3289 = vpack.c.b16 %v3273, %v3273
  %v3290 = vpack.c.b16 %v3274, %v3274
  %v3291 = vpack.c.b16 %v3275, %v3275
  %v3292 = vpack.c.b16 %v3276, %v3276
  %v3293 = vpack.c.b16 %v3277, %v3277
  %v3294 = vpack.c.b16 %v3278, %v3278
  %v3295 = vpack.c.b16 %v3279, %v3279
  %v3296 = vpack.c.b16 %v3280, %v3280
  %3297 = vrot.lane.b32.xlu0 %v3281, 24
  %v3298 = vpop.permute.xlu0 %3297
  %3299 = vrot.lane.b32.xlu0 %v3282, 24
  %v3300 = vpop.permute.xlu0 %3299
  %3301 = vrot.lane.b32.xlu0 %v3283, 24
  %v3302 = vpop.permute.xlu0 %3301
  %3303 = vrot.lane.b32.xlu0 %v3284, 24
  %v3304 = vpop.permute.xlu0 %3303
  %3305 = vrot.lane.b32.xlu0 %v3285, 24
  %v3306 = vpop.permute.xlu0 %3305
  %3307 = vrot.lane.b32.xlu0 %v3286, 24
  %v3308 = vpop.permute.xlu0 %3307
  %3309 = vrot.lane.b32.xlu0 %v3287, 24
  %v3310 = vpop.permute.xlu0 %3309
  %3311 = vrot.lane.b32.xlu0 %v3288, 24
  %v3312 = vpop.permute.xlu0 %3311
  %3313 = vrot.lane.b32.xlu0 %v3289, 24
  %v3314 = vpop.permute.xlu0 %3313
  %3315 = vrot.lane.b32.xlu0 %v3290, 24
  %v3316 = vpop.permute.xlu0 %3315
  %3317 = vrot.lane.b32.xlu0 %v3291, 24
  %v3318 = vpop.permute.xlu0 %3317
  %3319 = vrot.lane.b32.xlu0 %v3292, 24
  %v3320 = vpop.permute.xlu0 %3319
  %3321 = vrot.lane.b32.xlu0 %v3293, 24
  %v3322 = vpop.permute.xlu0 %3321
  %3323 = vrot.lane.b32.xlu0 %v3294, 24
  %v3324 = vpop.permute.xlu0 %3323
  %3325 = vrot.lane.b32.xlu0 %v3295, 24
  %v3326 = vpop.permute.xlu0 %3325
  %3327 = vrot.lane.b32.xlu0 %v3296, 24
  %v3328 = vpop.permute.xlu0 %3327
  %v3345 = vunpack.c.l.b16 %v2838
  %v3346 = vunpack.c.l.b16 %v2839
  %v3347 = vunpack.c.l.b16 %v2840
  %v3348 = vunpack.c.l.b16 %v2841
  %v3349 = vunpack.c.l.b16 %v2842
  %v3350 = vunpack.c.l.b16 %v2843
  %v3351 = vunpack.c.l.b16 %v2844
  %v3352 = vunpack.c.l.b16 %v2845
  %v3353 = vunpack.c.l.b16 %v2846
  %v3354 = vunpack.c.l.b16 %v2847
  %v3355 = vunpack.c.l.b16 %v2848
  %v3356 = vunpack.c.l.b16 %v2849
  %v3357 = vunpack.c.l.b16 %v2850
  %v3358 = vunpack.c.l.b16 %v2851
  %v3359 = vunpack.c.l.b16 %v2852
  %v3360 = vunpack.c.l.b16 %v2853
  %v3361 = vpack.c.b16 %v3345, %v3265
  %v3362 = vpack.c.b16 %v3346, %v3266
  %v3363 = vpack.c.b16 %v3347, %v3267
  %v3364 = vpack.c.b16 %v3348, %v3268
  %v3365 = vpack.c.b16 %v3349, %v3269
  %v3366 = vpack.c.b16 %v3350, %v3270
  %v3367 = vpack.c.b16 %v3351, %v3271
  %v3368 = vpack.c.b16 %v3352, %v3272
  %v3369 = vpack.c.b16 %v3353, %v3273
  %v3370 = vpack.c.b16 %v3354, %v3274
  %v3371 = vpack.c.b16 %v3355, %v3275
  %v3372 = vpack.c.b16 %v3356, %v3276
  %v3373 = vpack.c.b16 %v3357, %v3277
  %v3374 = vpack.c.b16 %v3358, %v3278
  %v3375 = vpack.c.b16 %v3359, %v3279
  %v3376 = vpack.c.b16 %v3360, %v3280
  %v3378 = vshrl.u32 %v3361, 16
  %v3380 = vshll.u32 %v3361, 16
  %v3382 = vrot.slane %v3380, 1
  %v3383 = vor.u32 %v3378, %v3382
  %v3385 = vshrl.u32 %v3362, 16
  %v3387 = vshll.u32 %v3362, 16
  %v3389 = vrot.slane %v3387, 1
  %v3390 = vor.u32 %v3385, %v3389
  %v3392 = vshrl.u32 %v3363, 16
  %v3394 = vshll.u32 %v3363, 16
  %v3396 = vrot.slane %v3394, 1
  %v3397 = vor.u32 %v3392, %v3396
  %v3399 = vshrl.u32 %v3364, 16
  %v3401 = vshll.u32 %v3364, 16
  %v3403 = vrot.slane %v3401, 1
  %v3404 = vor.u32 %v3399, %v3403
  %v3406 = vshrl.u32 %v3365, 16
  %v3408 = vshll.u32 %v3365, 16
  %v3410 = vrot.slane %v3408, 1
  %v3411 = vor.u32 %v3406, %v3410
  %v3413 = vshrl.u32 %v3366, 16
  %v3415 = vshll.u32 %v3366, 16
  %v3417 = vrot.slane %v3415, 1
  %v3418 = vor.u32 %v3413, %v3417
  %v3420 = vshrl.u32 %v3367, 16
  %v3422 = vshll.u32 %v3367, 16
  %v3424 = vrot.slane %v3422, 1
  %v3425 = vor.u32 %v3420, %v3424
  %v3427 = vshrl.u32 %v3368, 16
  %v3429 = vshll.u32 %v3368, 16
  %v3431 = vrot.slane %v3429, 1
  %v3432 = vor.u32 %v3427, %v3431
  %v3434 = vshrl.u32 %v3369, 16
  %v3436 = vshll.u32 %v3369, 16
  %v3438 = vrot.slane %v3436, 1
  %v3439 = vor.u32 %v3434, %v3438
  %v3441 = vshrl.u32 %v3370, 16
  %v3443 = vshll.u32 %v3370, 16
  %v3445 = vrot.slane %v3443, 1
  %v3446 = vor.u32 %v3441, %v3445
  %v3448 = vshrl.u32 %v3371, 16
  %v3450 = vshll.u32 %v3371, 16
  %v3452 = vrot.slane %v3450, 1
  %v3453 = vor.u32 %v3448, %v3452
  %v3455 = vshrl.u32 %v3372, 16
  %v3457 = vshll.u32 %v3372, 16
  %v3459 = vrot.slane %v3457, 1
  %v3460 = vor.u32 %v3455, %v3459
  %v3462 = vshrl.u32 %v3373, 16
  %v3464 = vshll.u32 %v3373, 16
  %v3466 = vrot.slane %v3464, 1
  %v3467 = vor.u32 %v3462, %v3466
  %v3469 = vshrl.u32 %v3374, 16
  %v3471 = vshll.u32 %v3374, 16
  %v3473 = vrot.slane %v3471, 1
  %v3474 = vor.u32 %v3469, %v3473
  %v3476 = vshrl.u32 %v3375, 16
  %v3478 = vshll.u32 %v3375, 16
  %v3480 = vrot.slane %v3478, 1
  %v3481 = vor.u32 %v3476, %v3480
  %v3483 = vshrl.u32 %v3376, 16
  %v3485 = vshll.u32 %v3376, 16
  %v3487 = vrot.slane %v3485, 1
  %v3488 = vor.u32 %v3483, %v3487
  %3489 = vrot.lane.b32.xlu0 %v3383, 32
  %v3490 = vpop.permute.xlu0 %3489
  %3491 = vrot.lane.b32.xlu0 %v3390, 32
  %v3492 = vpop.permute.xlu0 %3491
  %3493 = vrot.lane.b32.xlu0 %v3397, 32
  %v3494 = vpop.permute.xlu0 %3493
  %3495 = vrot.lane.b32.xlu0 %v3404, 32
  %v3496 = vpop.permute.xlu0 %3495
  %3497 = vrot.lane.b32.xlu0 %v3411, 32
  %v3498 = vpop.permute.xlu0 %3497
  %3499 = vrot.lane.b32.xlu0 %v3418, 32
  %v3500 = vpop.permute.xlu0 %3499
  %3501 = vrot.lane.b32.xlu0 %v3425, 32
  %v3502 = vpop.permute.xlu0 %3501
  %3503 = vrot.lane.b32.xlu0 %v3432, 32
  %v3504 = vpop.permute.xlu0 %3503
  %3505 = vrot.lane.b32.xlu0 %v3439, 32
  %v3506 = vpop.permute.xlu0 %3505
  %3507 = vrot.lane.b32.xlu0 %v3446, 32
  %v3508 = vpop.permute.xlu0 %3507
  %3509 = vrot.lane.b32.xlu0 %v3453, 32
  %v3510 = vpop.permute.xlu0 %3509
  %3511 = vrot.lane.b32.xlu0 %v3460, 32
  %v3512 = vpop.permute.xlu0 %3511
  %3513 = vrot.lane.b32.xlu0 %v3467, 32
  %v3514 = vpop.permute.xlu0 %3513
  %3515 = vrot.lane.b32.xlu0 %v3474, 32
  %v3516 = vpop.permute.xlu0 %3515
  %3517 = vrot.lane.b32.xlu0 %v3481, 32
  %v3518 = vpop.permute.xlu0 %3517
  %3519 = vrot.lane.b32.xlu0 %v3488, 32
  %v3520 = vpop.permute.xlu0 %3519
  %v3537 = vunpack.c.l.b16 %v2854
  %v3538 = vunpack.c.l.b16 %v2855
  %v3539 = vunpack.c.l.b16 %v2856
  %v3540 = vunpack.c.l.b16 %v2857
  %v3541 = vunpack.c.l.b16 %v2858
  %v3542 = vunpack.c.l.b16 %v2859
  %v3543 = vunpack.c.l.b16 %v2860
  %v3544 = vunpack.c.l.b16 %v2861
  %v3545 = vunpack.c.l.b16 %v2862
  %v3546 = vunpack.c.l.b16 %v2863
  %v3547 = vunpack.c.l.b16 %v2864
  %v3548 = vunpack.c.l.b16 %v2865
  %v3549 = vunpack.c.l.b16 %v2866
  %v3550 = vunpack.c.l.b16 %v2867
  %v3551 = vunpack.c.l.b16 %v2868
  %v3552 = vunpack.c.l.b16 %v2869
  %v3553 = vpack.c.b16 %v3345, %v3537
  %v3554 = vpack.c.b16 %v3346, %v3538
  %v3555 = vpack.c.b16 %v3347, %v3539
  %v3556 = vpack.c.b16 %v3348, %v3540
  %v3557 = vpack.c.b16 %v3349, %v3541
  %v3558 = vpack.c.b16 %v3350, %v3542
  %v3559 = vpack.c.b16 %v3351, %v3543
  %v3560 = vpack.c.b16 %v3352, %v3544
  %v3561 = vpack.c.b16 %v3353, %v3545
  %v3562 = vpack.c.b16 %v3354, %v3546
  %v3563 = vpack.c.b16 %v3355, %v3547
  %v3564 = vpack.c.b16 %v3356, %v3548
  %v3565 = vpack.c.b16 %v3357, %v3549
  %v3566 = vpack.c.b16 %v3358, %v3550
  %v3567 = vpack.c.b16 %v3359, %v3551
  %v3568 = vpack.c.b16 %v3360, %v3552
  %v3569 = vrot.slane %v3553, 1
  %v3570 = vrot.slane %v3554, 1
  %v3571 = vrot.slane %v3555, 1
  %v3572 = vrot.slane %v3556, 1
  %v3573 = vrot.slane %v3557, 1
  %v3574 = vrot.slane %v3558, 1
  %v3575 = vrot.slane %v3559, 1
  %v3576 = vrot.slane %v3560, 1
  %v3577 = vrot.slane %v3561, 1
  %v3578 = vrot.slane %v3562, 1
  %v3579 = vrot.slane %v3563, 1
  %v3580 = vrot.slane %v3564, 1
  %v3581 = vrot.slane %v3565, 1
  %v3582 = vrot.slane %v3566, 1
  %v3583 = vrot.slane %v3567, 1
  %v3584 = vrot.slane %v3568, 1
  %3585 = vrot.lane.b32.xlu0 %v3569, 40
  %v3586 = vpop.permute.xlu0 %3585
  %3587 = vrot.lane.b32.xlu0 %v3570, 40
  %v3588 = vpop.permute.xlu0 %3587
  %3589 = vrot.lane.b32.xlu0 %v3571, 40
  %v3590 = vpop.permute.xlu0 %3589
  %3591 = vrot.lane.b32.xlu0 %v3572, 40
  %v3592 = vpop.permute.xlu0 %3591
  %3593 = vrot.lane.b32.xlu0 %v3573, 40
  %v3594 = vpop.permute.xlu0 %3593
  %3595 = vrot.lane.b32.xlu0 %v3574, 40
  %v3596 = vpop.permute.xlu0 %3595
  %3597 = vrot.lane.b32.xlu0 %v3575, 40
  %v3598 = vpop.permute.xlu0 %3597
  %3599 = vrot.lane.b32.xlu0 %v3576, 40
  %v3600 = vpop.permute.xlu0 %3599
  %3601 = vrot.lane.b32.xlu0 %v3577, 40
  %v3602 = vpop.permute.xlu0 %3601
  %3603 = vrot.lane.b32.xlu0 %v3578, 40
  %v3604 = vpop.permute.xlu0 %3603
  %3605 = vrot.lane.b32.xlu0 %v3579, 40
  %v3606 = vpop.permute.xlu0 %3605
  %3607 = vrot.lane.b32.xlu0 %v3580, 40
  %v3608 = vpop.permute.xlu0 %3607
  %3609 = vrot.lane.b32.xlu0 %v3581, 40
  %v3610 = vpop.permute.xlu0 %3609
  %3611 = vrot.lane.b32.xlu0 %v3582, 40
  %v3612 = vpop.permute.xlu0 %3611
  %3613 = vrot.lane.b32.xlu0 %v3583, 40
  %v3614 = vpop.permute.xlu0 %3613
  %3615 = vrot.lane.b32.xlu0 %v3584, 40
  %v3616 = vpop.permute.xlu0 %3615
  %v3633 = vunpack.c.l.b16 %v2871
  %v3634 = vunpack.c.l.b16 %v2872
  %v3635 = vunpack.c.l.b16 %v2873
  %v3636 = vunpack.c.l.b16 %v2874
  %v3637 = vunpack.c.l.b16 %v2875
  %v3638 = vunpack.c.l.b16 %v2876
  %v3639 = vunpack.c.l.b16 %v2877
  %v3640 = vunpack.c.l.b16 %v2878
  %v3641 = vunpack.c.l.b16 %v2879
  %v3642 = vunpack.c.l.b16 %v2880
  %v3643 = vunpack.c.l.b16 %v2881
  %v3644 = vunpack.c.l.b16 %v2882
  %v3645 = vunpack.c.l.b16 %v2883
  %v3646 = vunpack.c.l.b16 %v2884
  %v3647 = vunpack.c.l.b16 %v2885
  %v3648 = vunpack.c.l.b16 %v2886
  %v3649 = vpack.c.b16 %v3633, %v3633
  %v3650 = vpack.c.b16 %v3634, %v3634
  %v3651 = vpack.c.b16 %v3635, %v3635
  %v3652 = vpack.c.b16 %v3636, %v3636
  %v3653 = vpack.c.b16 %v3637, %v3637
  %v3654 = vpack.c.b16 %v3638, %v3638
  %v3655 = vpack.c.b16 %v3639, %v3639
  %v3656 = vpack.c.b16 %v3640, %v3640
  %v3657 = vpack.c.b16 %v3641, %v3641
  %v3658 = vpack.c.b16 %v3642, %v3642
  %v3659 = vpack.c.b16 %v3643, %v3643
  %v3660 = vpack.c.b16 %v3644, %v3644
  %v3661 = vpack.c.b16 %v3645, %v3645
  %v3662 = vpack.c.b16 %v3646, %v3646
  %v3663 = vpack.c.b16 %v3647, %v3647
  %v3664 = vpack.c.b16 %v3648, %v3648
  %3665 = vrot.lane.b32.xlu0 %v3649, 48
  %v3666 = vpop.permute.xlu0 %3665
  %3667 = vrot.lane.b32.xlu0 %v3650, 48
  %v3668 = vpop.permute.xlu0 %3667
  %3669 = vrot.lane.b32.xlu0 %v3651, 48
  %v3670 = vpop.permute.xlu0 %3669
  %3671 = vrot.lane.b32.xlu0 %v3652, 48
  %v3672 = vpop.permute.xlu0 %3671
  %3673 = vrot.lane.b32.xlu0 %v3653, 48
  %v3674 = vpop.permute.xlu0 %3673
  %3675 = vrot.lane.b32.xlu0 %v3654, 48
  %v3676 = vpop.permute.xlu0 %3675
  %3677 = vrot.lane.b32.xlu0 %v3655, 48
  %v3678 = vpop.permute.xlu0 %3677
  %3679 = vrot.lane.b32.xlu0 %v3656, 48
  %v3680 = vpop.permute.xlu0 %3679
  %3681 = vrot.lane.b32.xlu0 %v3657, 48
  %v3682 = vpop.permute.xlu0 %3681
  %3683 = vrot.lane.b32.xlu0 %v3658, 48
  %v3684 = vpop.permute.xlu0 %3683
  %3685 = vrot.lane.b32.xlu0 %v3659, 48
  %v3686 = vpop.permute.xlu0 %3685
  %3687 = vrot.lane.b32.xlu0 %v3660, 48
  %v3688 = vpop.permute.xlu0 %3687
  %3689 = vrot.lane.b32.xlu0 %v3661, 48
  %v3690 = vpop.permute.xlu0 %3689
  %3691 = vrot.lane.b32.xlu0 %v3662, 48
  %v3692 = vpop.permute.xlu0 %3691
  %3693 = vrot.lane.b32.xlu0 %v3663, 48
  %v3694 = vpop.permute.xlu0 %3693
  %3695 = vrot.lane.b32.xlu0 %v3664, 48
  %v3696 = vpop.permute.xlu0 %3695
  %v3713 = vunpack.c.l.b16 %v2887
  %v3714 = vunpack.c.l.b16 %v2888
  %v3715 = vunpack.c.l.b16 %v2889
  %v3716 = vunpack.c.l.b16 %v2890
  %v3717 = vunpack.c.l.b16 %v2891
  %v3718 = vunpack.c.l.b16 %v2892
  %v3719 = vunpack.c.l.b16 %v2893
  %v3720 = vunpack.c.l.b16 %v2894
  %v3721 = vunpack.c.l.b16 %v2895
  %v3722 = vunpack.c.l.b16 %v2896
  %v3723 = vunpack.c.l.b16 %v2897
  %v3724 = vunpack.c.l.b16 %v2898
  %v3725 = vunpack.c.l.b16 %v2899
  %v3726 = vunpack.c.l.b16 %v2900
  %v3727 = vunpack.c.l.b16 %v2901
  %v3728 = vunpack.c.l.b16 %v2902
  %v3729 = vpack.c.b16 %v3713, %v3633
  %v3730 = vpack.c.b16 %v3714, %v3634
  %v3731 = vpack.c.b16 %v3715, %v3635
  %v3732 = vpack.c.b16 %v3716, %v3636
  %v3733 = vpack.c.b16 %v3717, %v3637
  %v3734 = vpack.c.b16 %v3718, %v3638
  %v3735 = vpack.c.b16 %v3719, %v3639
  %v3736 = vpack.c.b16 %v3720, %v3640
  %v3737 = vpack.c.b16 %v3721, %v3641
  %v3738 = vpack.c.b16 %v3722, %v3642
  %v3739 = vpack.c.b16 %v3723, %v3643
  %v3740 = vpack.c.b16 %v3724, %v3644
  %v3741 = vpack.c.b16 %v3725, %v3645
  %v3742 = vpack.c.b16 %v3726, %v3646
  %v3743 = vpack.c.b16 %v3727, %v3647
  %v3744 = vpack.c.b16 %v3728, %v3648
  %v3746 = vshrl.u32 %v3729, 16
  %v3748 = vshll.u32 %v3729, 16
  %v3750 = vrot.slane %v3748, 1
  %v3751 = vor.u32 %v3746, %v3750
  %v3753 = vshrl.u32 %v3730, 16
  %v3755 = vshll.u32 %v3730, 16
  %v3757 = vrot.slane %v3755, 1
  %v3758 = vor.u32 %v3753, %v3757
  %v3760 = vshrl.u32 %v3731, 16
  %v3762 = vshll.u32 %v3731, 16
  %v3764 = vrot.slane %v3762, 1
  %v3765 = vor.u32 %v3760, %v3764
  %v3767 = vshrl.u32 %v3732, 16
  %v3769 = vshll.u32 %v3732, 16
  %v3771 = vrot.slane %v3769, 1
  %v3772 = vor.u32 %v3767, %v3771
  %v3774 = vshrl.u32 %v3733, 16
  %v3776 = vshll.u32 %v3733, 16
  %v3778 = vrot.slane %v3776, 1
  %v3779 = vor.u32 %v3774, %v3778
  %v3781 = vshrl.u32 %v3734, 16
  %v3783 = vshll.u32 %v3734, 16
  %v3785 = vrot.slane %v3783, 1
  %v3786 = vor.u32 %v3781, %v3785
  %v3788 = vshrl.u32 %v3735, 16
  %v3790 = vshll.u32 %v3735, 16
  %v3792 = vrot.slane %v3790, 1
  %v3793 = vor.u32 %v3788, %v3792
  %v3795 = vshrl.u32 %v3736, 16
  %v3797 = vshll.u32 %v3736, 16
  %v3799 = vrot.slane %v3797, 1
  %v3800 = vor.u32 %v3795, %v3799
  %v3802 = vshrl.u32 %v3737, 16
  %v3804 = vshll.u32 %v3737, 16
  %v3806 = vrot.slane %v3804, 1
  %v3807 = vor.u32 %v3802, %v3806
  %v3809 = vshrl.u32 %v3738, 16
  %v3811 = vshll.u32 %v3738, 16
  %v3813 = vrot.slane %v3811, 1
  %v3814 = vor.u32 %v3809, %v3813
  %v3816 = vshrl.u32 %v3739, 16
  %v3818 = vshll.u32 %v3739, 16
  %v3820 = vrot.slane %v3818, 1
  %v3821 = vor.u32 %v3816, %v3820
  %v3823 = vshrl.u32 %v3740, 16
  %v3825 = vshll.u32 %v3740, 16
  %v3827 = vrot.slane %v3825, 1
  %v3828 = vor.u32 %v3823, %v3827
  %v3830 = vshrl.u32 %v3741, 16
  %v3832 = vshll.u32 %v3741, 16
  %v3834 = vrot.slane %v3832, 1
  %v3835 = vor.u32 %v3830, %v3834
  %v3837 = vshrl.u32 %v3742, 16
  %v3839 = vshll.u32 %v3742, 16
  %v3841 = vrot.slane %v3839, 1
  %v3842 = vor.u32 %v3837, %v3841
  %v3844 = vshrl.u32 %v3743, 16
  %v3846 = vshll.u32 %v3743, 16
  %v3848 = vrot.slane %v3846, 1
  %v3849 = vor.u32 %v3844, %v3848
  %v3851 = vshrl.u32 %v3744, 16
  %v3853 = vshll.u32 %v3744, 16
  %v3855 = vrot.slane %v3853, 1
  %v3856 = vor.u32 %v3851, %v3855
  %3857 = vrot.lane.b32.xlu0 %v3751, 56
  %v3858 = vpop.permute.xlu0 %3857
  %3859 = vrot.lane.b32.xlu0 %v3758, 56
  %v3860 = vpop.permute.xlu0 %3859
  %3861 = vrot.lane.b32.xlu0 %v3765, 56
  %v3862 = vpop.permute.xlu0 %3861
  %3863 = vrot.lane.b32.xlu0 %v3772, 56
  %v3864 = vpop.permute.xlu0 %3863
  %3865 = vrot.lane.b32.xlu0 %v3779, 56
  %v3866 = vpop.permute.xlu0 %3865
  %3867 = vrot.lane.b32.xlu0 %v3786, 56
  %v3868 = vpop.permute.xlu0 %3867
  %3869 = vrot.lane.b32.xlu0 %v3793, 56
  %v3870 = vpop.permute.xlu0 %3869
  %3871 = vrot.lane.b32.xlu0 %v3800, 56
  %v3872 = vpop.permute.xlu0 %3871
  %3873 = vrot.lane.b32.xlu0 %v3807, 56
  %v3874 = vpop.permute.xlu0 %3873
  %3875 = vrot.lane.b32.xlu0 %v3814, 56
  %v3876 = vpop.permute.xlu0 %3875
  %3877 = vrot.lane.b32.xlu0 %v3821, 56
  %v3878 = vpop.permute.xlu0 %3877
  %3879 = vrot.lane.b32.xlu0 %v3828, 56
  %v3880 = vpop.permute.xlu0 %3879
  %3881 = vrot.lane.b32.xlu0 %v3835, 56
  %v3882 = vpop.permute.xlu0 %3881
  %3883 = vrot.lane.b32.xlu0 %v3842, 56
  %v3884 = vpop.permute.xlu0 %3883
  %3885 = vrot.lane.b32.xlu0 %v3849, 56
  %v3886 = vpop.permute.xlu0 %3885
  %3887 = vrot.lane.b32.xlu0 %v3856, 56
  %v3888 = vpop.permute.xlu0 %3887
  %v3905 = vunpack.c.l.b16 %v2903
  %v3906 = vunpack.c.l.b16 %v2904
  %v3907 = vunpack.c.l.b16 %v2905
  %v3908 = vunpack.c.l.b16 %v2906
  %v3909 = vunpack.c.l.b16 %v2907
  %v3910 = vunpack.c.l.b16 %v2908
  %v3911 = vunpack.c.l.b16 %v2909
  %v3912 = vunpack.c.l.b16 %v2910
  %v3913 = vunpack.c.l.b16 %v2911
  %v3914 = vunpack.c.l.b16 %v2912
  %v3915 = vunpack.c.l.b16 %v2913
  %v3916 = vunpack.c.l.b16 %v2914
  %v3917 = vunpack.c.l.b16 %v2915
  %v3918 = vunpack.c.l.b16 %v2916
  %v3919 = vunpack.c.l.b16 %v2917
  %v3920 = vunpack.c.l.b16 %v2918
  %v3921 = vpack.c.b16 %v3713, %v3905
  %v3922 = vpack.c.b16 %v3714, %v3906
  %v3923 = vpack.c.b16 %v3715, %v3907
  %v3924 = vpack.c.b16 %v3716, %v3908
  %v3925 = vpack.c.b16 %v3717, %v3909
  %v3926 = vpack.c.b16 %v3718, %v3910
  %v3927 = vpack.c.b16 %v3719, %v3911
  %v3928 = vpack.c.b16 %v3720, %v3912
  %v3929 = vpack.c.b16 %v3721, %v3913
  %v3930 = vpack.c.b16 %v3722, %v3914
  %v3931 = vpack.c.b16 %v3723, %v3915
  %v3932 = vpack.c.b16 %v3724, %v3916
  %v3933 = vpack.c.b16 %v3725, %v3917
  %v3934 = vpack.c.b16 %v3726, %v3918
  %v3935 = vpack.c.b16 %v3727, %v3919
  %v3936 = vpack.c.b16 %v3728, %v3920
  %v3937 = vrot.slane %v3921, 1
  %v3938 = vrot.slane %v3922, 1
  %v3939 = vrot.slane %v3923, 1
  %v3940 = vrot.slane %v3924, 1
  %v3941 = vrot.slane %v3925, 1
  %v3942 = vrot.slane %v3926, 1
  %v3943 = vrot.slane %v3927, 1
  %v3944 = vrot.slane %v3928, 1
  %v3945 = vrot.slane %v3929, 1
  %v3946 = vrot.slane %v3930, 1
  %v3947 = vrot.slane %v3931, 1
  %v3948 = vrot.slane %v3932, 1
  %v3949 = vrot.slane %v3933, 1
  %v3950 = vrot.slane %v3934, 1
  %v3951 = vrot.slane %v3935, 1
  %v3952 = vrot.slane %v3936, 1
  %3953 = vrot.lane.b32.xlu0 %v3937, 64
  %v3954 = vpop.permute.xlu0 %3953
  %3955 = vrot.lane.b32.xlu0 %v3938, 64
  %v3956 = vpop.permute.xlu0 %3955
  %3957 = vrot.lane.b32.xlu0 %v3939, 64
  %v3958 = vpop.permute.xlu0 %3957
  %3959 = vrot.lane.b32.xlu0 %v3940, 64
  %v3960 = vpop.permute.xlu0 %3959
  %3961 = vrot.lane.b32.xlu0 %v3941, 64
  %v3962 = vpop.permute.xlu0 %3961
  %3963 = vrot.lane.b32.xlu0 %v3942, 64
  %v3964 = vpop.permute.xlu0 %3963
  %3965 = vrot.lane.b32.xlu0 %v3943, 64
  %v3966 = vpop.permute.xlu0 %3965
  %3967 = vrot.lane.b32.xlu0 %v3944, 64
  %v3968 = vpop.permute.xlu0 %3967
  %3969 = vrot.lane.b32.xlu0 %v3945, 64
  %v3970 = vpop.permute.xlu0 %3969
  %3971 = vrot.lane.b32.xlu0 %v3946, 64
  %v3972 = vpop.permute.xlu0 %3971
  %3973 = vrot.lane.b32.xlu0 %v3947, 64
  %v3974 = vpop.permute.xlu0 %3973
  %3975 = vrot.lane.b32.xlu0 %v3948, 64
  %v3976 = vpop.permute.xlu0 %3975
  %3977 = vrot.lane.b32.xlu0 %v3949, 64
  %v3978 = vpop.permute.xlu0 %3977
  %3979 = vrot.lane.b32.xlu0 %v3950, 64
  %v3980 = vpop.permute.xlu0 %3979
  %3981 = vrot.lane.b32.xlu0 %v3951, 64
  %v3982 = vpop.permute.xlu0 %3981
  %3983 = vrot.lane.b32.xlu0 %v3952, 64
  %v3984 = vpop.permute.xlu0 %3983
  %v3987 = vsel %vm1800, %v2774, %v3122
  %v3990 = vsel %vm1800, %v2775, %v3124
  %v3993 = vsel %vm1800, %v2776, %v3126
  %v3996 = vsel %vm1800, %v2777, %v3128
  %v3999 = vsel %vm1800, %v2778, %v3130
  %v4002 = vsel %vm1800, %v2779, %v3132
  %v4005 = vsel %vm1800, %v2780, %v3134
  %v4008 = vsel %vm1800, %v2781, %v3136
  %v4011 = vsel %vm1800, %v2782, %v3138
  %v4014 = vsel %vm1800, %v2783, %v3140
  %v4017 = vsel %vm1800, %v2784, %v3142
  %v4020 = vsel %vm1800, %v2785, %v3144
  %v4023 = vsel %vm1800, %v2786, %v3146
  %v4026 = vsel %vm1800, %v2787, %v3148
  %v4029 = vsel %vm1800, %v2788, %v3150
  %v4032 = vsel %vm1800, %v2789, %v3152
  %v4034 = vsel %vm1850, %v3987, %v3218
  %v4036 = vsel %vm1850, %v3990, %v3220
  %v4038 = vsel %vm1850, %v3993, %v3222
  %v4040 = vsel %vm1850, %v3996, %v3224
  %v4042 = vsel %vm1850, %v3999, %v3226
  %v4044 = vsel %vm1850, %v4002, %v3228
  %v4046 = vsel %vm1850, %v4005, %v3230
  %v4048 = vsel %vm1850, %v4008, %v3232
  %v4050 = vsel %vm1850, %v4011, %v3234
  %v4052 = vsel %vm1850, %v4014, %v3236
  %v4054 = vsel %vm1850, %v4017, %v3238
  %v4056 = vsel %vm1850, %v4020, %v3240
  %v4058 = vsel %vm1850, %v4023, %v3242
  %v4060 = vsel %vm1850, %v4026, %v3244
  %v4062 = vsel %vm1850, %v4029, %v3246
  %v4064 = vsel %vm1850, %v4032, %v3248
  %v4066 = vsel %vm1900, %v4034, %v3298
  %v4068 = vsel %vm1900, %v4036, %v3300
  %v4070 = vsel %vm1900, %v4038, %v3302
  %v4072 = vsel %vm1900, %v4040, %v3304
  %v4074 = vsel %vm1900, %v4042, %v3306
  %v4076 = vsel %vm1900, %v4044, %v3308
  %v4078 = vsel %vm1900, %v4046, %v3310
  %v4080 = vsel %vm1900, %v4048, %v3312
  %v4082 = vsel %vm1900, %v4050, %v3314
  %v4084 = vsel %vm1900, %v4052, %v3316
  %v4086 = vsel %vm1900, %v4054, %v3318
  %v4088 = vsel %vm1900, %v4056, %v3320
  %v4090 = vsel %vm1900, %v4058, %v3322
  %v4092 = vsel %vm1900, %v4060, %v3324
  %v4094 = vsel %vm1900, %v4062, %v3326
  %v4096 = vsel %vm1900, %v4064, %v3328
  %v4098 = vsel %vm1966, %v4066, %v3490
  %v4100 = vsel %vm1966, %v4068, %v3492
  %v4102 = vsel %vm1966, %v4070, %v3494
  %v4104 = vsel %vm1966, %v4072, %v3496
  %v4106 = vsel %vm1966, %v4074, %v3498
  %v4108 = vsel %vm1966, %v4076, %v3500
  %v4110 = vsel %vm1966, %v4078, %v3502
  %v4112 = vsel %vm1966, %v4080, %v3504
  %v4114 = vsel %vm1966, %v4082, %v3506
  %v4116 = vsel %vm1966, %v4084, %v3508
  %v4118 = vsel %vm1966, %v4086, %v3510
  %v4120 = vsel %vm1966, %v4088, %v3512
  %v4122 = vsel %vm1966, %v4090, %v3514
  %v4124 = vsel %vm1966, %v4092, %v3516
  %v4126 = vsel %vm1966, %v4094, %v3518
  %v4128 = vsel %vm1966, %v4096, %v3520
  %vm4129 = vcmask 326656
  %v4131 = vsel %vm4129, %v4098, %v3586
  %v4133 = vsel %vm4129, %v4100, %v3588
  %v4135 = vsel %vm4129, %v4102, %v3590
  %v4137 = vsel %vm4129, %v4104, %v3592
  %v4139 = vsel %vm4129, %v4106, %v3594
  %v4141 = vsel %vm4129, %v4108, %v3596
  %v4143 = vsel %vm4129, %v4110, %v3598
  %v4145 = vsel %vm4129, %v4112, %v3600
  %v4147 = vsel %vm4129, %v4114, %v3602
  %v4149 = vsel %vm4129, %v4116, %v3604
  %v4151 = vsel %vm4129, %v4118, %v3606
  %v4153 = vsel %vm4129, %v4120, %v3608
  %v4155 = vsel %vm4129, %v4122, %v3610
  %v4157 = vsel %vm4129, %v4124, %v3612
  %v4159 = vsel %vm4129, %v4126, %v3614
  %v4161 = vsel %vm4129, %v4128, %v3616
  %vm4162 = vcmask 392192
  %v4164 = vsel %vm4162, %v4131, %v3666
  %v4166 = vsel %vm4162, %v4133, %v3668
  %v4168 = vsel %vm4162, %v4135, %v3670
  %v4170 = vsel %vm4162, %v4137, %v3672
  %v4172 = vsel %vm4162, %v4139, %v3674
  %v4174 = vsel %vm4162, %v4141, %v3676
  %v4176 = vsel %vm4162, %v4143, %v3678
  %v4178 = vsel %vm4162, %v4145, %v3680
  %v4180 = vsel %vm4162, %v4147, %v3682
  %v4182 = vsel %vm4162, %v4149, %v3684
  %v4184 = vsel %vm4162, %v4151, %v3686
  %v4186 = vsel %vm4162, %v4153, %v3688
  %v4188 = vsel %vm4162, %v4155, %v3690
  %v4190 = vsel %vm4162, %v4157, %v3692
  %v4192 = vsel %vm4162, %v4159, %v3694
  %v4194 = vsel %vm4162, %v4161, %v3696
  %vm4195 = vcmask 457728
  %v4197 = vsel %vm4195, %v4164, %v3858
  %v4199 = vsel %vm4195, %v4166, %v3860
  %v4201 = vsel %vm4195, %v4168, %v3862
  %v4203 = vsel %vm4195, %v4170, %v3864
  %v4205 = vsel %vm4195, %v4172, %v3866
  %v4207 = vsel %vm4195, %v4174, %v3868
  %v4209 = vsel %vm4195, %v4176, %v3870
  %v4211 = vsel %vm4195, %v4178, %v3872
  %v4213 = vsel %vm4195, %v4180, %v3874
  %v4215 = vsel %vm4195, %v4182, %v3876
  %v4217 = vsel %vm4195, %v4184, %v3878
  %v4219 = vsel %vm4195, %v4186, %v3880
  %v4221 = vsel %vm4195, %v4188, %v3882
  %v4223 = vsel %vm4195, %v4190, %v3884
  %v4225 = vsel %vm4195, %v4192, %v3886
  %v4227 = vsel %vm4195, %v4194, %v3888
  %vm4228 = vcmask 523264
  %v4230 = vsel %vm4228, %v4197, %v3954
  %v4232 = vsel %vm4228, %v4199, %v3956
  %v4234 = vsel %vm4228, %v4201, %v3958
  %v4236 = vsel %vm4228, %v4203, %v3960
  %v4238 = vsel %vm4228, %v4205, %v3962
  %v4240 = vsel %vm4228, %v4207, %v3964
  %v4242 = vsel %vm4228, %v4209, %v3966
  %v4244 = vsel %vm4228, %v4211, %v3968
  %v4246 = vsel %vm4228, %v4213, %v3970
  %v4248 = vsel %vm4228, %v4215, %v3972
  %v4250 = vsel %vm4228, %v4217, %v3974
  %v4252 = vsel %vm4228, %v4219, %v3976
  %v4254 = vsel %vm4228, %v4221, %v3978
  %v4256 = vsel %vm4228, %v4223, %v3980
  %v4258 = vsel %vm4228, %v4225, %v3982
  %v4260 = vsel %vm4228, %v4227, %v3984
  %v4262 = vlaneseq
  %v4263 = vshrl.u32 %v4262, 7
  %v4264 = vsub.s32 0, %v4263
  %v4265 = vrot.slane %v2928, %v4264
  %v4283 = vunpack.c.l.b16 %v4230
  %v4284 = vunpack.c.l.b16 %v4232
  %v4285 = vunpack.c.l.b16 %v4234
  %v4286 = vunpack.c.l.b16 %v4236
  %v4287 = vunpack.c.l.b16 %v4238
  %v4288 = vunpack.c.l.b16 %v4240
  %v4289 = vunpack.c.l.b16 %v4242
  %v4290 = vunpack.c.l.b16 %v4244
  %v4291 = vunpack.c.l.b16 %v4246
  %v4292 = vunpack.c.l.b16 %v4248
  %v4293 = vunpack.c.l.b16 %v4250
  %v4294 = vunpack.c.l.b16 %v4252
  %v4295 = vunpack.c.l.b16 %v4254
  %v4296 = vunpack.c.l.b16 %v4256
  %v4297 = vunpack.c.l.b16 %v4258
  %v4298 = vunpack.c.l.b16 %v4260
  %v4299 = vpack.c.b16 %v4284, %v4283
  %v4300 = vpack.c.b16 %v4286, %v4285
  %v4301 = vpack.c.b16 %v4288, %v4287
  %v4302 = vpack.c.b16 %v4290, %v4289
  %v4303 = vpack.c.b16 %v4292, %v4291
  %v4304 = vpack.c.b16 %v4294, %v4293
  %v4305 = vpack.c.b16 %v4296, %v4295
  %v4306 = vpack.c.b16 %v4298, %v4297
  %v4316 = vunpack.c.l.b16 %v2919
  %v4317 = vunpack.c.l.b16 %v2920
  %v4318 = vunpack.c.l.b16 %v2921
  %v4319 = vunpack.c.l.b16 %v2922
  %v4320 = vunpack.c.l.b16 %v2923
  %v4321 = vunpack.c.l.b16 %v2924
  %v4322 = vunpack.c.l.b16 %v2925
  %v4323 = vunpack.c.l.b16 %v2926
  %v4324 = vunpack.c.l.b16 %v2927
  %v4325 = vpack.c.b16 %v4317, %v4316
  %v4326 = vpack.c.b16 %v4319, %v4318
  %v4327 = vpack.c.b16 %v4321, %v4320
  %v4328 = vpack.c.b16 %v4323, %v4322
  %v4329 = vpack.c.b16 %v4324, %v4324
  %vm4334 = vcmask 588800
  %v4336 = vsel %vm4334, %v4299, 0
  %v4339 = vsel %vm4334, %v4300, 0
  %v4342 = vsel %vm4334, %v4301, 0
  %v4345 = vsel %vm4334, %v4302, 0
  %v4348 = vsel %vm4334, %v4303, 0
  %v4351 = vsel %vm4334, %v4304, 0
  %v4354 = vsel %vm4334, %v4305, 0
  %v4357 = vsel %vm4334, %v4306, 0
  %vm4359 = vcmask 1043456
  %v4361 = vsel %vm4359, %v4329, 0
  %4363 = vmatprep.subr.bf16.mxu0 0
  %4364 = vmatpush1.bf16.msra.mxu0 0
  %4365 = vmatprep.subr.bf16.mxu0 0
  %4366 = vmatpush1.bf16.msra.mxu0 0
  %4367 = vmatprep.subr.bf16.mxu0 0
  %4368 = vmatpush1.bf16.msra.mxu0 0
  %4369 = vmatprep.subr.bf16.mxu0 0
  %4370 = vmatpush1.bf16.msra.mxu0 %v4361
  %4371 = vmatprep.subr.bf16.mxu0 0
  %4372 = vmatpush1.bf16.msra.mxu0 %v4328
  %4373 = vmatprep.subr.bf16.mxu0 0
  %4374 = vmatpush1.bf16.msra.mxu0 %v4327
  %4375 = vmatprep.subr.bf16.mxu0 0
  %4376 = vmatpush1.bf16.msra.mxu0 %v4326
  %4377 = vmatprep.subr.bf16.mxu0 0
  %4378 = vmatpush1.bf16.msra.mxu0 %v4325
  %4379 = vmatprep.subr.bf16.mxu0 0
  %4380 = vmatpush2.bf16.msra.mxu0 0
  %4381 = vmatprep.subr.bf16.mxu0 0
  %4382 = vmatpush2.bf16.msra.mxu0 0
  %4383 = vmatprep.subr.bf16.mxu0 0
  %4384 = vmatpush2.bf16.msra.mxu0 0
  %4385 = vmatprep.subr.bf16.mxu0 0
  %4386 = vmatpush2.bf16.msra.mxu0 0
  %4387 = vmatprep.subr.bf16.mxu0 0
  %4388 = vmatpush2.bf16.msra.mxu0 0
  %4389 = vmatprep.subr.bf16.mxu0 0
  %4390 = vmatpush2.bf16.msra.mxu0 0
  %4391 = vmatprep.subr.bf16.mxu0 0
  %4392 = vmatpush2.bf16.msra.mxu0 0
  %4393 = vmatprep.subr.bf16.mxu0 0
  %4394 = vmatpush2.bf16.msra.mxu0 0
  %4395 = vmatprep.mubr.bf16.mxu0 0
  %4396 = vmatmul.mubr.bf16.gmra.mxu0 %v4336
  %v4397 = vpop.f32.mrf.mxu0
  %v4398 = vadd.f32 %v4265, %v4397
  %v4399 = vpop.f32.mrf.mxu0
  %v4400 = vpop.f32.mrf.mxu0
  %v4401 = vadd.f32 %v4265, %v4400
  %v4402 = vpop.f32.mrf.mxu0
  %4403 = vmatprep.mubr.bf16.mxu0 0
  %4404 = vmatmul.mubr.bf16.gmra.mxu0 %v4339
  %v4405 = vpop.f32.mrf.mxu0
  %v4406 = vadd.f32 %v4265, %v4405
  %v4407 = vpop.f32.mrf.mxu0
  %v4408 = vpop.f32.mrf.mxu0
  %v4409 = vadd.f32 %v4265, %v4408
  %v4410 = vpop.f32.mrf.mxu0
  %4411 = vmatprep.mubr.bf16.mxu0 0
  %4412 = vmatmul.mubr.bf16.gmra.mxu0 %v4342
  %v4413 = vpop.f32.mrf.mxu0
  %v4414 = vadd.f32 %v4265, %v4413
  %v4415 = vpop.f32.mrf.mxu0
  %v4416 = vpop.f32.mrf.mxu0
  %v4417 = vadd.f32 %v4265, %v4416
  %v4418 = vpop.f32.mrf.mxu0
  %4419 = vmatprep.mubr.bf16.mxu0 0
  %4420 = vmatmul.mubr.bf16.gmra.mxu0 %v4345
  %v4421 = vpop.f32.mrf.mxu0
  %v4422 = vadd.f32 %v4265, %v4421
  %v4423 = vpop.f32.mrf.mxu0
  %v4424 = vpop.f32.mrf.mxu0
  %v4425 = vadd.f32 %v4265, %v4424
  %v4426 = vpop.f32.mrf.mxu0
  %4427 = vmatprep.mubr.bf16.mxu0 0
  %4428 = vmatmul.mubr.bf16.gmra.mxu0 %v4348
  %v4429 = vpop.f32.mrf.mxu0
  %v4430 = vadd.f32 %v4265, %v4429
  %v4431 = vpop.f32.mrf.mxu0
  %v4432 = vpop.f32.mrf.mxu0
  %v4433 = vadd.f32 %v4265, %v4432
  %v4434 = vpop.f32.mrf.mxu0
  %4435 = vmatprep.mubr.bf16.mxu0 0
  %4436 = vmatmul.mubr.bf16.gmra.mxu0 %v4351
  %v4437 = vpop.f32.mrf.mxu0
  %v4438 = vadd.f32 %v4265, %v4437
  %v4439 = vpop.f32.mrf.mxu0
  %v4440 = vpop.f32.mrf.mxu0
  %v4441 = vadd.f32 %v4265, %v4440
  %v4442 = vpop.f32.mrf.mxu0
  %4443 = vmatprep.mubr.bf16.mxu0 0
  %4444 = vmatmul.mubr.bf16.gmra.mxu0 %v4354
  %v4445 = vpop.f32.mrf.mxu0
  %v4446 = vadd.f32 %v4265, %v4445
  %v4447 = vpop.f32.mrf.mxu0
  %v4448 = vpop.f32.mrf.mxu0
  %v4449 = vadd.f32 %v4265, %v4448
  %v4450 = vpop.f32.mrf.mxu0
  %4451 = vmatprep.mubr.bf16.mxu0 0
  %4452 = vmatmul.mubr.bf16.gmra.mxu0 %v4357
  %v4453 = vpop.f32.mrf.mxu0
  %v4454 = vadd.f32 %v4265, %v4453
  %v4455 = vpop.f32.mrf.mxu0
  %v4456 = vpop.f32.mrf.mxu0
  %v4457 = vadd.f32 %v4265, %v4456
  %v4458 = vpop.f32.mrf.mxu0
  %4459 = vdwg.mxu0
  %v4460 = vsel %vm1800, %v4398, 0.0
  %v4461 = vsel %vm1800, %v4401, 0.0
  %v4462 = vadd.f32 %v4460, %v4461
  %v4463 = vsel %vm1800, %v4406, 0.0
  %v4464 = vadd.f32 %v4462, %v4463
  %v4465 = vsel %vm1800, %v4409, 0.0
  %v4466 = vadd.f32 %v4464, %v4465
  %v4467 = vsel %vm1800, %v4414, 0.0
  %v4468 = vadd.f32 %v4466, %v4467
  %v4469 = vsel %vm1800, %v4417, 0.0
  %v4470 = vadd.f32 %v4468, %v4469
  %v4471 = vsel %vm1800, %v4422, 0.0
  %v4472 = vadd.f32 %v4470, %v4471
  %v4473 = vsel %vm1800, %v4425, 0.0
  %v4474 = vadd.f32 %v4472, %v4473
  %v4475 = vsel %vm1800, %v4430, 0.0
  %v4476 = vadd.f32 %v4474, %v4475
  %v4477 = vsel %vm1800, %v4433, 0.0
  %v4478 = vadd.f32 %v4476, %v4477
  %v4479 = vsel %vm1800, %v4438, 0.0
  %v4480 = vadd.f32 %v4478, %v4479
  %v4481 = vsel %vm1800, %v4441, 0.0
  %v4482 = vadd.f32 %v4480, %v4481
  %v4483 = vsel %vm1800, %v4446, 0.0
  %v4484 = vadd.f32 %v4482, %v4483
  %v4485 = vsel %vm1800, %v4449, 0.0
  %v4486 = vadd.f32 %v4484, %v4485
  %v4487 = vsel %vm1800, %v4454, 0.0
  %v4488 = vadd.f32 %v4486, %v4487
  %v4489 = vsel %vm1800, %v4457, 0.0
  %v4490 = vadd.f32 %v4488, %v4489
  %v4491 = vrot.slane %v4490, 4
  %v4492 = vadd.f32 %v4490, %v4491
  %v4493 = vrot.slane %v4492, 2
  %v4494 = vadd.f32 %v4492, %v4493
  %v4495 = vrot.slane %v4494, 1
  %v4496 = vadd.f32 %v4494, %v4495
  %v4497 = vmul.f32 %v4496, %v2207
  %v4498 = vsub.f32 %v4398, %v4497
  %v4499 = vsub.f32 %v4401, %v4497
  %v4500 = vsub.f32 %v4406, %v4497
  %v4501 = vsub.f32 %v4409, %v4497
  %v4502 = vsub.f32 %v4414, %v4497
  %v4503 = vsub.f32 %v4417, %v4497
  %v4504 = vsub.f32 %v4422, %v4497
  %v4505 = vsub.f32 %v4425, %v4497
  %v4506 = vsub.f32 %v4430, %v4497
  %v4507 = vsub.f32 %v4433, %v4497
  %v4508 = vsub.f32 %v4438, %v4497
  %v4509 = vsub.f32 %v4441, %v4497
  %v4510 = vsub.f32 %v4446, %v4497
  %v4511 = vsub.f32 %v4449, %v4497
  %v4512 = vsub.f32 %v4454, %v4497
  %v4513 = vsub.f32 %v4457, %v4497
  %v4514 = vmul.f32 %v4498, %v4498
  %v4515 = vmul.f32 %v4499, %v4499
  %v4516 = vmul.f32 %v4500, %v4500
  %v4517 = vmul.f32 %v4501, %v4501
  %v4518 = vmul.f32 %v4502, %v4502
  %v4519 = vmul.f32 %v4503, %v4503
  %v4520 = vmul.f32 %v4504, %v4504
  %v4521 = vmul.f32 %v4505, %v4505
  %v4522 = vmul.f32 %v4506, %v4506
  %v4523 = vmul.f32 %v4507, %v4507
  %v4524 = vmul.f32 %v4508, %v4508
  %v4525 = vmul.f32 %v4509, %v4509
  %v4526 = vmul.f32 %v4510, %v4510
  %v4527 = vmul.f32 %v4511, %v4511
  %v4528 = vmul.f32 %v4512, %v4512
  %v4529 = vmul.f32 %v4513, %v4513
  %v4530 = vsel %vm1800, %v4514, 0.0
  %v4531 = vsel %vm1800, %v4515, 0.0
  %v4532 = vadd.f32 %v4530, %v4531
  %v4533 = vsel %vm1800, %v4516, 0.0
  %v4534 = vadd.f32 %v4532, %v4533
  %v4535 = vsel %vm1800, %v4517, 0.0
  %v4536 = vadd.f32 %v4534, %v4535
  %v4537 = vsel %vm1800, %v4518, 0.0
  %v4538 = vadd.f32 %v4536, %v4537
  %v4539 = vsel %vm1800, %v4519, 0.0
  %v4540 = vadd.f32 %v4538, %v4539
  %v4541 = vsel %vm1800, %v4520, 0.0
  %v4542 = vadd.f32 %v4540, %v4541
  %v4543 = vsel %vm1800, %v4521, 0.0
  %v4544 = vadd.f32 %v4542, %v4543
  %v4545 = vsel %vm1800, %v4522, 0.0
  %v4546 = vadd.f32 %v4544, %v4545
  %v4547 = vsel %vm1800, %v4523, 0.0
  %v4548 = vadd.f32 %v4546, %v4547
  %v4549 = vsel %vm1800, %v4524, 0.0
  %v4550 = vadd.f32 %v4548, %v4549
  %v4551 = vsel %vm1800, %v4525, 0.0
  %v4552 = vadd.f32 %v4550, %v4551
  %v4553 = vsel %vm1800, %v4526, 0.0
  %v4554 = vadd.f32 %v4552, %v4553
  %v4555 = vsel %vm1800, %v4527, 0.0
  %v4556 = vadd.f32 %v4554, %v4555
  %v4557 = vsel %vm1800, %v4528, 0.0
  %v4558 = vadd.f32 %v4556, %v4557
  %v4559 = vsel %vm1800, %v4529, 0.0
  %v4560 = vadd.f32 %v4558, %v4559
  %v4561 = vrot.slane %v4560, 4
  %v4562 = vadd.f32 %v4560, %v4561
  %v4563 = vrot.slane %v4562, 2
  %v4564 = vadd.f32 %v4562, %v4563
  %v4565 = vrot.slane %v4564, 1
  %v4566 = vadd.f32 %v4564, %v4565
  %v4567 = vmul.f32 %v4566, %v2207
  %v4568 = vld [vmem:[%s7] sm:$0x1]
  %v4569 = vadd.f32 %v4567, 1e-05
  %v4570 = vrsqrt.pop %v4569
  %v4571 = vmul.f32 %v4568, %v4570
  %v4572 = vld [vmem:[%s8] sm:$0x1]
  %v4573 = vmul.f32 %v4497, %v4571
  %v4574 = vsub.f32 %v4572, %v4573
  %v4576 = vlaneseq
  %v4577 = vshrl.u32 %v4576, 7
  %v4578 = vsub.s32 0, %v4577
  %v4579 = vrot.slane %v4571, %v4578
  %v4581 = vmul.f32 %v4398, %v4579
  %v4582 = vmul.f32 %v4401, %v4579
  %v4583 = vmul.f32 %v4406, %v4579
  %v4584 = vmul.f32 %v4409, %v4579
  %v4585 = vmul.f32 %v4414, %v4579
  %v4586 = vmul.f32 %v4417, %v4579
  %v4587 = vmul.f32 %v4422, %v4579
  %v4588 = vmul.f32 %v4425, %v4579
  %v4589 = vmul.f32 %v4430, %v4579
  %v4590 = vmul.f32 %v4433, %v4579
  %v4591 = vmul.f32 %v4438, %v4579
  %v4592 = vmul.f32 %v4441, %v4579
  %v4593 = vmul.f32 %v4446, %v4579
  %v4594 = vmul.f32 %v4449, %v4579
  %v4595 = vmul.f32 %v4454, %v4579
  %v4596 = vmul.f32 %v4457, %v4579
  %v4598 = vlaneseq
  %v4599 = vshrl.u32 %v4598, 7
  %v4600 = vsub.s32 0, %v4599
  %v4601 = vrot.slane %v4574, %v4600
  %v4603 = vadd.f32 %v4581, %v4601
  %v4604 = vadd.f32 %v4582, %v4601
  %v4605 = vadd.f32 %v4583, %v4601
  %v4606 = vadd.f32 %v4584, %v4601
  %v4607 = vadd.f32 %v4585, %v4601
  %v4608 = vadd.f32 %v4586, %v4601
  %v4609 = vadd.f32 %v4587, %v4601
  %v4610 = vadd.f32 %v4588, %v4601
  %v4611 = vadd.f32 %v4589, %v4601
  %v4612 = vadd.f32 %v4590, %v4601
  %v4613 = vadd.f32 %v4591, %v4601
  %v4614 = vadd.f32 %v4592, %v4601
  %v4615 = vadd.f32 %v4593, %v4601
  %v4616 = vadd.f32 %v4594, %v4601
  %v4617 = vadd.f32 %v4595, %v4601
  %v4618 = vadd.f32 %v4596, %v4601
  %vm4619 = vsmask.f32 3328
  %vm4620 = vsmask.f32 7440
  %vm4621 = vmor %vm4619, %vm4620
  %v4623 = vshrl.u32 %v864, 16
  %v4625 = vrot.slane %v4623, 4
  %v4626 = vshll.u32 %v864, 16
  %v4628 = vrot.slane %v4626, 5
  %v4629 = vor.u32 %v4625, %v4628
  %v4630 = vrot.slane %v4629, 4
  %v4632 = vshll.u32 %v880, 16
  %v4634 = vrot.slane %v4632, 5
  %v4635 = vsel %vm4621, %v4630, %v4634
  %v4637 = vshrl.u32 %v865, 16
  %v4639 = vrot.slane %v4637, 4
  %v4640 = vshll.u32 %v865, 16
  %v4642 = vrot.slane %v4640, 5
  %v4643 = vor.u32 %v4639, %v4642
  %v4644 = vrot.slane %v4643, 4
  %v4646 = vshll.u32 %v881, 16
  %v4648 = vrot.slane %v4646, 5
  %v4649 = vsel %vm4621, %v4644, %v4648
  %v4651 = vshrl.u32 %v866, 16
  %v4653 = vrot.slane %v4651, 4
  %v4654 = vshll.u32 %v866, 16
  %v4656 = vrot.slane %v4654, 5
  %v4657 = vor.u32 %v4653, %v4656
  %v4658 = vrot.slane %v4657, 4
  %v4660 = vshll.u32 %v882, 16
  %v4662 = vrot.slane %v4660, 5
  %v4663 = vsel %vm4621, %v4658, %v4662
  %v4665 = vshrl.u32 %v867, 16
  %v4667 = vrot.slane %v4665, 4
  %v4668 = vshll.u32 %v867, 16
  %v4670 = vrot.slane %v4668, 5
  %v4671 = vor.u32 %v4667, %v4670
  %v4672 = vrot.slane %v4671, 4
  %v4674 = vshll.u32 %v883, 16
  %v4676 = vrot.slane %v4674, 5
  %v4677 = vsel %vm4621, %v4672, %v4676
  %v4679 = vshrl.u32 %v868, 16
  %v4681 = vrot.slane %v4679, 4
  %v4682 = vshll.u32 %v868, 16
  %v4684 = vrot.slane %v4682, 5
  %v4685 = vor.u32 %v4681, %v4684
  %v4686 = vrot.slane %v4685, 4
  %v4688 = vshll.u32 %v884, 16
  %v4690 = vrot.slane %v4688, 5
  %v4691 = vsel %vm4621, %v4686, %v4690
  %v4693 = vshrl.u32 %v869, 16
  %v4695 = vrot.slane %v4693, 4
  %v4696 = vshll.u32 %v869, 16
  %v4698 = vrot.slane %v4696, 5
  %v4699 = vor.u32 %v4695, %v4698
  %v4700 = vrot.slane %v4699, 4
  %v4702 = vshll.u32 %v885, 16
  %v4704 = vrot.slane %v4702, 5
  %v4705 = vsel %vm4621, %v4700, %v4704
  %v4707 = vshrl.u32 %v870, 16
  %v4709 = vrot.slane %v4707, 4
  %v4710 = vshll.u32 %v870, 16
  %v4712 = vrot.slane %v4710, 5
  %v4713 = vor.u32 %v4709, %v4712
  %v4714 = vrot.slane %v4713, 4
  %v4716 = vshll.u32 %v886, 16
  %v4718 = vrot.slane %v4716, 5
  %v4719 = vsel %vm4621, %v4714, %v4718
  %v4721 = vshrl.u32 %v871, 16
  %v4723 = vrot.slane %v4721, 4
  %v4724 = vshll.u32 %v871, 16
  %v4726 = vrot.slane %v4724, 5
  %v4727 = vor.u32 %v4723, %v4726
  %v4728 = vrot.slane %v4727, 4
  %v4730 = vshll.u32 %v887, 16
  %v4732 = vrot.slane %v4730, 5
  %v4733 = vsel %vm4621, %v4728, %v4732
  %v4735 = vshrl.u32 %v872, 16
  %v4737 = vrot.slane %v4735, 4
  %v4738 = vshll.u32 %v872, 16
  %v4740 = vrot.slane %v4738, 5
  %v4741 = vor.u32 %v4737, %v4740
  %v4742 = vrot.slane %v4741, 4
  %v4744 = vshll.u32 %v888, 16
  %v4746 = vrot.slane %v4744, 5
  %v4747 = vsel %vm4621, %v4742, %v4746
  %v4749 = vshrl.u32 %v873, 16
  %v4751 = vrot.slane %v4749, 4
  %v4752 = vshll.u32 %v873, 16
  %v4754 = vrot.slane %v4752, 5
  %v4755 = vor.u32 %v4751, %v4754
  %v4756 = vrot.slane %v4755, 4
  %v4758 = vshll.u32 %v889, 16
  %v4760 = vrot.slane %v4758, 5
  %v4761 = vsel %vm4621, %v4756, %v4760
  %v4763 = vshrl.u32 %v874, 16
  %v4765 = vrot.slane %v4763, 4
  %v4766 = vshll.u32 %v874, 16
  %v4768 = vrot.slane %v4766, 5
  %v4769 = vor.u32 %v4765, %v4768
  %v4770 = vrot.slane %v4769, 4
  %v4772 = vshll.u32 %v890, 16
  %v4774 = vrot.slane %v4772, 5
  %v4775 = vsel %vm4621, %v4770, %v4774
  %v4777 = vshrl.u32 %v875, 16
  %v4779 = vrot.slane %v4777, 4
  %v4780 = vshll.u32 %v875, 16
  %v4782 = vrot.slane %v4780, 5
  %v4783 = vor.u32 %v4779, %v4782
  %v4784 = vrot.slane %v4783, 4
  %v4786 = vshll.u32 %v891, 16
  %v4788 = vrot.slane %v4786, 5
  %v4789 = vsel %vm4621, %v4784, %v4788
  %v4791 = vshrl.u32 %v876, 16
  %v4793 = vrot.slane %v4791, 4
  %v4794 = vshll.u32 %v876, 16
  %v4796 = vrot.slane %v4794, 5
  %v4797 = vor.u32 %v4793, %v4796
  %v4798 = vrot.slane %v4797, 4
  %v4800 = vshll.u32 %v892, 16
  %v4802 = vrot.slane %v4800, 5
  %v4803 = vsel %vm4621, %v4798, %v4802
  %v4805 = vshrl.u32 %v877, 16
  %v4807 = vrot.slane %v4805, 4
  %v4808 = vshll.u32 %v877, 16
  %v4810 = vrot.slane %v4808, 5
  %v4811 = vor.u32 %v4807, %v4810
  %v4812 = vrot.slane %v4811, 4
  %v4814 = vshll.u32 %v893, 16
  %v4816 = vrot.slane %v4814, 5
  %v4817 = vsel %vm4621, %v4812, %v4816
  %v4819 = vshrl.u32 %v878, 16
  %v4821 = vrot.slane %v4819, 4
  %v4822 = vshll.u32 %v878, 16
  %v4824 = vrot.slane %v4822, 5
  %v4825 = vor.u32 %v4821, %v4824
  %v4826 = vrot.slane %v4825, 4
  %v4828 = vshll.u32 %v894, 16
  %v4830 = vrot.slane %v4828, 5
  %v4831 = vsel %vm4621, %v4826, %v4830
  %v4833 = vshrl.u32 %v879, 16
  %v4835 = vrot.slane %v4833, 4
  %v4836 = vshll.u32 %v879, 16
  %v4838 = vrot.slane %v4836, 5
  %v4839 = vor.u32 %v4835, %v4838
  %v4840 = vrot.slane %v4839, 4
  %v4842 = vshll.u32 %v895, 16
  %v4844 = vrot.slane %v4842, 5
  %v4845 = vsel %vm4621, %v4840, %v4844
  %v4846 = vld [vmem:[%s9] sm:$0x3]
  %v4847 = vld [vmem:[%s10] sm:$0x1]
  %v4849 = vlaneseq
  %v4850 = vshrl.u32 %v4849, 7
  %v4851 = vsub.s32 0, %v4850
  %v4852 = vrot.slane %v4847, %v4851
  %v4854 = vunpack.c.l.b16 %v4635
  %v4855 = vunpack.c.l.b16 %v4649
  %v4856 = vunpack.c.l.b16 %v4663
  %v4857 = vunpack.c.l.b16 %v4677
  %v4858 = vunpack.c.l.b16 %v4691
  %v4859 = vunpack.c.l.b16 %v4705
  %v4860 = vunpack.c.l.b16 %v4719
  %v4861 = vunpack.c.l.b16 %v4733
  %v4862 = vunpack.c.l.b16 %v4747
  %v4863 = vunpack.c.l.b16 %v4761
  %v4864 = vunpack.c.l.b16 %v4775
  %v4865 = vunpack.c.l.b16 %v4789
  %v4866 = vunpack.c.l.b16 %v4803
  %v4867 = vunpack.c.l.b16 %v4817
  %v4868 = vunpack.c.l.b16 %v4831
  %v4869 = vunpack.c.l.b16 %v4845
  %v4870 = vpack.c.b16 %v4855, %v4854
  %v4871 = vpack.c.b16 %v4857, %v4856
  %v4872 = vpack.c.b16 %v4859, %v4858
  %v4873 = vpack.c.b16 %v4861, %v4860
  %v4874 = vpack.c.b16 %v4863, %v4862
  %v4875 = vpack.c.b16 %v4865, %v4864
  %v4876 = vpack.c.b16 %v4867, %v4866
  %v4877 = vpack.c.b16 %v4869, %v4868
  %v4879 = vsel %vm1751, %v4870, 0
  %v4882 = vsel %vm1751, %v4871, 0
  %v4885 = vsel %vm1751, %v4872, 0
  %v4888 = vsel %vm1751, %v4873, 0
  %v4891 = vsel %vm1751, %v4874, 0
  %v4894 = vsel %vm1751, %v4875, 0
  %v4897 = vsel %vm1751, %v4876, 0
  %v4900 = vsel %vm1751, %v4877, 0
  %v4903 = vsel %vm2069, %v4846, 0
  %4905 = vmatprep.subr.bf16.mxu0 0
  %4906 = vmatpush1.bf16.msra.mxu0 0
  %4907 = vmatprep.subr.bf16.mxu0 0
  %4908 = vmatpush1.bf16.msra.mxu0 0
  %4909 = vmatprep.subr.bf16.mxu0 0
  %4910 = vmatpush1.bf16.msra.mxu0 0
  %4911 = vmatprep.subr.bf16.mxu0 0
  %4912 = vmatpush1.bf16.msra.mxu0 0
  %4913 = vmatprep.subr.bf16.mxu0 0
  %4914 = vmatpush1.bf16.msra.mxu0 0
  %4915 = vmatprep.subr.bf16.mxu0 0
  %4916 = vmatpush1.bf16.msra.mxu0 0
  %4917 = vmatprep.subr.bf16.mxu0 0
  %4918 = vmatpush1.bf16.msra.mxu0 0
  %4919 = vmatprep.subr.bf16.mxu0 0
  %4920 = vmatpush1.bf16.msra.mxu0 %v4903
  %4921 = vmatprep.subr.bf16.mxu0 0
  %4922 = vmatpush2.bf16.msra.mxu0 0
  %4923 = vmatprep.subr.bf16.mxu0 0
  %4924 = vmatpush2.bf16.msra.mxu0 0
  %4925 = vmatprep.subr.bf16.mxu0 0
  %4926 = vmatpush2.bf16.msra.mxu0 0
  %4927 = vmatprep.subr.bf16.mxu0 0
  %4928 = vmatpush2.bf16.msra.mxu0 0
  %4929 = vmatprep.subr.bf16.mxu0 0
  %4930 = vmatpush2.bf16.msra.mxu0 0
  %4931 = vmatprep.subr.bf16.mxu0 0
  %4932 = vmatpush2.bf16.msra.mxu0 0
  %4933 = vmatprep.subr.bf16.mxu0 0
  %4934 = vmatpush2.bf16.msra.mxu0 0
  %4935 = vmatprep.subr.bf16.mxu0 0
  %4936 = vmatpush2.bf16.msra.mxu0 0
  %4937 = vmatprep.mubr.bf16.mxu0 0
  %4938 = vmatmul.mubr.bf16.gmra.mxu0 %v4879
  %v4939 = vpop.f32.mrf.mxu0
  %v4940 = vadd.f32 %v4852, %v4939
  %v4941 = vpop.f32.mrf.mxu0
  %v4942 = vpop.f32.mrf.mxu0
  %v4943 = vadd.f32 %v4852, %v4942
  %v4944 = vpop.f32.mrf.mxu0
  %4945 = vmatprep.mubr.bf16.mxu0 0
  %4946 = vmatmul.mubr.bf16.gmra.mxu0 %v4882
  %v4947 = vpop.f32.mrf.mxu0
  %v4948 = vadd.f32 %v4852, %v4947
  %v4949 = vpop.f32.mrf.mxu0
  %v4950 = vpop.f32.mrf.mxu0
  %v4951 = vadd.f32 %v4852, %v4950
  %v4952 = vpop.f32.mrf.mxu0
  %4953 = vmatprep.mubr.bf16.mxu0 0
  %4954 = vmatmul.mubr.bf16.gmra.mxu0 %v4885
  %v4955 = vpop.f32.mrf.mxu0
  %v4956 = vadd.f32 %v4852, %v4955
  %v4957 = vpop.f32.mrf.mxu0
  %v4958 = vpop.f32.mrf.mxu0
  %v4959 = vadd.f32 %v4852, %v4958
  %v4960 = vpop.f32.mrf.mxu0
  %4961 = vmatprep.mubr.bf16.mxu0 0
  %4962 = vmatmul.mubr.bf16.gmra.mxu0 %v4888
  %v4963 = vpop.f32.mrf.mxu0
  %v4964 = vadd.f32 %v4852, %v4963
  %v4965 = vpop.f32.mrf.mxu0
  %v4966 = vpop.f32.mrf.mxu0
  %v4967 = vadd.f32 %v4852, %v4966
  %v4968 = vpop.f32.mrf.mxu0
  %4969 = vmatprep.mubr.bf16.mxu0 0
  %4970 = vmatmul.mubr.bf16.gmra.mxu0 %v4891
  %v4971 = vpop.f32.mrf.mxu0
  %v4972 = vadd.f32 %v4852, %v4971
  %v4973 = vpop.f32.mrf.mxu0
  %v4974 = vpop.f32.mrf.mxu0
  %v4975 = vadd.f32 %v4852, %v4974
  %v4976 = vpop.f32.mrf.mxu0
  %4977 = vmatprep.mubr.bf16.mxu0 0
  %4978 = vmatmul.mubr.bf16.gmra.mxu0 %v4894
  %v4979 = vpop.f32.mrf.mxu0
  %v4980 = vadd.f32 %v4852, %v4979
  %v4981 = vpop.f32.mrf.mxu0
  %v4982 = vpop.f32.mrf.mxu0
  %v4983 = vadd.f32 %v4852, %v4982
  %v4984 = vpop.f32.mrf.mxu0
  %4985 = vmatprep.mubr.bf16.mxu0 0
  %4986 = vmatmul.mubr.bf16.gmra.mxu0 %v4897
  %v4987 = vpop.f32.mrf.mxu0
  %v4988 = vadd.f32 %v4852, %v4987
  %v4989 = vpop.f32.mrf.mxu0
  %v4990 = vpop.f32.mrf.mxu0
  %v4991 = vadd.f32 %v4852, %v4990
  %v4992 = vpop.f32.mrf.mxu0
  %4993 = vmatprep.mubr.bf16.mxu0 0
  %4994 = vmatmul.mubr.bf16.gmra.mxu0 %v4900
  %v4995 = vpop.f32.mrf.mxu0
  %v4996 = vadd.f32 %v4852, %v4995
  %v4997 = vpop.f32.mrf.mxu0
  %v4998 = vpop.f32.mrf.mxu0
  %v4999 = vadd.f32 %v4852, %v4998
  %v5000 = vpop.f32.mrf.mxu0
  %5001 = vdwg.mxu0
  %v5002 = vadd.f32 %v4603, %v4940
  %v5003 = vadd.f32 %v4604, %v4943
  %v5004 = vadd.f32 %v4605, %v4948
  %v5005 = vadd.f32 %v4606, %v4951
  %v5006 = vadd.f32 %v4607, %v4956
  %v5007 = vadd.f32 %v4608, %v4959
  %v5008 = vadd.f32 %v4609, %v4964
  %v5009 = vadd.f32 %v4610, %v4967
  %v5010 = vadd.f32 %v4611, %v4972
  %v5011 = vadd.f32 %v4612, %v4975
  %v5012 = vadd.f32 %v4613, %v4980
  %v5013 = vadd.f32 %v4614, %v4983
  %v5014 = vadd.f32 %v4615, %v4988
  %v5015 = vadd.f32 %v4616, %v4991
  %v5016 = vadd.f32 %v4617, %v4996
  %v5017 = vadd.f32 %v4618, %v4999
  %v5018 = vmax.f32 %v5002, 0.0
  %v5019 = vmax.f32 %v5003, 0.0
  %v5020 = vmax.f32 %v5004, 0.0
  %v5021 = vmax.f32 %v5005, 0.0
  %v5022 = vmax.f32 %v5006, 0.0
  %v5023 = vmax.f32 %v5007, 0.0
  %v5024 = vmax.f32 %v5008, 0.0
  %v5025 = vmax.f32 %v5009, 0.0
  %v5026 = vmax.f32 %v5010, 0.0
  %v5027 = vmax.f32 %v5011, 0.0
  %v5028 = vmax.f32 %v5012, 0.0
  %v5029 = vmax.f32 %v5013, 0.0
  %v5030 = vmax.f32 %v5014, 0.0
  %v5031 = vmax.f32 %v5015, 0.0
  %v5032 = vmax.f32 %v5016, 0.0
  %v5033 = vmax.f32 %v5017, 0.0
  %5034 = vst.msk [vmem:[%s11] sm:$0xff] %vm1800, %v5018
  %5035 = vst.msk [vmem:[%s11 + $0x8] sm:$0xff] %vm1800, %v5019
  %5036 = vst.msk [vmem:[%s11 + $0x10] sm:$0xff] %vm1800, %v5020
  %5037 = vst.msk [vmem:[%s11 + $0x18] sm:$0xff] %vm1800, %v5021
  %5038 = vst.msk [vmem:[%s11 + $0x20] sm:$0xff] %vm1800, %v5022
  %5039 = vst.msk [vmem:[%s11 + $0x28] sm:$0xff] %vm1800, %v5023
  %5040 = vst.msk [vmem:[%s11 + $0x30] sm:$0xff] %vm1800, %v5024
  %5041 = vst.msk [vmem:[%s11 + $0x38] sm:$0xff] %vm1800, %v5025
  %5042 = vst.msk [vmem:[%s11 + $0x40] sm:$0xff] %vm1800, %v5026
  %5043 = vst.msk [vmem:[%s11 + $0x48] sm:$0xff] %vm1800, %v5027
  %5044 = vst.msk [vmem:[%s11 + $0x50] sm:$0xff] %vm1800, %v5028
  %5045 = vst.msk [vmem:[%s11 + $0x58] sm:$0xff] %vm1800, %v5029
  %5046 = vst.msk [vmem:[%s11 + $0x60] sm:$0xff] %vm1800, %v5030
  %5047 = vst.msk [vmem:[%s11 + $0x68] sm:$0xff] %vm1800, %v5031
  %5048 = vst.msk [vmem:[%s11 + $0x70] sm:$0xff] %vm1800, %v5032
  %5049 = vst.msk [vmem:[%s11 + $0x78] sm:$0xff] %vm1800, %v5033
  // Predicated region
  $region46: #{_forward.2} parent=0 // pred_check
    _
  $region47: #{_forward.2} parent=0 // pred_check_branch
    %5051 = sbr.rel (0) target = $region49
  $region48: #{_forward.2} parent=0 // pred_region
    _
  $region49: #{_forward.2} parent=0 // pred_fallthru
    _
  // Predicated region
  $region50: #{_forward.2} parent=0 // pred_check
    _
  $region51: #{_forward.2} parent=0 // pred_check_branch
    %5053 = sbr.rel (0) target = $region53
  $region52: #{_forward.2} parent=0 // pred_region
    _
  $region53: #{_forward.2} parent=0 // pred_fallthru
    _

</llo_original>
